<compile_context>
chip_gen: v6e
topology: v6e:2x2x1
jax: 0.10.0
libtpu: 0.0.40
codegen_flags: <defaults>
</compile_context>

<pallas_src>
import math
from functools import partial

import jax
import jax.numpy as jnp
from jax import lax
from jax.experimental import pallas as pl
from jax.experimental.pallas import tpu as pltpu

_INV_SQRT2 = 1.0 / math.sqrt(2.0)


# ------------------------------ in-kernel helpers ----------------------------

def _ln_f32(x, g, b, eps):
    """LayerNorm over the last axis in fp32 (matches the torch LayerNorm subclass)."""
    mean = jnp.mean(x, axis=-1, keepdims=True)
    xc = x - mean
    var = jnp.mean(xc * xc, axis=-1, keepdims=True)
    return xc * lax.rsqrt(var + eps) * g + b


def _gelu_exact(x):
    """Exact (erf-based) GELU, matching torch.nn.GELU()."""
    return 0.5 * x * (1.0 + lax.erf(x * _INV_SQRT2))


def _mm(a, w):
    """MXU matmul with f32 accumulation; casts the activation to the weight dtype
    so the same kernel serves fp32 (parity) and bf16 (v6e/v7x) weights."""
    return jnp.dot(a.astype(w.dtype), w, preferred_element_type=jnp.float32)


# ------------------------------- Pallas kernels ------------------------------

def _embed_kernel(p_ref, w_ref, pos_ref, g_ref, b_ref, o_ref, *, eps):
    """patchify-conv (bias-free, as matmul) + abs-pos add + ln_pre."""
    x = _mm(p_ref[0], w_ref[...]) + pos_ref[...]              # (R, E)
    o_ref[0] = _ln_f32(x, g_ref[...], b_ref[...], eps).astype(o_ref.dtype)


def embed_ln_pre(patches, w, pos, g, b, eps=1e-5):
    """patches: (Bg, R, K); w: (K, E); pos: (R, E); g/b: (1, E)."""
    Bg, R, K = patches.shape
    E = w.shape[1]
    return pl.pallas_call(
        partial(_embed_kernel, eps=eps),
        out_shape=jax.ShapeDtypeStruct((Bg, R, E), patches.dtype),
        grid=(Bg,),
        in_specs=[
            pl.BlockSpec((1, R, K), lambda i: (i, 0, 0)),
            pl.BlockSpec((K, E), lambda i: (0, 0)),
            pl.BlockSpec((R, E), lambda i: (0, 0)),
            pl.BlockSpec((1, E), lambda i: (0, 0)),
            pl.BlockSpec((1, E), lambda i: (0, 0)),
        ],
        out_specs=pl.BlockSpec((1, R, E), lambda i: (i, 0, 0)),
        compiler_params=pltpu.CompilerParams(dimension_semantics=("parallel",)),
    )(patches, w, pos, g, b)


def _stack_kernel(x_ref, ln1g_ref, ln1b_ref, wqkv_ref, bqkv_ref,
                  cos_ref, sin_ref, wout_ref, bout_ref,
                  ln2g_ref, ln2b_ref, wfc_ref, bfc_ref, wpj_ref, bpj_ref,
                  o_ref, act_ref, *, num_heads, seq, eps):
    """One depth step of the fused transformer stack.  grid=(batch_groups, depth);
    the (R, E) activation is carried in VMEM scratch across the depth axis."""
    d = pl.program_id(1)

    @pl.when(d == 0)
    def _():
        act_ref[...] = x_ref[0].astype(jnp.float32)

    x = act_ref[...]                                          # (R, E), R = n_img * seq
    R, E = x.shape
    H = num_heads
    D = E // H
    half = D // 2
    Eh = E // 2
    n_img = R // seq

    # ---------------- attention branch ----------------
    xn = _ln_f32(x, ln1g_ref[0], ln1b_ref[0], eps)
    qkv = _mm(xn, wqkv_ref[0]) + bqkv_ref[0]                  # (R, 3E)
    q = qkv[:, :E]
    k = qkv[:, E:2 * E]
    v = qkv[:, 2 * E:]
    cos = cos_ref[...]
    sin = sin_ref[...]                                        # sign-folded sin table
    # rotate_half == one full-width lane rotate in the permuted layout (XLU slot);
    # attention scale is already folded into the q weights/bias.
    q = q * cos + pltpu.roll(q, Eh, 1) * sin
    k = k * cos + pltpu.roll(k, Eh, 1) * sin

    wout = wout_ref[0]                                        # (E, E)
    bout = bout_ref[0]                                        # (1, E)
    img_outs = []
    for i in range(n_img):                                    # static unroll over images
        r0 = i * seq
        xi = x[r0:r0 + seq, :]
        qi = q[r0:r0 + seq, :]
        ki = k[r0:r0 + seq, :]
        vi = v[r0:r0 + seq, :]
        acc = xi + bout                                       # residual + out-proj bias
        for h in range(H):                                    # static unroll over heads
            c0 = h * half
            s = (jnp.dot(qi[:, c0:c0 + half], ki[:, c0:c0 + half].T,
                         preferred_element_type=jnp.float32)
                 + jnp.dot(qi[:, Eh + c0:Eh + c0 + half],
                           ki[:, Eh + c0:Eh + c0 + half].T,
                           preferred_element_type=jnp.float32))
            s = s - jnp.max(s, axis=-1, keepdims=True)
            p = jnp.exp(s)
            # NOTE: approx reciprocal (EUP) deviates slightly from exact softmax.
            p = p * pl.reciprocal(jnp.sum(p, axis=-1, keepdims=True), approx=True)
            ho = jnp.dot(p, vi[:, h * D:(h + 1) * D],
                         preferred_element_type=jnp.float32)  # (seq, D)
            acc = acc + _mm(ho, wout[h * D:(h + 1) * D, :])   # fused out_proj (no concat)
        img_outs.append(acc)
    x = img_outs[0] if n_img == 1 else jnp.concatenate(img_outs, axis=0)

    # ---------------- MLP branch ----------------
    xn2 = _ln_f32(x, ln2g_ref[0], ln2b_ref[0], eps)
    hdn = _gelu_exact(_mm(xn2, wfc_ref[0]) + bfc_ref[0])
    x = x + _mm(hdn, wpj_ref[0]) + bpj_ref[0]

    act_ref[...] = x

    @pl.when(d == pl.num_programs(1) - 1)
    def _():
        o_ref[0] = x.astype(o_ref.dtype)


def transformer_stack(xg, st, cos_t, sin_t, *, num_heads, seq, eps=1e-5):
    """xg: (Bg, R, E); st: dict of depth-stacked per-block tensors."""
    Bg, R, E = xg.shape
    depth = st["wqkv"].shape[0]
    hidden = st["wfc"].shape[2]

    def wspec(*shape):      # per-depth weight slice, pipelined along the depth axis
        return pl.BlockSpec((1,) + shape, lambda b, d: (d,) + (0,) * len(shape))

    def cspec(*shape):      # grid-invariant (RoPE tables)
        return pl.BlockSpec(shape, lambda b, d: (0,) * len(shape))

    tok = pl.BlockSpec((1, R, E), lambda b, d: (b, 0, 0))

    return pl.pallas_call(
        partial(_stack_kernel, num_heads=num_heads, seq=seq, eps=eps),
        out_shape=jax.ShapeDtypeStruct((Bg, R, E), xg.dtype),
        grid=(Bg, depth),
        in_specs=[tok,
                  wspec(1, E), wspec(1, E),
                  wspec(E, 3 * E), wspec(1, 3 * E),
                  cspec(R, E), cspec(R, E),
                  wspec(E, E), wspec(1, E),
                  wspec(1, E), wspec(1, E),
                  wspec(E, hidden), wspec(1, hidden),
                  wspec(hidden, E), wspec(1, E)],
        out_specs=tok,
        scratch_shapes=[pltpu.VMEM((R, E), jnp.float32)],
        compiler_params=pltpu.CompilerParams(
            dimension_semantics=("parallel", "arbitrary"),
            vmem_limit_bytes=32 * 1024 * 1024),   # v5e scoped default is only 16 MiB
    )(xg, st["ln1_g"], st["ln1_b"], st["wqkv"], st["bqkv"],
      cos_t, sin_t, st["wout"], st["bout"],
      st["ln2_g"], st["ln2_b"], st["wfc"], st["bfc"], st["wpj"], st["bpj"])


def _matmul_bias_kernel(x_ref, w_ref, b_ref, o_ref):
    o_ref[0] = (_mm(x_ref[0], w_ref[...]) + b_ref[...]).astype(o_ref.dtype)


def batched_matmul_bias(x, w, b):
    """x: (Bg, R, K) @ w: (K, N) + b: (1, N) -> (Bg, R, N)."""
    Bg, R, K = x.shape
    N = w.shape[1]
    return pl.pallas_call(
        _matmul_bias_kernel,
        out_shape=jax.ShapeDtypeStruct((Bg, R, N), x.dtype),
        grid=(Bg,),
        in_specs=[pl.BlockSpec((1, R, K), lambda i: (i, 0, 0)),
                  pl.BlockSpec((K, N), lambda i: (0, 0)),
                  pl.BlockSpec((1, N), lambda i: (0, 0))],
        out_specs=pl.BlockSpec((1, R, N), lambda i: (i, 0, 0)),
        compiler_params=pltpu.CompilerParams(dimension_semantics=("parallel",)),
    )(x, w, b)


# --------------------------- parameters / buffers ----------------------------

def build_rope_tables(head_dim, pt_seq_len, ft_seq_len, theta=10000.0):
    """Reproduces VisionRotaryEmbeddingFast buffers (freqs_cos / freqs_sin)."""
    dim = head_dim // 2
    freqs = 1.0 / (theta ** (jnp.arange(0, dim, 2)[: dim // 2].astype(jnp.float32) / dim))
    t = jnp.arange(ft_seq_len, dtype=jnp.float32) / ft_seq_len * pt_seq_len + 1.0
    freqs = jnp.einsum("i,j->ij", t, freqs)                   # (ft, dim//2)
    freqs = jnp.repeat(freqs, 2, axis=-1)                     # (ft, dim)
    fa = jnp.broadcast_to(freqs[None, :, :], (ft_seq_len, ft_seq_len, dim))
    fb = jnp.broadcast_to(freqs[:, None, :], (ft_seq_len, ft_seq_len, dim))
    freqs2 = jnp.concatenate([fa, fb], axis=-1)               # (ft, ft, head_dim)
    cos = jnp.cos(freqs2).reshape(-1, head_dim)
    sin = jnp.sin(freqs2).reshape(-1, head_dim)
    return cos, sin


def init_params(key, cfg):
    """PyTorch-layout parameters (same shapes / semantics as the nn.Module)."""
    E = cfg["embed_dim"]; Cin = cfg["in_chans"]; P = cfg["patch_size"]
    depth = cfg["depth"]
    hidden = int(E * cfg["mlp_ratio"])
    npos = (cfg["pretrain_img_size"] // P) ** 2 + 1           # +1 cls token

    keys = jax.random.split(key, 4 + depth)

    def nrm(k, shape, std=0.02):
        return (std * jax.random.normal(k, shape)).astype(jnp.float32)

    params = {
        "conv1_w": nrm(keys[0], (E, Cin, P, P)),              # Conv2d, bias=False
        "pos_emb": nrm(keys[1], (1, npos, E)),
        "ln_pre_g": jnp.ones((E,), jnp.float32),
        "ln_pre_b": jnp.zeros((E,), jnp.float32),
        "fpn1_w": nrm(keys[2], (E, E // 2, 2, 2)),            # ConvTranspose2d weight
        "fpn1_b": jnp.zeros((E // 2,), jnp.float32),
    }
    blocks = []
    for i in range(depth):
        bk = jax.random.split(keys[4 + i], 4)
        blocks.append({
            "ln1_g": jnp.ones((E,), jnp.float32), "ln1_b": jnp.zeros((E,), jnp.float32),
            "in_proj_w": nrm(bk[0], (3 * E, E)), "in_proj_b": jnp.zeros((3 * E,), jnp.float32),
            "out_proj_w": nrm(bk[1], (E, E)), "out_proj_b": jnp.zeros((E,), jnp.float32),
            "ln2_g": jnp.ones((E,), jnp.float32), "ln2_b": jnp.zeros((E,), jnp.float32),
            "c_fc_w": nrm(bk[2], (hidden, E)), "c_fc_b": jnp.zeros((hidden,), jnp.float32),
            "c_proj_w": nrm(bk[3], (E, hidden)), "c_proj_b": jnp.zeros((E,), jnp.float32),
        })
    params["blocks"] = blocks
    return params


def prepare_params(params, cfg):
    """One-time static folding: weight transposes, global q/k column permutation
    (evens-of-all-heads | odds-of-all-heads), attention scale folded into q,
    sign-folded sin table, bias reshapes, ConvTranspose weight flattening,
    depth-stacking of per-block tensors for the fused kernel."""
    E = cfg["embed_dim"]; Cin = cfg["in_chans"]; P = cfg["patch_size"]
    nhd = cfg["num_heads"]; D = E // nhd
    nh = cfg["img_size"] // P
    S = nh * nh
    scale = D ** -0.5
    wdt = jnp.bfloat16 if cfg.get("matmul_dtype", "float32") == "bfloat16" else jnp.float32

    # Global q/k column permutation so rotate_half is ONE full-width roll by E//2.
    ev = jnp.arange(0, D, 2)
    od = jnp.arange(1, D, 2)
    first = jnp.concatenate([h * D + ev for h in range(nhd)])
    second = jnp.concatenate([h * D + od for h in range(nhd)])
    q_perm = jnp.concatenate([first, second])                 # (E,)

    pos = params["pos_emb"][:, 1:, :]                         # drop cls token
    size = int(math.isqrt(pos.shape[1]))
    assert size * size == pos.shape[1]
    # TODO(synk): bicubic get_abs_pos interpolation branch (size != h/w) not implemented.
    assert size == nh, "abs-pos interpolation branch not exercised at these sizes"

    cos, sin = build_rope_tables(D, cfg["pt_hw_seq_len"], nh)  # (S, D), intp_freq=True
    cos_e = cos[:, 0::2]                                       # pairs share the same freq
    sin_e = sin[:, 0::2]
    cos_g = jnp.tile(cos_e, (1, 2 * nhd))                      # (S, E)
    sin_g = jnp.concatenate([-jnp.tile(sin_e, (1, nhd)),       # sign-folded for the roll
                             jnp.tile(sin_e, (1, nhd))], axis=1)

    kp = {
        "wp": params["conv1_w"].reshape(E, Cin * P * P).T.astype(wdt),
        "pos": pos.reshape(S, E),
        "ln_pre_g": params["ln_pre_g"].reshape(1, E),
        "ln_pre_b": params["ln_pre_b"].reshape(1, E),
        "rope_cos": cos_g,
        "rope_sin": sin_g,
    }

    blocks = []
    for blk in params["blocks"]:
        hidden = blk["c_fc_w"].shape[0]
        w = blk["in_proj_w"]; bq_ = blk["in_proj_b"]
        wq = w[:E][q_perm] * scale                             # fold attention scale into q
        wk = w[E:2 * E][q_perm]
        wv = w[2 * E:]
        bq = bq_[:E][q_perm] * scale
        bk = bq_[E:2 * E][q_perm]
        bv = bq_[2 * E:]
        blocks.append({
            "ln1_g": blk["ln1_g"].reshape(1, E), "ln1_b": blk["ln1_b"].reshape(1, E),
            "wqkv": jnp.concatenate([wq, wk, wv], axis=0).T.astype(wdt),   # (E, 3E)
            "bqkv": jnp.concatenate([bq, bk, bv]).reshape(1, 3 * E),
            "wout": blk["out_proj_w"].T.astype(wdt),           # (E, E)
            "bout": blk["out_proj_b"].reshape(1, E),
            "ln2_g": blk["ln2_g"].reshape(1, E), "ln2_b": blk["ln2_b"].reshape(1, E),
            "wfc": blk["c_fc_w"].T.astype(wdt),                # (E, hidden)
            "bfc": blk["c_fc_b"].reshape(1, hidden),
            "wpj": blk["c_proj_w"].T.astype(wdt),              # (hidden, E)
            "bpj": blk["c_proj_b"].reshape(1, E),
        })
    # Stack per-block tensors along a leading depth axis for the fused kernel.
    kp["stack"] = {k: jnp.stack([b[k] for b in blocks], axis=0) for k in blocks[0]}

    E2 = E // 2
    kp["fpn1_w"] = params["fpn1_w"].reshape(E, E2 * 4).astype(wdt)   # cols in (co, p, q) order
    kp["fpn1_b"] = jnp.broadcast_to(
        params["fpn1_b"][:, None, None], (E2, 2, 2)).reshape(1, E2 * 4)
    return kp


# ----------------------------------- forward ---------------------------------

def pev1_simplefpn_forward(x, kp, cfg):
    B, Cin, Himg, Wimg = x.shape
    P = cfg["patch_size"]; E = cfg["embed_dim"]; nhd = cfg["num_heads"]
    nh, nw = Himg // P, Wimg // P
    S = nh * nw

    n = cfg.get("imgs_per_block", 0) or B      # 0 -> fold the whole batch (v5e/v6e)
    assert B % n == 0, "imgs_per_block must divide the batch"
    Bg, R = B // n, n * S

    # patch extraction (tiny here).
    # TODO(synk): at production sizes read patch tiles via a gridded BlockSpec
    # index_map inside the embed kernel instead of materializing this relayout.
    patches = x.reshape(B, Cin, nh, P, nw, P).transpose(0, 2, 4, 1, 3, 5)
    patches = patches.reshape(Bg, R, Cin * P * P)

    pos_t = jnp.tile(kp["pos"], (n, 1))
    cos_t = jnp.tile(kp["rope_cos"], (n, 1))
    sin_t = jnp.tile(kp["rope_sin"], (n, 1))

    # conv1 + abs-pos + ln_pre (one fused kernel)
    xg = embed_ln_pre(patches, kp["wp"], pos_t, kp["ln_pre_g"], kp["ln_pre_b"])

    # full transformer (all depth blocks) in ONE fused kernel
    xg = transformer_stack(xg, kp["stack"], cos_t, sin_t, num_heads=nhd, seq=S)
    xh = xg.reshape(B, S, E)

    # ----- simple FPN -----
    xp = xh.reshape(B, nh, nw, E).transpose(0, 3, 1, 2)        # NCHW (B, E, nh, nw)

    # fpn1: ConvTranspose2d(E, E//2, k=2, s=2) as matmul + pixel unshuffle
    E2 = E // 2
    y = batched_matmul_bias(xg, kp["fpn1_w"], kp["fpn1_b"]).reshape(B, S, E2 * 4)
    p3 = y.reshape(B, nh, nw, E2, 2, 2).transpose(0, 3, 1, 4, 2, 5).reshape(
        B, E2, 2 * nh, 2 * nw)

    # fpn2: identity
    p4 = xp

    # fpn3: MaxPool2d(2,2) on a tiny map — plain-JAX glue
    # TODO(synk): fold into a Pallas kernel if this ever matters at scale.
    p5 = xp.reshape(B, E, nh // 2, 2, nw // 2, 2).max(axis=(3, 5))

    return {"p3": p3, "p4": p4, "p5": p5}


# ------------------------------------- main -----------------------------------

if __name__ == "__main__":
    cfg = dict(
        img_size=64, patch_size=16, in_chans=3, embed_dim=128, depth=2,
        num_heads=4, mlp_ratio=4.0, pretrain_img_size=64, pt_hw_seq_len=16,
        # Perf knobs:
        #  matmul_dtype="bfloat16" on v6e/v7x once a numeric parity test is in place.
        #  imgs_per_block=0 folds the whole batch into the matmul M dim (best on
        #  single-TC v5e/v6e); set 1 on v7x so the "parallel" batch grid axis
        #  feeds both TensorCores.
        matmul_dtype="float32", imgs_per_block=0,
    )
    key = jax.random.PRNGKey(0)
    pkey, xkey = jax.random.split(key)
    params = init_params(pkey, cfg)
    kparams = prepare_params(params, cfg)                      # static folding, once
    x = jax.random.normal(
        xkey, (2, cfg["in_chans"], cfg["img_size"], cfg["img_size"]), jnp.float32)

    fwd = jax.jit(lambda xx, pp: pev1_simplefpn_forward(xx, pp, cfg))
    out = fwd(x, kparams)
    jax.block_until_ready(out)

    assert out["p3"].shape == (2, cfg["embed_dim"] // 2, 8, 8)
    assert out["p4"].shape == (2, cfg["embed_dim"], 4, 4)
    assert out["p5"].shape == (2, cfg["embed_dim"], 2, 2)
    print("KERNEL_OK")
</pallas_src>

<mosaic_0001>
module attributes {stable_mosaic.version = 11 : i64} {
  func.func @_embed_kernel(%arg0: i32, %arg1: memref<1x32x768xf32, #tpu.memory_space<vmem>>, %arg2: memref<768x128xf32, #tpu.memory_space<vmem>>, %arg3: memref<32x128xf32, #tpu.memory_space<vmem>>, %arg4: memref<1x128xf32, #tpu.memory_space<vmem>>, %arg5: memref<1x128xf32, #tpu.memory_space<vmem>>, %arg6: memref<1x32x128xf32, #tpu.memory_space<vmem>>) attributes {dimension_semantics = [#tpu.dimension_semantics<parallel>], iteration_bounds = array<i64: 1>, scalar_prefetch = 0 : i64, scratch_operands = 0 : i64, tpu.core_type = #tpu.core_type<tc>, window_params = [{transform_indices = @transform_0, window_bounds = array<i64: 1, 32, 768>}, {pipeline_mode = #tpu.pipeline_mode<synchronous>, transform_indices = @transform_1, window_bounds = array<i64: 768, 128>}, {pipeline_mode = #tpu.pipeline_mode<synchronous>, transform_indices = @transform_2, window_bounds = array<i64: 32, 128>}, {pipeline_mode = #tpu.pipeline_mode<synchronous>, transform_indices = @transform_3, window_bounds = array<i64: 1, 128>}, {pipeline_mode = #tpu.pipeline_mode<synchronous>, transform_indices = @transform_4, window_bounds = array<i64: 1, 128>}, {transform_indices = @transform_5, window_bounds = array<i64: 1, 32, 128>}]} {
    %c0 = arith.constant 0 : index
    %c0_0 = arith.constant 0 : index
    %c0_1 = arith.constant 0 : index
    %0 = vector.load %arg1[%c0, %c0_0, %c0_1] : memref<1x32x768xf32, #tpu.memory_space<vmem>>, vector<1x32x768xf32>
    %1 = vector.shape_cast %0 : vector<1x32x768xf32> to vector<32x768xf32>
    %c0_2 = arith.constant 0 : index
    %c0_3 = arith.constant 0 : index
    %2 = vector.load %arg2[%c0_2, %c0_3] : memref<768x128xf32, #tpu.memory_space<vmem>>, vector<768x128xf32>
    %cst = arith.constant dense<0.000000e+00> : vector<32x128xf32>
    %3 = tpu.matmul %1, %2, %cst {dimension_numbers = #tpu.dot_dimension_numbers<[1], [0], [0], [1], [0, 0, 1, 1], [], []>} : vector<32x768xf32>, vector<768x128xf32>, vector<32x128xf32> -> vector<32x128xf32>
    %c0_4 = arith.constant 0 : index
    %c0_5 = arith.constant 0 : index
    %4 = vector.load %arg3[%c0_4, %c0_5] : memref<32x128xf32, #tpu.memory_space<vmem>>, vector<32x128xf32>
    %5 = arith.addf %3, %4 : vector<32x128xf32>
    %c0_6 = arith.constant 0 : index
    %c0_7 = arith.constant 0 : index
    %6 = vector.load %arg4[%c0_6, %c0_7] : memref<1x128xf32, #tpu.memory_space<vmem>>, vector<1x128xf32>
    %c0_8 = arith.constant 0 : index
    %c0_9 = arith.constant 0 : index
    %7 = vector.load %arg5[%c0_8, %c0_9] : memref<1x128xf32, #tpu.memory_space<vmem>>, vector<1x128xf32>
    %cst_10 = arith.constant dense<0.000000e+00> : vector<32xf32>
    %8 = vector.multi_reduction <add>, %5, %cst_10 [1] : vector<32x128xf32> to vector<32xf32>
    %9 = vector.shape_cast %8 : vector<32xf32> to vector<32x1xf32>
    %cst_11 = arith.constant 1.280000e+02 : f32
    %10 = vector.broadcast %cst_11 : f32 to vector<32x1xf32>
    %11 = arith.divf %9, %10 : vector<32x1xf32>
    %12 = vector.broadcast %11 : vector<32x1xf32> to vector<32x128xf32>
    %13 = arith.subf %5, %12 : vector<32x128xf32>
    %14 = arith.mulf %13, %13 : vector<32x128xf32>
    %cst_12 = arith.constant dense<0.000000e+00> : vector<32xf32>
    %15 = vector.multi_reduction <add>, %14, %cst_12 [1] : vector<32x128xf32> to vector<32xf32>
    %16 = vector.shape_cast %15 : vector<32xf32> to vector<32x1xf32>
    %cst_13 = arith.constant 1.280000e+02 : f32
    %17 = vector.broadcast %cst_13 : f32 to vector<32x1xf32>
    %18 = arith.divf %16, %17 : vector<32x1xf32>
    %cst_14 = arith.constant 9.99999974E-6 : f32
    %19 = vector.broadcast %cst_14 : f32 to vector<32x1xf32>
    %20 = arith.addf %18, %19 : vector<32x1xf32>
    %21 = math.rsqrt %20 : vector<32x1xf32>
    %22 = vector.broadcast %21 : vector<32x1xf32> to vector<32x128xf32>
    %23 = arith.mulf %13, %22 : vector<32x128xf32>
    %24 = vector.broadcast %6 : vector<1x128xf32> to vector<32x128xf32>
    %25 = arith.mulf %23, %24 : vector<32x128xf32>
    %26 = vector.broadcast %7 : vector<1x128xf32> to vector<32x128xf32>
    %27 = arith.addf %25, %26 : vector<32x128xf32>
    %c0_15 = arith.constant 0 : index
    %c0_16 = arith.constant 0 : index
    %c0_17 = arith.constant 0 : index
    %28 = vector.load %arg6[%c0_15, %c0_16, %c0_17] : memref<1x32x128xf32, #tpu.memory_space<vmem>>, vector<1x32x128xf32>
    %29 = vector.shape_cast %28 : vector<1x32x128xf32> to vector<32x128xf32>
    %30 = vector.shape_cast %27 : vector<32x128xf32> to vector<1x32x128xf32>
    tpu.vector_store %arg6[%c0_15, %c0_16, %c0_17], %30 {strides = array<i32>} : memref<1x32x128xf32, #tpu.memory_space<vmem>>, vector<1x32x128xf32>,
    return
  }
  func.func @transform_0(%arg0: i32) -> (i32, i32, i32) {
    %c0_i32 = arith.constant 0 : i32
    %c0_i32_0 = arith.constant 0 : i32
    %c0_i32_1 = arith.constant 0 : i32
    return %arg0, %c0_i32, %c0_i32_0 : i32, i32, i32
  }
  func.func @transform_1(%arg0: i32) -> (i32, i32) {
    %c0_i32 = arith.constant 0 : i32
    %c0_i32_0 = arith.constant 0 : i32
    %c0_i32_1 = arith.constant 0 : i32
    return %c0_i32, %c0_i32_0 : i32, i32
  }
  func.func @transform_2(%arg0: i32) -> (i32, i32) {
    %c0_i32 = arith.constant 0 : i32
    %c0_i32_0 = arith.constant 0 : i32
    %c0_i32_1 = arith.constant 0 : i32
    return %c0_i32, %c0_i32_0 : i32, i32
  }
  func.func @transform_3(%arg0: i32) -> (i32, i32) {
    %c0_i32 = arith.constant 0 : i32
    %c0_i32_0 = arith.constant 0 : i32
    %c0_i32_1 = arith.constant 0 : i32
    return %c0_i32, %c0_i32_0 : i32, i32
  }
  func.func @transform_4(%arg0: i32) -> (i32, i32) {
    %c0_i32 = arith.constant 0 : i32
    %c0_i32_0 = arith.constant 0 : i32
    %c0_i32_1 = arith.constant 0 : i32
    return %c0_i32, %c0_i32_0 : i32, i32
  }
  func.func @transform_5(%arg0: i32) -> (i32, i32, i32) {
    %c0_i32 = arith.constant 0 : i32
    %c0_i32_0 = arith.constant 0 : i32
    %c0_i32_1 = arith.constant 0 : i32
    return %arg0, %c0_i32, %c0_i32_0 : i32, i32, i32
  }
}

module attributes {stable_mosaic.version = 11 : i64} {
  func.func @_stack_kernel(%arg0: i32, %arg1: i32, %arg2: memref<1x32x128xf32, #tpu.memory_space<vmem>>, %arg3: memref<1x1x128xf32, #tpu.memory_space<vmem>>, %arg4: memref<1x1x128xf32, #tpu.memory_space<vmem>>, %arg5: memref<1x128x384xf32, #tpu.memory_space<vmem>>, %arg6: memref<1x1x384xf32, #tpu.memory_space<vmem>>, %arg7: memref<32x128xf32, #tpu.memory_space<vmem>>, %arg8: memref<32x128xf32, #tpu.memory_space<vmem>>, %arg9: memref<1x128x128xf32, #tpu.memory_space<vmem>>, %arg10: memref<1x1x128xf32, #tpu.memory_space<vmem>>, %arg11: memref<1x1x128xf32, #tpu.memory_space<vmem>>, %arg12: memref<1x1x128xf32, #tpu.memory_space<vmem>>, %arg13: memref<1x128x512xf32, #tpu.memory_space<vmem>>, %arg14: memref<1x1x512xf32, #tpu.memory_space<vmem>>, %arg15: memref<1x512x128xf32, #tpu.memory_space<vmem>>, %arg16: memref<1x1x128xf32, #tpu.memory_space<vmem>>, %arg17: memref<1x32x128xf32, #tpu.memory_space<vmem>>, %arg18: memref<32x128xf32, #tpu.memory_space<vmem>>) attributes {dimension_semantics = [#tpu.dimension_semantics<parallel>, #tpu.dimension_semantics<arbitrary>], iteration_bounds = array<i64: 1, 2>, scalar_prefetch = 0 : i64, scratch_operands = 1 : i64, tpu.core_type = #tpu.core_type<tc>, window_params = [{transform_indices = @transform_0, window_bounds = array<i64: 1, 32, 128>}, {transform_indices = @transform_1, window_bounds = array<i64: 1, 1, 128>}, {transform_indices = @transform_2, window_bounds = array<i64: 1, 1, 128>}, {transform_indices = @transform_3, window_bounds = array<i64: 1, 128, 384>}, {transform_indices = @transform_4, window_bounds = array<i64: 1, 1, 384>}, {pipeline_mode = #tpu.pipeline_mode<synchronous>, transform_indices = @transform_5, window_bounds = array<i64: 32, 128>}, {pipeline_mode = #tpu.pipeline_mode<synchronous>, transform_indices = @transform_6, window_bounds = array<i64: 32, 128>}, {transform_indices = @transform_7, window_bounds = array<i64: 1, 128, 128>}, {transform_indices = @transform_8, window_bounds = array<i64: 1, 1, 128>}, {transform_indices = @transform_9, window_bounds = array<i64: 1, 1, 128>}, {transform_indices = @transform_10, window_bounds = array<i64: 1, 1, 128>}, {transform_indices = @transform_11, window_bounds = array<i64: 1, 128, 512>}, {transform_indices = @transform_12, window_bounds = array<i64: 1, 1, 512>}, {transform_indices = @transform_13, window_bounds = array<i64: 1, 512, 128>}, {transform_indices = @transform_14, window_bounds = array<i64: 1, 1, 128>}, {transform_indices = @transform_15, window_bounds = array<i64: 1, 32, 128>}]} {
    %c0_i32 = arith.constant 0 : i32
    %0 = arith.cmpi eq, %arg1, %c0_i32 : i32
    %1 = arith.extui %0 : i1 to i32
    %c0_i32_0 = arith.constant 0 : i32
    %2 = arith.cmpi ne, %1, %c0_i32_0 : i32
    scf.if %2 {
      %c0_109 = arith.constant 0 : index
      %c0_110 = arith.constant 0 : index
      %c0_111 = arith.constant 0 : index
      %308 = vector.load %arg2[%c0_109, %c0_110, %c0_111] : memref<1x32x128xf32, #tpu.memory_space<vmem>>, vector<1x32x128xf32>
      %309 = vector.shape_cast %308 : vector<1x32x128xf32> to vector<32x128xf32>
      %c0_112 = arith.constant 0 : index
      %c0_113 = arith.constant 0 : index
      %310 = vector.load %arg18[%c0_112, %c0_113] : memref<32x128xf32, #tpu.memory_space<vmem>>, vector<32x128xf32>
      tpu.vector_store %arg18[%c0_112, %c0_113], %309 {strides = array<i32>} : memref<32x128xf32, #tpu.memory_space<vmem>>, vector<32x128xf32>,
    } else {
    }
    %c0 = arith.constant 0 : index
    %c0_1 = arith.constant 0 : index
    %3 = vector.load %arg18[%c0, %c0_1] : memref<32x128xf32, #tpu.memory_space<vmem>>, vector<32x128xf32>
    %c0_2 = arith.constant 0 : index
    %c0_3 = arith.constant 0 : index
    %c0_4 = arith.constant 0 : index
    %4 = vector.load %arg3[%c0_2, %c0_3, %c0_4] : memref<1x1x128xf32, #tpu.memory_space<vmem>>, vector<1x1x128xf32>
    %5 = vector.shape_cast %4 : vector<1x1x128xf32> to vector<1x128xf32>
    %c0_5 = arith.constant 0 : index
    %c0_6 = arith.constant 0 : index
    %c0_7 = arith.constant 0 : index
    %6 = vector.load %arg4[%c0_5, %c0_6, %c0_7] : memref<1x1x128xf32, #tpu.memory_space<vmem>>, vector<1x1x128xf32>
    %7 = vector.shape_cast %6 : vector<1x1x128xf32> to vector<1x128xf32>
    %cst = arith.constant dense<0.000000e+00> : vector<32xf32>
    %8 = vector.multi_reduction <add>, %3, %cst [1] : vector<32x128xf32> to vector<32xf32>
    %9 = vector.shape_cast %8 : vector<32xf32> to vector<32x1xf32>
    %cst_8 = arith.constant 1.280000e+02 : f32
    %10 = vector.broadcast %cst_8 : f32 to vector<32x1xf32>
    %11 = arith.divf %9, %10 : vector<32x1xf32>
    %12 = vector.broadcast %11 : vector<32x1xf32> to vector<32x128xf32>
    %13 = arith.subf %3, %12 : vector<32x128xf32>
    %14 = arith.mulf %13, %13 : vector<32x128xf32>
    %cst_9 = arith.constant dense<0.000000e+00> : vector<32xf32>
    %15 = vector.multi_reduction <add>, %14, %cst_9 [1] : vector<32x128xf32> to vector<32xf32>
    %16 = vector.shape_cast %15 : vector<32xf32> to vector<32x1xf32>
    %cst_10 = arith.constant 1.280000e+02 : f32
    %17 = vector.broadcast %cst_10 : f32 to vector<32x1xf32>
    %18 = arith.divf %16, %17 : vector<32x1xf32>
    %cst_11 = arith.constant 9.99999974E-6 : f32
    %19 = vector.broadcast %cst_11 : f32 to vector<32x1xf32>
    %20 = arith.addf %18, %19 : vector<32x1xf32>
    %21 = math.rsqrt %20 : vector<32x1xf32>
    %22 = vector.broadcast %21 : vector<32x1xf32> to vector<32x128xf32>
    %23 = arith.mulf %13, %22 : vector<32x128xf32>
    %24 = vector.broadcast %5 : vector<1x128xf32> to vector<32x128xf32>
    %25 = arith.mulf %23, %24 : vector<32x128xf32>
    %26 = vector.broadcast %7 : vector<1x128xf32> to vector<32x128xf32>
    %27 = arith.addf %25, %26 : vector<32x128xf32>
    %c0_12 = arith.constant 0 : index
    %c0_13 = arith.constant 0 : index
    %c0_14 = arith.constant 0 : index
    %28 = vector.load %arg5[%c0_12, %c0_13, %c0_14] : memref<1x128x384xf32, #tpu.memory_space<vmem>>, vector<1x128x384xf32>
    %29 = vector.shape_cast %28 : vector<1x128x384xf32> to vector<128x384xf32>
    %cst_15 = arith.constant dense<0.000000e+00> : vector<32x384xf32>
    %30 = tpu.matmul %27, %29, %cst_15 {dimension_numbers = #tpu.dot_dimension_numbers<[1], [0], [0], [1], [0, 0, 1, 1], [], []>} : vector<32x128xf32>, vector<128x384xf32>, vector<32x384xf32> -> vector<32x384xf32>
    %c0_16 = arith.constant 0 : index
    %c0_17 = arith.constant 0 : index
    %c0_18 = arith.constant 0 : index
    %31 = vector.load %arg6[%c0_16, %c0_17, %c0_18] : memref<1x1x384xf32, #tpu.memory_space<vmem>>, vector<1x1x384xf32>
    %32 = vector.shape_cast %31 : vector<1x1x384xf32> to vector<1x384xf32>
    %33 = vector.broadcast %32 : vector<1x384xf32> to vector<32x384xf32>
    %34 = arith.addf %30, %33 : vector<32x384xf32>
    %35 = vector.extract_strided_slice %34 {offsets = [0, 0], sizes = [32, 128], strides = [1, 1]} : vector<32x384xf32> to vector<32x128xf32>
    %36 = vector.extract_strided_slice %34 {offsets = [0, 128], sizes = [32, 128], strides = [1, 1]} : vector<32x384xf32> to vector<32x128xf32>
    %37 = vector.extract_strided_slice %34 {offsets = [0, 256], sizes = [32, 128], strides = [1, 1]} : vector<32x384xf32> to vector<32x128xf32>
    %c0_19 = arith.constant 0 : index
    %c0_20 = arith.constant 0 : index
    %38 = vector.load %arg7[%c0_19, %c0_20] : memref<32x128xf32, #tpu.memory_space<vmem>>, vector<32x128xf32>
    %c0_21 = arith.constant 0 : index
    %c0_22 = arith.constant 0 : index
    %39 = vector.load %arg8[%c0_21, %c0_22] : memref<32x128xf32, #tpu.memory_space<vmem>>, vector<32x128xf32>
    %40 = arith.mulf %35, %38 : vector<32x128xf32>
    %c64_i32 = arith.constant 64 : i32
    %41 = tpu.dynamic_rotate %35 by %c64_i32 dim 1 : vector<32x128xf32>, i32 -> vector<32x128xf32>
    %42 = arith.mulf %41, %39 : vector<32x128xf32>
    %43 = arith.addf %40, %42 : vector<32x128xf32>
    %44 = arith.mulf %36, %38 : vector<32x128xf32>
    %c64_i32_23 = arith.constant 64 : i32
    %45 = tpu.dynamic_rotate %36 by %c64_i32_23 dim 1 : vector<32x128xf32>, i32 -> vector<32x128xf32>
    %46 = arith.mulf %45, %39 : vector<32x128xf32>
    %47 = arith.addf %44, %46 : vector<32x128xf32>
    %c0_24 = arith.constant 0 : index
    %c0_25 = arith.constant 0 : index
    %c0_26 = arith.constant 0 : index
    %48 = vector.load %arg9[%c0_24, %c0_25, %c0_26] : memref<1x128x128xf32, #tpu.memory_space<vmem>>, vector<1x128x128xf32>
    %49 = vector.shape_cast %48 : vector<1x128x128xf32> to vector<128x128xf32>
    %c0_27 = arith.constant 0 : index
    %c0_28 = arith.constant 0 : index
    %c0_29 = arith.constant 0 : index
    %50 = vector.load %arg10[%c0_27, %c0_28, %c0_29] : memref<1x1x128xf32, #tpu.memory_space<vmem>>, vector<1x1x128xf32>
    %51 = vector.shape_cast %50 : vector<1x1x128xf32> to vector<1x128xf32>
    %52 = vector.extract_strided_slice %3 {offsets = [0, 0], sizes = [16, 128], strides = [1, 1]} : vector<32x128xf32> to vector<16x128xf32>
    %53 = vector.extract_strided_slice %43 {offsets = [0, 0], sizes = [16, 128], strides = [1, 1]} : vector<32x128xf32> to vector<16x128xf32>
    %54 = vector.extract_strided_slice %47 {offsets = [0, 0], sizes = [16, 128], strides = [1, 1]} : vector<32x128xf32> to vector<16x128xf32>
    %55 = vector.extract_strided_slice %37 {offsets = [0, 0], sizes = [16, 128], strides = [1, 1]} : vector<32x128xf32> to vector<16x128xf32>
    %56 = vector.broadcast %51 : vector<1x128xf32> to vector<16x128xf32>
    %57 = arith.addf %52, %56 : vector<16x128xf32>
    %58 = vector.extract_strided_slice %53 {offsets = [0, 0], sizes = [16, 16], strides = [1, 1]} : vector<16x128xf32> to vector<16x16xf32>
    %59 = vector.extract_strided_slice %54 {offsets = [0, 0], sizes = [16, 16], strides = [1, 1]} : vector<16x128xf32> to vector<16x16xf32>
    %60 = tpu.transpose %59, [1, 0] : vector<16x16xf32> -> vector<16x16xf32>
    %cst_30 = arith.constant dense<0.000000e+00> : vector<16x16xf32>
    %61 = tpu.matmul %58, %60, %cst_30 {dimension_numbers = #tpu.dot_dimension_numbers<[1], [0], [0], [1], [0, 0, 1, 1], [], []>} : vector<16x16xf32>, vector<16x16xf32>, vector<16x16xf32> -> vector<16x16xf32>
    %62 = vector.extract_strided_slice %53 {offsets = [0, 64], sizes = [16, 16], strides = [1, 1]} : vector<16x128xf32> to vector<16x16xf32>
    %63 = vector.extract_strided_slice %54 {offsets = [0, 64], sizes = [16, 16], strides = [1, 1]} : vector<16x128xf32> to vector<16x16xf32>
    %64 = tpu.transpose %63, [1, 0] : vector<16x16xf32> -> vector<16x16xf32>
    %cst_31 = arith.constant dense<0.000000e+00> : vector<16x16xf32>
    %65 = tpu.matmul %62, %64, %cst_31 {dimension_numbers = #tpu.dot_dimension_numbers<[1], [0], [0], [1], [0, 0, 1, 1], [], []>} : vector<16x16xf32>, vector<16x16xf32>, vector<16x16xf32> -> vector<16x16xf32>
    %66 = arith.addf %61, %65 : vector<16x16xf32>
    %cst_32 = arith.constant dense<0xFF800000> : vector<16xf32>
    %67 = vector.multi_reduction <maximumf>, %66, %cst_32 [1] : vector<16x16xf32> to vector<16xf32>
    %68 = vector.shape_cast %67 : vector<16xf32> to vector<16x1xf32>
    %69 = vector.broadcast %68 : vector<16x1xf32> to vector<16x16xf32>
    %70 = arith.subf %66, %69 : vector<16x16xf32>
    %71 = math.exp %70 : vector<16x16xf32>
    %cst_33 = arith.constant dense<0.000000e+00> : vector<16xf32>
    %72 = vector.multi_reduction <add>, %71, %cst_33 [1] : vector<16x16xf32> to vector<16xf32>
    %73 = vector.shape_cast %72 : vector<16xf32> to vector<16x1xf32>
    %74 = tpu.reciprocal %73 {approx = true} : vector<16x1xf32> -> vector<16x1xf32>
    %75 = vector.broadcast %74 : vector<16x1xf32> to vector<16x16xf32>
    %76 = arith.mulf %71, %75 : vector<16x16xf32>
    %77 = vector.extract_strided_slice %55 {offsets = [0, 0], sizes = [16, 32], strides = [1, 1]} : vector<16x128xf32> to vector<16x32xf32>
    %cst_34 = arith.constant dense<0.000000e+00> : vector<16x32xf32>
    %78 = tpu.matmul %76, %77, %cst_34 {dimension_numbers = #tpu.dot_dimension_numbers<[1], [0], [0], [1], [0, 0, 1, 1], [], []>} : vector<16x16xf32>, vector<16x32xf32>, vector<16x32xf32> -> vector<16x32xf32>
    %79 = vector.extract_strided_slice %49 {offsets = [0, 0], sizes = [32, 128], strides = [1, 1]} : vector<128x128xf32> to vector<32x128xf32>
    %cst_35 = arith.constant dense<0.000000e+00> : vector<16x128xf32>
    %80 = tpu.matmul %78, %79, %cst_35 {dimension_numbers = #tpu.dot_dimension_numbers<[1], [0], [0], [1], [0, 0, 1, 1], [], []>} : vector<16x32xf32>, vector<32x128xf32>, vector<16x128xf32> -> vector<16x128xf32>
    %81 = arith.addf %57, %80 : vector<16x128xf32>
    %82 = vector.extract_strided_slice %53 {offsets = [0, 16], sizes = [16, 16], strides = [1, 1]} : vector<16x128xf32> to vector<16x16xf32>
    %83 = vector.extract_strided_slice %54 {offsets = [0, 16], sizes = [16, 16], strides = [1, 1]} : vector<16x128xf32> to vector<16x16xf32>
    %84 = tpu.transpose %83, [1, 0] : vector<16x16xf32> -> vector<16x16xf32>
    %cst_36 = arith.constant dense<0.000000e+00> : vector<16x16xf32>
    %85 = tpu.matmul %82, %84, %cst_36 {dimension_numbers = #tpu.dot_dimension_numbers<[1], [0], [0], [1], [0, 0, 1, 1], [], []>} : vector<16x16xf32>, vector<16x16xf32>, vector<16x16xf32> -> vector<16x16xf32>
    %86 = vector.extract_strided_slice %53 {offsets = [0, 80], sizes = [16, 16], strides = [1, 1]} : vector<16x128xf32> to vector<16x16xf32>
    %87 = vector.extract_strided_slice %54 {offsets = [0, 80], sizes = [16, 16], strides = [1, 1]} : vector<16x128xf32> to vector<16x16xf32>
    %88 = tpu.transpose %87, [1, 0] : vector<16x16xf32> -> vector<16x16xf32>
    %cst_37 = arith.constant dense<0.000000e+00> : vector<16x16xf32>
    %89 = tpu.matmul %86, %88, %cst_37 {dimension_numbers = #tpu.dot_dimension_numbers<[1], [0], [0], [1], [0, 0, 1, 1], [], []>} : vector<16x16xf32>, vector<16x16xf32>, vector<16x16xf32> -> vector<16x16xf32>
    %90 = arith.addf %85, %89 : vector<16x16xf32>
    %cst_38 = arith.constant dense<0xFF800000> : vector<16xf32>
    %91 = vector.multi_reduction <maximumf>, %90, %cst_38 [1] : vector<16x16xf32> to vector<16xf32>
    %92 = vector.shape_cast %91 : vector<16xf32> to vector<16x1xf32>
    %93 = vector.broadcast %92 : vector<16x1xf32> to vector<16x16xf32>
    %94 = arith.subf %90, %93 : vector<16x16xf32>
    %95 = math.exp %94 : vector<16x16xf32>
    %cst_39 = arith.constant dense<0.000000e+00> : vector<16xf32>
    %96 = vector.multi_reduction <add>, %95, %cst_39 [1] : vector<16x16xf32> to vector<16xf32>
    %97 = vector.shape_cast %96 : vector<16xf32> to vector<16x1xf32>
    %98 = tpu.reciprocal %97 {approx = true} : vector<16x1xf32> -> vector<16x1xf32>
    %99 = vector.broadcast %98 : vector<16x1xf32> to vector<16x16xf32>
    %100 = arith.mulf %95, %99 : vector<16x16xf32>
    %101 = vector.extract_strided_slice %55 {offsets = [0, 32], sizes = [16, 32], strides = [1, 1]} : vector<16x128xf32> to vector<16x32xf32>
    %cst_40 = arith.constant dense<0.000000e+00> : vector<16x32xf32>
    %102 = tpu.matmul %100, %101, %cst_40 {dimension_numbers = #tpu.dot_dimension_numbers<[1], [0], [0], [1], [0, 0, 1, 1], [], []>} : vector<16x16xf32>, vector<16x32xf32>, vector<16x32xf32> -> vector<16x32xf32>
    %103 = vector.extract_strided_slice %49 {offsets = [32, 0], sizes = [32, 128], strides = [1, 1]} : vector<128x128xf32> to vector<32x128xf32>
    %cst_41 = arith.constant dense<0.000000e+00> : vector<16x128xf32>
    %104 = tpu.matmul %102, %103, %cst_41 {dimension_numbers = #tpu.dot_dimension_numbers<[1], [0], [0], [1], [0, 0, 1, 1], [], []>} : vector<16x32xf32>, vector<32x128xf32>, vector<16x128xf32> -> vector<16x128xf32>
    %105 = arith.addf %81, %104 : vector<16x128xf32>
    %106 = vector.extract_strided_slice %53 {offsets = [0, 32], sizes = [16, 16], strides = [1, 1]} : vector<16x128xf32> to vector<16x16xf32>
    %107 = vector.extract_strided_slice %54 {offsets = [0, 32], sizes = [16, 16], strides = [1, 1]} : vector<16x128xf32> to vector<16x16xf32>
    %108 = tpu.transpose %107, [1, 0] : vector<16x16xf32> -> vector<16x16xf32>
    %cst_42 = arith.constant dense<0.000000e+00> : vector<16x16xf32>
    %109 = tpu.matmul %106, %108, %cst_42 {dimension_numbers = #tpu.dot_dimension_numbers<[1], [0], [0], [1], [0, 0, 1, 1], [], []>} : vector<16x16xf32>, vector<16x16xf32>, vector<16x16xf32> -> vector<16x16xf32>
    %110 = vector.extract_strided_slice %53 {offsets = [0, 96], sizes = [16, 16], strides = [1, 1]} : vector<16x128xf32> to vector<16x16xf32>
    %111 = vector.extract_strided_slice %54 {offsets = [0, 96], sizes = [16, 16], strides = [1, 1]} : vector<16x128xf32> to vector<16x16xf32>
    %112 = tpu.transpose %111, [1, 0] : vector<16x16xf32> -> vector<16x16xf32>
    %cst_43 = arith.constant dense<0.000000e+00> : vector<16x16xf32>
    %113 = tpu.matmul %110, %112, %cst_43 {dimension_numbers = #tpu.dot_dimension_numbers<[1], [0], [0], [1], [0, 0, 1, 1], [], []>} : vector<16x16xf32>, vector<16x16xf32>, vector<16x16xf32> -> vector<16x16xf32>
    %114 = arith.addf %109, %113 : vector<16x16xf32>
    %cst_44 = arith.constant dense<0xFF800000> : vector<16xf32>
    %115 = vector.multi_reduction <maximumf>, %114, %cst_44 [1] : vector<16x16xf32> to vector<16xf32>
    %116 = vector.shape_cast %115 : vector<16xf32> to vector<16x1xf32>
    %117 = vector.broadcast %116 : vector<16x1xf32> to vector<16x16xf32>
    %118 = arith.subf %114, %117 : vector<16x16xf32>
    %119 = math.exp %118 : vector<16x16xf32>
    %cst_45 = arith.constant dense<0.000000e+00> : vector<16xf32>
    %120 = vector.multi_reduction <add>, %119, %cst_45 [1] : vector<16x16xf32> to vector<16xf32>
    %121 = vector.shape_cast %120 : vector<16xf32> to vector<16x1xf32>
    %122 = tpu.reciprocal %121 {approx = true} : vector<16x1xf32> -> vector<16x1xf32>
    %123 = vector.broadcast %122 : vector<16x1xf32> to vector<16x16xf32>
    %124 = arith.mulf %119, %123 : vector<16x16xf32>
    %125 = vector.extract_strided_slice %55 {offsets = [0, 64], sizes = [16, 32], strides = [1, 1]} : vector<16x128xf32> to vector<16x32xf32>
    %cst_46 = arith.constant dense<0.000000e+00> : vector<16x32xf32>
    %126 = tpu.matmul %124, %125, %cst_46 {dimension_numbers = #tpu.dot_dimension_numbers<[1], [0], [0], [1], [0, 0, 1, 1], [], []>} : vector<16x16xf32>, vector<16x32xf32>, vector<16x32xf32> -> vector<16x32xf32>
    %127 = vector.extract_strided_slice %49 {offsets = [64, 0], sizes = [32, 128], strides = [1, 1]} : vector<128x128xf32> to vector<32x128xf32>
    %cst_47 = arith.constant dense<0.000000e+00> : vector<16x128xf32>
    %128 = tpu.matmul %126, %127, %cst_47 {dimension_numbers = #tpu.dot_dimension_numbers<[1], [0], [0], [1], [0, 0, 1, 1], [], []>} : vector<16x32xf32>, vector<32x128xf32>, vector<16x128xf32> -> vector<16x128xf32>
    %129 = arith.addf %105, %128 : vector<16x128xf32>
    %130 = vector.extract_strided_slice %53 {offsets = [0, 48], sizes = [16, 16], strides = [1, 1]} : vector<16x128xf32> to vector<16x16xf32>
    %131 = vector.extract_strided_slice %54 {offsets = [0, 48], sizes = [16, 16], strides = [1, 1]} : vector<16x128xf32> to vector<16x16xf32>
    %132 = tpu.transpose %131, [1, 0] : vector<16x16xf32> -> vector<16x16xf32>
    %cst_48 = arith.constant dense<0.000000e+00> : vector<16x16xf32>
    %133 = tpu.matmul %130, %132, %cst_48 {dimension_numbers = #tpu.dot_dimension_numbers<[1], [0], [0], [1], [0, 0, 1, 1], [], []>} : vector<16x16xf32>, vector<16x16xf32>, vector<16x16xf32> -> vector<16x16xf32>
    %134 = vector.extract_strided_slice %53 {offsets = [0, 112], sizes = [16, 16], strides = [1, 1]} : vector<16x128xf32> to vector<16x16xf32>
    %135 = vector.extract_strided_slice %54 {offsets = [0, 112], sizes = [16, 16], strides = [1, 1]} : vector<16x128xf32> to vector<16x16xf32>
    %136 = tpu.transpose %135, [1, 0] : vector<16x16xf32> -> vector<16x16xf32>
    %cst_49 = arith.constant dense<0.000000e+00> : vector<16x16xf32>
    %137 = tpu.matmul %134, %136, %cst_49 {dimension_numbers = #tpu.dot_dimension_numbers<[1], [0], [0], [1], [0, 0, 1, 1], [], []>} : vector<16x16xf32>, vector<16x16xf32>, vector<16x16xf32> -> vector<16x16xf32>
    %138 = arith.addf %133, %137 : vector<16x16xf32>
    %cst_50 = arith.constant dense<0xFF800000> : vector<16xf32>
    %139 = vector.multi_reduction <maximumf>, %138, %cst_50 [1] : vector<16x16xf32> to vector<16xf32>
    %140 = vector.shape_cast %139 : vector<16xf32> to vector<16x1xf32>
    %141 = vector.broadcast %140 : vector<16x1xf32> to vector<16x16xf32>
    %142 = arith.subf %138, %141 : vector<16x16xf32>
    %143 = math.exp %142 : vector<16x16xf32>
    %cst_51 = arith.constant dense<0.000000e+00> : vector<16xf32>
    %144 = vector.multi_reduction <add>, %143, %cst_51 [1] : vector<16x16xf32> to vector<16xf32>
    %145 = vector.shape_cast %144 : vector<16xf32> to vector<16x1xf32>
    %146 = tpu.reciprocal %145 {approx = true} : vector<16x1xf32> -> vector<16x1xf32>
    %147 = vector.broadcast %146 : vector<16x1xf32> to vector<16x16xf32>
    %148 = arith.mulf %143, %147 : vector<16x16xf32>
    %149 = vector.extract_strided_slice %55 {offsets = [0, 96], sizes = [16, 32], strides = [1, 1]} : vector<16x128xf32> to vector<16x32xf32>
    %cst_52 = arith.constant dense<0.000000e+00> : vector<16x32xf32>
    %150 = tpu.matmul %148, %149, %cst_52 {dimension_numbers = #tpu.dot_dimension_numbers<[1], [0], [0], [1], [0, 0, 1, 1], [], []>} : vector<16x16xf32>, vector<16x32xf32>, vector<16x32xf32> -> vector<16x32xf32>
    %151 = vector.extract_strided_slice %49 {offsets = [96, 0], sizes = [32, 128], strides = [1, 1]} : vector<128x128xf32> to vector<32x128xf32>
    %cst_53 = arith.constant dense<0.000000e+00> : vector<16x128xf32>
    %152 = tpu.matmul %150, %151, %cst_53 {dimension_numbers = #tpu.dot_dimension_numbers<[1], [0], [0], [1], [0, 0, 1, 1], [], []>} : vector<16x32xf32>, vector<32x128xf32>, vector<16x128xf32> -> vector<16x128xf32>
    %153 = arith.addf %129, %152 : vector<16x128xf32>
    %154 = vector.extract_strided_slice %3 {offsets = [16, 0], sizes = [16, 128], strides = [1, 1]} : vector<32x128xf32> to vector<16x128xf32>
    %155 = vector.extract_strided_slice %43 {offsets = [16, 0], sizes = [16, 128], strides = [1, 1]} : vector<32x128xf32> to vector<16x128xf32>
    %156 = vector.extract_strided_slice %47 {offsets = [16, 0], sizes = [16, 128], strides = [1, 1]} : vector<32x128xf32> to vector<16x128xf32>
    %157 = vector.extract_strided_slice %37 {offsets = [16, 0], sizes = [16, 128], strides = [1, 1]} : vector<32x128xf32> to vector<16x128xf32>
    %158 = vector.broadcast %51 : vector<1x128xf32> to vector<16x128xf32>
    %159 = arith.addf %154, %158 : vector<16x128xf32>
    %160 = vector.extract_strided_slice %155 {offsets = [0, 0], sizes = [16, 16], strides = [1, 1]} : vector<16x128xf32> to vector<16x16xf32>
    %161 = vector.extract_strided_slice %156 {offsets = [0, 0], sizes = [16, 16], strides = [1, 1]} : vector<16x128xf32> to vector<16x16xf32>
    %162 = tpu.transpose %161, [1, 0] : vector<16x16xf32> -> vector<16x16xf32>
    %cst_54 = arith.constant dense<0.000000e+00> : vector<16x16xf32>
    %163 = tpu.matmul %160, %162, %cst_54 {dimension_numbers = #tpu.dot_dimension_numbers<[1], [0], [0], [1], [0, 0, 1, 1], [], []>} : vector<16x16xf32>, vector<16x16xf32>, vector<16x16xf32> -> vector<16x16xf32>
    %164 = vector.extract_strided_slice %155 {offsets = [0, 64], sizes = [16, 16], strides = [1, 1]} : vector<16x128xf32> to vector<16x16xf32>
    %165 = vector.extract_strided_slice %156 {offsets = [0, 64], sizes = [16, 16], strides = [1, 1]} : vector<16x128xf32> to vector<16x16xf32>
    %166 = tpu.transpose %165, [1, 0] : vector<16x16xf32> -> vector<16x16xf32>
    %cst_55 = arith.constant dense<0.000000e+00> : vector<16x16xf32>
    %167 = tpu.matmul %164, %166, %cst_55 {dimension_numbers = #tpu.dot_dimension_numbers<[1], [0], [0], [1], [0, 0, 1, 1], [], []>} : vector<16x16xf32>, vector<16x16xf32>, vector<16x16xf32> -> vector<16x16xf32>
    %168 = arith.addf %163, %167 : vector<16x16xf32>
    %cst_56 = arith.constant dense<0xFF800000> : vector<16xf32>
    %169 = vector.multi_reduction <maximumf>, %168, %cst_56 [1] : vector<16x16xf32> to vector<16xf32>
    %170 = vector.shape_cast %169 : vector<16xf32> to vector<16x1xf32>
    %171 = vector.broadcast %170 : vector<16x1xf32> to vector<16x16xf32>
    %172 = arith.subf %168, %171 : vector<16x16xf32>
    %173 = math.exp %172 : vector<16x16xf32>
    %cst_57 = arith.constant dense<0.000000e+00> : vector<16xf32>
    %174 = vector.multi_reduction <add>, %173, %cst_57 [1] : vector<16x16xf32> to vector<16xf32>
    %175 = vector.shape_cast %174 : vector<16xf32> to vector<16x1xf32>
    %176 = tpu.reciprocal %175 {approx = true} : vector<16x1xf32> -> vector<16x1xf32>
    %177 = vector.broadcast %176 : vector<16x1xf32> to vector<16x16xf32>
    %178 = arith.mulf %173, %177 : vector<16x16xf32>
    %179 = vector.extract_strided_slice %157 {offsets = [0, 0], sizes = [16, 32], strides = [1, 1]} : vector<16x128xf32> to vector<16x32xf32>
    %cst_58 = arith.constant dense<0.000000e+00> : vector<16x32xf32>
    %180 = tpu.matmul %178, %179, %cst_58 {dimension_numbers = #tpu.dot_dimension_numbers<[1], [0], [0], [1], [0, 0, 1, 1], [], []>} : vector<16x16xf32>, vector<16x32xf32>, vector<16x32xf32> -> vector<16x32xf32>
    %181 = vector.extract_strided_slice %49 {offsets = [0, 0], sizes = [32, 128], strides = [1, 1]} : vector<128x128xf32> to vector<32x128xf32>
    %cst_59 = arith.constant dense<0.000000e+00> : vector<16x128xf32>
    %182 = tpu.matmul %180, %181, %cst_59 {dimension_numbers = #tpu.dot_dimension_numbers<[1], [0], [0], [1], [0, 0, 1, 1], [], []>} : vector<16x32xf32>, vector<32x128xf32>, vector<16x128xf32> -> vector<16x128xf32>
    %183 = arith.addf %159, %182 : vector<16x128xf32>
    %184 = vector.extract_strided_slice %155 {offsets = [0, 16], sizes = [16, 16], strides = [1, 1]} : vector<16x128xf32> to vector<16x16xf32>
    %185 = vector.extract_strided_slice %156 {offsets = [0, 16], sizes = [16, 16], strides = [1, 1]} : vector<16x128xf32> to vector<16x16xf32>
    %186 = tpu.transpose %185, [1, 0] : vector<16x16xf32> -> vector<16x16xf32>
    %cst_60 = arith.constant dense<0.000000e+00> : vector<16x16xf32>
    %187 = tpu.matmul %184, %186, %cst_60 {dimension_numbers = #tpu.dot_dimension_numbers<[1], [0], [0], [1], [0, 0, 1, 1], [], []>} : vector<16x16xf32>, vector<16x16xf32>, vector<16x16xf32> -> vector<16x16xf32>
    %188 = vector.extract_strided_slice %155 {offsets = [0, 80], sizes = [16, 16], strides = [1, 1]} : vector<16x128xf32> to vector<16x16xf32>
    %189 = vector.extract_strided_slice %156 {offsets = [0, 80], sizes = [16, 16], strides = [1, 1]} : vector<16x128xf32> to vector<16x16xf32>
    %190 = tpu.transpose %189, [1, 0] : vector<16x16xf32> -> vector<16x16xf32>
    %cst_61 = arith.constant dense<0.000000e+00> : vector<16x16xf32>
    %191 = tpu.matmul %188, %190, %cst_61 {dimension_numbers = #tpu.dot_dimension_numbers<[1], [0], [0], [1], [0, 0, 1, 1], [], []>} : vector<16x16xf32>, vector<16x16xf32>, vector<16x16xf32> -> vector<16x16xf32>
    %192 = arith.addf %187, %191 : vector<16x16xf32>
    %cst_62 = arith.constant dense<0xFF800000> : vector<16xf32>
    %193 = vector.multi_reduction <maximumf>, %192, %cst_62 [1] : vector<16x16xf32> to vector<16xf32>
    %194 = vector.shape_cast %193 : vector<16xf32> to vector<16x1xf32>
    %195 = vector.broadcast %194 : vector<16x1xf32> to vector<16x16xf32>
    %196 = arith.subf %192, %195 : vector<16x16xf32>
    %197 = math.exp %196 : vector<16x16xf32>
    %cst_63 = arith.constant dense<0.000000e+00> : vector<16xf32>
    %198 = vector.multi_reduction <add>, %197, %cst_63 [1] : vector<16x16xf32> to vector<16xf32>
    %199 = vector.shape_cast %198 : vector<16xf32> to vector<16x1xf32>
    %200 = tpu.reciprocal %199 {approx = true} : vector<16x1xf32> -> vector<16x1xf32>
    %201 = vector.broadcast %200 : vector<16x1xf32> to vector<16x16xf32>
    %202 = arith.mulf %197, %201 : vector<16x16xf32>
    %203 = vector.extract_strided_slice %157 {offsets = [0, 32], sizes = [16, 32], strides = [1, 1]} : vector<16x128xf32> to vector<16x32xf32>
    %cst_64 = arith.constant dense<0.000000e+00> : vector<16x32xf32>
    %204 = tpu.matmul %202, %203, %cst_64 {dimension_numbers = #tpu.dot_dimension_numbers<[1], [0], [0], [1], [0, 0, 1, 1], [], []>} : vector<16x16xf32>, vector<16x32xf32>, vector<16x32xf32> -> vector<16x32xf32>
    %205 = vector.extract_strided_slice %49 {offsets = [32, 0], sizes = [32, 128], strides = [1, 1]} : vector<128x128xf32> to vector<32x128xf32>
    %cst_65 = arith.constant dense<0.000000e+00> : vector<16x128xf32>
    %206 = tpu.matmul %204, %205, %cst_65 {dimension_numbers = #tpu.dot_dimension_numbers<[1], [0], [0], [1], [0, 0, 1, 1], [], []>} : vector<16x32xf32>, vector<32x128xf32>, vector<16x128xf32> -> vector<16x128xf32>
    %207 = arith.addf %183, %206 : vector<16x128xf32>
    %208 = vector.extract_strided_slice %155 {offsets = [0, 32], sizes = [16, 16], strides = [1, 1]} : vector<16x128xf32> to vector<16x16xf32>
    %209 = vector.extract_strided_slice %156 {offsets = [0, 32], sizes = [16, 16], strides = [1, 1]} : vector<16x128xf32> to vector<16x16xf32>
    %210 = tpu.transpose %209, [1, 0] : vector<16x16xf32> -> vector<16x16xf32>
    %cst_66 = arith.constant dense<0.000000e+00> : vector<16x16xf32>
    %211 = tpu.matmul %208, %210, %cst_66 {dimension_numbers = #tpu.dot_dimension_numbers<[1], [0], [0], [1], [0, 0, 1, 1], [], []>} : vector<16x16xf32>, vector<16x16xf32>, vector<16x16xf32> -> vector<16x16xf32>
    %212 = vector.extract_strided_slice %155 {offsets = [0, 96], sizes = [16, 16], strides = [1, 1]} : vector<16x128xf32> to vector<16x16xf32>
    %213 = vector.extract_strided_slice %156 {offsets = [0, 96], sizes = [16, 16], strides = [1, 1]} : vector<16x128xf32> to vector<16x16xf32>
    %214 = tpu.transpose %213, [1, 0] : vector<16x16xf32> -> vector<16x16xf32>
    %cst_67 = arith.constant dense<0.000000e+00> : vector<16x16xf32>
    %215 = tpu.matmul %212, %214, %cst_67 {dimension_numbers = #tpu.dot_dimension_numbers<[1], [0], [0], [1], [0, 0, 1, 1], [], []>} : vector<16x16xf32>, vector<16x16xf32>, vector<16x16xf32> -> vector<16x16xf32>
    %216 = arith.addf %211, %215 : vector<16x16xf32>
    %cst_68 = arith.constant dense<0xFF800000> : vector<16xf32>
    %217 = vector.multi_reduction <maximumf>, %216, %cst_68 [1] : vector<16x16xf32> to vector<16xf32>
    %218 = vector.shape_cast %217 : vector<16xf32> to vector<16x1xf32>
    %219 = vector.broadcast %218 : vector<16x1xf32> to vector<16x16xf32>
    %220 = arith.subf %216, %219 : vector<16x16xf32>
    %221 = math.exp %220 : vector<16x16xf32>
    %cst_69 = arith.constant dense<0.000000e+00> : vector<16xf32>
    %222 = vector.multi_reduction <add>, %221, %cst_69 [1] : vector<16x16xf32> to vector<16xf32>
    %223 = vector.shape_cast %222 : vector<16xf32> to vector<16x1xf32>
    %224 = tpu.reciprocal %223 {approx = true} : vector<16x1xf32> -> vector<16x1xf32>
    %225 = vector.broadcast %224 : vector<16x1xf32> to vector<16x16xf32>
    %226 = arith.mulf %221, %225 : vector<16x16xf32>
    %227 = vector.extract_strided_slice %157 {offsets = [0, 64], sizes = [16, 32], strides = [1, 1]} : vector<16x128xf32> to vector<16x32xf32>
    %cst_70 = arith.constant dense<0.000000e+00> : vector<16x32xf32>
    %228 = tpu.matmul %226, %227, %cst_70 {dimension_numbers = #tpu.dot_dimension_numbers<[1], [0], [0], [1], [0, 0, 1, 1], [], []>} : vector<16x16xf32>, vector<16x32xf32>, vector<16x32xf32> -> vector<16x32xf32>
    %229 = vector.extract_strided_slice %49 {offsets = [64, 0], sizes = [32, 128], strides = [1, 1]} : vector<128x128xf32> to vector<32x128xf32>
    %cst_71 = arith.constant dense<0.000000e+00> : vector<16x128xf32>
    %230 = tpu.matmul %228, %229, %cst_71 {dimension_numbers = #tpu.dot_dimension_numbers<[1], [0], [0], [1], [0, 0, 1, 1], [], []>} : vector<16x32xf32>, vector<32x128xf32>, vector<16x128xf32> -> vector<16x128xf32>
    %231 = arith.addf %207, %230 : vector<16x128xf32>
    %232 = vector.extract_strided_slice %155 {offsets = [0, 48], sizes = [16, 16], strides = [1, 1]} : vector<16x128xf32> to vector<16x16xf32>
    %233 = vector.extract_strided_slice %156 {offsets = [0, 48], sizes = [16, 16], strides = [1, 1]} : vector<16x128xf32> to vector<16x16xf32>
    %234 = tpu.transpose %233, [1, 0] : vector<16x16xf32> -> vector<16x16xf32>
    %cst_72 = arith.constant dense<0.000000e+00> : vector<16x16xf32>
    %235 = tpu.matmul %232, %234, %cst_72 {dimension_numbers = #tpu.dot_dimension_numbers<[1], [0], [0], [1], [0, 0, 1, 1], [], []>} : vector<16x16xf32>, vector<16x16xf32>, vector<16x16xf32> -> vector<16x16xf32>
    %236 = vector.extract_strided_slice %155 {offsets = [0, 112], sizes = [16, 16], strides = [1, 1]} : vector<16x128xf32> to vector<16x16xf32>
    %237 = vector.extract_strided_slice %156 {offsets = [0, 112], sizes = [16, 16], strides = [1, 1]} : vector<16x128xf32> to vector<16x16xf32>
    %238 = tpu.transpose %237, [1, 0] : vector<16x16xf32> -> vector<16x16xf32>
    %cst_73 = arith.constant dense<0.000000e+00> : vector<16x16xf32>
    %239 = tpu.matmul %236, %238, %cst_73 {dimension_numbers = #tpu.dot_dimension_numbers<[1], [0], [0], [1], [0, 0, 1, 1], [], []>} : vector<16x16xf32>, vector<16x16xf32>, vector<16x16xf32> -> vector<16x16xf32>
    %240 = arith.addf %235, %239 : vector<16x16xf32>
    %cst_74 = arith.constant dense<0xFF800000> : vector<16xf32>
    %241 = vector.multi_reduction <maximumf>, %240, %cst_74 [1] : vector<16x16xf32> to vector<16xf32>
    %242 = vector.shape_cast %241 : vector<16xf32> to vector<16x1xf32>
    %243 = vector.broadcast %242 : vector<16x1xf32> to vector<16x16xf32>
    %244 = arith.subf %240, %243 : vector<16x16xf32>
    %245 = math.exp %244 : vector<16x16xf32>
    %cst_75 = arith.constant dense<0.000000e+00> : vector<16xf32>
    %246 = vector.multi_reduction <add>, %245, %cst_75 [1] : vector<16x16xf32> to vector<16xf32>
    %247 = vector.shape_cast %246 : vector<16xf32> to vector<16x1xf32>
    %248 = tpu.reciprocal %247 {approx = true} : vector<16x1xf32> -> vector<16x1xf32>
    %249 = vector.broadcast %248 : vector<16x1xf32> to vector<16x16xf32>
    %250 = arith.mulf %245, %249 : vector<16x16xf32>
    %251 = vector.extract_strided_slice %157 {offsets = [0, 96], sizes = [16, 32], strides = [1, 1]} : vector<16x128xf32> to vector<16x32xf32>
    %cst_76 = arith.constant dense<0.000000e+00> : vector<16x32xf32>
    %252 = tpu.matmul %250, %251, %cst_76 {dimension_numbers = #tpu.dot_dimension_numbers<[1], [0], [0], [1], [0, 0, 1, 1], [], []>} : vector<16x16xf32>, vector<16x32xf32>, vector<16x32xf32> -> vector<16x32xf32>
    %253 = vector.extract_strided_slice %49 {offsets = [96, 0], sizes = [32, 128], strides = [1, 1]} : vector<128x128xf32> to vector<32x128xf32>
    %cst_77 = arith.constant dense<0.000000e+00> : vector<16x128xf32>
    %254 = tpu.matmul %252, %253, %cst_77 {dimension_numbers = #tpu.dot_dimension_numbers<[1], [0], [0], [1], [0, 0, 1, 1], [], []>} : vector<16x32xf32>, vector<32x128xf32>, vector<16x128xf32> -> vector<16x128xf32>
    %255 = arith.addf %231, %254 : vector<16x128xf32>
    %256 = tpu.concatenate %153, %255 in 0 : vector<16x128xf32>, vector<16x128xf32> -> vector<32x128xf32>
    %c0_78 = arith.constant 0 : index
    %c0_79 = arith.constant 0 : index
    %c0_80 = arith.constant 0 : index
    %257 = vector.load %arg11[%c0_78, %c0_79, %c0_80] : memref<1x1x128xf32, #tpu.memory_space<vmem>>, vector<1x1x128xf32>
    %258 = vector.shape_cast %257 : vector<1x1x128xf32> to vector<1x128xf32>
    %c0_81 = arith.constant 0 : index
    %c0_82 = arith.constant 0 : index
    %c0_83 = arith.constant 0 : index
    %259 = vector.load %arg12[%c0_81, %c0_82, %c0_83] : memref<1x1x128xf32, #tpu.memory_space<vmem>>, vector<1x1x128xf32>
    %260 = vector.shape_cast %259 : vector<1x1x128xf32> to vector<1x128xf32>
    %cst_84 = arith.constant dense<0.000000e+00> : vector<32xf32>
    %261 = vector.multi_reduction <add>, %256, %cst_84 [1] : vector<32x128xf32> to vector<32xf32>
    %262 = vector.shape_cast %261 : vector<32xf32> to vector<32x1xf32>
    %cst_85 = arith.constant 1.280000e+02 : f32
    %263 = vector.broadcast %cst_85 : f32 to vector<32x1xf32>
    %264 = arith.divf %262, %263 : vector<32x1xf32>
    %265 = vector.broadcast %264 : vector<32x1xf32> to vector<32x128xf32>
    %266 = arith.subf %256, %265 : vector<32x128xf32>
    %267 = arith.mulf %266, %266 : vector<32x128xf32>
    %cst_86 = arith.constant dense<0.000000e+00> : vector<32xf32>
    %268 = vector.multi_reduction <add>, %267, %cst_86 [1] : vector<32x128xf32> to vector<32xf32>
    %269 = vector.shape_cast %268 : vector<32xf32> to vector<32x1xf32>
    %cst_87 = arith.constant 1.280000e+02 : f32
    %270 = vector.broadcast %cst_87 : f32 to vector<32x1xf32>
    %271 = arith.divf %269, %270 : vector<32x1xf32>
    %cst_88 = arith.constant 9.99999974E-6 : f32
    %272 = vector.broadcast %cst_88 : f32 to vector<32x1xf32>
    %273 = arith.addf %271, %272 : vector<32x1xf32>
    %274 = math.rsqrt %273 : vector<32x1xf32>
    %275 = vector.broadcast %274 : vector<32x1xf32> to vector<32x128xf32>
    %276 = arith.mulf %266, %275 : vector<32x128xf32>
    %277 = vector.broadcast %258 : vector<1x128xf32> to vector<32x128xf32>
    %278 = arith.mulf %276, %277 : vector<32x128xf32>
    %279 = vector.broadcast %260 : vector<1x128xf32> to vector<32x128xf32>
    %280 = arith.addf %278, %279 : vector<32x128xf32>
    %c0_89 = arith.constant 0 : index
    %c0_90 = arith.constant 0 : index
    %c0_91 = arith.constant 0 : index
    %281 = vector.load %arg13[%c0_89, %c0_90, %c0_91] : memref<1x128x512xf32, #tpu.memory_space<vmem>>, vector<1x128x512xf32>
    %282 = vector.shape_cast %281 : vector<1x128x512xf32> to vector<128x512xf32>
    %cst_92 = arith.constant dense<0.000000e+00> : vector<32x512xf32>
    %283 = tpu.matmul %280, %282, %cst_92 {dimension_numbers = #tpu.dot_dimension_numbers<[1], [0], [0], [1], [0, 0, 1, 1], [], []>} : vector<32x128xf32>, vector<128x512xf32>, vector<32x512xf32> -> vector<32x512xf32>
    %c0_93 = arith.constant 0 : index
    %c0_94 = arith.constant 0 : index
    %c0_95 = arith.constant 0 : index
    %284 = vector.load %arg14[%c0_93, %c0_94, %c0_95] : memref<1x1x512xf32, #tpu.memory_space<vmem>>, vector<1x1x512xf32>
    %285 = vector.shape_cast %284 : vector<1x1x512xf32> to vector<1x512xf32>
    %286 = vector.broadcast %285 : vector<1x512xf32> to vector<32x512xf32>
    %287 = arith.addf %283, %286 : vector<32x512xf32>
    %cst_96 = arith.constant 5.000000e-01 : f32
    %288 = vector.broadcast %cst_96 : f32 to vector<32x512xf32>
    %289 = arith.mulf %288, %287 : vector<32x512xf32>
    %cst_97 = arith.constant 0.707106769 : f32
    %290 = vector.broadcast %cst_97 : f32 to vector<32x512xf32>
    %291 = arith.mulf %287, %290 : vector<32x512xf32>
    %292 = math.erf %291 : vector<32x512xf32>
    %cst_98 = arith.constant 1.000000e+00 : f32
    %293 = vector.broadcast %cst_98 : f32 to vector<32x512xf32>
    %294 = arith.addf %293, %292 : vector<32x512xf32>
    %295 = arith.mulf %289, %294 : vector<32x512xf32>
    %c0_99 = arith.constant 0 : index
    %c0_100 = arith.constant 0 : index
    %c0_101 = arith.constant 0 : index
    %296 = vector.load %arg15[%c0_99, %c0_100, %c0_101] : memref<1x512x128xf32, #tpu.memory_space<vmem>>, vector<1x512x128xf32>
    %297 = vector.shape_cast %296 : vector<1x512x128xf32> to vector<512x128xf32>
    %cst_102 = arith.constant dense<0.000000e+00> : vector<32x128xf32>
    %298 = tpu.matmul %295, %297, %cst_102 {dimension_numbers = #tpu.dot_dimension_numbers<[1], [0], [0], [1], [0, 0, 1, 1], [], []>} : vector<32x512xf32>, vector<512x128xf32>, vector<32x128xf32> -> vector<32x128xf32>
    %299 = arith.addf %256, %298 : vector<32x128xf32>
    %c0_103 = arith.constant 0 : index
    %c0_104 = arith.constant 0 : index
    %c0_105 = arith.constant 0 : index
    %300 = vector.load %arg16[%c0_103, %c0_104, %c0_105] : memref<1x1x128xf32, #tpu.memory_space<vmem>>, vector<1x1x128xf32>
    %301 = vector.shape_cast %300 : vector<1x1x128xf32> to vector<1x128xf32>
    %302 = vector.broadcast %301 : vector<1x128xf32> to vector<32x128xf32>
    %303 = arith.addf %299, %302 : vector<32x128xf32>
    %c0_106 = arith.constant 0 : index
    %c0_107 = arith.constant 0 : index
    %304 = vector.load %arg18[%c0_106, %c0_107] : memref<32x128xf32, #tpu.memory_space<vmem>>, vector<32x128xf32>
    tpu.vector_store %arg18[%c0_106, %c0_107], %303 {strides = array<i32>} : memref<32x128xf32, #tpu.memory_space<vmem>>, vector<32x128xf32>,
    %c1_i32 = arith.constant 1 : i32
    %305 = arith.cmpi eq, %arg1, %c1_i32 : i32
    %306 = arith.extui %305 : i1 to i32
    %c0_i32_108 = arith.constant 0 : i32
    %307 = arith.cmpi ne, %306, %c0_i32_108 : i32
    scf.if %307 {
      %c0_109 = arith.constant 0 : index
      %c0_110 = arith.constant 0 : index
      %c0_111 = arith.constant 0 : index
      %308 = vector.load %arg17[%c0_109, %c0_110, %c0_111] : memref<1x32x128xf32, #tpu.memory_space<vmem>>, vector<1x32x128xf32>
      %309 = vector.shape_cast %308 : vector<1x32x128xf32> to vector<32x128xf32>
      %310 = vector.shape_cast %303 : vector<32x128xf32> to vector<1x32x128xf32>
      tpu.vector_store %arg17[%c0_109, %c0_110, %c0_111], %310 {strides = array<i32>} : memref<1x32x128xf32, #tpu.memory_space<vmem>>, vector<1x32x128xf32>,
    } else {
    }
    return
  }
  func.func @transform_0(%arg0: i32, %arg1: i32) -> (i32, i32, i32) {
    %c0_i32 = arith.constant 0 : i32
    %c0_i32_0 = arith.constant 0 : i32
    %c0_i32_1 = arith.constant 0 : i32
    return %arg0, %c0_i32, %c0_i32_0 : i32, i32, i32
  }
  func.func @transform_1(%arg0: i32, %arg1: i32) -> (i32, i32, i32) {
    %c0_i32 = arith.constant 0 : i32
    %c0_i32_0 = arith.constant 0 : i32
    %c0_i32_1 = arith.constant 0 : i32
    return %arg1, %c0_i32, %c0_i32_0 : i32, i32, i32
  }
  func.func @transform_2(%arg0: i32, %arg1: i32) -> (i32, i32, i32) {
    %c0_i32 = arith.constant 0 : i32
    %c0_i32_0 = arith.constant 0 : i32
    %c0_i32_1 = arith.constant 0 : i32
    return %arg1, %c0_i32, %c0_i32_0 : i32, i32, i32
  }
  func.func @transform_3(%arg0: i32, %arg1: i32) -> (i32, i32, i32) {
    %c0_i32 = arith.constant 0 : i32
    %c0_i32_0 = arith.constant 0 : i32
    %c0_i32_1 = arith.constant 0 : i32
    return %arg1, %c0_i32, %c0_i32_0 : i32, i32, i32
  }
  func.func @transform_4(%arg0: i32, %arg1: i32) -> (i32, i32, i32) {
    %c0_i32 = arith.constant 0 : i32
    %c0_i32_0 = arith.constant 0 : i32
    %c0_i32_1 = arith.constant 0 : i32
    return %arg1, %c0_i32, %c0_i32_0 : i32, i32, i32
  }
  func.func @transform_5(%arg0: i32, %arg1: i32) -> (i32, i32) {
    %c0_i32 = arith.constant 0 : i32
    %c0_i32_0 = arith.constant 0 : i32
    %c0_i32_1 = arith.constant 0 : i32
    return %c0_i32, %c0_i32_0 : i32, i32
  }
  func.func @transform_6(%arg0: i32, %arg1: i32) -> (i32, i32) {
    %c0_i32 = arith.constant 0 : i32
    %c0_i32_0 = arith.constant 0 : i32
    %c0_i32_1 = arith.constant 0 : i32
    return %c0_i32, %c0_i32_0 : i32, i32
  }
  func.func @transform_7(%arg0: i32, %arg1: i32) -> (i32, i32, i32) {
    %c0_i32 = arith.constant 0 : i32
    %c0_i32_0 = arith.constant 0 : i32
    %c0_i32_1 = arith.constant 0 : i32
    return %arg1, %c0_i32, %c0_i32_0 : i32, i32, i32
  }
  func.func @transform_8(%arg0: i32, %arg1: i32) -> (i32, i32, i32) {
    %c0_i32 = arith.constant 0 : i32
    %c0_i32_0 = arith.constant 0 : i32
    %c0_i32_1 = arith.constant 0 : i32
    return %arg1, %c0_i32, %c0_i32_0 : i32, i32, i32
  }
  func.func @transform_9(%arg0: i32, %arg1: i32) -> (i32, i32, i32) {
    %c0_i32 = arith.constant 0 : i32
    %c0_i32_0 = arith.constant 0 : i32
    %c0_i32_1 = arith.constant 0 : i32
    return %arg1, %c0_i32, %c0_i32_0 : i32, i32, i32
  }
  func.func @transform_10(%arg0: i32, %arg1: i32) -> (i32, i32, i32) {
    %c0_i32 = arith.constant 0 : i32
    %c0_i32_0 = arith.constant 0 : i32
    %c0_i32_1 = arith.constant 0 : i32
    return %arg1, %c0_i32, %c0_i32_0 : i32, i32, i32
  }
  func.func @transform_11(%arg0: i32, %arg1: i32) -> (i32, i32, i32) {
    %c0_i32 = arith.constant 0 : i32
    %c0_i32_0 = arith.constant 0 : i32
    %c0_i32_1 = arith.constant 0 : i32
    return %arg1, %c0_i32, %c0_i32_0 : i32, i32, i32
  }
  func.func @transform_12(%arg0: i32, %arg1: i32) -> (i32, i32, i32) {
    %c0_i32 = arith.constant 0 : i32
    %c0_i32_0 = arith.constant 0 : i32
    %c0_i32_1 = arith.constant 0 : i32
    return %arg1, %c0_i32, %c0_i32_0 : i32, i32, i32
  }
  func.func @transform_13(%arg0: i32, %arg1: i32) -> (i32, i32, i32) {
    %c0_i32 = arith.constant 0 : i32
    %c0_i32_0 = arith.constant 0 : i32
    %c0_i32_1 = arith.constant 0 : i32
    return %arg1, %c0_i32, %c0_i32_0 : i32, i32, i32
  }
  func.func @transform_14(%arg0: i32, %arg1: i32) -> (i32, i32, i32) {
    %c0_i32 = arith.constant 0 : i32
    %c0_i32_0 = arith.constant 0 : i32
    %c0_i32_1 = arith.constant 0 : i32
    return %arg1, %c0_i32, %c0_i32_0 : i32, i32, i32
  }
  func.func @transform_15(%arg0: i32, %arg1: i32) -> (i32, i32, i32) {
    %c0_i32 = arith.constant 0 : i32
    %c0_i32_0 = arith.constant 0 : i32
    %c0_i32_1 = arith.constant 0 : i32
    return %arg0, %c0_i32, %c0_i32_0 : i32, i32, i32
  }
}

module attributes {stable_mosaic.version = 11 : i64} {
  func.func @_matmul_bias_kernel(%arg0: i32, %arg1: memref<1x32x128xf32, #tpu.memory_space<vmem>>, %arg2: memref<128x256xf32, #tpu.memory_space<vmem>>, %arg3: memref<1x256xf32, #tpu.memory_space<vmem>>, %arg4: memref<1x32x256xf32, #tpu.memory_space<vmem>>) attributes {dimension_semantics = [#tpu.dimension_semantics<parallel>], iteration_bounds = array<i64: 1>, scalar_prefetch = 0 : i64, scratch_operands = 0 : i64, tpu.core_type = #tpu.core_type<tc>, window_params = [{transform_indices = @transform_0, window_bounds = array<i64: 1, 32, 128>}, {pipeline_mode = #tpu.pipeline_mode<synchronous>, transform_indices = @transform_1, window_bounds = array<i64: 128, 256>}, {pipeline_mode = #tpu.pipeline_mode<synchronous>, transform_indices = @transform_2, window_bounds = array<i64: 1, 256>}, {transform_indices = @transform_3, window_bounds = array<i64: 1, 32, 256>}]} {
    %c0 = arith.constant 0 : index
    %c0_0 = arith.constant 0 : index
    %c0_1 = arith.constant 0 : index
    %0 = vector.load %arg1[%c0, %c0_0, %c0_1] : memref<1x32x128xf32, #tpu.memory_space<vmem>>, vector<1x32x128xf32>
    %1 = vector.shape_cast %0 : vector<1x32x128xf32> to vector<32x128xf32>
    %c0_2 = arith.constant 0 : index
    %c0_3 = arith.constant 0 : index
    %2 = vector.load %arg2[%c0_2, %c0_3] : memref<128x256xf32, #tpu.memory_space<vmem>>, vector<128x256xf32>
    %cst = arith.constant dense<0.000000e+00> : vector<32x256xf32>
    %3 = tpu.matmul %1, %2, %cst {dimension_numbers = #tpu.dot_dimension_numbers<[1], [0], [0], [1], [0, 0, 1, 1], [], []>} : vector<32x128xf32>, vector<128x256xf32>, vector<32x256xf32> -> vector<32x256xf32>
    %c0_4 = arith.constant 0 : index
    %c0_5 = arith.constant 0 : index
    %4 = vector.load %arg3[%c0_4, %c0_5] : memref<1x256xf32, #tpu.memory_space<vmem>>, vector<1x256xf32>
    %5 = vector.broadcast %4 : vector<1x256xf32> to vector<32x256xf32>
    %6 = arith.addf %3, %5 : vector<32x256xf32>
    %c0_6 = arith.constant 0 : index
    %c0_7 = arith.constant 0 : index
    %c0_8 = arith.constant 0 : index
    %7 = vector.load %arg4[%c0_6, %c0_7, %c0_8] : memref<1x32x256xf32, #tpu.memory_space<vmem>>, vector<1x32x256xf32>
    %8 = vector.shape_cast %7 : vector<1x32x256xf32> to vector<32x256xf32>
    %9 = vector.shape_cast %6 : vector<32x256xf32> to vector<1x32x256xf32>
    tpu.vector_store %arg4[%c0_6, %c0_7, %c0_8], %9 {strides = array<i32>} : memref<1x32x256xf32, #tpu.memory_space<vmem>>, vector<1x32x256xf32>,
    return
  }
  func.func @transform_0(%arg0: i32) -> (i32, i32, i32) {
    %c0_i32 = arith.constant 0 : i32
    %c0_i32_0 = arith.constant 0 : i32
    %c0_i32_1 = arith.constant 0 : i32
    return %arg0, %c0_i32, %c0_i32_0 : i32, i32, i32
  }
  func.func @transform_1(%arg0: i32) -> (i32, i32) {
    %c0_i32 = arith.constant 0 : i32
    %c0_i32_0 = arith.constant 0 : i32
    %c0_i32_1 = arith.constant 0 : i32
    return %c0_i32, %c0_i32_0 : i32, i32
  }
  func.func @transform_2(%arg0: i32) -> (i32, i32) {
    %c0_i32 = arith.constant 0 : i32
    %c0_i32_0 = arith.constant 0 : i32
    %c0_i32_1 = arith.constant 0 : i32
    return %c0_i32, %c0_i32_0 : i32, i32
  }
  func.func @transform_3(%arg0: i32) -> (i32, i32, i32) {
    %c0_i32 = arith.constant 0 : i32
    %c0_i32_0 = arith.constant 0 : i32
    %c0_i32_1 = arith.constant 0 : i32
    return %arg0, %c0_i32, %c0_i32_0 : i32, i32, i32
  }
}

</mosaic_0001>

<llo_original>
// kernel: _lambda_.3
$region0: #{_lambda_.3}
  #allocation0 [shape = 'u32[]', space=smem, size = 0x4, offset = 0x4, fixed_abs, tag = 'smem constant byte address 0x4 - core index']
  #allocation1 [shape = 'u32[144,128]{1,0:T(1,128)}', space=vmem, size = 0x12000, scoped, tag = 'internal scratch']
  %s0 = inlined_call_operand.vmem [shape: f32[1,32,768], index: 0, kind: input, shape index: {}]
  %s1 = inlined_call_operand.vmem [shape: f32[768,128], index: 1, kind: input, shape index: {}]
  %s2 = inlined_call_operand.vmem [shape: f32[32,128], index: 2, kind: input, shape index: {}]
  %s3 = inlined_call_operand.vmem [shape: f32[1,128], index: 3, kind: input, shape index: {}]
  %s4 = inlined_call_operand.vmem [shape: f32[1,128], index: 4, kind: input, shape index: {}]
  %s5 = inlined_call_operand.vmem [shape: f32[1,32,128], index: 5, kind: output, shape index: {}]
  %s6 = sld [smem:[#allocation0]]
  $region30: #{_lambda_.3} parent=0
    _
  %s8 = ssub.s32 1, %s6
  %s9 = scalar_select 0, %s8, %s6
  // Predicated region
  $region2: #{_lambda_.3} parent=0 // pred_check
    _
  $region3: #{_lambda_.3} parent=0 // pred_check_branch
    %11 = sbr.rel (0) target = $region5
  $region4: #{_lambda_.3} parent=0 // pred_region
    _
  $region5: #{_lambda_.3} parent=0 // pred_fallthru
    _
  // Predicated region
  $region6: #{_lambda_.3} parent=0 // pred_check
    _
  $region7: #{_lambda_.3} parent=0 // pred_check_branch
    %13 = sbr.rel (0) target = $region9
  $region8: #{_lambda_.3} parent=0 // pred_region
    _
  $region9: #{_lambda_.3} parent=0 // pred_fallthru
    _
  // Predicated region
  $region10: #{_lambda_.3} parent=0 // pred_check
    _
  $region11: #{_lambda_.3} parent=0 // pred_check_branch
    %15 = sbr.rel (0) target = $region13
  $region12: #{_lambda_.3} parent=0 // pred_region
    _
  $region13: #{_lambda_.3} parent=0 // pred_fallthru
    _
  // Predicated region
  $region14: #{_lambda_.3} parent=0 // pred_check
    _
  $region15: #{_lambda_.3} parent=0 // pred_check_branch
    %17 = sbr.rel (0) target = $region17
  $region16: #{_lambda_.3} parent=0 // pred_region
    _
  $region17: #{_lambda_.3} parent=0 // pred_fallthru
    _
  // Predicated region
  $region18: #{_lambda_.3} parent=0 // pred_check
    _
  $region19: #{_lambda_.3} parent=0 // pred_check_branch
    %19 = sbr.rel (0) target = $region21
  $region20: #{_lambda_.3} parent=0 // pred_region
    _
  $region21: #{_lambda_.3} parent=0 // pred_fallthru
    _
  %v20 = vld [vmem:[%s0] sm:$0xff]
  %v21 = vld [vmem:[%s0 + $0x8] sm:$0xff]
  %v22 = vld [vmem:[%s0 + $0x10] sm:$0xff]
  %v23 = vld [vmem:[%s0 + $0x18] sm:$0xff]
  %v24 = vld [vmem:[%s0 + $0x20] sm:$0xff]
  %v25 = vld [vmem:[%s0 + $0x28] sm:$0xff]
  %v26 = vld [vmem:[%s0 + $0x30] sm:$0xff]
  %v27 = vld [vmem:[%s0 + $0x38] sm:$0xff]
  %v28 = vld [vmem:[%s0 + $0x40] sm:$0xff]
  %v29 = vld [vmem:[%s0 + $0x48] sm:$0xff]
  %v30 = vld [vmem:[%s0 + $0x50] sm:$0xff]
  %v31 = vld [vmem:[%s0 + $0x58] sm:$0xff]
  %v32 = vld [vmem:[%s0 + $0x60] sm:$0xff]
  %v33 = vld [vmem:[%s0 + $0x68] sm:$0xff]
  %v34 = vld [vmem:[%s0 + $0x70] sm:$0xff]
  %v35 = vld [vmem:[%s0 + $0x78] sm:$0xff]
  %v36 = vld [vmem:[%s0 + $0x80] sm:$0xff]
  %v37 = vld [vmem:[%s0 + $0x88] sm:$0xff]
  %v38 = vld [vmem:[%s0 + $0x90] sm:$0xff]
  %v39 = vld [vmem:[%s0 + $0x98] sm:$0xff]
  %v40 = vld [vmem:[%s0 + $0xa0] sm:$0xff]
  %v41 = vld [vmem:[%s0 + $0xa8] sm:$0xff]
  %v42 = vld [vmem:[%s0 + $0xb0] sm:$0xff]
  %v43 = vld [vmem:[%s0 + $0xb8] sm:$0xff]
  %v44 = vld [vmem:[%s1] sm:$0xff]
  %v45 = vld [vmem:[%s1 + $0x8] sm:$0xff]
  %v46 = vld [vmem:[%s1 + $0x10] sm:$0xff]
  %v47 = vld [vmem:[%s1 + $0x18] sm:$0xff]
  %v48 = vld [vmem:[%s1 + $0x20] sm:$0xff]
  %v49 = vld [vmem:[%s1 + $0x28] sm:$0xff]
  %v50 = vld [vmem:[%s1 + $0x30] sm:$0xff]
  %v51 = vld [vmem:[%s1 + $0x38] sm:$0xff]
  %v52 = vld [vmem:[%s1 + $0x40] sm:$0xff]
  %v53 = vld [vmem:[%s1 + $0x48] sm:$0xff]
  %v54 = vld [vmem:[%s1 + $0x50] sm:$0xff]
  %v55 = vld [vmem:[%s1 + $0x58] sm:$0xff]
  %v56 = vld [vmem:[%s1 + $0x60] sm:$0xff]
  %v57 = vld [vmem:[%s1 + $0x68] sm:$0xff]
  %v58 = vld [vmem:[%s1 + $0x70] sm:$0xff]
  %v59 = vld [vmem:[%s1 + $0x78] sm:$0xff]
  %v60 = vld [vmem:[%s1 + $0x80] sm:$0xff]
  %v61 = vld [vmem:[%s1 + $0x88] sm:$0xff]
  %v62 = vld [vmem:[%s1 + $0x90] sm:$0xff]
  %v63 = vld [vmem:[%s1 + $0x98] sm:$0xff]
  %v64 = vld [vmem:[%s1 + $0xa0] sm:$0xff]
  %v65 = vld [vmem:[%s1 + $0xa8] sm:$0xff]
  %v66 = vld [vmem:[%s1 + $0xb0] sm:$0xff]
  %v67 = vld [vmem:[%s1 + $0xb8] sm:$0xff]
  %v68 = vld [vmem:[%s1 + $0xc0] sm:$0xff]
  %v69 = vld [vmem:[%s1 + $0xc8] sm:$0xff]
  %v70 = vld [vmem:[%s1 + $0xd0] sm:$0xff]
  %v71 = vld [vmem:[%s1 + $0xd8] sm:$0xff]
  %v72 = vld [vmem:[%s1 + $0xe0] sm:$0xff]
  %v73 = vld [vmem:[%s1 + $0xe8] sm:$0xff]
  %v74 = vld [vmem:[%s1 + $0xf0] sm:$0xff]
  %v75 = vld [vmem:[%s1 + $0xf8] sm:$0xff]
  %v76 = vld [vmem:[%s1 + $0x100] sm:$0xff]
  %v77 = vld [vmem:[%s1 + $0x108] sm:$0xff]
  %v78 = vld [vmem:[%s1 + $0x110] sm:$0xff]
  %v79 = vld [vmem:[%s1 + $0x118] sm:$0xff]
  %v80 = vld [vmem:[%s1 + $0x120] sm:$0xff]
  %v81 = vld [vmem:[%s1 + $0x128] sm:$0xff]
  %v82 = vld [vmem:[%s1 + $0x130] sm:$0xff]
  %v83 = vld [vmem:[%s1 + $0x138] sm:$0xff]
  %v84 = vld [vmem:[%s1 + $0x140] sm:$0xff]
  %v85 = vld [vmem:[%s1 + $0x148] sm:$0xff]
  %v86 = vld [vmem:[%s1 + $0x150] sm:$0xff]
  %v87 = vld [vmem:[%s1 + $0x158] sm:$0xff]
  %v88 = vld [vmem:[%s1 + $0x160] sm:$0xff]
  %v89 = vld [vmem:[%s1 + $0x168] sm:$0xff]
  %v90 = vld [vmem:[%s1 + $0x170] sm:$0xff]
  %v91 = vld [vmem:[%s1 + $0x178] sm:$0xff]
  %v92 = vld [vmem:[%s1 + $0x180] sm:$0xff]
  %v93 = vld [vmem:[%s1 + $0x188] sm:$0xff]
  %v94 = vld [vmem:[%s1 + $0x190] sm:$0xff]
  %v95 = vld [vmem:[%s1 + $0x198] sm:$0xff]
  %v96 = vld [vmem:[%s1 + $0x1a0] sm:$0xff]
  %v97 = vld [vmem:[%s1 + $0x1a8] sm:$0xff]
  %v98 = vld [vmem:[%s1 + $0x1b0] sm:$0xff]
  %v99 = vld [vmem:[%s1 + $0x1b8] sm:$0xff]
  %v100 = vld [vmem:[%s1 + $0x1c0] sm:$0xff]
  %v101 = vld [vmem:[%s1 + $0x1c8] sm:$0xff]
  %v102 = vld [vmem:[%s1 + $0x1d0] sm:$0xff]
  %v103 = vld [vmem:[%s1 + $0x1d8] sm:$0xff]
  %v104 = vld [vmem:[%s1 + $0x1e0] sm:$0xff]
  %v105 = vld [vmem:[%s1 + $0x1e8] sm:$0xff]
  %v106 = vld [vmem:[%s1 + $0x1f0] sm:$0xff]
  %v107 = vld [vmem:[%s1 + $0x1f8] sm:$0xff]
  %v108 = vld [vmem:[%s1 + $0x200] sm:$0xff]
  %v109 = vld [vmem:[%s1 + $0x208] sm:$0xff]
  %v110 = vld [vmem:[%s1 + $0x210] sm:$0xff]
  %v111 = vld [vmem:[%s1 + $0x218] sm:$0xff]
  %v112 = vld [vmem:[%s1 + $0x220] sm:$0xff]
  %v113 = vld [vmem:[%s1 + $0x228] sm:$0xff]
  %v114 = vld [vmem:[%s1 + $0x230] sm:$0xff]
  %v115 = vld [vmem:[%s1 + $0x238] sm:$0xff]
  %v116 = vld [vmem:[%s1 + $0x240] sm:$0xff]
  %v117 = vld [vmem:[%s1 + $0x248] sm:$0xff]
  %v118 = vld [vmem:[%s1 + $0x250] sm:$0xff]
  %v119 = vld [vmem:[%s1 + $0x258] sm:$0xff]
  %v120 = vld [vmem:[%s1 + $0x260] sm:$0xff]
  %v121 = vld [vmem:[%s1 + $0x268] sm:$0xff]
  %v122 = vld [vmem:[%s1 + $0x270] sm:$0xff]
  %v123 = vld [vmem:[%s1 + $0x278] sm:$0xff]
  %v124 = vld [vmem:[%s1 + $0x280] sm:$0xff]
  %v125 = vld [vmem:[%s1 + $0x288] sm:$0xff]
  %v126 = vld [vmem:[%s1 + $0x290] sm:$0xff]
  %v127 = vld [vmem:[%s1 + $0x298] sm:$0xff]
  %v128 = vld [vmem:[%s1 + $0x2a0] sm:$0xff]
  %v129 = vld [vmem:[%s1 + $0x2a8] sm:$0xff]
  %v130 = vld [vmem:[%s1 + $0x2b0] sm:$0xff]
  %v131 = vld [vmem:[%s1 + $0x2b8] sm:$0xff]
  %v132 = vld [vmem:[%s1 + $0x2c0] sm:$0xff]
  %v133 = vld [vmem:[%s1 + $0x2c8] sm:$0xff]
  %v134 = vld [vmem:[%s1 + $0x2d0] sm:$0xff]
  %v135 = vld [vmem:[%s1 + $0x2d8] sm:$0xff]
  %v136 = vld [vmem:[%s1 + $0x2e0] sm:$0xff]
  %v137 = vld [vmem:[%s1 + $0x2e8] sm:$0xff]
  %v138 = vld [vmem:[%s1 + $0x2f0] sm:$0xff]
  %v139 = vld [vmem:[%s1 + $0x2f8] sm:$0xff]
  %v140 = vld [vmem:[%s2] sm:$0xff]
  %v141 = vld [vmem:[%s2 + $0x8] sm:$0xff]
  %v142 = vld [vmem:[%s2 + $0x10] sm:$0xff]
  %v143 = vld [vmem:[%s2 + $0x18] sm:$0xff]
  %144 = vmatprep.subr.mxu0 0.0
  %145 = vmatpush1.msra.mxu0 %v59
  %146 = vmatprep.subr.mxu0 0.0
  %147 = vmatpush1.msra.mxu0 %v58
  %148 = vmatprep.subr.mxu0 0.0
  %149 = vmatpush1.msra.mxu0 %v57
  %150 = vmatprep.subr.mxu0 0.0
  %151 = vmatpush1.msra.mxu0 %v56
  %152 = vmatprep.subr.mxu0 0.0
  %153 = vmatpush1.msra.mxu0 %v55
  %154 = vmatprep.subr.mxu0 0.0
  %155 = vmatpush1.msra.mxu0 %v54
  %156 = vmatprep.subr.mxu0 0.0
  %157 = vmatpush1.msra.mxu0 %v53
  %158 = vmatprep.subr.mxu0 0.0
  %159 = vmatpush1.msra.mxu0 %v52
  %160 = vmatprep.subr.mxu0 0.0
  %161 = vmatpush1.msra.mxu0 %v51
  %162 = vmatprep.subr.mxu0 0.0
  %163 = vmatpush1.msra.mxu0 %v50
  %164 = vmatprep.subr.mxu0 0.0
  %165 = vmatpush1.msra.mxu0 %v49
  %166 = vmatprep.subr.mxu0 0.0
  %167 = vmatpush1.msra.mxu0 %v48
  %168 = vmatprep.subr.mxu0 0.0
  %169 = vmatpush1.msra.mxu0 %v47
  %170 = vmatprep.subr.mxu0 0.0
  %171 = vmatpush1.msra.mxu0 %v46
  %172 = vmatprep.subr.mxu0 0.0
  %173 = vmatpush1.msra.mxu0 %v45
  %174 = vmatprep.subr.mxu0 0.0
  %175 = vmatpush1.msra.mxu0 %v44
  %176 = vmatprep.subr.mxu0 0.0
  %177 = vmatpush2.msra.mxu0 %v75
  %178 = vmatprep.subr.mxu0 0.0
  %179 = vmatpush2.msra.mxu0 %v74
  %180 = vmatprep.subr.mxu0 0.0
  %181 = vmatpush2.msra.mxu0 %v73
  %182 = vmatprep.subr.mxu0 0.0
  %183 = vmatpush2.msra.mxu0 %v72
  %184 = vmatprep.subr.mxu0 0.0
  %185 = vmatpush2.msra.mxu0 %v71
  %186 = vmatprep.subr.mxu0 0.0
  %187 = vmatpush2.msra.mxu0 %v70
  %188 = vmatprep.subr.mxu0 0.0
  %189 = vmatpush2.msra.mxu0 %v69
  %190 = vmatprep.subr.mxu0 0.0
  %191 = vmatpush2.msra.mxu0 %v68
  %192 = vmatprep.subr.mxu0 0.0
  %193 = vmatpush2.msra.mxu0 %v67
  %194 = vmatprep.subr.mxu0 0.0
  %195 = vmatpush2.msra.mxu0 %v66
  %196 = vmatprep.subr.mxu0 0.0
  %197 = vmatpush2.msra.mxu0 %v65
  %198 = vmatprep.subr.mxu0 0.0
  %199 = vmatpush2.msra.mxu0 %v64
  %200 = vmatprep.subr.mxu0 0.0
  %201 = vmatpush2.msra.mxu0 %v63
  %202 = vmatprep.subr.mxu0 0.0
  %203 = vmatpush2.msra.mxu0 %v62
  %204 = vmatprep.subr.mxu0 0.0
  %205 = vmatpush2.msra.mxu0 %v61
  %206 = vmatprep.subr.mxu0 0.0
  %207 = vmatpush2.msra.mxu0 %v60
  %208 = vmatprep.mubr.f32.mxu0 %v21
  %209 = vmatmul.mubr.f32.gmra.mxu0 %v20
  %v210 = vpop.f32.mrf.mxu0
  %v211 = vadd.f32 %v140, %v210
  %v212 = vpop.f32.mrf.mxu0
  %213 = vmatprep.mubr.f32.mxu0 %v27
  %214 = vmatmul.mubr.f32.gmra.mxu0 %v26
  %v215 = vpop.f32.mrf.mxu0
  %v216 = vadd.f32 %v141, %v215
  %v217 = vpop.f32.mrf.mxu0
  %218 = vmatprep.mubr.f32.mxu0 %v33
  %219 = vmatmul.mubr.f32.gmra.mxu0 %v32
  %v220 = vpop.f32.mrf.mxu0
  %v221 = vadd.f32 %v142, %v220
  %v222 = vpop.f32.mrf.mxu0
  %223 = vmatprep.mubr.f32.mxu0 %v39
  %224 = vmatmul.mubr.f32.gmra.mxu0 %v38
  %v225 = vpop.f32.mrf.mxu0
  %v226 = vadd.f32 %v143, %v225
  %v227 = vpop.f32.mrf.mxu0
  %228 = vdwg.mxu0
  %229 = vmatprep.subr.mxu0 0.0
  %230 = vmatpush1.msra.mxu0 %v91
  %231 = vmatprep.subr.mxu0 0.0
  %232 = vmatpush1.msra.mxu0 %v90
  %233 = vmatprep.subr.mxu0 0.0
  %234 = vmatpush1.msra.mxu0 %v89
  %235 = vmatprep.subr.mxu0 0.0
  %236 = vmatpush1.msra.mxu0 %v88
  %237 = vmatprep.subr.mxu0 0.0
  %238 = vmatpush1.msra.mxu0 %v87
  %239 = vmatprep.subr.mxu0 0.0
  %240 = vmatpush1.msra.mxu0 %v86
  %241 = vmatprep.subr.mxu0 0.0
  %242 = vmatpush1.msra.mxu0 %v85
  %243 = vmatprep.subr.mxu0 0.0
  %244 = vmatpush1.msra.mxu0 %v84
  %245 = vmatprep.subr.mxu0 0.0
  %246 = vmatpush1.msra.mxu0 %v83
  %247 = vmatprep.subr.mxu0 0.0
  %248 = vmatpush1.msra.mxu0 %v82
  %249 = vmatprep.subr.mxu0 0.0
  %250 = vmatpush1.msra.mxu0 %v81
  %251 = vmatprep.subr.mxu0 0.0
  %252 = vmatpush1.msra.mxu0 %v80
  %253 = vmatprep.subr.mxu0 0.0
  %254 = vmatpush1.msra.mxu0 %v79
  %255 = vmatprep.subr.mxu0 0.0
  %256 = vmatpush1.msra.mxu0 %v78
  %257 = vmatprep.subr.mxu0 0.0
  %258 = vmatpush1.msra.mxu0 %v77
  %259 = vmatprep.subr.mxu0 0.0
  %260 = vmatpush1.msra.mxu0 %v76
  %261 = vmatprep.subr.mxu0 0.0
  %262 = vmatpush2.msra.mxu0 %v107
  %263 = vmatprep.subr.mxu0 0.0
  %264 = vmatpush2.msra.mxu0 %v106
  %265 = vmatprep.subr.mxu0 0.0
  %266 = vmatpush2.msra.mxu0 %v105
  %267 = vmatprep.subr.mxu0 0.0
  %268 = vmatpush2.msra.mxu0 %v104
  %269 = vmatprep.subr.mxu0 0.0
  %270 = vmatpush2.msra.mxu0 %v103
  %271 = vmatprep.subr.mxu0 0.0
  %272 = vmatpush2.msra.mxu0 %v102
  %273 = vmatprep.subr.mxu0 0.0
  %274 = vmatpush2.msra.mxu0 %v101
  %275 = vmatprep.subr.mxu0 0.0
  %276 = vmatpush2.msra.mxu0 %v100
  %277 = vmatprep.subr.mxu0 0.0
  %278 = vmatpush2.msra.mxu0 %v99
  %279 = vmatprep.subr.mxu0 0.0
  %280 = vmatpush2.msra.mxu0 %v98
  %281 = vmatprep.subr.mxu0 0.0
  %282 = vmatpush2.msra.mxu0 %v97
  %283 = vmatprep.subr.mxu0 0.0
  %284 = vmatpush2.msra.mxu0 %v96
  %285 = vmatprep.subr.mxu0 0.0
  %286 = vmatpush2.msra.mxu0 %v95
  %287 = vmatprep.subr.mxu0 0.0
  %288 = vmatpush2.msra.mxu0 %v94
  %289 = vmatprep.subr.mxu0 0.0
  %290 = vmatpush2.msra.mxu0 %v93
  %291 = vmatprep.subr.mxu0 0.0
  %292 = vmatpush2.msra.mxu0 %v92
  %293 = vmatprep.mubr.f32.mxu0 %v23
  %294 = vmatmul.mubr.f32.gmra.mxu0 %v22
  %v295 = vpop.f32.mrf.mxu0
  %v296 = vadd.f32 %v211, %v295
  %v297 = vpop.f32.mrf.mxu0
  %298 = vmatprep.mubr.f32.mxu0 %v29
  %299 = vmatmul.mubr.f32.gmra.mxu0 %v28
  %v300 = vpop.f32.mrf.mxu0
  %v301 = vadd.f32 %v216, %v300
  %v302 = vpop.f32.mrf.mxu0
  %303 = vmatprep.mubr.f32.mxu0 %v35
  %304 = vmatmul.mubr.f32.gmra.mxu0 %v34
  %v305 = vpop.f32.mrf.mxu0
  %v306 = vadd.f32 %v221, %v305
  %v307 = vpop.f32.mrf.mxu0
  %308 = vmatprep.mubr.f32.mxu0 %v41
  %309 = vmatmul.mubr.f32.gmra.mxu0 %v40
  %v310 = vpop.f32.mrf.mxu0
  %v311 = vadd.f32 %v226, %v310
  %v312 = vpop.f32.mrf.mxu0
  %313 = vdwg.mxu0
  %314 = vmatprep.subr.mxu0 0.0
  %315 = vmatpush1.msra.mxu0 %v123
  %316 = vmatprep.subr.mxu0 0.0
  %317 = vmatpush1.msra.mxu0 %v122
  %318 = vmatprep.subr.mxu0 0.0
  %319 = vmatpush1.msra.mxu0 %v121
  %320 = vmatprep.subr.mxu0 0.0
  %321 = vmatpush1.msra.mxu0 %v120
  %322 = vmatprep.subr.mxu0 0.0
  %323 = vmatpush1.msra.mxu0 %v119
  %324 = vmatprep.subr.mxu0 0.0
  %325 = vmatpush1.msra.mxu0 %v118
  %326 = vmatprep.subr.mxu0 0.0
  %327 = vmatpush1.msra.mxu0 %v117
  %328 = vmatprep.subr.mxu0 0.0
  %329 = vmatpush1.msra.mxu0 %v116
  %330 = vmatprep.subr.mxu0 0.0
  %331 = vmatpush1.msra.mxu0 %v115
  %332 = vmatprep.subr.mxu0 0.0
  %333 = vmatpush1.msra.mxu0 %v114
  %334 = vmatprep.subr.mxu0 0.0
  %335 = vmatpush1.msra.mxu0 %v113
  %336 = vmatprep.subr.mxu0 0.0
  %337 = vmatpush1.msra.mxu0 %v112
  %338 = vmatprep.subr.mxu0 0.0
  %339 = vmatpush1.msra.mxu0 %v111
  %340 = vmatprep.subr.mxu0 0.0
  %341 = vmatpush1.msra.mxu0 %v110
  %342 = vmatprep.subr.mxu0 0.0
  %343 = vmatpush1.msra.mxu0 %v109
  %344 = vmatprep.subr.mxu0 0.0
  %345 = vmatpush1.msra.mxu0 %v108
  %346 = vmatprep.subr.mxu0 0.0
  %347 = vmatpush2.msra.mxu0 %v139
  %348 = vmatprep.subr.mxu0 0.0
  %349 = vmatpush2.msra.mxu0 %v138
  %350 = vmatprep.subr.mxu0 0.0
  %351 = vmatpush2.msra.mxu0 %v137
  %352 = vmatprep.subr.mxu0 0.0
  %353 = vmatpush2.msra.mxu0 %v136
  %354 = vmatprep.subr.mxu0 0.0
  %355 = vmatpush2.msra.mxu0 %v135
  %356 = vmatprep.subr.mxu0 0.0
  %357 = vmatpush2.msra.mxu0 %v134
  %358 = vmatprep.subr.mxu0 0.0
  %359 = vmatpush2.msra.mxu0 %v133
  %360 = vmatprep.subr.mxu0 0.0
  %361 = vmatpush2.msra.mxu0 %v132
  %362 = vmatprep.subr.mxu0 0.0
  %363 = vmatpush2.msra.mxu0 %v131
  %364 = vmatprep.subr.mxu0 0.0
  %365 = vmatpush2.msra.mxu0 %v130
  %366 = vmatprep.subr.mxu0 0.0
  %367 = vmatpush2.msra.mxu0 %v129
  %368 = vmatprep.subr.mxu0 0.0
  %369 = vmatpush2.msra.mxu0 %v128
  %370 = vmatprep.subr.mxu0 0.0
  %371 = vmatpush2.msra.mxu0 %v127
  %372 = vmatprep.subr.mxu0 0.0
  %373 = vmatpush2.msra.mxu0 %v126
  %374 = vmatprep.subr.mxu0 0.0
  %375 = vmatpush2.msra.mxu0 %v125
  %376 = vmatprep.subr.mxu0 0.0
  %377 = vmatpush2.msra.mxu0 %v124
  %378 = vmatprep.mubr.f32.mxu0 %v25
  %379 = vmatmul.mubr.f32.gmra.mxu0 %v24
  %v380 = vpop.f32.mrf.mxu0
  %v381 = vadd.f32 %v296, %v380
  %v382 = vpop.f32.mrf.mxu0
  %383 = vmatprep.mubr.f32.mxu0 %v31
  %384 = vmatmul.mubr.f32.gmra.mxu0 %v30
  %v385 = vpop.f32.mrf.mxu0
  %v386 = vadd.f32 %v301, %v385
  %v387 = vpop.f32.mrf.mxu0
  %388 = vmatprep.mubr.f32.mxu0 %v37
  %389 = vmatmul.mubr.f32.gmra.mxu0 %v36
  %v390 = vpop.f32.mrf.mxu0
  %v391 = vadd.f32 %v306, %v390
  %v392 = vpop.f32.mrf.mxu0
  %393 = vmatprep.mubr.f32.mxu0 %v43
  %394 = vmatmul.mubr.f32.gmra.mxu0 %v42
  %v395 = vpop.f32.mrf.mxu0
  %v396 = vadd.f32 %v311, %v395
  %v397 = vpop.f32.mrf.mxu0
  %398 = vdwg.mxu0
  %v399 = vld [vmem:[%s3] sm:$0x1]
  %v400 = vld [vmem:[%s4] sm:$0x1]
  %401 = vadd.xlane.f32.xlu0 %v381
  %v402 = vpop.xlane.xlu0 %401
  %403 = vadd.xlane.f32.xlu0 %v386
  %v404 = vpop.xlane.xlu0 %403
  %405 = vadd.xlane.f32.xlu0 %v391
  %v406 = vpop.xlane.xlu0 %405
  %407 = vadd.xlane.f32.xlu0 %v396
  %v408 = vpop.xlane.xlu0 %407
  %v409 = vrcp.pop 128.0
  %v410 = vmul.f32 %v402, %v409
  %v411 = vmul.f32 %v404, %v409
  %v412 = vmul.f32 %v406, %v409
  %v413 = vmul.f32 %v408, %v409
  %v414 = vsub.f32 %v381, %v410
  %v415 = vsub.f32 %v386, %v411
  %v416 = vsub.f32 %v391, %v412
  %v417 = vsub.f32 %v396, %v413
  %v418 = vmul.f32 %v414, %v414
  %v419 = vmul.f32 %v415, %v415
  %v420 = vmul.f32 %v416, %v416
  %v421 = vmul.f32 %v417, %v417
  %422 = vadd.xlane.f32.xlu0 %v418
  %v423 = vpop.xlane.xlu0 %422
  %424 = vadd.xlane.f32.xlu0 %v419
  %v425 = vpop.xlane.xlu0 %424
  %426 = vadd.xlane.f32.xlu0 %v420
  %v427 = vpop.xlane.xlu0 %426
  %428 = vadd.xlane.f32.xlu0 %v421
  %v429 = vpop.xlane.xlu0 %428
  %v430 = vmul.f32 %v423, %v409
  %v431 = vmul.f32 %v425, %v409
  %v432 = vmul.f32 %v427, %v409
  %v433 = vmul.f32 %v429, %v409
  %v434 = vadd.f32 %v430, 1e-05
  %v435 = vadd.f32 %v431, 1e-05
  %v436 = vadd.f32 %v432, 1e-05
  %v437 = vadd.f32 %v433, 1e-05
  %v438 = vrsqrt.pop %v434
  %v439 = vrsqrt.pop %v435
  %v440 = vrsqrt.pop %v436
  %v441 = vrsqrt.pop %v437
  %v442 = vmul.f32 %v414, %v438
  %v443 = vmul.f32 %v415, %v439
  %v444 = vmul.f32 %v416, %v440
  %v445 = vmul.f32 %v417, %v441
  %v447 = vlaneseq
  %v448 = vshrl.u32 %v447, 7
  %v449 = vsub.s32 0, %v448
  %v450 = vrot.slane %v399, %v449
  %v452 = vmul.f32 %v442, %v450
  %v453 = vmul.f32 %v443, %v450
  %v454 = vmul.f32 %v444, %v450
  %v455 = vmul.f32 %v445, %v450
  %v457 = vlaneseq
  %v458 = vshrl.u32 %v457, 7
  %v459 = vsub.s32 0, %v458
  %v460 = vrot.slane %v400, %v459
  %v462 = vadd.f32 %v452, %v460
  %v463 = vadd.f32 %v453, %v460
  %v464 = vadd.f32 %v454, %v460
  %v465 = vadd.f32 %v455, %v460
  %466 = vst [vmem:[%s5] sm:$0xff] %v462
  %467 = vst [vmem:[%s5 + $0x8] sm:$0xff] %v463
  %468 = vst [vmem:[%s5 + $0x10] sm:$0xff] %v464
  %469 = vst [vmem:[%s5 + $0x18] sm:$0xff] %v465
  // Predicated region
  $region22: #{_lambda_.3} parent=0 // pred_check
    _
  $region23: #{_lambda_.3} parent=0 // pred_check_branch
    %471 = sbr.rel (0) target = $region25
  $region24: #{_lambda_.3} parent=0 // pred_region
    _
  $region25: #{_lambda_.3} parent=0 // pred_fallthru
    _
  // Predicated region
  $region26: #{_lambda_.3} parent=0 // pred_check
    _
  $region27: #{_lambda_.3} parent=0 // pred_check_branch
    %473 = sbr.rel (0) target = $region29
  $region28: #{_lambda_.3} parent=0 // pred_region
    _
  $region29: #{_lambda_.3} parent=0 // pred_fallthru
    _

// kernel: _lambda_.5
$region0: #{_lambda_.5}
  #allocation0 [shape = 'u32[]', space=smem, size = 0x4, offset = 0x4, fixed_abs, tag = 'smem constant byte address 0x4 - core index']
  #allocation1 [shape = 'u32[144,128]{1,0:T(1,128)}', space=vmem, size = 0x12000, scoped, tag = 'internal scratch']
  %s0 = inlined_call_operand.vmem [shape: f32[1,32,128], index: 0, kind: input, shape index: {}]
  %s1 = inlined_call_operand.vmem [shape: f32[128,256], index: 1, kind: input, shape index: {}]
  %s2 = inlined_call_operand.vmem [shape: f32[1,256], index: 2, kind: input, shape index: {}]
  %s3 = inlined_call_operand.vmem [shape: f32[1,32,256], index: 3, kind: output, shape index: {}]
  %s4 = sld [smem:[#allocation0]]
  $region22: #{_lambda_.5} parent=0
    _
  %s6 = ssub.s32 1, %s4
  %s7 = scalar_select 0, %s6, %s4
  // Predicated region
  $region2: #{_lambda_.5} parent=0 // pred_check
    _
  $region3: #{_lambda_.5} parent=0 // pred_check_branch
    %9 = sbr.rel (0) target = $region5
  $region4: #{_lambda_.5} parent=0 // pred_region
    _
  $region5: #{_lambda_.5} parent=0 // pred_fallthru
    _
  // Predicated region
  $region6: #{_lambda_.5} parent=0 // pred_check
    _
  $region7: #{_lambda_.5} parent=0 // pred_check_branch
    %11 = sbr.rel (0) target = $region9
  $region8: #{_lambda_.5} parent=0 // pred_region
    _
  $region9: #{_lambda_.5} parent=0 // pred_fallthru
    _
  // Predicated region
  $region10: #{_lambda_.5} parent=0 // pred_check
    _
  $region11: #{_lambda_.5} parent=0 // pred_check_branch
    %13 = sbr.rel (0) target = $region13
  $region12: #{_lambda_.5} parent=0 // pred_region
    _
  $region13: #{_lambda_.5} parent=0 // pred_fallthru
    _
  %v14 = vld [vmem:[%s0] sm:$0xff]
  %v15 = vld [vmem:[%s0 + $0x8] sm:$0xff]
  %v16 = vld [vmem:[%s0 + $0x10] sm:$0xff]
  %v17 = vld [vmem:[%s0 + $0x18] sm:$0xff]
  %v18 = vld [vmem:[%s1] sm:$0xff]
  %v19 = vld [vmem:[%s1 + $0x8] sm:$0xff]
  %v20 = vld [vmem:[%s1 + $0x10] sm:$0xff]
  %v21 = vld [vmem:[%s1 + $0x18] sm:$0xff]
  %v22 = vld [vmem:[%s1 + $0x20] sm:$0xff]
  %v23 = vld [vmem:[%s1 + $0x28] sm:$0xff]
  %v24 = vld [vmem:[%s1 + $0x30] sm:$0xff]
  %v25 = vld [vmem:[%s1 + $0x38] sm:$0xff]
  %v26 = vld [vmem:[%s1 + $0x40] sm:$0xff]
  %v27 = vld [vmem:[%s1 + $0x48] sm:$0xff]
  %v28 = vld [vmem:[%s1 + $0x50] sm:$0xff]
  %v29 = vld [vmem:[%s1 + $0x58] sm:$0xff]
  %v30 = vld [vmem:[%s1 + $0x60] sm:$0xff]
  %v31 = vld [vmem:[%s1 + $0x68] sm:$0xff]
  %v32 = vld [vmem:[%s1 + $0x70] sm:$0xff]
  %v33 = vld [vmem:[%s1 + $0x78] sm:$0xff]
  %v34 = vld [vmem:[%s1 + $0x80] sm:$0xff]
  %v35 = vld [vmem:[%s1 + $0x88] sm:$0xff]
  %v36 = vld [vmem:[%s1 + $0x90] sm:$0xff]
  %v37 = vld [vmem:[%s1 + $0x98] sm:$0xff]
  %v38 = vld [vmem:[%s1 + $0xa0] sm:$0xff]
  %v39 = vld [vmem:[%s1 + $0xa8] sm:$0xff]
  %v40 = vld [vmem:[%s1 + $0xb0] sm:$0xff]
  %v41 = vld [vmem:[%s1 + $0xb8] sm:$0xff]
  %v42 = vld [vmem:[%s1 + $0xc0] sm:$0xff]
  %v43 = vld [vmem:[%s1 + $0xc8] sm:$0xff]
  %v44 = vld [vmem:[%s1 + $0xd0] sm:$0xff]
  %v45 = vld [vmem:[%s1 + $0xd8] sm:$0xff]
  %v46 = vld [vmem:[%s1 + $0xe0] sm:$0xff]
  %v47 = vld [vmem:[%s1 + $0xe8] sm:$0xff]
  %v48 = vld [vmem:[%s1 + $0xf0] sm:$0xff]
  %v49 = vld [vmem:[%s1 + $0xf8] sm:$0xff]
  %v50 = vld [vmem:[%s2] sm:$0x3]
  %v52 = vlaneseq
  %v53 = vshrl.u32 %v52, 7
  %v54 = vsub.s32 0, %v53
  %v55 = vrot.slane %v50, %v54
  %v56 = vlaneseq
  %v57 = vshrl.u32 %v56, 7
  %v58 = vsub.s32 1, %v57
  %v59 = vrot.slane %v50, %v58
  %62 = vmatprep.subr.mxu0 %v49
  %63 = vmatpush1.msra.mxu0 %v48
  %64 = vmatprep.subr.mxu0 %v47
  %65 = vmatpush1.msra.mxu0 %v46
  %66 = vmatprep.subr.mxu0 %v45
  %67 = vmatpush1.msra.mxu0 %v44
  %68 = vmatprep.subr.mxu0 %v43
  %69 = vmatpush1.msra.mxu0 %v42
  %70 = vmatprep.subr.mxu0 %v41
  %71 = vmatpush1.msra.mxu0 %v40
  %72 = vmatprep.subr.mxu0 %v39
  %73 = vmatpush1.msra.mxu0 %v38
  %74 = vmatprep.subr.mxu0 %v37
  %75 = vmatpush1.msra.mxu0 %v36
  %76 = vmatprep.subr.mxu0 %v35
  %77 = vmatpush1.msra.mxu0 %v34
  %78 = vmatprep.subr.mxu0 %v33
  %79 = vmatpush1.msra.mxu0 %v32
  %80 = vmatprep.subr.mxu0 %v31
  %81 = vmatpush1.msra.mxu0 %v30
  %82 = vmatprep.subr.mxu0 %v29
  %83 = vmatpush1.msra.mxu0 %v28
  %84 = vmatprep.subr.mxu0 %v27
  %85 = vmatpush1.msra.mxu0 %v26
  %86 = vmatprep.subr.mxu0 %v25
  %87 = vmatpush1.msra.mxu0 %v24
  %88 = vmatprep.subr.mxu0 %v23
  %89 = vmatpush1.msra.mxu0 %v22
  %90 = vmatprep.subr.mxu0 %v21
  %91 = vmatpush1.msra.mxu0 %v20
  %92 = vmatprep.subr.mxu0 %v19
  %93 = vmatpush1.msra.mxu0 %v18
  %94 = vmatprep.subr.mxu0 0.0
  %95 = vmatpush2.msra.mxu0 0.0
  %96 = vmatprep.subr.mxu0 0.0
  %97 = vmatpush2.msra.mxu0 0.0
  %98 = vmatprep.subr.mxu0 0.0
  %99 = vmatpush2.msra.mxu0 0.0
  %100 = vmatprep.subr.mxu0 0.0
  %101 = vmatpush2.msra.mxu0 0.0
  %102 = vmatprep.subr.mxu0 0.0
  %103 = vmatpush2.msra.mxu0 0.0
  %104 = vmatprep.subr.mxu0 0.0
  %105 = vmatpush2.msra.mxu0 0.0
  %106 = vmatprep.subr.mxu0 0.0
  %107 = vmatpush2.msra.mxu0 0.0
  %108 = vmatprep.subr.mxu0 0.0
  %109 = vmatpush2.msra.mxu0 0.0
  %110 = vmatprep.subr.mxu0 0.0
  %111 = vmatpush2.msra.mxu0 0.0
  %112 = vmatprep.subr.mxu0 0.0
  %113 = vmatpush2.msra.mxu0 0.0
  %114 = vmatprep.subr.mxu0 0.0
  %115 = vmatpush2.msra.mxu0 0.0
  %116 = vmatprep.subr.mxu0 0.0
  %117 = vmatpush2.msra.mxu0 0.0
  %118 = vmatprep.subr.mxu0 0.0
  %119 = vmatpush2.msra.mxu0 0.0
  %120 = vmatprep.subr.mxu0 0.0
  %121 = vmatpush2.msra.mxu0 0.0
  %122 = vmatprep.subr.mxu0 0.0
  %123 = vmatpush2.msra.mxu0 0.0
  %124 = vmatprep.subr.mxu0 0.0
  %125 = vmatpush2.msra.mxu0 0.0
  %126 = vmatprep.mubr.f32.mxu0 0.0
  %127 = vmatmul.mubr.f32.gmra.mxu0 %v14
  %v128 = vpop.f32.mrf.mxu0
  %v129 = vadd.f32 %v55, %v128
  %v130 = vpop.f32.mrf.mxu0
  %v131 = vadd.f32 %v59, %v130
  %132 = vmatprep.mubr.f32.mxu0 0.0
  %133 = vmatmul.mubr.f32.gmra.mxu0 %v15
  %v134 = vpop.f32.mrf.mxu0
  %v135 = vadd.f32 %v55, %v134
  %v136 = vpop.f32.mrf.mxu0
  %v137 = vadd.f32 %v59, %v136
  %138 = vmatprep.mubr.f32.mxu0 0.0
  %139 = vmatmul.mubr.f32.gmra.mxu0 %v16
  %v140 = vpop.f32.mrf.mxu0
  %v141 = vadd.f32 %v55, %v140
  %v142 = vpop.f32.mrf.mxu0
  %v143 = vadd.f32 %v59, %v142
  %144 = vmatprep.mubr.f32.mxu0 0.0
  %145 = vmatmul.mubr.f32.gmra.mxu0 %v17
  %v146 = vpop.f32.mrf.mxu0
  %v147 = vadd.f32 %v55, %v146
  %v148 = vpop.f32.mrf.mxu0
  %v149 = vadd.f32 %v59, %v148
  %150 = vdwg.mxu0
  %151 = vst [vmem:[%s3] sm:$0xff] %v129
  %152 = vst [vmem:[%s3 + $0x8] sm:$0xff] %v131
  %153 = vst [vmem:[%s3 + $0x10] sm:$0xff] %v135
  %154 = vst [vmem:[%s3 + $0x18] sm:$0xff] %v137
  %155 = vst [vmem:[%s3 + $0x20] sm:$0xff] %v141
  %156 = vst [vmem:[%s3 + $0x28] sm:$0xff] %v143
  %157 = vst [vmem:[%s3 + $0x30] sm:$0xff] %v147
  %158 = vst [vmem:[%s3 + $0x38] sm:$0xff] %v149
  // Predicated region
  $region14: #{_lambda_.5} parent=0 // pred_check
    _
  $region15: #{_lambda_.5} parent=0 // pred_check_branch
    %160 = sbr.rel (0) target = $region17
  $region16: #{_lambda_.5} parent=0 // pred_region
    _
  $region17: #{_lambda_.5} parent=0 // pred_fallthru
    _
  // Predicated region
  $region18: #{_lambda_.5} parent=0 // pred_check
    _
  $region19: #{_lambda_.5} parent=0 // pred_check_branch
    %162 = sbr.rel (0) target = $region21
  $region20: #{_lambda_.5} parent=0 // pred_region
    _
  $region21: #{_lambda_.5} parent=0 // pred_fallthru
    _

// kernel: _lambda_.4
$region0: #{_lambda_.4}
  #allocation0 [shape = 'u32[]', space=smem, size = 0x4, offset = 0x4, fixed_abs, tag = 'smem constant byte address 0x4 - core index']
  #allocation1 [shape = 'u32[144,128]{1,0:T(1,128)}', space=vmem, size = 0x12000, scoped, tag = 'internal scratch']
  #allocation2 [shape = 'f32[32,128]{1,0:T(8,128)}', space=vmem, size = 0x4000, scoped, tag = 'scratch operand']
  %s0 = inlined_call_operand.vmem [shape: f32[1,32,128], index: 0, kind: input, shape index: {}]
  %s1 = inlined_call_operand.vmem [shape: f32[2,1,128], index: 1, kind: input, shape index: {}]
  %s2 = inlined_call_operand.vmem [shape: f32[2,1,128], index: 2, kind: input, shape index: {}]
  %s3 = inlined_call_operand.vmem [shape: f32[2,128,384], index: 3, kind: input, shape index: {}]
  %s4 = inlined_call_operand.vmem [shape: f32[2,1,384], index: 4, kind: input, shape index: {}]
  %s5 = inlined_call_operand.vmem [shape: f32[32,128], index: 5, kind: input, shape index: {}]
  %s6 = inlined_call_operand.vmem [shape: f32[32,128], index: 6, kind: input, shape index: {}]
  %s7 = inlined_call_operand.vmem [shape: f32[2,128,128], index: 7, kind: input, shape index: {}]
  %s8 = inlined_call_operand.vmem [shape: f32[2,1,128], index: 8, kind: input, shape index: {}]
  %s9 = inlined_call_operand.vmem [shape: f32[2,1,128], index: 9, kind: input, shape index: {}]
  %s10 = inlined_call_operand.vmem [shape: f32[2,1,128], index: 10, kind: input, shape index: {}]
  %s11 = inlined_call_operand.vmem [shape: f32[2,128,512], index: 11, kind: input, shape index: {}]
  %s12 = inlined_call_operand.vmem [shape: f32[2,1,512], index: 12, kind: input, shape index: {}]
  %s13 = inlined_call_operand.vmem [shape: f32[2,512,128], index: 13, kind: input, shape index: {}]
  %s14 = inlined_call_operand.vmem [shape: f32[2,1,128], index: 14, kind: input, shape index: {}]
  %s15 = inlined_call_operand.vmem [shape: f32[1,32,128], index: 15, kind: output, shape index: {}]
  %s16 = sld [smem:[#allocation0]]
  $region101: #{_lambda_.4} parent=0
    _
  %s18 = ssub.s32 1, %s16
  %s19 = scalar_select 0, %s18, %s16
  loop: start=0, step=1, limit=4
  $region2: #{_lambda_.4} parent=0 // loop_pre_header
    _
  $region3: #{_lambda_.4} parent=0 // loop_header
    %s21 = sphi 0, %s25
    %p22 = scmp.ge.s32.totalorder %s21, 4
    %s28 = sphi 0, %s40
    %s29 = sphi 0, %s36
    %s30 = sphi 0, %s28
    %s31 = sphi 0, %s29
    %s32 = sphi 0, %s30
    %s33 = sphi 0, %s31
    %s43 = sphi 0, %s45
    %s46 = sphi 0, %s43
    %s47 = sphi 0, %s46
    %s63 = sphi 0, %s47
    %s69 = sphi 0, %s71
    %s72 = sphi 0, %s69
    %s73 = sphi 0, %s72
    %s89 = sphi 0, %s73
    %s95 = sphi 0, %s97
    %s98 = sphi 0, %s95
    %s99 = sphi 0, %s98
    %s115 = sphi 0, %s99
    %s121 = sphi 0, %s123
    %s124 = sphi 0, %s121
    %s125 = sphi 0, %s124
    %s141 = sphi 0, %s125
    %s147 = sphi 0, %s149
    %s150 = sphi 0, %s147
    %s151 = sphi 0, %s150
    %s167 = sphi 0, %s151
    %s171 = sphi 0, %s171
    %s173 = sphi 0, %s171
    %s174 = sphi 0, %s173
    %s188 = sphi 0, %s174
    %s192 = sphi 0, %s192
    %s194 = sphi 0, %s192
    %s195 = sphi 0, %s194
    %s209 = sphi 0, %s195
    %s215 = sphi 0, %s217
    %s218 = sphi 0, %s215
    %s219 = sphi 0, %s218
    %s235 = sphi 0, %s219
    %s241 = sphi 0, %s243
    %s244 = sphi 0, %s241
    %s245 = sphi 0, %s244
    %s261 = sphi 0, %s245
    %s267 = sphi 0, %s269
    %s270 = sphi 0, %s267
    %s271 = sphi 0, %s270
    %s287 = sphi 0, %s271
    %s293 = sphi 0, %s295
    %s296 = sphi 0, %s293
    %s297 = sphi 0, %s296
    %s313 = sphi 0, %s297
    %s319 = sphi 0, %s321
    %s322 = sphi 0, %s319
    %s323 = sphi 0, %s322
    %s339 = sphi 0, %s323
    %s345 = sphi 0, %s347
    %s348 = sphi 0, %s345
    %s349 = sphi 0, %s348
    %s365 = sphi 0, %s349
    %s371 = sphi 0, %s373
    %s374 = sphi 0, %s371
    %s375 = sphi 0, %s374
    %s391 = sphi 0, %s375
    %s397 = sphi 0, %s399
    %s400 = sphi 0, %s397
    %s401 = sphi 0, %s400
    %s417 = sphi 0, %s401
    %s423 = sphi 0, %s425
    %s426 = sphi 0, %s423
    %s427 = sphi 0, %s426
    %s443 = sphi 0, %s427
  $region4: #{_lambda_.4} parent=0 // loop_header_branch
    %24 = sbr.rel (%p22) target = $region8
  $region5: #{_lambda_.4} parent=0 // loop_body
    %s26 = ssub.s32 %s21, 1
    %s27 = ssub.s32 %s21, 2
    %s34 = sadd.s32 1, %s29
    %p35 = scmp.ge.s32.totalorder %s34, 2
    %s36 = scalar_select %p35, 0, %s34
    %s37 = sadd.s32 1, %s28
    %s38 = scalar_select %p35, %s37, %s28
    %p39 = scmp.ge.s32.totalorder %s38, 1
    %s40 = scalar_select %p39, 0, %s38
    %s41 = ssub.s32 %s28, %s40
    %p42 = scmp.eq.s32.totalorder %s41, 0
    %s44 = sadd.s32 %s43, 1
    %s45 = scalar_select %p42, %s43, %s44
    %p48 = pneg %p42
    %p49 = scmp.eq.s32.totalorder %s21, 1
    %p50 = por %p48, %p49
    %p51 = scmp.ne.s32.totalorder %s43, %s46
    %p52 = scmp.eq.s32.totalorder %s21, 0
    %p53 = por %p51, %p52
    %p54 = scmp.ne.s32.totalorder %s43, %s46
    %p55 = scmp.eq.s32.totalorder %s26, 1
    %p56 = por %p54, %p55
    %p57 = scmp.ne.s32.totalorder %s46, %s47
    %p58 = scmp.eq.s32.totalorder %s26, 0
    %p59 = por %p57, %p58
    %p60 = scmp.ne.s32.totalorder %s46, %s47
    %p61 = scmp.eq.s32.totalorder %s27, 1
    %p62 = por %p60, %p61
    %p64 = scmp.ne.s32.totalorder %s47, %s63
    %p65 = scmp.eq.s32.totalorder %s27, 0
    %p66 = por %p64, %p65
    %s67 = ssub.s32 %s29, %s36
    %p68 = scmp.eq.s32.totalorder %s67, 0
    %s70 = sadd.s32 %s69, 1
    %s71 = scalar_select %p68, %s69, %s70
    %p74 = pneg %p68
    %p75 = scmp.eq.s32.totalorder %s21, 1
    %p76 = por %p74, %p75
    %p77 = scmp.ne.s32.totalorder %s69, %s72
    %p78 = scmp.eq.s32.totalorder %s21, 0
    %p79 = por %p77, %p78
    %p80 = scmp.ne.s32.totalorder %s69, %s72
    %p81 = scmp.eq.s32.totalorder %s26, 1
    %p82 = por %p80, %p81
    %p83 = scmp.ne.s32.totalorder %s72, %s73
    %p84 = scmp.eq.s32.totalorder %s26, 0
    %p85 = por %p83, %p84
    %p86 = scmp.ne.s32.totalorder %s72, %s73
    %p87 = scmp.eq.s32.totalorder %s27, 1
    %p88 = por %p86, %p87
    %p90 = scmp.ne.s32.totalorder %s73, %s89
    %p91 = scmp.eq.s32.totalorder %s27, 0
    %p92 = por %p90, %p91
    %s93 = ssub.s32 %s29, %s36
    %p94 = scmp.eq.s32.totalorder %s93, 0
    %s96 = sadd.s32 %s95, 1
    %s97 = scalar_select %p94, %s95, %s96
    %p100 = pneg %p94
    %p101 = scmp.eq.s32.totalorder %s21, 1
    %p102 = por %p100, %p101
    %p103 = scmp.ne.s32.totalorder %s95, %s98
    %p104 = scmp.eq.s32.totalorder %s21, 0
    %p105 = por %p103, %p104
    %p106 = scmp.ne.s32.totalorder %s95, %s98
    %p107 = scmp.eq.s32.totalorder %s26, 1
    %p108 = por %p106, %p107
    %p109 = scmp.ne.s32.totalorder %s98, %s99
    %p110 = scmp.eq.s32.totalorder %s26, 0
    %p111 = por %p109, %p110
    %p112 = scmp.ne.s32.totalorder %s98, %s99
    %p113 = scmp.eq.s32.totalorder %s27, 1
    %p114 = por %p112, %p113
    %p116 = scmp.ne.s32.totalorder %s99, %s115
    %p117 = scmp.eq.s32.totalorder %s27, 0
    %p118 = por %p116, %p117
    %s119 = ssub.s32 %s29, %s36
    %p120 = scmp.eq.s32.totalorder %s119, 0
    %s122 = sadd.s32 %s121, 1
    %s123 = scalar_select %p120, %s121, %s122
    %p126 = pneg %p120
    %p127 = scmp.eq.s32.totalorder %s21, 1
    %p128 = por %p126, %p127
    %p129 = scmp.ne.s32.totalorder %s121, %s124
    %p130 = scmp.eq.s32.totalorder %s21, 0
    %p131 = por %p129, %p130
    %p132 = scmp.ne.s32.totalorder %s121, %s124
    %p133 = scmp.eq.s32.totalorder %s26, 1
    %p134 = por %p132, %p133
    %p135 = scmp.ne.s32.totalorder %s124, %s125
    %p136 = scmp.eq.s32.totalorder %s26, 0
    %p137 = por %p135, %p136
    %p138 = scmp.ne.s32.totalorder %s124, %s125
    %p139 = scmp.eq.s32.totalorder %s27, 1
    %p140 = por %p138, %p139
    %p142 = scmp.ne.s32.totalorder %s125, %s141
    %p143 = scmp.eq.s32.totalorder %s27, 0
    %p144 = por %p142, %p143
    %s145 = ssub.s32 %s29, %s36
    %p146 = scmp.eq.s32.totalorder %s145, 0
    %s148 = sadd.s32 %s147, 1
    %s149 = scalar_select %p146, %s147, %s148
    %p152 = pneg %p146
    %p153 = scmp.eq.s32.totalorder %s21, 1
    %p154 = por %p152, %p153
    %p155 = scmp.ne.s32.totalorder %s147, %s150
    %p156 = scmp.eq.s32.totalorder %s21, 0
    %p157 = por %p155, %p156
    %p158 = scmp.ne.s32.totalorder %s147, %s150
    %p159 = scmp.eq.s32.totalorder %s26, 1
    %p160 = por %p158, %p159
    %p161 = scmp.ne.s32.totalorder %s150, %s151
    %p162 = scmp.eq.s32.totalorder %s26, 0
    %p163 = por %p161, %p162
    %p164 = scmp.ne.s32.totalorder %s150, %s151
    %p165 = scmp.eq.s32.totalorder %s27, 1
    %p166 = por %p164, %p165
    %p168 = scmp.ne.s32.totalorder %s151, %s167
    %p169 = scmp.eq.s32.totalorder %s27, 0
    %p170 = por %p168, %p169
    %s172 = sadd.s32 %s171, 1
    %p175 = scmp.eq.s32.totalorder %s21, 1
    %p176 = scmp.ne.s32.totalorder %s171, %s173
    %p177 = scmp.eq.s32.totalorder %s21, 0
    %p178 = por %p176, %p177
    %p179 = scmp.ne.s32.totalorder %s171, %s173
    %p180 = scmp.eq.s32.totalorder %s26, 1
    %p181 = por %p179, %p180
    %p182 = scmp.ne.s32.totalorder %s173, %s174
    %p183 = scmp.eq.s32.totalorder %s26, 0
    %p184 = por %p182, %p183
    %p185 = scmp.ne.s32.totalorder %s173, %s174
    %p186 = scmp.eq.s32.totalorder %s27, 1
    %p187 = por %p185, %p186
    %p189 = scmp.ne.s32.totalorder %s174, %s188
    %p190 = scmp.eq.s32.totalorder %s27, 0
    %p191 = por %p189, %p190
    %s193 = sadd.s32 %s192, 1
    %p196 = scmp.eq.s32.totalorder %s21, 1
    %p197 = scmp.ne.s32.totalorder %s192, %s194
    %p198 = scmp.eq.s32.totalorder %s21, 0
    %p199 = por %p197, %p198
    %p200 = scmp.ne.s32.totalorder %s192, %s194
    %p201 = scmp.eq.s32.totalorder %s26, 1
    %p202 = por %p200, %p201
    %p203 = scmp.ne.s32.totalorder %s194, %s195
    %p204 = scmp.eq.s32.totalorder %s26, 0
    %p205 = por %p203, %p204
    %p206 = scmp.ne.s32.totalorder %s194, %s195
    %p207 = scmp.eq.s32.totalorder %s27, 1
    %p208 = por %p206, %p207
    %p210 = scmp.ne.s32.totalorder %s195, %s209
    %p211 = scmp.eq.s32.totalorder %s27, 0
    %p212 = por %p210, %p211
    %s213 = ssub.s32 %s29, %s36
    %p214 = scmp.eq.s32.totalorder %s213, 0
    %s216 = sadd.s32 %s215, 1
    %s217 = scalar_select %p214, %s215, %s216
    %p220 = pneg %p214
    %p221 = scmp.eq.s32.totalorder %s21, 1
    %p222 = por %p220, %p221
    %p223 = scmp.ne.s32.totalorder %s215, %s218
    %p224 = scmp.eq.s32.totalorder %s21, 0
    %p225 = por %p223, %p224
    %p226 = scmp.ne.s32.totalorder %s215, %s218
    %p227 = scmp.eq.s32.totalorder %s26, 1
    %p228 = por %p226, %p227
    %p229 = scmp.ne.s32.totalorder %s218, %s219
    %p230 = scmp.eq.s32.totalorder %s26, 0
    %p231 = por %p229, %p230
    %p232 = scmp.ne.s32.totalorder %s218, %s219
    %p233 = scmp.eq.s32.totalorder %s27, 1
    %p234 = por %p232, %p233
    %p236 = scmp.ne.s32.totalorder %s219, %s235
    %p237 = scmp.eq.s32.totalorder %s27, 0
    %p238 = por %p236, %p237
    %s239 = ssub.s32 %s29, %s36
    %p240 = scmp.eq.s32.totalorder %s239, 0
    %s242 = sadd.s32 %s241, 1
    %s243 = scalar_select %p240, %s241, %s242
    %p246 = pneg %p240
    %p247 = scmp.eq.s32.totalorder %s21, 1
    %p248 = por %p246, %p247
    %p249 = scmp.ne.s32.totalorder %s241, %s244
    %p250 = scmp.eq.s32.totalorder %s21, 0
    %p251 = por %p249, %p250
    %p252 = scmp.ne.s32.totalorder %s241, %s244
    %p253 = scmp.eq.s32.totalorder %s26, 1
    %p254 = por %p252, %p253
    %p255 = scmp.ne.s32.totalorder %s244, %s245
    %p256 = scmp.eq.s32.totalorder %s26, 0
    %p257 = por %p255, %p256
    %p258 = scmp.ne.s32.totalorder %s244, %s245
    %p259 = scmp.eq.s32.totalorder %s27, 1
    %p260 = por %p258, %p259
    %p262 = scmp.ne.s32.totalorder %s245, %s261
    %p263 = scmp.eq.s32.totalorder %s27, 0
    %p264 = por %p262, %p263
    %s265 = ssub.s32 %s29, %s36
    %p266 = scmp.eq.s32.totalorder %s265, 0
    %s268 = sadd.s32 %s267, 1
    %s269 = scalar_select %p266, %s267, %s268
    %p272 = pneg %p266
    %p273 = scmp.eq.s32.totalorder %s21, 1
    %p274 = por %p272, %p273
    %p275 = scmp.ne.s32.totalorder %s267, %s270
    %p276 = scmp.eq.s32.totalorder %s21, 0
    %p277 = por %p275, %p276
    %p278 = scmp.ne.s32.totalorder %s267, %s270
    %p279 = scmp.eq.s32.totalorder %s26, 1
    %p280 = por %p278, %p279
    %p281 = scmp.ne.s32.totalorder %s270, %s271
    %p282 = scmp.eq.s32.totalorder %s26, 0
    %p283 = por %p281, %p282
    %p284 = scmp.ne.s32.totalorder %s270, %s271
    %p285 = scmp.eq.s32.totalorder %s27, 1
    %p286 = por %p284, %p285
    %p288 = scmp.ne.s32.totalorder %s271, %s287
    %p289 = scmp.eq.s32.totalorder %s27, 0
    %p290 = por %p288, %p289
    %s291 = ssub.s32 %s29, %s36
    %p292 = scmp.eq.s32.totalorder %s291, 0
    %s294 = sadd.s32 %s293, 1
    %s295 = scalar_select %p292, %s293, %s294
    %p298 = pneg %p292
    %p299 = scmp.eq.s32.totalorder %s21, 1
    %p300 = por %p298, %p299
    %p301 = scmp.ne.s32.totalorder %s293, %s296
    %p302 = scmp.eq.s32.totalorder %s21, 0
    %p303 = por %p301, %p302
    %p304 = scmp.ne.s32.totalorder %s293, %s296
    %p305 = scmp.eq.s32.totalorder %s26, 1
    %p306 = por %p304, %p305
    %p307 = scmp.ne.s32.totalorder %s296, %s297
    %p308 = scmp.eq.s32.totalorder %s26, 0
    %p309 = por %p307, %p308
    %p310 = scmp.ne.s32.totalorder %s296, %s297
    %p311 = scmp.eq.s32.totalorder %s27, 1
    %p312 = por %p310, %p311
    %p314 = scmp.ne.s32.totalorder %s297, %s313
    %p315 = scmp.eq.s32.totalorder %s27, 0
    %p316 = por %p314, %p315
    %s317 = ssub.s32 %s29, %s36
    %p318 = scmp.eq.s32.totalorder %s317, 0
    %s320 = sadd.s32 %s319, 1
    %s321 = scalar_select %p318, %s319, %s320
    %p324 = pneg %p318
    %p325 = scmp.eq.s32.totalorder %s21, 1
    %p326 = por %p324, %p325
    %p327 = scmp.ne.s32.totalorder %s319, %s322
    %p328 = scmp.eq.s32.totalorder %s21, 0
    %p329 = por %p327, %p328
    %p330 = scmp.ne.s32.totalorder %s319, %s322
    %p331 = scmp.eq.s32.totalorder %s26, 1
    %p332 = por %p330, %p331
    %p333 = scmp.ne.s32.totalorder %s322, %s323
    %p334 = scmp.eq.s32.totalorder %s26, 0
    %p335 = por %p333, %p334
    %p336 = scmp.ne.s32.totalorder %s322, %s323
    %p337 = scmp.eq.s32.totalorder %s27, 1
    %p338 = por %p336, %p337
    %p340 = scmp.ne.s32.totalorder %s323, %s339
    %p341 = scmp.eq.s32.totalorder %s27, 0
    %p342 = por %p340, %p341
    %s343 = ssub.s32 %s29, %s36
    %p344 = scmp.eq.s32.totalorder %s343, 0
    %s346 = sadd.s32 %s345, 1
    %s347 = scalar_select %p344, %s345, %s346
    %p350 = pneg %p344
    %p351 = scmp.eq.s32.totalorder %s21, 1
    %p352 = por %p350, %p351
    %p353 = scmp.ne.s32.totalorder %s345, %s348
    %p354 = scmp.eq.s32.totalorder %s21, 0
    %p355 = por %p353, %p354
    %p356 = scmp.ne.s32.totalorder %s345, %s348
    %p357 = scmp.eq.s32.totalorder %s26, 1
    %p358 = por %p356, %p357
    %p359 = scmp.ne.s32.totalorder %s348, %s349
    %p360 = scmp.eq.s32.totalorder %s26, 0
    %p361 = por %p359, %p360
    %p362 = scmp.ne.s32.totalorder %s348, %s349
    %p363 = scmp.eq.s32.totalorder %s27, 1
    %p364 = por %p362, %p363
    %p366 = scmp.ne.s32.totalorder %s349, %s365
    %p367 = scmp.eq.s32.totalorder %s27, 0
    %p368 = por %p366, %p367
    %s369 = ssub.s32 %s29, %s36
    %p370 = scmp.eq.s32.totalorder %s369, 0
    %s372 = sadd.s32 %s371, 1
    %s373 = scalar_select %p370, %s371, %s372
    %p376 = pneg %p370
    %p377 = scmp.eq.s32.totalorder %s21, 1
    %p378 = por %p376, %p377
    %p379 = scmp.ne.s32.totalorder %s371, %s374
    %p380 = scmp.eq.s32.totalorder %s21, 0
    %p381 = por %p379, %p380
    %p382 = scmp.ne.s32.totalorder %s371, %s374
    %p383 = scmp.eq.s32.totalorder %s26, 1
    %p384 = por %p382, %p383
    %p385 = scmp.ne.s32.totalorder %s374, %s375
    %p386 = scmp.eq.s32.totalorder %s26, 0
    %p387 = por %p385, %p386
    %p388 = scmp.ne.s32.totalorder %s374, %s375
    %p389 = scmp.eq.s32.totalorder %s27, 1
    %p390 = por %p388, %p389
    %p392 = scmp.ne.s32.totalorder %s375, %s391
    %p393 = scmp.eq.s32.totalorder %s27, 0
    %p394 = por %p392, %p393
    %s395 = ssub.s32 %s29, %s36
    %p396 = scmp.eq.s32.totalorder %s395, 0
    %s398 = sadd.s32 %s397, 1
    %s399 = scalar_select %p396, %s397, %s398
    %p402 = pneg %p396
    %p403 = scmp.eq.s32.totalorder %s21, 1
    %p404 = por %p402, %p403
    %p405 = scmp.ne.s32.totalorder %s397, %s400
    %p406 = scmp.eq.s32.totalorder %s21, 0
    %p407 = por %p405, %p406
    %p408 = scmp.ne.s32.totalorder %s397, %s400
    %p409 = scmp.eq.s32.totalorder %s26, 1
    %p410 = por %p408, %p409
    %p411 = scmp.ne.s32.totalorder %s400, %s401
    %p412 = scmp.eq.s32.totalorder %s26, 0
    %p413 = por %p411, %p412
    %p414 = scmp.ne.s32.totalorder %s400, %s401
    %p415 = scmp.eq.s32.totalorder %s27, 1
    %p416 = por %p414, %p415
    %p418 = scmp.ne.s32.totalorder %s401, %s417
    %p419 = scmp.eq.s32.totalorder %s27, 0
    %p420 = por %p418, %p419
    %s421 = ssub.s32 %s28, %s40
    %p422 = scmp.eq.s32.totalorder %s421, 0
    %s424 = sadd.s32 %s423, 1
    %s425 = scalar_select %p422, %s423, %s424
    %p428 = pneg %p422
    %p429 = scmp.eq.s32.totalorder %s21, 1
    %p430 = por %p428, %p429
    %p431 = scmp.ne.s32.totalorder %s423, %s426
    %p432 = scmp.eq.s32.totalorder %s21, 0
    %p433 = por %p431, %p432
    %p434 = scmp.ne.s32.totalorder %s423, %s426
    %p435 = scmp.eq.s32.totalorder %s26, 1
    %p436 = por %p434, %p435
    %p437 = scmp.ne.s32.totalorder %s426, %s427
    %p438 = scmp.eq.s32.totalorder %s26, 0
    %p439 = por %p437, %p438
    %p440 = scmp.ne.s32.totalorder %s426, %s427
    %p441 = scmp.eq.s32.totalorder %s27, 1
    %p442 = por %p440, %p441
    %p444 = scmp.ne.s32.totalorder %s427, %s443
    %p445 = scmp.eq.s32.totalorder %s27, 0
    %p446 = por %p444, %p445
    %p447 = scmp.le.s32.totalorder 1, %s21
    %p448 = scmp.lt.s32.totalorder %s21, 3
    %p449 = pnand %p447, %p448
    %p450 = pneg %p449
    // Predicated region
    $region9: #{_lambda_.4} parent=5 // pred_check
      _
    $region10: #{_lambda_.4} parent=5 // pred_check_branch
      %452 = sbr.rel (%p449) target = $region12
    $region11: #{_lambda_.4} parent=5 // pred_region
      %s453 = ssub.s32 %s21, 1
      // Predicated region
      $region13: #{_lambda_.4} parent=11 // pred_check
        %p454 = pneg %p59
      $region14: #{_lambda_.4} parent=11 // pred_check_branch
        %456 = sbr.rel (%p454) target = $region16
      $region15: #{_lambda_.4} parent=11 // pred_region
        %p457 = scmp.lt.s32.totalorder %s30, 0
        %s458 = scalar_select %p457, %s30, 0
        %s459 = smul.addr %s458, 4
        %s460 = smul.addr %s459, 8
        %s461 = scalar_lea.vmem %s0, %s460
      $region16: #{_lambda_.4} parent=11 // pred_fallthru
        _
      // Predicated region
      $region17: #{_lambda_.4} parent=11 // pred_check
        %p462 = pneg %p184
      $region18: #{_lambda_.4} parent=11 // pred_check_branch
        %464 = sbr.rel (%p462) target = $region20
      $region19: #{_lambda_.4} parent=11 // pred_region
        _
      $region20: #{_lambda_.4} parent=11 // pred_fallthru
        _
      // Predicated region
      $region21: #{_lambda_.4} parent=11 // pred_check
        %p465 = pneg %p205
      $region22: #{_lambda_.4} parent=11 // pred_check_branch
        %467 = sbr.rel (%p465) target = $region24
      $region23: #{_lambda_.4} parent=11 // pred_region
        _
      $region24: #{_lambda_.4} parent=11 // pred_fallthru
        _
    $region12: #{_lambda_.4} parent=5 // pred_fallthru
      _
    %p468 = scmp.lt.s32.totalorder %s21, 2
    // Predicated region
    $region25: #{_lambda_.4} parent=5 // pred_check
      %p469 = pneg %p468
    $region26: #{_lambda_.4} parent=5 // pred_check_branch
      %471 = sbr.rel (%p469) target = $region28
    $region27: #{_lambda_.4} parent=5 // pred_region
      // Predicated region
      $region29: #{_lambda_.4} parent=27 // pred_check
        %p472 = pneg %p79
      $region30: #{_lambda_.4} parent=27 // pred_check_branch
        %474 = sbr.rel (%p472) target = $region32
      $region31: #{_lambda_.4} parent=27 // pred_region
        %p475 = scmp.lt.s32.totalorder %s29, 1
        %s476 = scalar_select %p475, %s29, 1
        %s477 = scalar_lea.vmem %s1, %s476
      $region32: #{_lambda_.4} parent=27 // pred_fallthru
        _
      // Predicated region
      $region33: #{_lambda_.4} parent=27 // pred_check
        %p478 = pneg %p105
      $region34: #{_lambda_.4} parent=27 // pred_check_branch
        %480 = sbr.rel (%p478) target = $region36
      $region35: #{_lambda_.4} parent=27 // pred_region
        %p481 = scmp.lt.s32.totalorder %s29, 1
        %s482 = scalar_select %p481, %s29, 1
        %s483 = scalar_lea.vmem %s2, %s482
      $region36: #{_lambda_.4} parent=27 // pred_fallthru
        _
      // Predicated region
      $region37: #{_lambda_.4} parent=27 // pred_check
        %p484 = pneg %p131
      $region38: #{_lambda_.4} parent=27 // pred_check_branch
        %486 = sbr.rel (%p484) target = $region40
      $region39: #{_lambda_.4} parent=27 // pred_region
        %p487 = scmp.lt.s32.totalorder %s29, 1
        %s488 = scalar_select %p487, %s29, 1
        %s489 = smul.addr %s488, 48
        %s490 = smul.addr %s489, 8
        %s491 = scalar_lea.vmem %s3, %s490
      $region40: #{_lambda_.4} parent=27 // pred_fallthru
        _
      // Predicated region
      $region41: #{_lambda_.4} parent=27 // pred_check
        %p492 = pneg %p157
      $region42: #{_lambda_.4} parent=27 // pred_check_branch
        %494 = sbr.rel (%p492) target = $region44
      $region43: #{_lambda_.4} parent=27 // pred_region
        %p495 = scmp.lt.s32.totalorder %s29, 1
        %s496 = scalar_select %p495, %s29, 1
        %s497 = smul.addr %s496, 3
        %s498 = scalar_lea.vmem %s4, %s497
      $region44: #{_lambda_.4} parent=27 // pred_fallthru
        _
      // Predicated region
      $region45: #{_lambda_.4} parent=27 // pred_check
        %p499 = pneg %p225
      $region46: #{_lambda_.4} parent=27 // pred_check_branch
        %501 = sbr.rel (%p499) target = $region48
      $region47: #{_lambda_.4} parent=27 // pred_region
        %p502 = scmp.lt.s32.totalorder %s29, 1
        %s503 = scalar_select %p502, %s29, 1
        %s504 = smul.addr %s503, 16
        %s505 = smul.addr %s504, 8
        %s506 = scalar_lea.vmem %s7, %s505
      $region48: #{_lambda_.4} parent=27 // pred_fallthru
        _
      // Predicated region
      $region49: #{_lambda_.4} parent=27 // pred_check
        %p507 = pneg %p251
      $region50: #{_lambda_.4} parent=27 // pred_check_branch
        %509 = sbr.rel (%p507) target = $region52
      $region51: #{_lambda_.4} parent=27 // pred_region
        %p510 = scmp.lt.s32.totalorder %s29, 1
        %s511 = scalar_select %p510, %s29, 1
        %s512 = scalar_lea.vmem %s8, %s511
      $region52: #{_lambda_.4} parent=27 // pred_fallthru
        _
      // Predicated region
      $region53: #{_lambda_.4} parent=27 // pred_check
        %p513 = pneg %p277
      $region54: #{_lambda_.4} parent=27 // pred_check_branch
        %515 = sbr.rel (%p513) target = $region56
      $region55: #{_lambda_.4} parent=27 // pred_region
        %p516 = scmp.lt.s32.totalorder %s29, 1
        %s517 = scalar_select %p516, %s29, 1
        %s518 = scalar_lea.vmem %s9, %s517
      $region56: #{_lambda_.4} parent=27 // pred_fallthru
        _
      // Predicated region
      $region57: #{_lambda_.4} parent=27 // pred_check
        %p519 = pneg %p303
      $region58: #{_lambda_.4} parent=27 // pred_check_branch
        %521 = sbr.rel (%p519) target = $region60
      $region59: #{_lambda_.4} parent=27 // pred_region
        %p522 = scmp.lt.s32.totalorder %s29, 1
        %s523 = scalar_select %p522, %s29, 1
        %s524 = scalar_lea.vmem %s10, %s523
      $region60: #{_lambda_.4} parent=27 // pred_fallthru
        _
      // Predicated region
      $region61: #{_lambda_.4} parent=27 // pred_check
        %p525 = pneg %p329
      $region62: #{_lambda_.4} parent=27 // pred_check_branch
        %527 = sbr.rel (%p525) target = $region64
      $region63: #{_lambda_.4} parent=27 // pred_region
        %p528 = scmp.lt.s32.totalorder %s29, 1
        %s529 = scalar_select %p528, %s29, 1
        %s530 = smul.addr %s529, 64
        %s531 = smul.addr %s530, 8
        %s532 = scalar_lea.vmem %s11, %s531
      $region64: #{_lambda_.4} parent=27 // pred_fallthru
        _
      // Predicated region
      $region65: #{_lambda_.4} parent=27 // pred_check
        %p533 = pneg %p355
      $region66: #{_lambda_.4} parent=27 // pred_check_branch
        %535 = sbr.rel (%p533) target = $region68
      $region67: #{_lambda_.4} parent=27 // pred_region
        %p536 = scmp.lt.s32.totalorder %s29, 1
        %s537 = scalar_select %p536, %s29, 1
        %s538 = smul.addr %s537, 4
        %s539 = scalar_lea.vmem %s12, %s538
      $region68: #{_lambda_.4} parent=27 // pred_fallthru
        _
      // Predicated region
      $region69: #{_lambda_.4} parent=27 // pred_check
        %p540 = pneg %p381
      $region70: #{_lambda_.4} parent=27 // pred_check_branch
        %542 = sbr.rel (%p540) target = $region72
      $region71: #{_lambda_.4} parent=27 // pred_region
        %p543 = scmp.lt.s32.totalorder %s29, 1
        %s544 = scalar_select %p543, %s29, 1
        %s545 = smul.addr %s544, 64
        %s546 = smul.addr %s545, 8
        %s547 = scalar_lea.vmem %s13, %s546
      $region72: #{_lambda_.4} parent=27 // pred_fallthru
        _
      // Predicated region
      $region73: #{_lambda_.4} parent=27 // pred_check
        %p548 = pneg %p407
      $region74: #{_lambda_.4} parent=27 // pred_check_branch
        %550 = sbr.rel (%p548) target = $region76
      $region75: #{_lambda_.4} parent=27 // pred_region
        %p551 = scmp.lt.s32.totalorder %s29, 1
        %s552 = scalar_select %p551, %s29, 1
        %s553 = scalar_lea.vmem %s14, %s552
      $region76: #{_lambda_.4} parent=27 // pred_fallthru
        _
    $region28: #{_lambda_.4} parent=5 // pred_fallthru
      _
    %p554 = scmp.le.s32.totalorder 1, %s21
    %p555 = scmp.lt.s32.totalorder %s21, 3
    %p556 = pnand %p554, %p555
    %p557 = pneg %p556
    // Predicated region
    $region77: #{_lambda_.4} parent=5 // pred_check
      _
    $region78: #{_lambda_.4} parent=5 // pred_check_branch
      %559 = sbr.rel (%p556) target = $region80
    $region79: #{_lambda_.4} parent=5 // pred_region
      %s560 = ssub.s32 %s21, 1
      %p561 = scmp.lt.s32.totalorder %s30, 0
      %s562 = scalar_select %p561, %s30, 0
      %s563 = smul.addr %s562, 4
      %s564 = smul.addr %s563, 8
      %s565 = scalar_lea.vmem %s0, %s564
      %p566 = pneg %p59
      %p567 = pneg %p56
      %p568 = scmp.lt.s32.totalorder %s31, 1
      %s569 = scalar_select %p568, %s31, 1
      %s570 = scalar_lea.vmem %s1, %s569
      %p571 = pneg %p85
      %p572 = pneg %p82
      %p573 = scmp.lt.s32.totalorder %s31, 1
      %s574 = scalar_select %p573, %s31, 1
      %s575 = scalar_lea.vmem %s2, %s574
      %p576 = pneg %p111
      %p577 = pneg %p108
      %p578 = scmp.lt.s32.totalorder %s31, 1
      %s579 = scalar_select %p578, %s31, 1
      %s580 = smul.addr %s579, 48
      %s581 = smul.addr %s580, 8
      %s582 = scalar_lea.vmem %s3, %s581
      %p583 = pneg %p137
      %p584 = pneg %p134
      %p585 = scmp.lt.s32.totalorder %s31, 1
      %s586 = scalar_select %p585, %s31, 1
      %s587 = smul.addr %s586, 3
      %s588 = scalar_lea.vmem %s4, %s587
      %p589 = pneg %p163
      %p590 = pneg %p160
      %p591 = pneg %p184
      %p592 = pneg %p181
      %p593 = pneg %p205
      %p594 = pneg %p202
      %p595 = scmp.lt.s32.totalorder %s31, 1
      %s596 = scalar_select %p595, %s31, 1
      %s597 = smul.addr %s596, 16
      %s598 = smul.addr %s597, 8
      %s599 = scalar_lea.vmem %s7, %s598
      %p600 = pneg %p231
      %p601 = pneg %p228
      %p602 = scmp.lt.s32.totalorder %s31, 1
      %s603 = scalar_select %p602, %s31, 1
      %s604 = scalar_lea.vmem %s8, %s603
      %p605 = pneg %p257
      %p606 = pneg %p254
      %p607 = scmp.lt.s32.totalorder %s31, 1
      %s608 = scalar_select %p607, %s31, 1
      %s609 = scalar_lea.vmem %s9, %s608
      %p610 = pneg %p283
      %p611 = pneg %p280
      %p612 = scmp.lt.s32.totalorder %s31, 1
      %s613 = scalar_select %p612, %s31, 1
      %s614 = scalar_lea.vmem %s10, %s613
      %p615 = pneg %p309
      %p616 = pneg %p306
      %p617 = scmp.lt.s32.totalorder %s31, 1
      %s618 = scalar_select %p617, %s31, 1
      %s619 = smul.addr %s618, 64
      %s620 = smul.addr %s619, 8
      %s621 = scalar_lea.vmem %s11, %s620
      %p622 = pneg %p335
      %p623 = pneg %p332
      %p624 = scmp.lt.s32.totalorder %s31, 1
      %s625 = scalar_select %p624, %s31, 1
      %s626 = smul.addr %s625, 4
      %s627 = scalar_lea.vmem %s12, %s626
      %p628 = pneg %p361
      %p629 = pneg %p358
      %p630 = scmp.lt.s32.totalorder %s31, 1
      %s631 = scalar_select %p630, %s31, 1
      %s632 = smul.addr %s631, 64
      %s633 = smul.addr %s632, 8
      %s634 = scalar_lea.vmem %s13, %s633
      %p635 = pneg %p387
      %p636 = pneg %p384
      %p637 = scmp.lt.s32.totalorder %s31, 1
      %s638 = scalar_select %p637, %s31, 1
      %s639 = scalar_lea.vmem %s14, %s638
      %p640 = pneg %p413
      %p641 = pneg %p410
      %p642 = pneg %p439
      %p643 = pneg %p436
      %p644 = scmp.lt.s32.totalorder %s30, 0
      %s645 = scalar_select %p644, %s30, 0
      %s646 = smul.addr %s645, 4
      %s647 = smul.addr %s646, 8
      %s648 = scalar_lea.vmem %s15, %s647
      %p649 = scmp.lt.s32.totalorder %s30, 0
      %s650 = scalar_select %p649, %s30, 0
      %s651 = smul.addr %s650, 4
      %s652 = smul.addr %s651, 8
      %s653 = scalar_lea.vmem %s0, %s652
      %p654 = scmp.lt.s32.totalorder %s31, 1
      %s655 = scalar_select %p654, %s31, 1
      %s656 = scalar_lea.vmem %s1, %s655
      %p657 = scmp.lt.s32.totalorder %s31, 1
      %s658 = scalar_select %p657, %s31, 1
      %s659 = scalar_lea.vmem %s2, %s658
      %p660 = scmp.lt.s32.totalorder %s31, 1
      %s661 = scalar_select %p660, %s31, 1
      %s662 = smul.addr %s661, 48
      %s663 = smul.addr %s662, 8
      %s664 = scalar_lea.vmem %s3, %s663
      %p665 = scmp.lt.s32.totalorder %s31, 1
      %s666 = scalar_select %p665, %s31, 1
      %s667 = smul.addr %s666, 3
      %s668 = scalar_lea.vmem %s4, %s667
      %p669 = scmp.lt.s32.totalorder %s31, 1
      %s670 = scalar_select %p669, %s31, 1
      %s671 = smul.addr %s670, 16
      %s672 = smul.addr %s671, 8
      %s673 = scalar_lea.vmem %s7, %s672
      %p674 = scmp.lt.s32.totalorder %s31, 1
      %s675 = scalar_select %p674, %s31, 1
      %s676 = scalar_lea.vmem %s8, %s675
      %p677 = scmp.lt.s32.totalorder %s31, 1
      %s678 = scalar_select %p677, %s31, 1
      %s679 = scalar_lea.vmem %s9, %s678
      %p680 = scmp.lt.s32.totalorder %s31, 1
      %s681 = scalar_select %p680, %s31, 1
      %s682 = scalar_lea.vmem %s10, %s681
      %p683 = scmp.lt.s32.totalorder %s31, 1
      %s684 = scalar_select %p683, %s31, 1
      %s685 = smul.addr %s684, 64
      %s686 = smul.addr %s685, 8
      %s687 = scalar_lea.vmem %s11, %s686
      %p688 = scmp.lt.s32.totalorder %s31, 1
      %s689 = scalar_select %p688, %s31, 1
      %s690 = smul.addr %s689, 4
      %s691 = scalar_lea.vmem %s12, %s690
      %p692 = scmp.lt.s32.totalorder %s31, 1
      %s693 = scalar_select %p692, %s31, 1
      %s694 = smul.addr %s693, 64
      %s695 = smul.addr %s694, 8
      %s696 = scalar_lea.vmem %s13, %s695
      %p697 = scmp.lt.s32.totalorder %s31, 1
      %s698 = scalar_select %p697, %s31, 1
      %s699 = scalar_lea.vmem %s14, %s698
      %p700 = scmp.lt.s32.totalorder %s30, 0
      %s701 = scalar_select %p700, %s30, 0
      %s702 = smul.addr %s701, 4
      %s703 = smul.addr %s702, 8
      %s704 = scalar_lea.vmem %s15, %s703
      %p705 = scmp.eq.s32.totalorder %s31, 0
      // Predicated region
      $region81: #{_lambda_.4} parent=79 // pred_check
        %p706 = pneg %p705
      $region82: #{_lambda_.4} parent=79 // pred_check_branch
        %708 = sbr.rel (%p706) target = $region84
      $region83: #{_lambda_.4} parent=79 // pred_region
        %v709 = vld [vmem:[%s653] sm:$0xff]
        %v710 = vld [vmem:[%s653 + $0x8] sm:$0xff]
        %v711 = vld [vmem:[%s653 + $0x10] sm:$0xff]
        %v712 = vld [vmem:[%s653 + $0x18] sm:$0xff]
        %713 = vst [vmem:[#allocation2] sm:$0xff] %v709
        %714 = vst [vmem:[#allocation2 + $0x8] sm:$0xff] %v710
        %715 = vst [vmem:[#allocation2 + $0x10] sm:$0xff] %v711
        %716 = vst [vmem:[#allocation2 + $0x18] sm:$0xff] %v712
      $region84: #{_lambda_.4} parent=79 // pred_fallthru
        _
      %v717 = vld [vmem:[#allocation2] sm:$0xff]
      %v718 = vld [vmem:[#allocation2 + $0x8] sm:$0xff]
      %v719 = vld [vmem:[#allocation2 + $0x10] sm:$0xff]
      %v720 = vld [vmem:[#allocation2 + $0x18] sm:$0xff]
      %v721 = vld [vmem:[%s656] sm:$0x1]
      %v722 = vld [vmem:[%s659] sm:$0x1]
      %723 = vadd.xlane.f32.xlu0 %v717
      %v724 = vpop.xlane.xlu0 %723
      %725 = vadd.xlane.f32.xlu0 %v718
      %v726 = vpop.xlane.xlu0 %725
      %727 = vadd.xlane.f32.xlu0 %v719
      %v728 = vpop.xlane.xlu0 %727
      %729 = vadd.xlane.f32.xlu0 %v720
      %v730 = vpop.xlane.xlu0 %729
      %v731 = vrcp.pop 128.0
      %v732 = vmul.f32 %v724, %v731
      %v733 = vmul.f32 %v726, %v731
      %v734 = vmul.f32 %v728, %v731
      %v735 = vmul.f32 %v730, %v731
      %v736 = vsub.f32 %v717, %v732
      %v737 = vsub.f32 %v718, %v733
      %v738 = vsub.f32 %v719, %v734
      %v739 = vsub.f32 %v720, %v735
      %v740 = vmul.f32 %v736, %v736
      %v741 = vmul.f32 %v737, %v737
      %v742 = vmul.f32 %v738, %v738
      %v743 = vmul.f32 %v739, %v739
      %744 = vadd.xlane.f32.xlu0 %v740
      %v745 = vpop.xlane.xlu0 %744
      %746 = vadd.xlane.f32.xlu0 %v741
      %v747 = vpop.xlane.xlu0 %746
      %748 = vadd.xlane.f32.xlu0 %v742
      %v749 = vpop.xlane.xlu0 %748
      %750 = vadd.xlane.f32.xlu0 %v743
      %v751 = vpop.xlane.xlu0 %750
      %v752 = vmul.f32 %v745, %v731
      %v753 = vmul.f32 %v747, %v731
      %v754 = vmul.f32 %v749, %v731
      %v755 = vmul.f32 %v751, %v731
      %v756 = vadd.f32 %v752, 1e-05
      %v757 = vadd.f32 %v753, 1e-05
      %v758 = vadd.f32 %v754, 1e-05
      %v759 = vadd.f32 %v755, 1e-05
      %v760 = vrsqrt.pop %v756
      %v761 = vrsqrt.pop %v757
      %v762 = vrsqrt.pop %v758
      %v763 = vrsqrt.pop %v759
      %v764 = vmul.f32 %v736, %v760
      %v765 = vmul.f32 %v737, %v761
      %v766 = vmul.f32 %v738, %v762
      %v767 = vmul.f32 %v739, %v763
      %v769 = vlaneseq
      %v770 = vshrl.u32 %v769, 7
      %v771 = vsub.s32 0, %v770
      %v772 = vrot.slane %v721, %v771
      %v774 = vmul.f32 %v764, %v772
      %v775 = vmul.f32 %v765, %v772
      %v776 = vmul.f32 %v766, %v772
      %v777 = vmul.f32 %v767, %v772
      %v779 = vlaneseq
      %v780 = vshrl.u32 %v779, 7
      %v781 = vsub.s32 0, %v780
      %v782 = vrot.slane %v722, %v781
      %v784 = vadd.f32 %v774, %v782
      %v785 = vadd.f32 %v775, %v782
      %v786 = vadd.f32 %v776, %v782
      %v787 = vadd.f32 %v777, %v782
      %v788 = vld [vmem:[%s664] sm:$0xff]
      %v789 = vld [vmem:[%s664 + $0x8] sm:$0xff]
      %v790 = vld [vmem:[%s664 + $0x10] sm:$0xff]
      %v791 = vld [vmem:[%s664 + $0x18] sm:$0xff]
      %v792 = vld [vmem:[%s664 + $0x20] sm:$0xff]
      %v793 = vld [vmem:[%s664 + $0x28] sm:$0xff]
      %v794 = vld [vmem:[%s664 + $0x30] sm:$0xff]
      %v795 = vld [vmem:[%s664 + $0x38] sm:$0xff]
      %v796 = vld [vmem:[%s664 + $0x40] sm:$0xff]
      %v797 = vld [vmem:[%s664 + $0x48] sm:$0xff]
      %v798 = vld [vmem:[%s664 + $0x50] sm:$0xff]
      %v799 = vld [vmem:[%s664 + $0x58] sm:$0xff]
      %v800 = vld [vmem:[%s664 + $0x60] sm:$0xff]
      %v801 = vld [vmem:[%s664 + $0x68] sm:$0xff]
      %v802 = vld [vmem:[%s664 + $0x70] sm:$0xff]
      %v803 = vld [vmem:[%s664 + $0x78] sm:$0xff]
      %v804 = vld [vmem:[%s664 + $0x80] sm:$0xff]
      %v805 = vld [vmem:[%s664 + $0x88] sm:$0xff]
      %v806 = vld [vmem:[%s664 + $0x90] sm:$0xff]
      %v807 = vld [vmem:[%s664 + $0x98] sm:$0xff]
      %v808 = vld [vmem:[%s664 + $0xa0] sm:$0xff]
      %v809 = vld [vmem:[%s664 + $0xa8] sm:$0xff]
      %v810 = vld [vmem:[%s664 + $0xb0] sm:$0xff]
      %v811 = vld [vmem:[%s664 + $0xb8] sm:$0xff]
      %v812 = vld [vmem:[%s664 + $0xc0] sm:$0xff]
      %v813 = vld [vmem:[%s664 + $0xc8] sm:$0xff]
      %v814 = vld [vmem:[%s664 + $0xd0] sm:$0xff]
      %v815 = vld [vmem:[%s664 + $0xd8] sm:$0xff]
      %v816 = vld [vmem:[%s664 + $0xe0] sm:$0xff]
      %v817 = vld [vmem:[%s664 + $0xe8] sm:$0xff]
      %v818 = vld [vmem:[%s664 + $0xf0] sm:$0xff]
      %v819 = vld [vmem:[%s664 + $0xf8] sm:$0xff]
      %v820 = vld [vmem:[%s664 + $0x100] sm:$0xff]
      %v821 = vld [vmem:[%s664 + $0x108] sm:$0xff]
      %v822 = vld [vmem:[%s664 + $0x110] sm:$0xff]
      %v823 = vld [vmem:[%s664 + $0x118] sm:$0xff]
      %v824 = vld [vmem:[%s664 + $0x120] sm:$0xff]
      %v825 = vld [vmem:[%s664 + $0x128] sm:$0xff]
      %v826 = vld [vmem:[%s664 + $0x130] sm:$0xff]
      %v827 = vld [vmem:[%s664 + $0x138] sm:$0xff]
      %v828 = vld [vmem:[%s664 + $0x140] sm:$0xff]
      %v829 = vld [vmem:[%s664 + $0x148] sm:$0xff]
      %v830 = vld [vmem:[%s664 + $0x150] sm:$0xff]
      %v831 = vld [vmem:[%s664 + $0x158] sm:$0xff]
      %v832 = vld [vmem:[%s664 + $0x160] sm:$0xff]
      %v833 = vld [vmem:[%s664 + $0x168] sm:$0xff]
      %v834 = vld [vmem:[%s664 + $0x170] sm:$0xff]
      %v835 = vld [vmem:[%s664 + $0x178] sm:$0xff]
      %v836 = vld [vmem:[%s668] sm:$0x7]
      %v838 = vlaneseq
      %v839 = vshrl.u32 %v838, 7
      %v840 = vsub.s32 0, %v839
      %v841 = vrot.slane %v836, %v840
      %v842 = vlaneseq
      %v843 = vshrl.u32 %v842, 7
      %v844 = vsub.s32 1, %v843
      %v845 = vrot.slane %v836, %v844
      %v846 = vlaneseq
      %v847 = vshrl.u32 %v846, 7
      %v848 = vsub.s32 2, %v847
      %v849 = vrot.slane %v836, %v848
      %853 = vmatprep.subr.mxu0 %v834
      %854 = vmatpush1.msra.mxu0 %v833
      %855 = vmatprep.subr.mxu0 %v831
      %856 = vmatpush1.msra.mxu0 %v830
      %857 = vmatprep.subr.mxu0 %v828
      %858 = vmatpush1.msra.mxu0 %v827
      %859 = vmatprep.subr.mxu0 %v825
      %860 = vmatpush1.msra.mxu0 %v824
      %861 = vmatprep.subr.mxu0 %v822
      %862 = vmatpush1.msra.mxu0 %v821
      %863 = vmatprep.subr.mxu0 %v819
      %864 = vmatpush1.msra.mxu0 %v818
      %865 = vmatprep.subr.mxu0 %v816
      %866 = vmatpush1.msra.mxu0 %v815
      %867 = vmatprep.subr.mxu0 %v813
      %868 = vmatpush1.msra.mxu0 %v812
      %869 = vmatprep.subr.mxu0 %v810
      %870 = vmatpush1.msra.mxu0 %v809
      %871 = vmatprep.subr.mxu0 %v807
      %872 = vmatpush1.msra.mxu0 %v806
      %873 = vmatprep.subr.mxu0 %v804
      %874 = vmatpush1.msra.mxu0 %v803
      %875 = vmatprep.subr.mxu0 %v801
      %876 = vmatpush1.msra.mxu0 %v800
      %877 = vmatprep.subr.mxu0 %v798
      %878 = vmatpush1.msra.mxu0 %v797
      %879 = vmatprep.subr.mxu0 %v795
      %880 = vmatpush1.msra.mxu0 %v794
      %881 = vmatprep.subr.mxu0 %v792
      %882 = vmatpush1.msra.mxu0 %v791
      %883 = vmatprep.subr.mxu0 %v789
      %884 = vmatpush1.msra.mxu0 %v788
      %885 = vmatprep.subr.mxu0 0.0
      %886 = vmatpush2.msra.mxu0 0.0
      %887 = vmatprep.subr.mxu0 0.0
      %888 = vmatpush2.msra.mxu0 0.0
      %889 = vmatprep.subr.mxu0 0.0
      %890 = vmatpush2.msra.mxu0 0.0
      %891 = vmatprep.subr.mxu0 0.0
      %892 = vmatpush2.msra.mxu0 0.0
      %893 = vmatprep.subr.mxu0 0.0
      %894 = vmatpush2.msra.mxu0 0.0
      %895 = vmatprep.subr.mxu0 0.0
      %896 = vmatpush2.msra.mxu0 0.0
      %897 = vmatprep.subr.mxu0 0.0
      %898 = vmatpush2.msra.mxu0 0.0
      %899 = vmatprep.subr.mxu0 0.0
      %900 = vmatpush2.msra.mxu0 0.0
      %901 = vmatprep.subr.mxu0 0.0
      %902 = vmatpush2.msra.mxu0 0.0
      %903 = vmatprep.subr.mxu0 0.0
      %904 = vmatpush2.msra.mxu0 0.0
      %905 = vmatprep.subr.mxu0 0.0
      %906 = vmatpush2.msra.mxu0 0.0
      %907 = vmatprep.subr.mxu0 0.0
      %908 = vmatpush2.msra.mxu0 0.0
      %909 = vmatprep.subr.mxu0 0.0
      %910 = vmatpush2.msra.mxu0 0.0
      %911 = vmatprep.subr.mxu0 0.0
      %912 = vmatpush2.msra.mxu0 0.0
      %913 = vmatprep.subr.mxu0 0.0
      %914 = vmatpush2.msra.mxu0 0.0
      %915 = vmatprep.subr.mxu0 0.0
      %916 = vmatpush2.msra.mxu0 0.0
      %917 = vmatprep.mubr.f32.mxu0 0.0
      %918 = vmatmul.mubr.f32.gmra.mxu0 %v784
      %v919 = vpop.f32.mrf.mxu0
      %v920 = vadd.f32 %v841, %v919
      %v921 = vpop.f32.mrf.mxu0
      %v922 = vadd.f32 %v845, %v921
      %923 = vmatprep.mubr.f32.mxu0 0.0
      %924 = vmatmul.mubr.f32.gmra.mxu0 %v785
      %v925 = vpop.f32.mrf.mxu0
      %v926 = vadd.f32 %v841, %v925
      %v927 = vpop.f32.mrf.mxu0
      %v928 = vadd.f32 %v845, %v927
      %929 = vmatprep.mubr.f32.mxu0 0.0
      %930 = vmatmul.mubr.f32.gmra.mxu0 %v786
      %v931 = vpop.f32.mrf.mxu0
      %v932 = vadd.f32 %v841, %v931
      %v933 = vpop.f32.mrf.mxu0
      %v934 = vadd.f32 %v845, %v933
      %935 = vmatprep.mubr.f32.mxu0 0.0
      %936 = vmatmul.mubr.f32.gmra.mxu0 %v787
      %v937 = vpop.f32.mrf.mxu0
      %v938 = vadd.f32 %v841, %v937
      %v939 = vpop.f32.mrf.mxu0
      %v940 = vadd.f32 %v845, %v939
      %941 = vdwg.mxu0
      %942 = vmatprep.subr.mxu0 0.0
      %943 = vmatpush1.msra.mxu0 %v835
      %944 = vmatprep.subr.mxu0 0.0
      %945 = vmatpush1.msra.mxu0 %v832
      %946 = vmatprep.subr.mxu0 0.0
      %947 = vmatpush1.msra.mxu0 %v829
      %948 = vmatprep.subr.mxu0 0.0
      %949 = vmatpush1.msra.mxu0 %v826
      %950 = vmatprep.subr.mxu0 0.0
      %951 = vmatpush1.msra.mxu0 %v823
      %952 = vmatprep.subr.mxu0 0.0
      %953 = vmatpush1.msra.mxu0 %v820
      %954 = vmatprep.subr.mxu0 0.0
      %955 = vmatpush1.msra.mxu0 %v817
      %956 = vmatprep.subr.mxu0 0.0
      %957 = vmatpush1.msra.mxu0 %v814
      %958 = vmatprep.subr.mxu0 0.0
      %959 = vmatpush1.msra.mxu0 %v811
      %960 = vmatprep.subr.mxu0 0.0
      %961 = vmatpush1.msra.mxu0 %v808
      %962 = vmatprep.subr.mxu0 0.0
      %963 = vmatpush1.msra.mxu0 %v805
      %964 = vmatprep.subr.mxu0 0.0
      %965 = vmatpush1.msra.mxu0 %v802
      %966 = vmatprep.subr.mxu0 0.0
      %967 = vmatpush1.msra.mxu0 %v799
      %968 = vmatprep.subr.mxu0 0.0
      %969 = vmatpush1.msra.mxu0 %v796
      %970 = vmatprep.subr.mxu0 0.0
      %971 = vmatpush1.msra.mxu0 %v793
      %972 = vmatprep.subr.mxu0 0.0
      %973 = vmatpush1.msra.mxu0 %v790
      %974 = vmatprep.subr.mxu0 0.0
      %975 = vmatpush2.msra.mxu0 0.0
      %976 = vmatprep.subr.mxu0 0.0
      %977 = vmatpush2.msra.mxu0 0.0
      %978 = vmatprep.subr.mxu0 0.0
      %979 = vmatpush2.msra.mxu0 0.0
      %980 = vmatprep.subr.mxu0 0.0
      %981 = vmatpush2.msra.mxu0 0.0
      %982 = vmatprep.subr.mxu0 0.0
      %983 = vmatpush2.msra.mxu0 0.0
      %984 = vmatprep.subr.mxu0 0.0
      %985 = vmatpush2.msra.mxu0 0.0
      %986 = vmatprep.subr.mxu0 0.0
      %987 = vmatpush2.msra.mxu0 0.0
      %988 = vmatprep.subr.mxu0 0.0
      %989 = vmatpush2.msra.mxu0 0.0
      %990 = vmatprep.subr.mxu0 0.0
      %991 = vmatpush2.msra.mxu0 0.0
      %992 = vmatprep.subr.mxu0 0.0
      %993 = vmatpush2.msra.mxu0 0.0
      %994 = vmatprep.subr.mxu0 0.0
      %995 = vmatpush2.msra.mxu0 0.0
      %996 = vmatprep.subr.mxu0 0.0
      %997 = vmatpush2.msra.mxu0 0.0
      %998 = vmatprep.subr.mxu0 0.0
      %999 = vmatpush2.msra.mxu0 0.0
      %1000 = vmatprep.subr.mxu0 0.0
      %1001 = vmatpush2.msra.mxu0 0.0
      %1002 = vmatprep.subr.mxu0 0.0
      %1003 = vmatpush2.msra.mxu0 0.0
      %1004 = vmatprep.subr.mxu0 0.0
      %1005 = vmatpush2.msra.mxu0 0.0
      %1006 = vmatprep.mubr.f32.mxu0 0.0
      %1007 = vmatmul.mubr.f32.gmra.mxu0 %v784
      %v1008 = vpop.f32.mrf.mxu0
      %v1009 = vadd.f32 %v849, %v1008
      %v1010 = vpop.f32.mrf.mxu0
      %1011 = vmatprep.mubr.f32.mxu0 0.0
      %1012 = vmatmul.mubr.f32.gmra.mxu0 %v785
      %v1013 = vpop.f32.mrf.mxu0
      %v1014 = vadd.f32 %v849, %v1013
      %v1015 = vpop.f32.mrf.mxu0
      %1016 = vmatprep.mubr.f32.mxu0 0.0
      %1017 = vmatmul.mubr.f32.gmra.mxu0 %v786
      %v1018 = vpop.f32.mrf.mxu0
      %v1019 = vadd.f32 %v849, %v1018
      %v1020 = vpop.f32.mrf.mxu0
      %1021 = vmatprep.mubr.f32.mxu0 0.0
      %1022 = vmatmul.mubr.f32.gmra.mxu0 %v787
      %v1023 = vpop.f32.mrf.mxu0
      %v1024 = vadd.f32 %v849, %v1023
      %v1025 = vpop.f32.mrf.mxu0
      %1026 = vdwg.mxu0
      %v1027 = vld [vmem:[%s5] sm:$0xff]
      %v1028 = vld [vmem:[%s5 + $0x8] sm:$0xff]
      %v1029 = vld [vmem:[%s5 + $0x10] sm:$0xff]
      %v1030 = vld [vmem:[%s5 + $0x18] sm:$0xff]
      %v1031 = vld [vmem:[%s6] sm:$0xff]
      %v1032 = vld [vmem:[%s6 + $0x8] sm:$0xff]
      %v1033 = vld [vmem:[%s6 + $0x10] sm:$0xff]
      %v1034 = vld [vmem:[%s6 + $0x18] sm:$0xff]
      %v1035 = vmul.f32 %v920, %v1027
      %v1036 = vmul.f32 %v926, %v1028
      %v1037 = vmul.f32 %v932, %v1029
      %v1038 = vmul.f32 %v938, %v1030
      %1039 = vrot.lane.b32.xlu0 %v920, 64
      %v1040 = vpop.permute.xlu0 %1039
      %1041 = vrot.lane.b32.xlu0 %v926, 64
      %v1042 = vpop.permute.xlu0 %1041
      %1043 = vrot.lane.b32.xlu0 %v932, 64
      %v1044 = vpop.permute.xlu0 %1043
      %1045 = vrot.lane.b32.xlu0 %v938, 64
      %v1046 = vpop.permute.xlu0 %1045
      %v1047 = vmul.f32 %v1040, %v1031
      %v1048 = vmul.f32 %v1042, %v1032
      %v1049 = vmul.f32 %v1044, %v1033
      %v1050 = vmul.f32 %v1046, %v1034
      %v1051 = vadd.f32 %v1035, %v1047
      %v1052 = vadd.f32 %v1036, %v1048
      %v1053 = vadd.f32 %v1037, %v1049
      %v1054 = vadd.f32 %v1038, %v1050
      %v1055 = vmul.f32 %v922, %v1027
      %v1056 = vmul.f32 %v928, %v1028
      %v1057 = vmul.f32 %v934, %v1029
      %v1058 = vmul.f32 %v940, %v1030
      %1059 = vrot.lane.b32.xlu0 %v922, 64
      %v1060 = vpop.permute.xlu0 %1059
      %1061 = vrot.lane.b32.xlu0 %v928, 64
      %v1062 = vpop.permute.xlu0 %1061
      %1063 = vrot.lane.b32.xlu0 %v934, 64
      %v1064 = vpop.permute.xlu0 %1063
      %1065 = vrot.lane.b32.xlu0 %v940, 64
      %v1066 = vpop.permute.xlu0 %1065
      %v1067 = vmul.f32 %v1060, %v1031
      %v1068 = vmul.f32 %v1062, %v1032
      %v1069 = vmul.f32 %v1064, %v1033
      %v1070 = vmul.f32 %v1066, %v1034
      %v1071 = vadd.f32 %v1055, %v1067
      %v1072 = vadd.f32 %v1056, %v1068
      %v1073 = vadd.f32 %v1057, %v1069
      %v1074 = vadd.f32 %v1058, %v1070
      %v1075 = vld [vmem:[%s673] sm:$0xff]
      %v1076 = vld [vmem:[%s673 + $0x8] sm:$0xff]
      %v1077 = vld [vmem:[%s673 + $0x10] sm:$0xff]
      %v1078 = vld [vmem:[%s673 + $0x18] sm:$0xff]
      %v1079 = vld [vmem:[%s673 + $0x20] sm:$0xff]
      %v1080 = vld [vmem:[%s673 + $0x28] sm:$0xff]
      %v1081 = vld [vmem:[%s673 + $0x30] sm:$0xff]
      %v1082 = vld [vmem:[%s673 + $0x38] sm:$0xff]
      %v1083 = vld [vmem:[%s673 + $0x40] sm:$0xff]
      %v1084 = vld [vmem:[%s673 + $0x48] sm:$0xff]
      %v1085 = vld [vmem:[%s673 + $0x50] sm:$0xff]
      %v1086 = vld [vmem:[%s673 + $0x58] sm:$0xff]
      %v1087 = vld [vmem:[%s673 + $0x60] sm:$0xff]
      %v1088 = vld [vmem:[%s673 + $0x68] sm:$0xff]
      %v1089 = vld [vmem:[%s673 + $0x70] sm:$0xff]
      %v1090 = vld [vmem:[%s673 + $0x78] sm:$0xff]
      %v1091 = vld [vmem:[%s676] sm:$0x1]
      %v1093 = vlaneseq
      %v1094 = vshrl.u32 %v1093, 7
      %v1095 = vsub.s32 0, %v1094
      %v1096 = vrot.slane %v1091, %v1095
      %v1098 = vadd.f32 %v717, %v1096
      %v1099 = vadd.f32 %v718, %v1096
      %1102 = vrot.lane.b32.xlu0 %v1051, 64
      %v1103 = vpop.permute.xlu0 %1102
      %1104 = vrot.lane.b32.xlu0 %v1052, 64
      %v1105 = vpop.permute.xlu0 %1104
      %1108 = vrot.lane.b32.xlu0 %v1071, 64
      %v1109 = vpop.permute.xlu0 %1108
      %1110 = vrot.lane.b32.xlu0 %v1072, 64
      %v1111 = vpop.permute.xlu0 %1110
      %vm1112 = vcmask 130048
      %v1113 = vsel %vm1112, %v1103, 0
      %v1115 = vsel %vm1112, %v1105, 0
      %v1117 = vsel %vm1112, %v1109, 0
      %v1119 = vsel %vm1112, %v1111, 0
      %1121 = vmatprep.subr.mxu0 0.0
      %1122 = vmatpush1.xpose.msra.mxu0 0.0
      %1123 = vmatprep.subr.mxu0 0.0
      %1124 = vmatpush1.xpose.msra.mxu0 0.0
      %1125 = vmatprep.subr.mxu0 0.0
      %1126 = vmatpush1.xpose.msra.mxu0 0.0
      %1127 = vmatprep.subr.mxu0 0.0
      %1128 = vmatpush1.xpose.msra.mxu0 0.0
      %1129 = vmatprep.subr.mxu0 0.0
      %1130 = vmatpush1.xpose.msra.mxu0 0.0
      %1131 = vmatprep.subr.mxu0 0.0
      %1132 = vmatpush1.xpose.msra.mxu0 0.0
      %1133 = vmatprep.subr.mxu0 0.0
      %1134 = vmatpush1.xpose.msra.mxu0 0.0
      %1135 = vmatprep.subr.mxu0 0.0
      %1136 = vmatpush1.xpose.msra.mxu0 0.0
      %1137 = vmatprep.subr.mxu0 0.0
      %1138 = vmatpush1.xpose.msra.mxu0 0.0
      %1139 = vmatprep.subr.mxu0 0.0
      %1140 = vmatpush1.xpose.msra.mxu0 0.0
      %1141 = vmatprep.subr.mxu0 0.0
      %1142 = vmatpush1.xpose.msra.mxu0 0.0
      %1143 = vmatprep.subr.mxu0 0.0
      %1144 = vmatpush1.xpose.msra.mxu0 0.0
      %1145 = vmatprep.subr.mxu0 0.0
      %1146 = vmatpush1.xpose.msra.mxu0 0.0
      %1147 = vmatprep.subr.mxu0 0.0
      %1148 = vmatpush1.xpose.msra.mxu0 0.0
      %1149 = vmatprep.subr.mxu0 0.0
      %1150 = vmatpush1.xpose.msra.mxu0 %v1119
      %1151 = vmatprep.subr.mxu0 0.0
      %1152 = vmatpush1.xpose.msra.mxu0 %v1117
      %1153 = vmatprep.subr.mxu0 0.0
      %1154 = vmatpush2.xpose.msra.mxu0 0.0
      %1155 = vmatprep.subr.mxu0 0.0
      %1156 = vmatpush2.xpose.msra.mxu0 0.0
      %1157 = vmatprep.subr.mxu0 0.0
      %1158 = vmatpush2.xpose.msra.mxu0 0.0
      %1159 = vmatprep.subr.mxu0 0.0
      %1160 = vmatpush2.xpose.msra.mxu0 0.0
      %1161 = vmatprep.subr.mxu0 0.0
      %1162 = vmatpush2.xpose.msra.mxu0 0.0
      %1163 = vmatprep.subr.mxu0 0.0
      %1164 = vmatpush2.xpose.msra.mxu0 0.0
      %1165 = vmatprep.subr.mxu0 0.0
      %1166 = vmatpush2.xpose.msra.mxu0 0.0
      %1167 = vmatprep.subr.mxu0 0.0
      %1168 = vmatpush2.xpose.msra.mxu0 0.0
      %1169 = vmatprep.subr.mxu0 0.0
      %1170 = vmatpush2.xpose.msra.mxu0 0.0
      %1171 = vmatprep.subr.mxu0 0.0
      %1172 = vmatpush2.xpose.msra.mxu0 0.0
      %1173 = vmatprep.subr.mxu0 0.0
      %1174 = vmatpush2.xpose.msra.mxu0 0.0
      %1175 = vmatprep.subr.mxu0 0.0
      %1176 = vmatpush2.xpose.msra.mxu0 0.0
      %1177 = vmatprep.subr.mxu0 0.0
      %1178 = vmatpush2.xpose.msra.mxu0 0.0
      %1179 = vmatprep.subr.mxu0 0.0
      %1180 = vmatpush2.xpose.msra.mxu0 0.0
      %1181 = vmatprep.subr.mxu0 0.0
      %1182 = vmatpush2.xpose.msra.mxu0 0.0
      %1183 = vmatprep.subr.mxu0 0.0
      %1184 = vmatpush2.xpose.msra.mxu0 0.0
      %1185 = vmatprep.mubr.f32.mxu0 0.0
      %1186 = vmatmul.mubr.f32.gmra.mxu0 %v1113
      %v1187 = vpop.f32.mrf.mxu0
      %v1188 = vadd.f32 0.0, %v1187
      %v1189 = vpop.f32.mrf.mxu0
      %1190 = vmatprep.mubr.f32.mxu0 0.0
      %1191 = vmatmul.mubr.f32.gmra.mxu0 %v1115
      %v1192 = vpop.f32.mrf.mxu0
      %v1193 = vadd.f32 0.0, %v1192
      %v1194 = vpop.f32.mrf.mxu0
      %1195 = vdwg.mxu0
      %v1196 = vsel %vm1112, %v1051, 0
      %v1198 = vsel %vm1112, %v1052, 0
      %v1200 = vsel %vm1112, %v1071, 0
      %v1202 = vsel %vm1112, %v1072, 0
      %1204 = vmatprep.subr.mxu0 0.0
      %1205 = vmatpush1.xpose.msra.mxu0 0.0
      %1206 = vmatprep.subr.mxu0 0.0
      %1207 = vmatpush1.xpose.msra.mxu0 0.0
      %1208 = vmatprep.subr.mxu0 0.0
      %1209 = vmatpush1.xpose.msra.mxu0 0.0
      %1210 = vmatprep.subr.mxu0 0.0
      %1211 = vmatpush1.xpose.msra.mxu0 0.0
      %1212 = vmatprep.subr.mxu0 0.0
      %1213 = vmatpush1.xpose.msra.mxu0 0.0
      %1214 = vmatprep.subr.mxu0 0.0
      %1215 = vmatpush1.xpose.msra.mxu0 0.0
      %1216 = vmatprep.subr.mxu0 0.0
      %1217 = vmatpush1.xpose.msra.mxu0 0.0
      %1218 = vmatprep.subr.mxu0 0.0
      %1219 = vmatpush1.xpose.msra.mxu0 0.0
      %1220 = vmatprep.subr.mxu0 0.0
      %1221 = vmatpush1.xpose.msra.mxu0 0.0
      %1222 = vmatprep.subr.mxu0 0.0
      %1223 = vmatpush1.xpose.msra.mxu0 0.0
      %1224 = vmatprep.subr.mxu0 0.0
      %1225 = vmatpush1.xpose.msra.mxu0 0.0
      %1226 = vmatprep.subr.mxu0 0.0
      %1227 = vmatpush1.xpose.msra.mxu0 0.0
      %1228 = vmatprep.subr.mxu0 0.0
      %1229 = vmatpush1.xpose.msra.mxu0 0.0
      %1230 = vmatprep.subr.mxu0 0.0
      %1231 = vmatpush1.xpose.msra.mxu0 0.0
      %1232 = vmatprep.subr.mxu0 0.0
      %1233 = vmatpush1.xpose.msra.mxu0 %v1202
      %1234 = vmatprep.subr.mxu0 0.0
      %1235 = vmatpush1.xpose.msra.mxu0 %v1200
      %1236 = vmatprep.subr.mxu0 0.0
      %1237 = vmatpush2.xpose.msra.mxu0 0.0
      %1238 = vmatprep.subr.mxu0 0.0
      %1239 = vmatpush2.xpose.msra.mxu0 0.0
      %1240 = vmatprep.subr.mxu0 0.0
      %1241 = vmatpush2.xpose.msra.mxu0 0.0
      %1242 = vmatprep.subr.mxu0 0.0
      %1243 = vmatpush2.xpose.msra.mxu0 0.0
      %1244 = vmatprep.subr.mxu0 0.0
      %1245 = vmatpush2.xpose.msra.mxu0 0.0
      %1246 = vmatprep.subr.mxu0 0.0
      %1247 = vmatpush2.xpose.msra.mxu0 0.0
      %1248 = vmatprep.subr.mxu0 0.0
      %1249 = vmatpush2.xpose.msra.mxu0 0.0
      %1250 = vmatprep.subr.mxu0 0.0
      %1251 = vmatpush2.xpose.msra.mxu0 0.0
      %1252 = vmatprep.subr.mxu0 0.0
      %1253 = vmatpush2.xpose.msra.mxu0 0.0
      %1254 = vmatprep.subr.mxu0 0.0
      %1255 = vmatpush2.xpose.msra.mxu0 0.0
      %1256 = vmatprep.subr.mxu0 0.0
      %1257 = vmatpush2.xpose.msra.mxu0 0.0
      %1258 = vmatprep.subr.mxu0 0.0
      %1259 = vmatpush2.xpose.msra.mxu0 0.0
      %1260 = vmatprep.subr.mxu0 0.0
      %1261 = vmatpush2.xpose.msra.mxu0 0.0
      %1262 = vmatprep.subr.mxu0 0.0
      %1263 = vmatpush2.xpose.msra.mxu0 0.0
      %1264 = vmatprep.subr.mxu0 0.0
      %1265 = vmatpush2.xpose.msra.mxu0 0.0
      %1266 = vmatprep.subr.mxu0 0.0
      %1267 = vmatpush2.xpose.msra.mxu0 0.0
      %1268 = vmatprep.mubr.f32.mxu0 0.0
      %1269 = vmatmul.mubr.f32.gmra.mxu0 %v1196
      %v1270 = vpop.f32.mrf.mxu0
      %v1271 = vadd.f32 %v1188, %v1270
      %v1272 = vpop.f32.mrf.mxu0
      %1273 = vmatprep.mubr.f32.mxu0 0.0
      %1274 = vmatmul.mubr.f32.gmra.mxu0 %v1198
      %v1275 = vpop.f32.mrf.mxu0
      %v1276 = vadd.f32 %v1193, %v1275
      %v1277 = vpop.f32.mrf.mxu0
      %1278 = vdwg.mxu0
      %v1279 = vsel %vm1112, %v1271, -inf
      %1280 = vmax.xlane.f32.xlu0 %v1279
      %v1281 = vpop.xlane.xlu0 %1280
      %v1282 = vsel %vm1112, %v1276, -inf
      %1283 = vmax.xlane.f32.xlu0 %v1282
      %v1284 = vpop.xlane.xlu0 %1283
      %v1285 = vsub.f32 %v1271, %v1281
      %v1286 = vsub.f32 %v1276, %v1284
      %v1287 = vmul.f32 %v1285, 1.442695
      %v1288 = vpow.pop %v1287
      %v1289 = vmul.f32 %v1286, 1.442695
      %v1290 = vpow.pop %v1289
      %v1291 = vsel %vm1112, %v1288, 0.0
      %1292 = vadd.xlane.f32.xlu0 %v1291
      %v1293 = vpop.xlane.xlu0 %1292
      %v1294 = vsel %vm1112, %v1290, 0.0
      %1295 = vadd.xlane.f32.xlu0 %v1294
      %v1296 = vpop.xlane.xlu0 %1295
      %v1297 = vrcp.pop %v1293
      %v1298 = vrcp.pop %v1296
      %v1299 = vmul.f32 %v1288, %v1297
      %v1300 = vmul.f32 %v1290, %v1298
      %v1302 = vsel %vm1112, %v1299, 0
      %v1305 = vsel %vm1112, %v1300, 0
      %1307 = vmatprep.subr.mxu0 0.0
      %1308 = vmatpush1.msra.mxu0 0.0
      %1309 = vmatprep.subr.mxu0 0.0
      %1310 = vmatpush1.msra.mxu0 0.0
      %1311 = vmatprep.subr.mxu0 0.0
      %1312 = vmatpush1.msra.mxu0 0.0
      %1313 = vmatprep.subr.mxu0 0.0
      %1314 = vmatpush1.msra.mxu0 0.0
      %1315 = vmatprep.subr.mxu0 0.0
      %1316 = vmatpush1.msra.mxu0 0.0
      %1317 = vmatprep.subr.mxu0 0.0
      %1318 = vmatpush1.msra.mxu0 0.0
      %1319 = vmatprep.subr.mxu0 0.0
      %1320 = vmatpush1.msra.mxu0 0.0
      %1321 = vmatprep.subr.mxu0 0.0
      %1322 = vmatpush1.msra.mxu0 0.0
      %1323 = vmatprep.subr.mxu0 0.0
      %1324 = vmatpush1.msra.mxu0 0.0
      %1325 = vmatprep.subr.mxu0 0.0
      %1326 = vmatpush1.msra.mxu0 0.0
      %1327 = vmatprep.subr.mxu0 0.0
      %1328 = vmatpush1.msra.mxu0 0.0
      %1329 = vmatprep.subr.mxu0 0.0
      %1330 = vmatpush1.msra.mxu0 0.0
      %1331 = vmatprep.subr.mxu0 0.0
      %1332 = vmatpush1.msra.mxu0 0.0
      %1333 = vmatprep.subr.mxu0 0.0
      %1334 = vmatpush1.msra.mxu0 0.0
      %1335 = vmatprep.subr.mxu0 0.0
      %1336 = vmatpush1.msra.mxu0 %v1014
      %1337 = vmatprep.subr.mxu0 0.0
      %1338 = vmatpush1.msra.mxu0 %v1009
      %1339 = vmatprep.subr.mxu0 0.0
      %1340 = vmatpush2.msra.mxu0 0.0
      %1341 = vmatprep.subr.mxu0 0.0
      %1342 = vmatpush2.msra.mxu0 0.0
      %1343 = vmatprep.subr.mxu0 0.0
      %1344 = vmatpush2.msra.mxu0 0.0
      %1345 = vmatprep.subr.mxu0 0.0
      %1346 = vmatpush2.msra.mxu0 0.0
      %1347 = vmatprep.subr.mxu0 0.0
      %1348 = vmatpush2.msra.mxu0 0.0
      %1349 = vmatprep.subr.mxu0 0.0
      %1350 = vmatpush2.msra.mxu0 0.0
      %1351 = vmatprep.subr.mxu0 0.0
      %1352 = vmatpush2.msra.mxu0 0.0
      %1353 = vmatprep.subr.mxu0 0.0
      %1354 = vmatpush2.msra.mxu0 0.0
      %1355 = vmatprep.subr.mxu0 0.0
      %1356 = vmatpush2.msra.mxu0 0.0
      %1357 = vmatprep.subr.mxu0 0.0
      %1358 = vmatpush2.msra.mxu0 0.0
      %1359 = vmatprep.subr.mxu0 0.0
      %1360 = vmatpush2.msra.mxu0 0.0
      %1361 = vmatprep.subr.mxu0 0.0
      %1362 = vmatpush2.msra.mxu0 0.0
      %1363 = vmatprep.subr.mxu0 0.0
      %1364 = vmatpush2.msra.mxu0 0.0
      %1365 = vmatprep.subr.mxu0 0.0
      %1366 = vmatpush2.msra.mxu0 0.0
      %1367 = vmatprep.subr.mxu0 0.0
      %1368 = vmatpush2.msra.mxu0 0.0
      %1369 = vmatprep.subr.mxu0 0.0
      %1370 = vmatpush2.msra.mxu0 0.0
      %1371 = vmatprep.mubr.f32.mxu0 0.0
      %1372 = vmatmul.mubr.f32.gmra.mxu0 %v1302
      %v1373 = vpop.f32.mrf.mxu0
      %v1374 = vadd.f32 0.0, %v1373
      %v1375 = vpop.f32.mrf.mxu0
      %1376 = vmatprep.mubr.f32.mxu0 0.0
      %1377 = vmatmul.mubr.f32.gmra.mxu0 %v1305
      %v1378 = vpop.f32.mrf.mxu0
      %v1379 = vadd.f32 0.0, %v1378
      %v1380 = vpop.f32.mrf.mxu0
      %1381 = vdwg.mxu0
      %vm1382 = vcmask 261120
      %v1384 = vsel %vm1382, %v1374, 0
      %v1387 = vsel %vm1382, %v1379, 0
      %1389 = vmatprep.subr.mxu0 0.0
      %1390 = vmatpush1.msra.mxu0 0.0
      %1391 = vmatprep.subr.mxu0 0.0
      %1392 = vmatpush1.msra.mxu0 0.0
      %1393 = vmatprep.subr.mxu0 0.0
      %1394 = vmatpush1.msra.mxu0 0.0
      %1395 = vmatprep.subr.mxu0 0.0
      %1396 = vmatpush1.msra.mxu0 0.0
      %1397 = vmatprep.subr.mxu0 0.0
      %1398 = vmatpush1.msra.mxu0 0.0
      %1399 = vmatprep.subr.mxu0 0.0
      %1400 = vmatpush1.msra.mxu0 0.0
      %1401 = vmatprep.subr.mxu0 0.0
      %1402 = vmatpush1.msra.mxu0 0.0
      %1403 = vmatprep.subr.mxu0 0.0
      %1404 = vmatpush1.msra.mxu0 0.0
      %1405 = vmatprep.subr.mxu0 0.0
      %1406 = vmatpush1.msra.mxu0 0.0
      %1407 = vmatprep.subr.mxu0 0.0
      %1408 = vmatpush1.msra.mxu0 0.0
      %1409 = vmatprep.subr.mxu0 0.0
      %1410 = vmatpush1.msra.mxu0 0.0
      %1411 = vmatprep.subr.mxu0 0.0
      %1412 = vmatpush1.msra.mxu0 0.0
      %1413 = vmatprep.subr.mxu0 0.0
      %1414 = vmatpush1.msra.mxu0 %v1078
      %1415 = vmatprep.subr.mxu0 0.0
      %1416 = vmatpush1.msra.mxu0 %v1077
      %1417 = vmatprep.subr.mxu0 0.0
      %1418 = vmatpush1.msra.mxu0 %v1076
      %1419 = vmatprep.subr.mxu0 0.0
      %1420 = vmatpush1.msra.mxu0 %v1075
      %1421 = vmatprep.subr.mxu0 0.0
      %1422 = vmatpush2.msra.mxu0 0.0
      %1423 = vmatprep.subr.mxu0 0.0
      %1424 = vmatpush2.msra.mxu0 0.0
      %1425 = vmatprep.subr.mxu0 0.0
      %1426 = vmatpush2.msra.mxu0 0.0
      %1427 = vmatprep.subr.mxu0 0.0
      %1428 = vmatpush2.msra.mxu0 0.0
      %1429 = vmatprep.subr.mxu0 0.0
      %1430 = vmatpush2.msra.mxu0 0.0
      %1431 = vmatprep.subr.mxu0 0.0
      %1432 = vmatpush2.msra.mxu0 0.0
      %1433 = vmatprep.subr.mxu0 0.0
      %1434 = vmatpush2.msra.mxu0 0.0
      %1435 = vmatprep.subr.mxu0 0.0
      %1436 = vmatpush2.msra.mxu0 0.0
      %1437 = vmatprep.subr.mxu0 0.0
      %1438 = vmatpush2.msra.mxu0 0.0
      %1439 = vmatprep.subr.mxu0 0.0
      %1440 = vmatpush2.msra.mxu0 0.0
      %1441 = vmatprep.subr.mxu0 0.0
      %1442 = vmatpush2.msra.mxu0 0.0
      %1443 = vmatprep.subr.mxu0 0.0
      %1444 = vmatpush2.msra.mxu0 0.0
      %1445 = vmatprep.subr.mxu0 0.0
      %1446 = vmatpush2.msra.mxu0 0.0
      %1447 = vmatprep.subr.mxu0 0.0
      %1448 = vmatpush2.msra.mxu0 0.0
      %1449 = vmatprep.subr.mxu0 0.0
      %1450 = vmatpush2.msra.mxu0 0.0
      %1451 = vmatprep.subr.mxu0 0.0
      %1452 = vmatpush2.msra.mxu0 0.0
      %1453 = vmatprep.mubr.f32.mxu0 0.0
      %1454 = vmatmul.mubr.f32.gmra.mxu0 %v1384
      %v1455 = vpop.f32.mrf.mxu0
      %v1456 = vadd.f32 0.0, %v1455
      %v1457 = vpop.f32.mrf.mxu0
      %1458 = vmatprep.mubr.f32.mxu0 0.0
      %1459 = vmatmul.mubr.f32.gmra.mxu0 %v1387
      %v1460 = vpop.f32.mrf.mxu0
      %v1461 = vadd.f32 0.0, %v1460
      %v1462 = vpop.f32.mrf.mxu0
      %1463 = vdwg.mxu0
      %v1464 = vadd.f32 %v1098, %v1456
      %v1465 = vadd.f32 %v1099, %v1461
      %1466 = vrot.lane.b32.xlu0 %v1051, 48
      %v1467 = vpop.permute.xlu0 %1466
      %1468 = vrot.lane.b32.xlu0 %v1052, 48
      %v1469 = vpop.permute.xlu0 %1468
      %1470 = vrot.lane.b32.xlu0 %v1071, 48
      %v1471 = vpop.permute.xlu0 %1470
      %1472 = vrot.lane.b32.xlu0 %v1072, 48
      %v1473 = vpop.permute.xlu0 %1472
      %v1474 = vsel %vm1112, %v1467, 0
      %v1476 = vsel %vm1112, %v1469, 0
      %v1478 = vsel %vm1112, %v1471, 0
      %v1480 = vsel %vm1112, %v1473, 0
      %1482 = vmatprep.subr.mxu0 0.0
      %1483 = vmatpush1.xpose.msra.mxu0 0.0
      %1484 = vmatprep.subr.mxu0 0.0
      %1485 = vmatpush1.xpose.msra.mxu0 0.0
      %1486 = vmatprep.subr.mxu0 0.0
      %1487 = vmatpush1.xpose.msra.mxu0 0.0
      %1488 = vmatprep.subr.mxu0 0.0
      %1489 = vmatpush1.xpose.msra.mxu0 0.0
      %1490 = vmatprep.subr.mxu0 0.0
      %1491 = vmatpush1.xpose.msra.mxu0 0.0
      %1492 = vmatprep.subr.mxu0 0.0
      %1493 = vmatpush1.xpose.msra.mxu0 0.0
      %1494 = vmatprep.subr.mxu0 0.0
      %1495 = vmatpush1.xpose.msra.mxu0 0.0
      %1496 = vmatprep.subr.mxu0 0.0
      %1497 = vmatpush1.xpose.msra.mxu0 0.0
      %1498 = vmatprep.subr.mxu0 0.0
      %1499 = vmatpush1.xpose.msra.mxu0 0.0
      %1500 = vmatprep.subr.mxu0 0.0
      %1501 = vmatpush1.xpose.msra.mxu0 0.0
      %1502 = vmatprep.subr.mxu0 0.0
      %1503 = vmatpush1.xpose.msra.mxu0 0.0
      %1504 = vmatprep.subr.mxu0 0.0
      %1505 = vmatpush1.xpose.msra.mxu0 0.0
      %1506 = vmatprep.subr.mxu0 0.0
      %1507 = vmatpush1.xpose.msra.mxu0 0.0
      %1508 = vmatprep.subr.mxu0 0.0
      %1509 = vmatpush1.xpose.msra.mxu0 0.0
      %1510 = vmatprep.subr.mxu0 0.0
      %1511 = vmatpush1.xpose.msra.mxu0 %v1480
      %1512 = vmatprep.subr.mxu0 0.0
      %1513 = vmatpush1.xpose.msra.mxu0 %v1478
      %1514 = vmatprep.subr.mxu0 0.0
      %1515 = vmatpush2.xpose.msra.mxu0 0.0
      %1516 = vmatprep.subr.mxu0 0.0
      %1517 = vmatpush2.xpose.msra.mxu0 0.0
      %1518 = vmatprep.subr.mxu0 0.0
      %1519 = vmatpush2.xpose.msra.mxu0 0.0
      %1520 = vmatprep.subr.mxu0 0.0
      %1521 = vmatpush2.xpose.msra.mxu0 0.0
      %1522 = vmatprep.subr.mxu0 0.0
      %1523 = vmatpush2.xpose.msra.mxu0 0.0
      %1524 = vmatprep.subr.mxu0 0.0
      %1525 = vmatpush2.xpose.msra.mxu0 0.0
      %1526 = vmatprep.subr.mxu0 0.0
      %1527 = vmatpush2.xpose.msra.mxu0 0.0
      %1528 = vmatprep.subr.mxu0 0.0
      %1529 = vmatpush2.xpose.msra.mxu0 0.0
      %1530 = vmatprep.subr.mxu0 0.0
      %1531 = vmatpush2.xpose.msra.mxu0 0.0
      %1532 = vmatprep.subr.mxu0 0.0
      %1533 = vmatpush2.xpose.msra.mxu0 0.0
      %1534 = vmatprep.subr.mxu0 0.0
      %1535 = vmatpush2.xpose.msra.mxu0 0.0
      %1536 = vmatprep.subr.mxu0 0.0
      %1537 = vmatpush2.xpose.msra.mxu0 0.0
      %1538 = vmatprep.subr.mxu0 0.0
      %1539 = vmatpush2.xpose.msra.mxu0 0.0
      %1540 = vmatprep.subr.mxu0 0.0
      %1541 = vmatpush2.xpose.msra.mxu0 0.0
      %1542 = vmatprep.subr.mxu0 0.0
      %1543 = vmatpush2.xpose.msra.mxu0 0.0
      %1544 = vmatprep.subr.mxu0 0.0
      %1545 = vmatpush2.xpose.msra.mxu0 0.0
      %1546 = vmatprep.mubr.f32.mxu0 0.0
      %1547 = vmatmul.mubr.f32.gmra.mxu0 %v1474
      %v1548 = vpop.f32.mrf.mxu0
      %v1549 = vadd.f32 0.0, %v1548
      %v1550 = vpop.f32.mrf.mxu0
      %1551 = vmatprep.mubr.f32.mxu0 0.0
      %1552 = vmatmul.mubr.f32.gmra.mxu0 %v1476
      %v1553 = vpop.f32.mrf.mxu0
      %v1554 = vadd.f32 0.0, %v1553
      %v1555 = vpop.f32.mrf.mxu0
      %1556 = vdwg.mxu0
      %1557 = vrot.lane.b32.xlu0 %v1051, 112
      %v1558 = vpop.permute.xlu0 %1557
      %1559 = vrot.lane.b32.xlu0 %v1052, 112
      %v1560 = vpop.permute.xlu0 %1559
      %1561 = vrot.lane.b32.xlu0 %v1071, 112
      %v1562 = vpop.permute.xlu0 %1561
      %1563 = vrot.lane.b32.xlu0 %v1072, 112
      %v1564 = vpop.permute.xlu0 %1563
      %v1565 = vsel %vm1112, %v1558, 0
      %v1567 = vsel %vm1112, %v1560, 0
      %v1569 = vsel %vm1112, %v1562, 0
      %v1571 = vsel %vm1112, %v1564, 0
      %1573 = vmatprep.subr.mxu0 0.0
      %1574 = vmatpush1.xpose.msra.mxu0 0.0
      %1575 = vmatprep.subr.mxu0 0.0
      %1576 = vmatpush1.xpose.msra.mxu0 0.0
      %1577 = vmatprep.subr.mxu0 0.0
      %1578 = vmatpush1.xpose.msra.mxu0 0.0
      %1579 = vmatprep.subr.mxu0 0.0
      %1580 = vmatpush1.xpose.msra.mxu0 0.0
      %1581 = vmatprep.subr.mxu0 0.0
      %1582 = vmatpush1.xpose.msra.mxu0 0.0
      %1583 = vmatprep.subr.mxu0 0.0
      %1584 = vmatpush1.xpose.msra.mxu0 0.0
      %1585 = vmatprep.subr.mxu0 0.0
      %1586 = vmatpush1.xpose.msra.mxu0 0.0
      %1587 = vmatprep.subr.mxu0 0.0
      %1588 = vmatpush1.xpose.msra.mxu0 0.0
      %1589 = vmatprep.subr.mxu0 0.0
      %1590 = vmatpush1.xpose.msra.mxu0 0.0
      %1591 = vmatprep.subr.mxu0 0.0
      %1592 = vmatpush1.xpose.msra.mxu0 0.0
      %1593 = vmatprep.subr.mxu0 0.0
      %1594 = vmatpush1.xpose.msra.mxu0 0.0
      %1595 = vmatprep.subr.mxu0 0.0
      %1596 = vmatpush1.xpose.msra.mxu0 0.0
      %1597 = vmatprep.subr.mxu0 0.0
      %1598 = vmatpush1.xpose.msra.mxu0 0.0
      %1599 = vmatprep.subr.mxu0 0.0
      %1600 = vmatpush1.xpose.msra.mxu0 0.0
      %1601 = vmatprep.subr.mxu0 0.0
      %1602 = vmatpush1.xpose.msra.mxu0 %v1571
      %1603 = vmatprep.subr.mxu0 0.0
      %1604 = vmatpush1.xpose.msra.mxu0 %v1569
      %1605 = vmatprep.subr.mxu0 0.0
      %1606 = vmatpush2.xpose.msra.mxu0 0.0
      %1607 = vmatprep.subr.mxu0 0.0
      %1608 = vmatpush2.xpose.msra.mxu0 0.0
      %1609 = vmatprep.subr.mxu0 0.0
      %1610 = vmatpush2.xpose.msra.mxu0 0.0
      %1611 = vmatprep.subr.mxu0 0.0
      %1612 = vmatpush2.xpose.msra.mxu0 0.0
      %1613 = vmatprep.subr.mxu0 0.0
      %1614 = vmatpush2.xpose.msra.mxu0 0.0
      %1615 = vmatprep.subr.mxu0 0.0
      %1616 = vmatpush2.xpose.msra.mxu0 0.0
      %1617 = vmatprep.subr.mxu0 0.0
      %1618 = vmatpush2.xpose.msra.mxu0 0.0
      %1619 = vmatprep.subr.mxu0 0.0
      %1620 = vmatpush2.xpose.msra.mxu0 0.0
      %1621 = vmatprep.subr.mxu0 0.0
      %1622 = vmatpush2.xpose.msra.mxu0 0.0
      %1623 = vmatprep.subr.mxu0 0.0
      %1624 = vmatpush2.xpose.msra.mxu0 0.0
      %1625 = vmatprep.subr.mxu0 0.0
      %1626 = vmatpush2.xpose.msra.mxu0 0.0
      %1627 = vmatprep.subr.mxu0 0.0
      %1628 = vmatpush2.xpose.msra.mxu0 0.0
      %1629 = vmatprep.subr.mxu0 0.0
      %1630 = vmatpush2.xpose.msra.mxu0 0.0
      %1631 = vmatprep.subr.mxu0 0.0
      %1632 = vmatpush2.xpose.msra.mxu0 0.0
      %1633 = vmatprep.subr.mxu0 0.0
      %1634 = vmatpush2.xpose.msra.mxu0 0.0
      %1635 = vmatprep.subr.mxu0 0.0
      %1636 = vmatpush2.xpose.msra.mxu0 0.0
      %1637 = vmatprep.mubr.f32.mxu0 0.0
      %1638 = vmatmul.mubr.f32.gmra.mxu0 %v1565
      %v1639 = vpop.f32.mrf.mxu0
      %v1640 = vadd.f32 %v1549, %v1639
      %v1641 = vpop.f32.mrf.mxu0
      %1642 = vmatprep.mubr.f32.mxu0 0.0
      %1643 = vmatmul.mubr.f32.gmra.mxu0 %v1567
      %v1644 = vpop.f32.mrf.mxu0
      %v1645 = vadd.f32 %v1554, %v1644
      %v1646 = vpop.f32.mrf.mxu0
      %1647 = vdwg.mxu0
      %v1648 = vsel %vm1112, %v1640, -inf
      %1649 = vmax.xlane.f32.xlu0 %v1648
      %v1650 = vpop.xlane.xlu0 %1649
      %v1651 = vsel %vm1112, %v1645, -inf
      %1652 = vmax.xlane.f32.xlu0 %v1651
      %v1653 = vpop.xlane.xlu0 %1652
      %v1654 = vsub.f32 %v1640, %v1650
      %v1655 = vsub.f32 %v1645, %v1653
      %v1656 = vmul.f32 %v1654, 1.442695
      %v1657 = vpow.pop %v1656
      %v1658 = vmul.f32 %v1655, 1.442695
      %v1659 = vpow.pop %v1658
      %v1660 = vsel %vm1112, %v1657, 0.0
      %1661 = vadd.xlane.f32.xlu0 %v1660
      %v1662 = vpop.xlane.xlu0 %1661
      %v1663 = vsel %vm1112, %v1659, 0.0
      %1664 = vadd.xlane.f32.xlu0 %v1663
      %v1665 = vpop.xlane.xlu0 %1664
      %v1666 = vrcp.pop %v1662
      %v1667 = vrcp.pop %v1665
      %v1668 = vmul.f32 %v1657, %v1666
      %v1669 = vmul.f32 %v1659, %v1667
      %1672 = vrot.lane.b32.xlu0 %v1009, 96
      %v1673 = vpop.permute.xlu0 %1672
      %1674 = vrot.lane.b32.xlu0 %v1014, 96
      %v1675 = vpop.permute.xlu0 %1674
      %v1679 = vsel %vm1112, %v1668, 0
      %v1682 = vsel %vm1112, %v1669, 0
      %1684 = vmatprep.subr.mxu0 0.0
      %1685 = vmatpush1.msra.mxu0 0.0
      %1686 = vmatprep.subr.mxu0 0.0
      %1687 = vmatpush1.msra.mxu0 0.0
      %1688 = vmatprep.subr.mxu0 0.0
      %1689 = vmatpush1.msra.mxu0 0.0
      %1690 = vmatprep.subr.mxu0 0.0
      %1691 = vmatpush1.msra.mxu0 0.0
      %1692 = vmatprep.subr.mxu0 0.0
      %1693 = vmatpush1.msra.mxu0 0.0
      %1694 = vmatprep.subr.mxu0 0.0
      %1695 = vmatpush1.msra.mxu0 0.0
      %1696 = vmatprep.subr.mxu0 0.0
      %1697 = vmatpush1.msra.mxu0 0.0
      %1698 = vmatprep.subr.mxu0 0.0
      %1699 = vmatpush1.msra.mxu0 0.0
      %1700 = vmatprep.subr.mxu0 0.0
      %1701 = vmatpush1.msra.mxu0 0.0
      %1702 = vmatprep.subr.mxu0 0.0
      %1703 = vmatpush1.msra.mxu0 0.0
      %1704 = vmatprep.subr.mxu0 0.0
      %1705 = vmatpush1.msra.mxu0 0.0
      %1706 = vmatprep.subr.mxu0 0.0
      %1707 = vmatpush1.msra.mxu0 0.0
      %1708 = vmatprep.subr.mxu0 0.0
      %1709 = vmatpush1.msra.mxu0 0.0
      %1710 = vmatprep.subr.mxu0 0.0
      %1711 = vmatpush1.msra.mxu0 0.0
      %1712 = vmatprep.subr.mxu0 0.0
      %1713 = vmatpush1.msra.mxu0 %v1675
      %1714 = vmatprep.subr.mxu0 0.0
      %1715 = vmatpush1.msra.mxu0 %v1673
      %1716 = vmatprep.subr.mxu0 0.0
      %1717 = vmatpush2.msra.mxu0 0.0
      %1718 = vmatprep.subr.mxu0 0.0
      %1719 = vmatpush2.msra.mxu0 0.0
      %1720 = vmatprep.subr.mxu0 0.0
      %1721 = vmatpush2.msra.mxu0 0.0
      %1722 = vmatprep.subr.mxu0 0.0
      %1723 = vmatpush2.msra.mxu0 0.0
      %1724 = vmatprep.subr.mxu0 0.0
      %1725 = vmatpush2.msra.mxu0 0.0
      %1726 = vmatprep.subr.mxu0 0.0
      %1727 = vmatpush2.msra.mxu0 0.0
      %1728 = vmatprep.subr.mxu0 0.0
      %1729 = vmatpush2.msra.mxu0 0.0
      %1730 = vmatprep.subr.mxu0 0.0
      %1731 = vmatpush2.msra.mxu0 0.0
      %1732 = vmatprep.subr.mxu0 0.0
      %1733 = vmatpush2.msra.mxu0 0.0
      %1734 = vmatprep.subr.mxu0 0.0
      %1735 = vmatpush2.msra.mxu0 0.0
      %1736 = vmatprep.subr.mxu0 0.0
      %1737 = vmatpush2.msra.mxu0 0.0
      %1738 = vmatprep.subr.mxu0 0.0
      %1739 = vmatpush2.msra.mxu0 0.0
      %1740 = vmatprep.subr.mxu0 0.0
      %1741 = vmatpush2.msra.mxu0 0.0
      %1742 = vmatprep.subr.mxu0 0.0
      %1743 = vmatpush2.msra.mxu0 0.0
      %1744 = vmatprep.subr.mxu0 0.0
      %1745 = vmatpush2.msra.mxu0 0.0
      %1746 = vmatprep.subr.mxu0 0.0
      %1747 = vmatpush2.msra.mxu0 0.0
      %1748 = vmatprep.mubr.f32.mxu0 0.0
      %1749 = vmatmul.mubr.f32.gmra.mxu0 %v1679
      %v1750 = vpop.f32.mrf.mxu0
      %v1751 = vadd.f32 0.0, %v1750
      %v1752 = vpop.f32.mrf.mxu0
      %1753 = vmatprep.mubr.f32.mxu0 0.0
      %1754 = vmatmul.mubr.f32.gmra.mxu0 %v1682
      %v1755 = vpop.f32.mrf.mxu0
      %v1756 = vadd.f32 0.0, %v1755
      %v1757 = vpop.f32.mrf.mxu0
      %1758 = vdwg.mxu0
      %v1760 = vsel %vm1382, %v1751, 0
      %v1763 = vsel %vm1382, %v1756, 0
      %1765 = vmatprep.subr.mxu0 0.0
      %1766 = vmatpush1.msra.mxu0 0.0
      %1767 = vmatprep.subr.mxu0 0.0
      %1768 = vmatpush1.msra.mxu0 0.0
      %1769 = vmatprep.subr.mxu0 0.0
      %1770 = vmatpush1.msra.mxu0 0.0
      %1771 = vmatprep.subr.mxu0 0.0
      %1772 = vmatpush1.msra.mxu0 0.0
      %1773 = vmatprep.subr.mxu0 0.0
      %1774 = vmatpush1.msra.mxu0 0.0
      %1775 = vmatprep.subr.mxu0 0.0
      %1776 = vmatpush1.msra.mxu0 0.0
      %1777 = vmatprep.subr.mxu0 0.0
      %1778 = vmatpush1.msra.mxu0 0.0
      %1779 = vmatprep.subr.mxu0 0.0
      %1780 = vmatpush1.msra.mxu0 0.0
      %1781 = vmatprep.subr.mxu0 0.0
      %1782 = vmatpush1.msra.mxu0 0.0
      %1783 = vmatprep.subr.mxu0 0.0
      %1784 = vmatpush1.msra.mxu0 0.0
      %1785 = vmatprep.subr.mxu0 0.0
      %1786 = vmatpush1.msra.mxu0 0.0
      %1787 = vmatprep.subr.mxu0 0.0
      %1788 = vmatpush1.msra.mxu0 0.0
      %1789 = vmatprep.subr.mxu0 0.0
      %1790 = vmatpush1.msra.mxu0 %v1082
      %1791 = vmatprep.subr.mxu0 0.0
      %1792 = vmatpush1.msra.mxu0 %v1081
      %1793 = vmatprep.subr.mxu0 0.0
      %1794 = vmatpush1.msra.mxu0 %v1080
      %1795 = vmatprep.subr.mxu0 0.0
      %1796 = vmatpush1.msra.mxu0 %v1079
      %1797 = vmatprep.subr.mxu0 0.0
      %1798 = vmatpush2.msra.mxu0 0.0
      %1799 = vmatprep.subr.mxu0 0.0
      %1800 = vmatpush2.msra.mxu0 0.0
      %1801 = vmatprep.subr.mxu0 0.0
      %1802 = vmatpush2.msra.mxu0 0.0
      %1803 = vmatprep.subr.mxu0 0.0
      %1804 = vmatpush2.msra.mxu0 0.0
      %1805 = vmatprep.subr.mxu0 0.0
      %1806 = vmatpush2.msra.mxu0 0.0
      %1807 = vmatprep.subr.mxu0 0.0
      %1808 = vmatpush2.msra.mxu0 0.0
      %1809 = vmatprep.subr.mxu0 0.0
      %1810 = vmatpush2.msra.mxu0 0.0
      %1811 = vmatprep.subr.mxu0 0.0
      %1812 = vmatpush2.msra.mxu0 0.0
      %1813 = vmatprep.subr.mxu0 0.0
      %1814 = vmatpush2.msra.mxu0 0.0
      %1815 = vmatprep.subr.mxu0 0.0
      %1816 = vmatpush2.msra.mxu0 0.0
      %1817 = vmatprep.subr.mxu0 0.0
      %1818 = vmatpush2.msra.mxu0 0.0
      %1819 = vmatprep.subr.mxu0 0.0
      %1820 = vmatpush2.msra.mxu0 0.0
      %1821 = vmatprep.subr.mxu0 0.0
      %1822 = vmatpush2.msra.mxu0 0.0
      %1823 = vmatprep.subr.mxu0 0.0
      %1824 = vmatpush2.msra.mxu0 0.0
      %1825 = vmatprep.subr.mxu0 0.0
      %1826 = vmatpush2.msra.mxu0 0.0
      %1827 = vmatprep.subr.mxu0 0.0
      %1828 = vmatpush2.msra.mxu0 0.0
      %1829 = vmatprep.mubr.f32.mxu0 0.0
      %1830 = vmatmul.mubr.f32.gmra.mxu0 %v1760
      %v1831 = vpop.f32.mrf.mxu0
      %v1832 = vadd.f32 0.0, %v1831
      %v1833 = vpop.f32.mrf.mxu0
      %1834 = vmatprep.mubr.f32.mxu0 0.0
      %1835 = vmatmul.mubr.f32.gmra.mxu0 %v1763
      %v1836 = vpop.f32.mrf.mxu0
      %v1837 = vadd.f32 0.0, %v1836
      %v1838 = vpop.f32.mrf.mxu0
      %1839 = vdwg.mxu0
      %v1840 = vadd.f32 %v1464, %v1832
      %v1841 = vadd.f32 %v1465, %v1837
      %1842 = vrot.lane.b32.xlu0 %v1051, 32
      %v1843 = vpop.permute.xlu0 %1842
      %1844 = vrot.lane.b32.xlu0 %v1052, 32
      %v1845 = vpop.permute.xlu0 %1844
      %1846 = vrot.lane.b32.xlu0 %v1071, 32
      %v1847 = vpop.permute.xlu0 %1846
      %1848 = vrot.lane.b32.xlu0 %v1072, 32
      %v1849 = vpop.permute.xlu0 %1848
      %v1850 = vsel %vm1112, %v1843, 0
      %v1852 = vsel %vm1112, %v1845, 0
      %v1854 = vsel %vm1112, %v1847, 0
      %v1856 = vsel %vm1112, %v1849, 0
      %1858 = vmatprep.subr.mxu0 0.0
      %1859 = vmatpush1.xpose.msra.mxu0 0.0
      %1860 = vmatprep.subr.mxu0 0.0
      %1861 = vmatpush1.xpose.msra.mxu0 0.0
      %1862 = vmatprep.subr.mxu0 0.0
      %1863 = vmatpush1.xpose.msra.mxu0 0.0
      %1864 = vmatprep.subr.mxu0 0.0
      %1865 = vmatpush1.xpose.msra.mxu0 0.0
      %1866 = vmatprep.subr.mxu0 0.0
      %1867 = vmatpush1.xpose.msra.mxu0 0.0
      %1868 = vmatprep.subr.mxu0 0.0
      %1869 = vmatpush1.xpose.msra.mxu0 0.0
      %1870 = vmatprep.subr.mxu0 0.0
      %1871 = vmatpush1.xpose.msra.mxu0 0.0
      %1872 = vmatprep.subr.mxu0 0.0
      %1873 = vmatpush1.xpose.msra.mxu0 0.0
      %1874 = vmatprep.subr.mxu0 0.0
      %1875 = vmatpush1.xpose.msra.mxu0 0.0
      %1876 = vmatprep.subr.mxu0 0.0
      %1877 = vmatpush1.xpose.msra.mxu0 0.0
      %1878 = vmatprep.subr.mxu0 0.0
      %1879 = vmatpush1.xpose.msra.mxu0 0.0
      %1880 = vmatprep.subr.mxu0 0.0
      %1881 = vmatpush1.xpose.msra.mxu0 0.0
      %1882 = vmatprep.subr.mxu0 0.0
      %1883 = vmatpush1.xpose.msra.mxu0 0.0
      %1884 = vmatprep.subr.mxu0 0.0
      %1885 = vmatpush1.xpose.msra.mxu0 0.0
      %1886 = vmatprep.subr.mxu0 0.0
      %1887 = vmatpush1.xpose.msra.mxu0 %v1856
      %1888 = vmatprep.subr.mxu0 0.0
      %1889 = vmatpush1.xpose.msra.mxu0 %v1854
      %1890 = vmatprep.subr.mxu0 0.0
      %1891 = vmatpush2.xpose.msra.mxu0 0.0
      %1892 = vmatprep.subr.mxu0 0.0
      %1893 = vmatpush2.xpose.msra.mxu0 0.0
      %1894 = vmatprep.subr.mxu0 0.0
      %1895 = vmatpush2.xpose.msra.mxu0 0.0
      %1896 = vmatprep.subr.mxu0 0.0
      %1897 = vmatpush2.xpose.msra.mxu0 0.0
      %1898 = vmatprep.subr.mxu0 0.0
      %1899 = vmatpush2.xpose.msra.mxu0 0.0
      %1900 = vmatprep.subr.mxu0 0.0
      %1901 = vmatpush2.xpose.msra.mxu0 0.0
      %1902 = vmatprep.subr.mxu0 0.0
      %1903 = vmatpush2.xpose.msra.mxu0 0.0
      %1904 = vmatprep.subr.mxu0 0.0
      %1905 = vmatpush2.xpose.msra.mxu0 0.0
      %1906 = vmatprep.subr.mxu0 0.0
      %1907 = vmatpush2.xpose.msra.mxu0 0.0
      %1908 = vmatprep.subr.mxu0 0.0
      %1909 = vmatpush2.xpose.msra.mxu0 0.0
      %1910 = vmatprep.subr.mxu0 0.0
      %1911 = vmatpush2.xpose.msra.mxu0 0.0
      %1912 = vmatprep.subr.mxu0 0.0
      %1913 = vmatpush2.xpose.msra.mxu0 0.0
      %1914 = vmatprep.subr.mxu0 0.0
      %1915 = vmatpush2.xpose.msra.mxu0 0.0
      %1916 = vmatprep.subr.mxu0 0.0
      %1917 = vmatpush2.xpose.msra.mxu0 0.0
      %1918 = vmatprep.subr.mxu0 0.0
      %1919 = vmatpush2.xpose.msra.mxu0 0.0
      %1920 = vmatprep.subr.mxu0 0.0
      %1921 = vmatpush2.xpose.msra.mxu0 0.0
      %1922 = vmatprep.mubr.f32.mxu0 0.0
      %1923 = vmatmul.mubr.f32.gmra.mxu0 %v1850
      %v1924 = vpop.f32.mrf.mxu0
      %v1925 = vadd.f32 0.0, %v1924
      %v1926 = vpop.f32.mrf.mxu0
      %1927 = vmatprep.mubr.f32.mxu0 0.0
      %1928 = vmatmul.mubr.f32.gmra.mxu0 %v1852
      %v1929 = vpop.f32.mrf.mxu0
      %v1930 = vadd.f32 0.0, %v1929
      %v1931 = vpop.f32.mrf.mxu0
      %1932 = vdwg.mxu0
      %1933 = vrot.lane.b32.xlu0 %v1051, 96
      %v1934 = vpop.permute.xlu0 %1933
      %1935 = vrot.lane.b32.xlu0 %v1052, 96
      %v1936 = vpop.permute.xlu0 %1935
      %1937 = vrot.lane.b32.xlu0 %v1071, 96
      %v1938 = vpop.permute.xlu0 %1937
      %1939 = vrot.lane.b32.xlu0 %v1072, 96
      %v1940 = vpop.permute.xlu0 %1939
      %v1941 = vsel %vm1112, %v1934, 0
      %v1943 = vsel %vm1112, %v1936, 0
      %v1945 = vsel %vm1112, %v1938, 0
      %v1947 = vsel %vm1112, %v1940, 0
      %1949 = vmatprep.subr.mxu0 0.0
      %1950 = vmatpush1.xpose.msra.mxu0 0.0
      %1951 = vmatprep.subr.mxu0 0.0
      %1952 = vmatpush1.xpose.msra.mxu0 0.0
      %1953 = vmatprep.subr.mxu0 0.0
      %1954 = vmatpush1.xpose.msra.mxu0 0.0
      %1955 = vmatprep.subr.mxu0 0.0
      %1956 = vmatpush1.xpose.msra.mxu0 0.0
      %1957 = vmatprep.subr.mxu0 0.0
      %1958 = vmatpush1.xpose.msra.mxu0 0.0
      %1959 = vmatprep.subr.mxu0 0.0
      %1960 = vmatpush1.xpose.msra.mxu0 0.0
      %1961 = vmatprep.subr.mxu0 0.0
      %1962 = vmatpush1.xpose.msra.mxu0 0.0
      %1963 = vmatprep.subr.mxu0 0.0
      %1964 = vmatpush1.xpose.msra.mxu0 0.0
      %1965 = vmatprep.subr.mxu0 0.0
      %1966 = vmatpush1.xpose.msra.mxu0 0.0
      %1967 = vmatprep.subr.mxu0 0.0
      %1968 = vmatpush1.xpose.msra.mxu0 0.0
      %1969 = vmatprep.subr.mxu0 0.0
      %1970 = vmatpush1.xpose.msra.mxu0 0.0
      %1971 = vmatprep.subr.mxu0 0.0
      %1972 = vmatpush1.xpose.msra.mxu0 0.0
      %1973 = vmatprep.subr.mxu0 0.0
      %1974 = vmatpush1.xpose.msra.mxu0 0.0
      %1975 = vmatprep.subr.mxu0 0.0
      %1976 = vmatpush1.xpose.msra.mxu0 0.0
      %1977 = vmatprep.subr.mxu0 0.0
      %1978 = vmatpush1.xpose.msra.mxu0 %v1947
      %1979 = vmatprep.subr.mxu0 0.0
      %1980 = vmatpush1.xpose.msra.mxu0 %v1945
      %1981 = vmatprep.subr.mxu0 0.0
      %1982 = vmatpush2.xpose.msra.mxu0 0.0
      %1983 = vmatprep.subr.mxu0 0.0
      %1984 = vmatpush2.xpose.msra.mxu0 0.0
      %1985 = vmatprep.subr.mxu0 0.0
      %1986 = vmatpush2.xpose.msra.mxu0 0.0
      %1987 = vmatprep.subr.mxu0 0.0
      %1988 = vmatpush2.xpose.msra.mxu0 0.0
      %1989 = vmatprep.subr.mxu0 0.0
      %1990 = vmatpush2.xpose.msra.mxu0 0.0
      %1991 = vmatprep.subr.mxu0 0.0
      %1992 = vmatpush2.xpose.msra.mxu0 0.0
      %1993 = vmatprep.subr.mxu0 0.0
      %1994 = vmatpush2.xpose.msra.mxu0 0.0
      %1995 = vmatprep.subr.mxu0 0.0
      %1996 = vmatpush2.xpose.msra.mxu0 0.0
      %1997 = vmatprep.subr.mxu0 0.0
      %1998 = vmatpush2.xpose.msra.mxu0 0.0
      %1999 = vmatprep.subr.mxu0 0.0
      %2000 = vmatpush2.xpose.msra.mxu0 0.0
      %2001 = vmatprep.subr.mxu0 0.0
      %2002 = vmatpush2.xpose.msra.mxu0 0.0
      %2003 = vmatprep.subr.mxu0 0.0
      %2004 = vmatpush2.xpose.msra.mxu0 0.0
      %2005 = vmatprep.subr.mxu0 0.0
      %2006 = vmatpush2.xpose.msra.mxu0 0.0
      %2007 = vmatprep.subr.mxu0 0.0
      %2008 = vmatpush2.xpose.msra.mxu0 0.0
      %2009 = vmatprep.subr.mxu0 0.0
      %2010 = vmatpush2.xpose.msra.mxu0 0.0
      %2011 = vmatprep.subr.mxu0 0.0
      %2012 = vmatpush2.xpose.msra.mxu0 0.0
      %2013 = vmatprep.mubr.f32.mxu0 0.0
      %2014 = vmatmul.mubr.f32.gmra.mxu0 %v1941
      %v2015 = vpop.f32.mrf.mxu0
      %v2016 = vadd.f32 %v1925, %v2015
      %v2017 = vpop.f32.mrf.mxu0
      %2018 = vmatprep.mubr.f32.mxu0 0.0
      %2019 = vmatmul.mubr.f32.gmra.mxu0 %v1943
      %v2020 = vpop.f32.mrf.mxu0
      %v2021 = vadd.f32 %v1930, %v2020
      %v2022 = vpop.f32.mrf.mxu0
      %2023 = vdwg.mxu0
      %v2024 = vsel %vm1112, %v2016, -inf
      %2025 = vmax.xlane.f32.xlu0 %v2024
      %v2026 = vpop.xlane.xlu0 %2025
      %v2027 = vsel %vm1112, %v2021, -inf
      %2028 = vmax.xlane.f32.xlu0 %v2027
      %v2029 = vpop.xlane.xlu0 %2028
      %v2030 = vsub.f32 %v2016, %v2026
      %v2031 = vsub.f32 %v2021, %v2029
      %v2032 = vmul.f32 %v2030, 1.442695
      %v2033 = vpow.pop %v2032
      %v2034 = vmul.f32 %v2031, 1.442695
      %v2035 = vpow.pop %v2034
      %v2036 = vsel %vm1112, %v2033, 0.0
      %2037 = vadd.xlane.f32.xlu0 %v2036
      %v2038 = vpop.xlane.xlu0 %2037
      %v2039 = vsel %vm1112, %v2035, 0.0
      %2040 = vadd.xlane.f32.xlu0 %v2039
      %v2041 = vpop.xlane.xlu0 %2040
      %v2042 = vrcp.pop %v2038
      %v2043 = vrcp.pop %v2041
      %v2044 = vmul.f32 %v2033, %v2042
      %v2045 = vmul.f32 %v2035, %v2043
      %2046 = vrot.lane.b32.xlu0 %v1009, 64
      %v2047 = vpop.permute.xlu0 %2046
      %2048 = vrot.lane.b32.xlu0 %v1014, 64
      %v2049 = vpop.permute.xlu0 %2048
      %v2053 = vsel %vm1112, %v2044, 0
      %v2056 = vsel %vm1112, %v2045, 0
      %2058 = vmatprep.subr.mxu0 0.0
      %2059 = vmatpush1.msra.mxu0 0.0
      %2060 = vmatprep.subr.mxu0 0.0
      %2061 = vmatpush1.msra.mxu0 0.0
      %2062 = vmatprep.subr.mxu0 0.0
      %2063 = vmatpush1.msra.mxu0 0.0
      %2064 = vmatprep.subr.mxu0 0.0
      %2065 = vmatpush1.msra.mxu0 0.0
      %2066 = vmatprep.subr.mxu0 0.0
      %2067 = vmatpush1.msra.mxu0 0.0
      %2068 = vmatprep.subr.mxu0 0.0
      %2069 = vmatpush1.msra.mxu0 0.0
      %2070 = vmatprep.subr.mxu0 0.0
      %2071 = vmatpush1.msra.mxu0 0.0
      %2072 = vmatprep.subr.mxu0 0.0
      %2073 = vmatpush1.msra.mxu0 0.0
      %2074 = vmatprep.subr.mxu0 0.0
      %2075 = vmatpush1.msra.mxu0 0.0
      %2076 = vmatprep.subr.mxu0 0.0
      %2077 = vmatpush1.msra.mxu0 0.0
      %2078 = vmatprep.subr.mxu0 0.0
      %2079 = vmatpush1.msra.mxu0 0.0
      %2080 = vmatprep.subr.mxu0 0.0
      %2081 = vmatpush1.msra.mxu0 0.0
      %2082 = vmatprep.subr.mxu0 0.0
      %2083 = vmatpush1.msra.mxu0 0.0
      %2084 = vmatprep.subr.mxu0 0.0
      %2085 = vmatpush1.msra.mxu0 0.0
      %2086 = vmatprep.subr.mxu0 0.0
      %2087 = vmatpush1.msra.mxu0 %v2049
      %2088 = vmatprep.subr.mxu0 0.0
      %2089 = vmatpush1.msra.mxu0 %v2047
      %2090 = vmatprep.subr.mxu0 0.0
      %2091 = vmatpush2.msra.mxu0 0.0
      %2092 = vmatprep.subr.mxu0 0.0
      %2093 = vmatpush2.msra.mxu0 0.0
      %2094 = vmatprep.subr.mxu0 0.0
      %2095 = vmatpush2.msra.mxu0 0.0
      %2096 = vmatprep.subr.mxu0 0.0
      %2097 = vmatpush2.msra.mxu0 0.0
      %2098 = vmatprep.subr.mxu0 0.0
      %2099 = vmatpush2.msra.mxu0 0.0
      %2100 = vmatprep.subr.mxu0 0.0
      %2101 = vmatpush2.msra.mxu0 0.0
      %2102 = vmatprep.subr.mxu0 0.0
      %2103 = vmatpush2.msra.mxu0 0.0
      %2104 = vmatprep.subr.mxu0 0.0
      %2105 = vmatpush2.msra.mxu0 0.0
      %2106 = vmatprep.subr.mxu0 0.0
      %2107 = vmatpush2.msra.mxu0 0.0
      %2108 = vmatprep.subr.mxu0 0.0
      %2109 = vmatpush2.msra.mxu0 0.0
      %2110 = vmatprep.subr.mxu0 0.0
      %2111 = vmatpush2.msra.mxu0 0.0
      %2112 = vmatprep.subr.mxu0 0.0
      %2113 = vmatpush2.msra.mxu0 0.0
      %2114 = vmatprep.subr.mxu0 0.0
      %2115 = vmatpush2.msra.mxu0 0.0
      %2116 = vmatprep.subr.mxu0 0.0
      %2117 = vmatpush2.msra.mxu0 0.0
      %2118 = vmatprep.subr.mxu0 0.0
      %2119 = vmatpush2.msra.mxu0 0.0
      %2120 = vmatprep.subr.mxu0 0.0
      %2121 = vmatpush2.msra.mxu0 0.0
      %2122 = vmatprep.mubr.f32.mxu0 0.0
      %2123 = vmatmul.mubr.f32.gmra.mxu0 %v2053
      %v2124 = vpop.f32.mrf.mxu0
      %v2125 = vadd.f32 0.0, %v2124
      %v2126 = vpop.f32.mrf.mxu0
      %2127 = vmatprep.mubr.f32.mxu0 0.0
      %2128 = vmatmul.mubr.f32.gmra.mxu0 %v2056
      %v2129 = vpop.f32.mrf.mxu0
      %v2130 = vadd.f32 0.0, %v2129
      %v2131 = vpop.f32.mrf.mxu0
      %2132 = vdwg.mxu0
      %v2134 = vsel %vm1382, %v2125, 0
      %v2137 = vsel %vm1382, %v2130, 0
      %2139 = vmatprep.subr.mxu0 0.0
      %2140 = vmatpush1.msra.mxu0 0.0
      %2141 = vmatprep.subr.mxu0 0.0
      %2142 = vmatpush1.msra.mxu0 0.0
      %2143 = vmatprep.subr.mxu0 0.0
      %2144 = vmatpush1.msra.mxu0 0.0
      %2145 = vmatprep.subr.mxu0 0.0
      %2146 = vmatpush1.msra.mxu0 0.0
      %2147 = vmatprep.subr.mxu0 0.0
      %2148 = vmatpush1.msra.mxu0 0.0
      %2149 = vmatprep.subr.mxu0 0.0
      %2150 = vmatpush1.msra.mxu0 0.0
      %2151 = vmatprep.subr.mxu0 0.0
      %2152 = vmatpush1.msra.mxu0 0.0
      %2153 = vmatprep.subr.mxu0 0.0
      %2154 = vmatpush1.msra.mxu0 0.0
      %2155 = vmatprep.subr.mxu0 0.0
      %2156 = vmatpush1.msra.mxu0 0.0
      %2157 = vmatprep.subr.mxu0 0.0
      %2158 = vmatpush1.msra.mxu0 0.0
      %2159 = vmatprep.subr.mxu0 0.0
      %2160 = vmatpush1.msra.mxu0 0.0
      %2161 = vmatprep.subr.mxu0 0.0
      %2162 = vmatpush1.msra.mxu0 0.0
      %2163 = vmatprep.subr.mxu0 0.0
      %2164 = vmatpush1.msra.mxu0 %v1086
      %2165 = vmatprep.subr.mxu0 0.0
      %2166 = vmatpush1.msra.mxu0 %v1085
      %2167 = vmatprep.subr.mxu0 0.0
      %2168 = vmatpush1.msra.mxu0 %v1084
      %2169 = vmatprep.subr.mxu0 0.0
      %2170 = vmatpush1.msra.mxu0 %v1083
      %2171 = vmatprep.subr.mxu0 0.0
      %2172 = vmatpush2.msra.mxu0 0.0
      %2173 = vmatprep.subr.mxu0 0.0
      %2174 = vmatpush2.msra.mxu0 0.0
      %2175 = vmatprep.subr.mxu0 0.0
      %2176 = vmatpush2.msra.mxu0 0.0
      %2177 = vmatprep.subr.mxu0 0.0
      %2178 = vmatpush2.msra.mxu0 0.0
      %2179 = vmatprep.subr.mxu0 0.0
      %2180 = vmatpush2.msra.mxu0 0.0
      %2181 = vmatprep.subr.mxu0 0.0
      %2182 = vmatpush2.msra.mxu0 0.0
      %2183 = vmatprep.subr.mxu0 0.0
      %2184 = vmatpush2.msra.mxu0 0.0
      %2185 = vmatprep.subr.mxu0 0.0
      %2186 = vmatpush2.msra.mxu0 0.0
      %2187 = vmatprep.subr.mxu0 0.0
      %2188 = vmatpush2.msra.mxu0 0.0
      %2189 = vmatprep.subr.mxu0 0.0
      %2190 = vmatpush2.msra.mxu0 0.0
      %2191 = vmatprep.subr.mxu0 0.0
      %2192 = vmatpush2.msra.mxu0 0.0
      %2193 = vmatprep.subr.mxu0 0.0
      %2194 = vmatpush2.msra.mxu0 0.0
      %2195 = vmatprep.subr.mxu0 0.0
      %2196 = vmatpush2.msra.mxu0 0.0
      %2197 = vmatprep.subr.mxu0 0.0
      %2198 = vmatpush2.msra.mxu0 0.0
      %2199 = vmatprep.subr.mxu0 0.0
      %2200 = vmatpush2.msra.mxu0 0.0
      %2201 = vmatprep.subr.mxu0 0.0
      %2202 = vmatpush2.msra.mxu0 0.0
      %2203 = vmatprep.mubr.f32.mxu0 0.0
      %2204 = vmatmul.mubr.f32.gmra.mxu0 %v2134
      %v2205 = vpop.f32.mrf.mxu0
      %v2206 = vadd.f32 0.0, %v2205
      %v2207 = vpop.f32.mrf.mxu0
      %2208 = vmatprep.mubr.f32.mxu0 0.0
      %2209 = vmatmul.mubr.f32.gmra.mxu0 %v2137
      %v2210 = vpop.f32.mrf.mxu0
      %v2211 = vadd.f32 0.0, %v2210
      %v2212 = vpop.f32.mrf.mxu0
      %2213 = vdwg.mxu0
      %v2214 = vadd.f32 %v1840, %v2206
      %v2215 = vadd.f32 %v1841, %v2211
      %2216 = vrot.lane.b32.xlu0 %v1051, 16
      %v2217 = vpop.permute.xlu0 %2216
      %2218 = vrot.lane.b32.xlu0 %v1052, 16
      %v2219 = vpop.permute.xlu0 %2218
      %2220 = vrot.lane.b32.xlu0 %v1071, 16
      %v2221 = vpop.permute.xlu0 %2220
      %2222 = vrot.lane.b32.xlu0 %v1072, 16
      %v2223 = vpop.permute.xlu0 %2222
      %v2224 = vsel %vm1112, %v2217, 0
      %v2226 = vsel %vm1112, %v2219, 0
      %v2228 = vsel %vm1112, %v2221, 0
      %v2230 = vsel %vm1112, %v2223, 0
      %2232 = vmatprep.subr.mxu0 0.0
      %2233 = vmatpush1.xpose.msra.mxu0 0.0
      %2234 = vmatprep.subr.mxu0 0.0
      %2235 = vmatpush1.xpose.msra.mxu0 0.0
      %2236 = vmatprep.subr.mxu0 0.0
      %2237 = vmatpush1.xpose.msra.mxu0 0.0
      %2238 = vmatprep.subr.mxu0 0.0
      %2239 = vmatpush1.xpose.msra.mxu0 0.0
      %2240 = vmatprep.subr.mxu0 0.0
      %2241 = vmatpush1.xpose.msra.mxu0 0.0
      %2242 = vmatprep.subr.mxu0 0.0
      %2243 = vmatpush1.xpose.msra.mxu0 0.0
      %2244 = vmatprep.subr.mxu0 0.0
      %2245 = vmatpush1.xpose.msra.mxu0 0.0
      %2246 = vmatprep.subr.mxu0 0.0
      %2247 = vmatpush1.xpose.msra.mxu0 0.0
      %2248 = vmatprep.subr.mxu0 0.0
      %2249 = vmatpush1.xpose.msra.mxu0 0.0
      %2250 = vmatprep.subr.mxu0 0.0
      %2251 = vmatpush1.xpose.msra.mxu0 0.0
      %2252 = vmatprep.subr.mxu0 0.0
      %2253 = vmatpush1.xpose.msra.mxu0 0.0
      %2254 = vmatprep.subr.mxu0 0.0
      %2255 = vmatpush1.xpose.msra.mxu0 0.0
      %2256 = vmatprep.subr.mxu0 0.0
      %2257 = vmatpush1.xpose.msra.mxu0 0.0
      %2258 = vmatprep.subr.mxu0 0.0
      %2259 = vmatpush1.xpose.msra.mxu0 0.0
      %2260 = vmatprep.subr.mxu0 0.0
      %2261 = vmatpush1.xpose.msra.mxu0 %v2230
      %2262 = vmatprep.subr.mxu0 0.0
      %2263 = vmatpush1.xpose.msra.mxu0 %v2228
      %2264 = vmatprep.subr.mxu0 0.0
      %2265 = vmatpush2.xpose.msra.mxu0 0.0
      %2266 = vmatprep.subr.mxu0 0.0
      %2267 = vmatpush2.xpose.msra.mxu0 0.0
      %2268 = vmatprep.subr.mxu0 0.0
      %2269 = vmatpush2.xpose.msra.mxu0 0.0
      %2270 = vmatprep.subr.mxu0 0.0
      %2271 = vmatpush2.xpose.msra.mxu0 0.0
      %2272 = vmatprep.subr.mxu0 0.0
      %2273 = vmatpush2.xpose.msra.mxu0 0.0
      %2274 = vmatprep.subr.mxu0 0.0
      %2275 = vmatpush2.xpose.msra.mxu0 0.0
      %2276 = vmatprep.subr.mxu0 0.0
      %2277 = vmatpush2.xpose.msra.mxu0 0.0
      %2278 = vmatprep.subr.mxu0 0.0
      %2279 = vmatpush2.xpose.msra.mxu0 0.0
      %2280 = vmatprep.subr.mxu0 0.0
      %2281 = vmatpush2.xpose.msra.mxu0 0.0
      %2282 = vmatprep.subr.mxu0 0.0
      %2283 = vmatpush2.xpose.msra.mxu0 0.0
      %2284 = vmatprep.subr.mxu0 0.0
      %2285 = vmatpush2.xpose.msra.mxu0 0.0
      %2286 = vmatprep.subr.mxu0 0.0
      %2287 = vmatpush2.xpose.msra.mxu0 0.0
      %2288 = vmatprep.subr.mxu0 0.0
      %2289 = vmatpush2.xpose.msra.mxu0 0.0
      %2290 = vmatprep.subr.mxu0 0.0
      %2291 = vmatpush2.xpose.msra.mxu0 0.0
      %2292 = vmatprep.subr.mxu0 0.0
      %2293 = vmatpush2.xpose.msra.mxu0 0.0
      %2294 = vmatprep.subr.mxu0 0.0
      %2295 = vmatpush2.xpose.msra.mxu0 0.0
      %2296 = vmatprep.mubr.f32.mxu0 0.0
      %2297 = vmatmul.mubr.f32.gmra.mxu0 %v2224
      %v2298 = vpop.f32.mrf.mxu0
      %v2299 = vadd.f32 0.0, %v2298
      %v2300 = vpop.f32.mrf.mxu0
      %2301 = vmatprep.mubr.f32.mxu0 0.0
      %2302 = vmatmul.mubr.f32.gmra.mxu0 %v2226
      %v2303 = vpop.f32.mrf.mxu0
      %v2304 = vadd.f32 0.0, %v2303
      %v2305 = vpop.f32.mrf.mxu0
      %2306 = vdwg.mxu0
      %2307 = vrot.lane.b32.xlu0 %v1051, 80
      %v2308 = vpop.permute.xlu0 %2307
      %2309 = vrot.lane.b32.xlu0 %v1052, 80
      %v2310 = vpop.permute.xlu0 %2309
      %2311 = vrot.lane.b32.xlu0 %v1071, 80
      %v2312 = vpop.permute.xlu0 %2311
      %2313 = vrot.lane.b32.xlu0 %v1072, 80
      %v2314 = vpop.permute.xlu0 %2313
      %v2315 = vsel %vm1112, %v2308, 0
      %v2317 = vsel %vm1112, %v2310, 0
      %v2319 = vsel %vm1112, %v2312, 0
      %v2321 = vsel %vm1112, %v2314, 0
      %2323 = vmatprep.subr.mxu0 0.0
      %2324 = vmatpush1.xpose.msra.mxu0 0.0
      %2325 = vmatprep.subr.mxu0 0.0
      %2326 = vmatpush1.xpose.msra.mxu0 0.0
      %2327 = vmatprep.subr.mxu0 0.0
      %2328 = vmatpush1.xpose.msra.mxu0 0.0
      %2329 = vmatprep.subr.mxu0 0.0
      %2330 = vmatpush1.xpose.msra.mxu0 0.0
      %2331 = vmatprep.subr.mxu0 0.0
      %2332 = vmatpush1.xpose.msra.mxu0 0.0
      %2333 = vmatprep.subr.mxu0 0.0
      %2334 = vmatpush1.xpose.msra.mxu0 0.0
      %2335 = vmatprep.subr.mxu0 0.0
      %2336 = vmatpush1.xpose.msra.mxu0 0.0
      %2337 = vmatprep.subr.mxu0 0.0
      %2338 = vmatpush1.xpose.msra.mxu0 0.0
      %2339 = vmatprep.subr.mxu0 0.0
      %2340 = vmatpush1.xpose.msra.mxu0 0.0
      %2341 = vmatprep.subr.mxu0 0.0
      %2342 = vmatpush1.xpose.msra.mxu0 0.0
      %2343 = vmatprep.subr.mxu0 0.0
      %2344 = vmatpush1.xpose.msra.mxu0 0.0
      %2345 = vmatprep.subr.mxu0 0.0
      %2346 = vmatpush1.xpose.msra.mxu0 0.0
      %2347 = vmatprep.subr.mxu0 0.0
      %2348 = vmatpush1.xpose.msra.mxu0 0.0
      %2349 = vmatprep.subr.mxu0 0.0
      %2350 = vmatpush1.xpose.msra.mxu0 0.0
      %2351 = vmatprep.subr.mxu0 0.0
      %2352 = vmatpush1.xpose.msra.mxu0 %v2321
      %2353 = vmatprep.subr.mxu0 0.0
      %2354 = vmatpush1.xpose.msra.mxu0 %v2319
      %2355 = vmatprep.subr.mxu0 0.0
      %2356 = vmatpush2.xpose.msra.mxu0 0.0
      %2357 = vmatprep.subr.mxu0 0.0
      %2358 = vmatpush2.xpose.msra.mxu0 0.0
      %2359 = vmatprep.subr.mxu0 0.0
      %2360 = vmatpush2.xpose.msra.mxu0 0.0
      %2361 = vmatprep.subr.mxu0 0.0
      %2362 = vmatpush2.xpose.msra.mxu0 0.0
      %2363 = vmatprep.subr.mxu0 0.0
      %2364 = vmatpush2.xpose.msra.mxu0 0.0
      %2365 = vmatprep.subr.mxu0 0.0
      %2366 = vmatpush2.xpose.msra.mxu0 0.0
      %2367 = vmatprep.subr.mxu0 0.0
      %2368 = vmatpush2.xpose.msra.mxu0 0.0
      %2369 = vmatprep.subr.mxu0 0.0
      %2370 = vmatpush2.xpose.msra.mxu0 0.0
      %2371 = vmatprep.subr.mxu0 0.0
      %2372 = vmatpush2.xpose.msra.mxu0 0.0
      %2373 = vmatprep.subr.mxu0 0.0
      %2374 = vmatpush2.xpose.msra.mxu0 0.0
      %2375 = vmatprep.subr.mxu0 0.0
      %2376 = vmatpush2.xpose.msra.mxu0 0.0
      %2377 = vmatprep.subr.mxu0 0.0
      %2378 = vmatpush2.xpose.msra.mxu0 0.0
      %2379 = vmatprep.subr.mxu0 0.0
      %2380 = vmatpush2.xpose.msra.mxu0 0.0
      %2381 = vmatprep.subr.mxu0 0.0
      %2382 = vmatpush2.xpose.msra.mxu0 0.0
      %2383 = vmatprep.subr.mxu0 0.0
      %2384 = vmatpush2.xpose.msra.mxu0 0.0
      %2385 = vmatprep.subr.mxu0 0.0
      %2386 = vmatpush2.xpose.msra.mxu0 0.0
      %2387 = vmatprep.mubr.f32.mxu0 0.0
      %2388 = vmatmul.mubr.f32.gmra.mxu0 %v2315
      %v2389 = vpop.f32.mrf.mxu0
      %v2390 = vadd.f32 %v2299, %v2389
      %v2391 = vpop.f32.mrf.mxu0
      %2392 = vmatprep.mubr.f32.mxu0 0.0
      %2393 = vmatmul.mubr.f32.gmra.mxu0 %v2317
      %v2394 = vpop.f32.mrf.mxu0
      %v2395 = vadd.f32 %v2304, %v2394
      %v2396 = vpop.f32.mrf.mxu0
      %2397 = vdwg.mxu0
      %v2398 = vsel %vm1112, %v2390, -inf
      %2399 = vmax.xlane.f32.xlu0 %v2398
      %v2400 = vpop.xlane.xlu0 %2399
      %v2401 = vsel %vm1112, %v2395, -inf
      %2402 = vmax.xlane.f32.xlu0 %v2401
      %v2403 = vpop.xlane.xlu0 %2402
      %v2404 = vsub.f32 %v2390, %v2400
      %v2405 = vsub.f32 %v2395, %v2403
      %v2406 = vmul.f32 %v2404, 1.442695
      %v2407 = vpow.pop %v2406
      %v2408 = vmul.f32 %v2405, 1.442695
      %v2409 = vpow.pop %v2408
      %v2410 = vsel %vm1112, %v2407, 0.0
      %2411 = vadd.xlane.f32.xlu0 %v2410
      %v2412 = vpop.xlane.xlu0 %2411
      %v2413 = vsel %vm1112, %v2409, 0.0
      %2414 = vadd.xlane.f32.xlu0 %v2413
      %v2415 = vpop.xlane.xlu0 %2414
      %v2416 = vrcp.pop %v2412
      %v2417 = vrcp.pop %v2415
      %v2418 = vmul.f32 %v2407, %v2416
      %v2419 = vmul.f32 %v2409, %v2417
      %2420 = vrot.lane.b32.xlu0 %v1009, 32
      %v2421 = vpop.permute.xlu0 %2420
      %2422 = vrot.lane.b32.xlu0 %v1014, 32
      %v2423 = vpop.permute.xlu0 %2422
      %v2427 = vsel %vm1112, %v2418, 0
      %v2430 = vsel %vm1112, %v2419, 0
      %2432 = vmatprep.subr.mxu0 0.0
      %2433 = vmatpush1.msra.mxu0 0.0
      %2434 = vmatprep.subr.mxu0 0.0
      %2435 = vmatpush1.msra.mxu0 0.0
      %2436 = vmatprep.subr.mxu0 0.0
      %2437 = vmatpush1.msra.mxu0 0.0
      %2438 = vmatprep.subr.mxu0 0.0
      %2439 = vmatpush1.msra.mxu0 0.0
      %2440 = vmatprep.subr.mxu0 0.0
      %2441 = vmatpush1.msra.mxu0 0.0
      %2442 = vmatprep.subr.mxu0 0.0
      %2443 = vmatpush1.msra.mxu0 0.0
      %2444 = vmatprep.subr.mxu0 0.0
      %2445 = vmatpush1.msra.mxu0 0.0
      %2446 = vmatprep.subr.mxu0 0.0
      %2447 = vmatpush1.msra.mxu0 0.0
      %2448 = vmatprep.subr.mxu0 0.0
      %2449 = vmatpush1.msra.mxu0 0.0
      %2450 = vmatprep.subr.mxu0 0.0
      %2451 = vmatpush1.msra.mxu0 0.0
      %2452 = vmatprep.subr.mxu0 0.0
      %2453 = vmatpush1.msra.mxu0 0.0
      %2454 = vmatprep.subr.mxu0 0.0
      %2455 = vmatpush1.msra.mxu0 0.0
      %2456 = vmatprep.subr.mxu0 0.0
      %2457 = vmatpush1.msra.mxu0 0.0
      %2458 = vmatprep.subr.mxu0 0.0
      %2459 = vmatpush1.msra.mxu0 0.0
      %2460 = vmatprep.subr.mxu0 0.0
      %2461 = vmatpush1.msra.mxu0 %v2423
      %2462 = vmatprep.subr.mxu0 0.0
      %2463 = vmatpush1.msra.mxu0 %v2421
      %2464 = vmatprep.subr.mxu0 0.0
      %2465 = vmatpush2.msra.mxu0 0.0
      %2466 = vmatprep.subr.mxu0 0.0
      %2467 = vmatpush2.msra.mxu0 0.0
      %2468 = vmatprep.subr.mxu0 0.0
      %2469 = vmatpush2.msra.mxu0 0.0
      %2470 = vmatprep.subr.mxu0 0.0
      %2471 = vmatpush2.msra.mxu0 0.0
      %2472 = vmatprep.subr.mxu0 0.0
      %2473 = vmatpush2.msra.mxu0 0.0
      %2474 = vmatprep.subr.mxu0 0.0
      %2475 = vmatpush2.msra.mxu0 0.0
      %2476 = vmatprep.subr.mxu0 0.0
      %2477 = vmatpush2.msra.mxu0 0.0
      %2478 = vmatprep.subr.mxu0 0.0
      %2479 = vmatpush2.msra.mxu0 0.0
      %2480 = vmatprep.subr.mxu0 0.0
      %2481 = vmatpush2.msra.mxu0 0.0
      %2482 = vmatprep.subr.mxu0 0.0
      %2483 = vmatpush2.msra.mxu0 0.0
      %2484 = vmatprep.subr.mxu0 0.0
      %2485 = vmatpush2.msra.mxu0 0.0
      %2486 = vmatprep.subr.mxu0 0.0
      %2487 = vmatpush2.msra.mxu0 0.0
      %2488 = vmatprep.subr.mxu0 0.0
      %2489 = vmatpush2.msra.mxu0 0.0
      %2490 = vmatprep.subr.mxu0 0.0
      %2491 = vmatpush2.msra.mxu0 0.0
      %2492 = vmatprep.subr.mxu0 0.0
      %2493 = vmatpush2.msra.mxu0 0.0
      %2494 = vmatprep.subr.mxu0 0.0
      %2495 = vmatpush2.msra.mxu0 0.0
      %2496 = vmatprep.mubr.f32.mxu0 0.0
      %2497 = vmatmul.mubr.f32.gmra.mxu0 %v2427
      %v2498 = vpop.f32.mrf.mxu0
      %v2499 = vadd.f32 0.0, %v2498
      %v2500 = vpop.f32.mrf.mxu0
      %2501 = vmatprep.mubr.f32.mxu0 0.0
      %2502 = vmatmul.mubr.f32.gmra.mxu0 %v2430
      %v2503 = vpop.f32.mrf.mxu0
      %v2504 = vadd.f32 0.0, %v2503
      %v2505 = vpop.f32.mrf.mxu0
      %2506 = vdwg.mxu0
      %v2508 = vsel %vm1382, %v2499, 0
      %v2511 = vsel %vm1382, %v2504, 0
      %2513 = vmatprep.subr.mxu0 0.0
      %2514 = vmatpush1.msra.mxu0 0.0
      %2515 = vmatprep.subr.mxu0 0.0
      %2516 = vmatpush1.msra.mxu0 0.0
      %2517 = vmatprep.subr.mxu0 0.0
      %2518 = vmatpush1.msra.mxu0 0.0
      %2519 = vmatprep.subr.mxu0 0.0
      %2520 = vmatpush1.msra.mxu0 0.0
      %2521 = vmatprep.subr.mxu0 0.0
      %2522 = vmatpush1.msra.mxu0 0.0
      %2523 = vmatprep.subr.mxu0 0.0
      %2524 = vmatpush1.msra.mxu0 0.0
      %2525 = vmatprep.subr.mxu0 0.0
      %2526 = vmatpush1.msra.mxu0 0.0
      %2527 = vmatprep.subr.mxu0 0.0
      %2528 = vmatpush1.msra.mxu0 0.0
      %2529 = vmatprep.subr.mxu0 0.0
      %2530 = vmatpush1.msra.mxu0 0.0
      %2531 = vmatprep.subr.mxu0 0.0
      %2532 = vmatpush1.msra.mxu0 0.0
      %2533 = vmatprep.subr.mxu0 0.0
      %2534 = vmatpush1.msra.mxu0 0.0
      %2535 = vmatprep.subr.mxu0 0.0
      %2536 = vmatpush1.msra.mxu0 0.0
      %2537 = vmatprep.subr.mxu0 0.0
      %2538 = vmatpush1.msra.mxu0 %v1090
      %2539 = vmatprep.subr.mxu0 0.0
      %2540 = vmatpush1.msra.mxu0 %v1089
      %2541 = vmatprep.subr.mxu0 0.0
      %2542 = vmatpush1.msra.mxu0 %v1088
      %2543 = vmatprep.subr.mxu0 0.0
      %2544 = vmatpush1.msra.mxu0 %v1087
      %2545 = vmatprep.subr.mxu0 0.0
      %2546 = vmatpush2.msra.mxu0 0.0
      %2547 = vmatprep.subr.mxu0 0.0
      %2548 = vmatpush2.msra.mxu0 0.0
      %2549 = vmatprep.subr.mxu0 0.0
      %2550 = vmatpush2.msra.mxu0 0.0
      %2551 = vmatprep.subr.mxu0 0.0
      %2552 = vmatpush2.msra.mxu0 0.0
      %2553 = vmatprep.subr.mxu0 0.0
      %2554 = vmatpush2.msra.mxu0 0.0
      %2555 = vmatprep.subr.mxu0 0.0
      %2556 = vmatpush2.msra.mxu0 0.0
      %2557 = vmatprep.subr.mxu0 0.0
      %2558 = vmatpush2.msra.mxu0 0.0
      %2559 = vmatprep.subr.mxu0 0.0
      %2560 = vmatpush2.msra.mxu0 0.0
      %2561 = vmatprep.subr.mxu0 0.0
      %2562 = vmatpush2.msra.mxu0 0.0
      %2563 = vmatprep.subr.mxu0 0.0
      %2564 = vmatpush2.msra.mxu0 0.0
      %2565 = vmatprep.subr.mxu0 0.0
      %2566 = vmatpush2.msra.mxu0 0.0
      %2567 = vmatprep.subr.mxu0 0.0
      %2568 = vmatpush2.msra.mxu0 0.0
      %2569 = vmatprep.subr.mxu0 0.0
      %2570 = vmatpush2.msra.mxu0 0.0
      %2571 = vmatprep.subr.mxu0 0.0
      %2572 = vmatpush2.msra.mxu0 0.0
      %2573 = vmatprep.subr.mxu0 0.0
      %2574 = vmatpush2.msra.mxu0 0.0
      %2575 = vmatprep.subr.mxu0 0.0
      %2576 = vmatpush2.msra.mxu0 0.0
      %2577 = vmatprep.mubr.f32.mxu0 0.0
      %2578 = vmatmul.mubr.f32.gmra.mxu0 %v2508
      %v2579 = vpop.f32.mrf.mxu0
      %v2580 = vadd.f32 0.0, %v2579
      %v2581 = vpop.f32.mrf.mxu0
      %2582 = vmatprep.mubr.f32.mxu0 0.0
      %2583 = vmatmul.mubr.f32.gmra.mxu0 %v2511
      %v2584 = vpop.f32.mrf.mxu0
      %v2585 = vadd.f32 0.0, %v2584
      %v2586 = vpop.f32.mrf.mxu0
      %2587 = vdwg.mxu0
      %v2588 = vadd.f32 %v2214, %v2580
      %v2589 = vadd.f32 %v2215, %v2585
      %v2590 = vadd.f32 %v719, %v1096
      %v2591 = vadd.f32 %v720, %v1096
      %2594 = vrot.lane.b32.xlu0 %v1053, 64
      %v2595 = vpop.permute.xlu0 %2594
      %2596 = vrot.lane.b32.xlu0 %v1054, 64
      %v2597 = vpop.permute.xlu0 %2596
      %2600 = vrot.lane.b32.xlu0 %v1073, 64
      %v2601 = vpop.permute.xlu0 %2600
      %2602 = vrot.lane.b32.xlu0 %v1074, 64
      %v2603 = vpop.permute.xlu0 %2602
      %v2604 = vsel %vm1112, %v2595, 0
      %v2606 = vsel %vm1112, %v2597, 0
      %v2608 = vsel %vm1112, %v2601, 0
      %v2610 = vsel %vm1112, %v2603, 0
      %2612 = vmatprep.subr.mxu0 0.0
      %2613 = vmatpush1.xpose.msra.mxu0 0.0
      %2614 = vmatprep.subr.mxu0 0.0
      %2615 = vmatpush1.xpose.msra.mxu0 0.0
      %2616 = vmatprep.subr.mxu0 0.0
      %2617 = vmatpush1.xpose.msra.mxu0 0.0
      %2618 = vmatprep.subr.mxu0 0.0
      %2619 = vmatpush1.xpose.msra.mxu0 0.0
      %2620 = vmatprep.subr.mxu0 0.0
      %2621 = vmatpush1.xpose.msra.mxu0 0.0
      %2622 = vmatprep.subr.mxu0 0.0
      %2623 = vmatpush1.xpose.msra.mxu0 0.0
      %2624 = vmatprep.subr.mxu0 0.0
      %2625 = vmatpush1.xpose.msra.mxu0 0.0
      %2626 = vmatprep.subr.mxu0 0.0
      %2627 = vmatpush1.xpose.msra.mxu0 0.0
      %2628 = vmatprep.subr.mxu0 0.0
      %2629 = vmatpush1.xpose.msra.mxu0 0.0
      %2630 = vmatprep.subr.mxu0 0.0
      %2631 = vmatpush1.xpose.msra.mxu0 0.0
      %2632 = vmatprep.subr.mxu0 0.0
      %2633 = vmatpush1.xpose.msra.mxu0 0.0
      %2634 = vmatprep.subr.mxu0 0.0
      %2635 = vmatpush1.xpose.msra.mxu0 0.0
      %2636 = vmatprep.subr.mxu0 0.0
      %2637 = vmatpush1.xpose.msra.mxu0 0.0
      %2638 = vmatprep.subr.mxu0 0.0
      %2639 = vmatpush1.xpose.msra.mxu0 0.0
      %2640 = vmatprep.subr.mxu0 0.0
      %2641 = vmatpush1.xpose.msra.mxu0 %v2610
      %2642 = vmatprep.subr.mxu0 0.0
      %2643 = vmatpush1.xpose.msra.mxu0 %v2608
      %2644 = vmatprep.subr.mxu0 0.0
      %2645 = vmatpush2.xpose.msra.mxu0 0.0
      %2646 = vmatprep.subr.mxu0 0.0
      %2647 = vmatpush2.xpose.msra.mxu0 0.0
      %2648 = vmatprep.subr.mxu0 0.0
      %2649 = vmatpush2.xpose.msra.mxu0 0.0
      %2650 = vmatprep.subr.mxu0 0.0
      %2651 = vmatpush2.xpose.msra.mxu0 0.0
      %2652 = vmatprep.subr.mxu0 0.0
      %2653 = vmatpush2.xpose.msra.mxu0 0.0
      %2654 = vmatprep.subr.mxu0 0.0
      %2655 = vmatpush2.xpose.msra.mxu0 0.0
      %2656 = vmatprep.subr.mxu0 0.0
      %2657 = vmatpush2.xpose.msra.mxu0 0.0
      %2658 = vmatprep.subr.mxu0 0.0
      %2659 = vmatpush2.xpose.msra.mxu0 0.0
      %2660 = vmatprep.subr.mxu0 0.0
      %2661 = vmatpush2.xpose.msra.mxu0 0.0
      %2662 = vmatprep.subr.mxu0 0.0
      %2663 = vmatpush2.xpose.msra.mxu0 0.0
      %2664 = vmatprep.subr.mxu0 0.0
      %2665 = vmatpush2.xpose.msra.mxu0 0.0
      %2666 = vmatprep.subr.mxu0 0.0
      %2667 = vmatpush2.xpose.msra.mxu0 0.0
      %2668 = vmatprep.subr.mxu0 0.0
      %2669 = vmatpush2.xpose.msra.mxu0 0.0
      %2670 = vmatprep.subr.mxu0 0.0
      %2671 = vmatpush2.xpose.msra.mxu0 0.0
      %2672 = vmatprep.subr.mxu0 0.0
      %2673 = vmatpush2.xpose.msra.mxu0 0.0
      %2674 = vmatprep.subr.mxu0 0.0
      %2675 = vmatpush2.xpose.msra.mxu0 0.0
      %2676 = vmatprep.mubr.f32.mxu0 0.0
      %2677 = vmatmul.mubr.f32.gmra.mxu0 %v2604
      %v2678 = vpop.f32.mrf.mxu0
      %v2679 = vadd.f32 0.0, %v2678
      %v2680 = vpop.f32.mrf.mxu0
      %2681 = vmatprep.mubr.f32.mxu0 0.0
      %2682 = vmatmul.mubr.f32.gmra.mxu0 %v2606
      %v2683 = vpop.f32.mrf.mxu0
      %v2684 = vadd.f32 0.0, %v2683
      %v2685 = vpop.f32.mrf.mxu0
      %2686 = vdwg.mxu0
      %v2687 = vsel %vm1112, %v1053, 0
      %v2689 = vsel %vm1112, %v1054, 0
      %v2691 = vsel %vm1112, %v1073, 0
      %v2693 = vsel %vm1112, %v1074, 0
      %2695 = vmatprep.subr.mxu0 0.0
      %2696 = vmatpush1.xpose.msra.mxu0 0.0
      %2697 = vmatprep.subr.mxu0 0.0
      %2698 = vmatpush1.xpose.msra.mxu0 0.0
      %2699 = vmatprep.subr.mxu0 0.0
      %2700 = vmatpush1.xpose.msra.mxu0 0.0
      %2701 = vmatprep.subr.mxu0 0.0
      %2702 = vmatpush1.xpose.msra.mxu0 0.0
      %2703 = vmatprep.subr.mxu0 0.0
      %2704 = vmatpush1.xpose.msra.mxu0 0.0
      %2705 = vmatprep.subr.mxu0 0.0
      %2706 = vmatpush1.xpose.msra.mxu0 0.0
      %2707 = vmatprep.subr.mxu0 0.0
      %2708 = vmatpush1.xpose.msra.mxu0 0.0
      %2709 = vmatprep.subr.mxu0 0.0
      %2710 = vmatpush1.xpose.msra.mxu0 0.0
      %2711 = vmatprep.subr.mxu0 0.0
      %2712 = vmatpush1.xpose.msra.mxu0 0.0
      %2713 = vmatprep.subr.mxu0 0.0
      %2714 = vmatpush1.xpose.msra.mxu0 0.0
      %2715 = vmatprep.subr.mxu0 0.0
      %2716 = vmatpush1.xpose.msra.mxu0 0.0
      %2717 = vmatprep.subr.mxu0 0.0
      %2718 = vmatpush1.xpose.msra.mxu0 0.0
      %2719 = vmatprep.subr.mxu0 0.0
      %2720 = vmatpush1.xpose.msra.mxu0 0.0
      %2721 = vmatprep.subr.mxu0 0.0
      %2722 = vmatpush1.xpose.msra.mxu0 0.0
      %2723 = vmatprep.subr.mxu0 0.0
      %2724 = vmatpush1.xpose.msra.mxu0 %v2693
      %2725 = vmatprep.subr.mxu0 0.0
      %2726 = vmatpush1.xpose.msra.mxu0 %v2691
      %2727 = vmatprep.subr.mxu0 0.0
      %2728 = vmatpush2.xpose.msra.mxu0 0.0
      %2729 = vmatprep.subr.mxu0 0.0
      %2730 = vmatpush2.xpose.msra.mxu0 0.0
      %2731 = vmatprep.subr.mxu0 0.0
      %2732 = vmatpush2.xpose.msra.mxu0 0.0
      %2733 = vmatprep.subr.mxu0 0.0
      %2734 = vmatpush2.xpose.msra.mxu0 0.0
      %2735 = vmatprep.subr.mxu0 0.0
      %2736 = vmatpush2.xpose.msra.mxu0 0.0
      %2737 = vmatprep.subr.mxu0 0.0
      %2738 = vmatpush2.xpose.msra.mxu0 0.0
      %2739 = vmatprep.subr.mxu0 0.0
      %2740 = vmatpush2.xpose.msra.mxu0 0.0
      %2741 = vmatprep.subr.mxu0 0.0
      %2742 = vmatpush2.xpose.msra.mxu0 0.0
      %2743 = vmatprep.subr.mxu0 0.0
      %2744 = vmatpush2.xpose.msra.mxu0 0.0
      %2745 = vmatprep.subr.mxu0 0.0
      %2746 = vmatpush2.xpose.msra.mxu0 0.0
      %2747 = vmatprep.subr.mxu0 0.0
      %2748 = vmatpush2.xpose.msra.mxu0 0.0
      %2749 = vmatprep.subr.mxu0 0.0
      %2750 = vmatpush2.xpose.msra.mxu0 0.0
      %2751 = vmatprep.subr.mxu0 0.0
      %2752 = vmatpush2.xpose.msra.mxu0 0.0
      %2753 = vmatprep.subr.mxu0 0.0
      %2754 = vmatpush2.xpose.msra.mxu0 0.0
      %2755 = vmatprep.subr.mxu0 0.0
      %2756 = vmatpush2.xpose.msra.mxu0 0.0
      %2757 = vmatprep.subr.mxu0 0.0
      %2758 = vmatpush2.xpose.msra.mxu0 0.0
      %2759 = vmatprep.mubr.f32.mxu0 0.0
      %2760 = vmatmul.mubr.f32.gmra.mxu0 %v2687
      %v2761 = vpop.f32.mrf.mxu0
      %v2762 = vadd.f32 %v2679, %v2761
      %v2763 = vpop.f32.mrf.mxu0
      %2764 = vmatprep.mubr.f32.mxu0 0.0
      %2765 = vmatmul.mubr.f32.gmra.mxu0 %v2689
      %v2766 = vpop.f32.mrf.mxu0
      %v2767 = vadd.f32 %v2684, %v2766
      %v2768 = vpop.f32.mrf.mxu0
      %2769 = vdwg.mxu0
      %v2770 = vsel %vm1112, %v2762, -inf
      %2771 = vmax.xlane.f32.xlu0 %v2770
      %v2772 = vpop.xlane.xlu0 %2771
      %v2773 = vsel %vm1112, %v2767, -inf
      %2774 = vmax.xlane.f32.xlu0 %v2773
      %v2775 = vpop.xlane.xlu0 %2774
      %v2776 = vsub.f32 %v2762, %v2772
      %v2777 = vsub.f32 %v2767, %v2775
      %v2778 = vmul.f32 %v2776, 1.442695
      %v2779 = vpow.pop %v2778
      %v2780 = vmul.f32 %v2777, 1.442695
      %v2781 = vpow.pop %v2780
      %v2782 = vsel %vm1112, %v2779, 0.0
      %2783 = vadd.xlane.f32.xlu0 %v2782
      %v2784 = vpop.xlane.xlu0 %2783
      %v2785 = vsel %vm1112, %v2781, 0.0
      %2786 = vadd.xlane.f32.xlu0 %v2785
      %v2787 = vpop.xlane.xlu0 %2786
      %v2788 = vrcp.pop %v2784
      %v2789 = vrcp.pop %v2787
      %v2790 = vmul.f32 %v2779, %v2788
      %v2791 = vmul.f32 %v2781, %v2789
      %v2793 = vsel %vm1112, %v2790, 0
      %v2796 = vsel %vm1112, %v2791, 0
      %2798 = vmatprep.subr.mxu0 0.0
      %2799 = vmatpush1.msra.mxu0 0.0
      %2800 = vmatprep.subr.mxu0 0.0
      %2801 = vmatpush1.msra.mxu0 0.0
      %2802 = vmatprep.subr.mxu0 0.0
      %2803 = vmatpush1.msra.mxu0 0.0
      %2804 = vmatprep.subr.mxu0 0.0
      %2805 = vmatpush1.msra.mxu0 0.0
      %2806 = vmatprep.subr.mxu0 0.0
      %2807 = vmatpush1.msra.mxu0 0.0
      %2808 = vmatprep.subr.mxu0 0.0
      %2809 = vmatpush1.msra.mxu0 0.0
      %2810 = vmatprep.subr.mxu0 0.0
      %2811 = vmatpush1.msra.mxu0 0.0
      %2812 = vmatprep.subr.mxu0 0.0
      %2813 = vmatpush1.msra.mxu0 0.0
      %2814 = vmatprep.subr.mxu0 0.0
      %2815 = vmatpush1.msra.mxu0 0.0
      %2816 = vmatprep.subr.mxu0 0.0
      %2817 = vmatpush1.msra.mxu0 0.0
      %2818 = vmatprep.subr.mxu0 0.0
      %2819 = vmatpush1.msra.mxu0 0.0
      %2820 = vmatprep.subr.mxu0 0.0
      %2821 = vmatpush1.msra.mxu0 0.0
      %2822 = vmatprep.subr.mxu0 0.0
      %2823 = vmatpush1.msra.mxu0 0.0
      %2824 = vmatprep.subr.mxu0 0.0
      %2825 = vmatpush1.msra.mxu0 0.0
      %2826 = vmatprep.subr.mxu0 0.0
      %2827 = vmatpush1.msra.mxu0 %v1024
      %2828 = vmatprep.subr.mxu0 0.0
      %2829 = vmatpush1.msra.mxu0 %v1019
      %2830 = vmatprep.subr.mxu0 0.0
      %2831 = vmatpush2.msra.mxu0 0.0
      %2832 = vmatprep.subr.mxu0 0.0
      %2833 = vmatpush2.msra.mxu0 0.0
      %2834 = vmatprep.subr.mxu0 0.0
      %2835 = vmatpush2.msra.mxu0 0.0
      %2836 = vmatprep.subr.mxu0 0.0
      %2837 = vmatpush2.msra.mxu0 0.0
      %2838 = vmatprep.subr.mxu0 0.0
      %2839 = vmatpush2.msra.mxu0 0.0
      %2840 = vmatprep.subr.mxu0 0.0
      %2841 = vmatpush2.msra.mxu0 0.0
      %2842 = vmatprep.subr.mxu0 0.0
      %2843 = vmatpush2.msra.mxu0 0.0
      %2844 = vmatprep.subr.mxu0 0.0
      %2845 = vmatpush2.msra.mxu0 0.0
      %2846 = vmatprep.subr.mxu0 0.0
      %2847 = vmatpush2.msra.mxu0 0.0
      %2848 = vmatprep.subr.mxu0 0.0
      %2849 = vmatpush2.msra.mxu0 0.0
      %2850 = vmatprep.subr.mxu0 0.0
      %2851 = vmatpush2.msra.mxu0 0.0
      %2852 = vmatprep.subr.mxu0 0.0
      %2853 = vmatpush2.msra.mxu0 0.0
      %2854 = vmatprep.subr.mxu0 0.0
      %2855 = vmatpush2.msra.mxu0 0.0
      %2856 = vmatprep.subr.mxu0 0.0
      %2857 = vmatpush2.msra.mxu0 0.0
      %2858 = vmatprep.subr.mxu0 0.0
      %2859 = vmatpush2.msra.mxu0 0.0
      %2860 = vmatprep.subr.mxu0 0.0
      %2861 = vmatpush2.msra.mxu0 0.0
      %2862 = vmatprep.mubr.f32.mxu0 0.0
      %2863 = vmatmul.mubr.f32.gmra.mxu0 %v2793
      %v2864 = vpop.f32.mrf.mxu0
      %v2865 = vadd.f32 0.0, %v2864
      %v2866 = vpop.f32.mrf.mxu0
      %2867 = vmatprep.mubr.f32.mxu0 0.0
      %2868 = vmatmul.mubr.f32.gmra.mxu0 %v2796
      %v2869 = vpop.f32.mrf.mxu0
      %v2870 = vadd.f32 0.0, %v2869
      %v2871 = vpop.f32.mrf.mxu0
      %2872 = vdwg.mxu0
      %v2874 = vsel %vm1382, %v2865, 0
      %v2877 = vsel %vm1382, %v2870, 0
      %2879 = vmatprep.subr.mxu0 0.0
      %2880 = vmatpush1.msra.mxu0 0.0
      %2881 = vmatprep.subr.mxu0 0.0
      %2882 = vmatpush1.msra.mxu0 0.0
      %2883 = vmatprep.subr.mxu0 0.0
      %2884 = vmatpush1.msra.mxu0 0.0
      %2885 = vmatprep.subr.mxu0 0.0
      %2886 = vmatpush1.msra.mxu0 0.0
      %2887 = vmatprep.subr.mxu0 0.0
      %2888 = vmatpush1.msra.mxu0 0.0
      %2889 = vmatprep.subr.mxu0 0.0
      %2890 = vmatpush1.msra.mxu0 0.0
      %2891 = vmatprep.subr.mxu0 0.0
      %2892 = vmatpush1.msra.mxu0 0.0
      %2893 = vmatprep.subr.mxu0 0.0
      %2894 = vmatpush1.msra.mxu0 0.0
      %2895 = vmatprep.subr.mxu0 0.0
      %2896 = vmatpush1.msra.mxu0 0.0
      %2897 = vmatprep.subr.mxu0 0.0
      %2898 = vmatpush1.msra.mxu0 0.0
      %2899 = vmatprep.subr.mxu0 0.0
      %2900 = vmatpush1.msra.mxu0 0.0
      %2901 = vmatprep.subr.mxu0 0.0
      %2902 = vmatpush1.msra.mxu0 0.0
      %2903 = vmatprep.subr.mxu0 0.0
      %2904 = vmatpush1.msra.mxu0 %v1078
      %2905 = vmatprep.subr.mxu0 0.0
      %2906 = vmatpush1.msra.mxu0 %v1077
      %2907 = vmatprep.subr.mxu0 0.0
      %2908 = vmatpush1.msra.mxu0 %v1076
      %2909 = vmatprep.subr.mxu0 0.0
      %2910 = vmatpush1.msra.mxu0 %v1075
      %2911 = vmatprep.subr.mxu0 0.0
      %2912 = vmatpush2.msra.mxu0 0.0
      %2913 = vmatprep.subr.mxu0 0.0
      %2914 = vmatpush2.msra.mxu0 0.0
      %2915 = vmatprep.subr.mxu0 0.0
      %2916 = vmatpush2.msra.mxu0 0.0
      %2917 = vmatprep.subr.mxu0 0.0
      %2918 = vmatpush2.msra.mxu0 0.0
      %2919 = vmatprep.subr.mxu0 0.0
      %2920 = vmatpush2.msra.mxu0 0.0
      %2921 = vmatprep.subr.mxu0 0.0
      %2922 = vmatpush2.msra.mxu0 0.0
      %2923 = vmatprep.subr.mxu0 0.0
      %2924 = vmatpush2.msra.mxu0 0.0
      %2925 = vmatprep.subr.mxu0 0.0
      %2926 = vmatpush2.msra.mxu0 0.0
      %2927 = vmatprep.subr.mxu0 0.0
      %2928 = vmatpush2.msra.mxu0 0.0
      %2929 = vmatprep.subr.mxu0 0.0
      %2930 = vmatpush2.msra.mxu0 0.0
      %2931 = vmatprep.subr.mxu0 0.0
      %2932 = vmatpush2.msra.mxu0 0.0
      %2933 = vmatprep.subr.mxu0 0.0
      %2934 = vmatpush2.msra.mxu0 0.0
      %2935 = vmatprep.subr.mxu0 0.0
      %2936 = vmatpush2.msra.mxu0 0.0
      %2937 = vmatprep.subr.mxu0 0.0
      %2938 = vmatpush2.msra.mxu0 0.0
      %2939 = vmatprep.subr.mxu0 0.0
      %2940 = vmatpush2.msra.mxu0 0.0
      %2941 = vmatprep.subr.mxu0 0.0
      %2942 = vmatpush2.msra.mxu0 0.0
      %2943 = vmatprep.mubr.f32.mxu0 0.0
      %2944 = vmatmul.mubr.f32.gmra.mxu0 %v2874
      %v2945 = vpop.f32.mrf.mxu0
      %v2946 = vadd.f32 0.0, %v2945
      %v2947 = vpop.f32.mrf.mxu0
      %2948 = vmatprep.mubr.f32.mxu0 0.0
      %2949 = vmatmul.mubr.f32.gmra.mxu0 %v2877
      %v2950 = vpop.f32.mrf.mxu0
      %v2951 = vadd.f32 0.0, %v2950
      %v2952 = vpop.f32.mrf.mxu0
      %2953 = vdwg.mxu0
      %v2954 = vadd.f32 %v2590, %v2946
      %v2955 = vadd.f32 %v2591, %v2951
      %2956 = vrot.lane.b32.xlu0 %v1053, 48
      %v2957 = vpop.permute.xlu0 %2956
      %2958 = vrot.lane.b32.xlu0 %v1054, 48
      %v2959 = vpop.permute.xlu0 %2958
      %2960 = vrot.lane.b32.xlu0 %v1073, 48
      %v2961 = vpop.permute.xlu0 %2960
      %2962 = vrot.lane.b32.xlu0 %v1074, 48
      %v2963 = vpop.permute.xlu0 %2962
      %v2964 = vsel %vm1112, %v2957, 0
      %v2966 = vsel %vm1112, %v2959, 0
      %v2968 = vsel %vm1112, %v2961, 0
      %v2970 = vsel %vm1112, %v2963, 0
      %2972 = vmatprep.subr.mxu0 0.0
      %2973 = vmatpush1.xpose.msra.mxu0 0.0
      %2974 = vmatprep.subr.mxu0 0.0
      %2975 = vmatpush1.xpose.msra.mxu0 0.0
      %2976 = vmatprep.subr.mxu0 0.0
      %2977 = vmatpush1.xpose.msra.mxu0 0.0
      %2978 = vmatprep.subr.mxu0 0.0
      %2979 = vmatpush1.xpose.msra.mxu0 0.0
      %2980 = vmatprep.subr.mxu0 0.0
      %2981 = vmatpush1.xpose.msra.mxu0 0.0
      %2982 = vmatprep.subr.mxu0 0.0
      %2983 = vmatpush1.xpose.msra.mxu0 0.0
      %2984 = vmatprep.subr.mxu0 0.0
      %2985 = vmatpush1.xpose.msra.mxu0 0.0
      %2986 = vmatprep.subr.mxu0 0.0
      %2987 = vmatpush1.xpose.msra.mxu0 0.0
      %2988 = vmatprep.subr.mxu0 0.0
      %2989 = vmatpush1.xpose.msra.mxu0 0.0
      %2990 = vmatprep.subr.mxu0 0.0
      %2991 = vmatpush1.xpose.msra.mxu0 0.0
      %2992 = vmatprep.subr.mxu0 0.0
      %2993 = vmatpush1.xpose.msra.mxu0 0.0
      %2994 = vmatprep.subr.mxu0 0.0
      %2995 = vmatpush1.xpose.msra.mxu0 0.0
      %2996 = vmatprep.subr.mxu0 0.0
      %2997 = vmatpush1.xpose.msra.mxu0 0.0
      %2998 = vmatprep.subr.mxu0 0.0
      %2999 = vmatpush1.xpose.msra.mxu0 0.0
      %3000 = vmatprep.subr.mxu0 0.0
      %3001 = vmatpush1.xpose.msra.mxu0 %v2970
      %3002 = vmatprep.subr.mxu0 0.0
      %3003 = vmatpush1.xpose.msra.mxu0 %v2968
      %3004 = vmatprep.subr.mxu0 0.0
      %3005 = vmatpush2.xpose.msra.mxu0 0.0
      %3006 = vmatprep.subr.mxu0 0.0
      %3007 = vmatpush2.xpose.msra.mxu0 0.0
      %3008 = vmatprep.subr.mxu0 0.0
      %3009 = vmatpush2.xpose.msra.mxu0 0.0
      %3010 = vmatprep.subr.mxu0 0.0
      %3011 = vmatpush2.xpose.msra.mxu0 0.0
      %3012 = vmatprep.subr.mxu0 0.0
      %3013 = vmatpush2.xpose.msra.mxu0 0.0
      %3014 = vmatprep.subr.mxu0 0.0
      %3015 = vmatpush2.xpose.msra.mxu0 0.0
      %3016 = vmatprep.subr.mxu0 0.0
      %3017 = vmatpush2.xpose.msra.mxu0 0.0
      %3018 = vmatprep.subr.mxu0 0.0
      %3019 = vmatpush2.xpose.msra.mxu0 0.0
      %3020 = vmatprep.subr.mxu0 0.0
      %3021 = vmatpush2.xpose.msra.mxu0 0.0
      %3022 = vmatprep.subr.mxu0 0.0
      %3023 = vmatpush2.xpose.msra.mxu0 0.0
      %3024 = vmatprep.subr.mxu0 0.0
      %3025 = vmatpush2.xpose.msra.mxu0 0.0
      %3026 = vmatprep.subr.mxu0 0.0
      %3027 = vmatpush2.xpose.msra.mxu0 0.0
      %3028 = vmatprep.subr.mxu0 0.0
      %3029 = vmatpush2.xpose.msra.mxu0 0.0
      %3030 = vmatprep.subr.mxu0 0.0
      %3031 = vmatpush2.xpose.msra.mxu0 0.0
      %3032 = vmatprep.subr.mxu0 0.0
      %3033 = vmatpush2.xpose.msra.mxu0 0.0
      %3034 = vmatprep.subr.mxu0 0.0
      %3035 = vmatpush2.xpose.msra.mxu0 0.0
      %3036 = vmatprep.mubr.f32.mxu0 0.0
      %3037 = vmatmul.mubr.f32.gmra.mxu0 %v2964
      %v3038 = vpop.f32.mrf.mxu0
      %v3039 = vadd.f32 0.0, %v3038
      %v3040 = vpop.f32.mrf.mxu0
      %3041 = vmatprep.mubr.f32.mxu0 0.0
      %3042 = vmatmul.mubr.f32.gmra.mxu0 %v2966
      %v3043 = vpop.f32.mrf.mxu0
      %v3044 = vadd.f32 0.0, %v3043
      %v3045 = vpop.f32.mrf.mxu0
      %3046 = vdwg.mxu0
      %3047 = vrot.lane.b32.xlu0 %v1053, 112
      %v3048 = vpop.permute.xlu0 %3047
      %3049 = vrot.lane.b32.xlu0 %v1054, 112
      %v3050 = vpop.permute.xlu0 %3049
      %3051 = vrot.lane.b32.xlu0 %v1073, 112
      %v3052 = vpop.permute.xlu0 %3051
      %3053 = vrot.lane.b32.xlu0 %v1074, 112
      %v3054 = vpop.permute.xlu0 %3053
      %v3055 = vsel %vm1112, %v3048, 0
      %v3057 = vsel %vm1112, %v3050, 0
      %v3059 = vsel %vm1112, %v3052, 0
      %v3061 = vsel %vm1112, %v3054, 0
      %3063 = vmatprep.subr.mxu0 0.0
      %3064 = vmatpush1.xpose.msra.mxu0 0.0
      %3065 = vmatprep.subr.mxu0 0.0
      %3066 = vmatpush1.xpose.msra.mxu0 0.0
      %3067 = vmatprep.subr.mxu0 0.0
      %3068 = vmatpush1.xpose.msra.mxu0 0.0
      %3069 = vmatprep.subr.mxu0 0.0
      %3070 = vmatpush1.xpose.msra.mxu0 0.0
      %3071 = vmatprep.subr.mxu0 0.0
      %3072 = vmatpush1.xpose.msra.mxu0 0.0
      %3073 = vmatprep.subr.mxu0 0.0
      %3074 = vmatpush1.xpose.msra.mxu0 0.0
      %3075 = vmatprep.subr.mxu0 0.0
      %3076 = vmatpush1.xpose.msra.mxu0 0.0
      %3077 = vmatprep.subr.mxu0 0.0
      %3078 = vmatpush1.xpose.msra.mxu0 0.0
      %3079 = vmatprep.subr.mxu0 0.0
      %3080 = vmatpush1.xpose.msra.mxu0 0.0
      %3081 = vmatprep.subr.mxu0 0.0
      %3082 = vmatpush1.xpose.msra.mxu0 0.0
      %3083 = vmatprep.subr.mxu0 0.0
      %3084 = vmatpush1.xpose.msra.mxu0 0.0
      %3085 = vmatprep.subr.mxu0 0.0
      %3086 = vmatpush1.xpose.msra.mxu0 0.0
      %3087 = vmatprep.subr.mxu0 0.0
      %3088 = vmatpush1.xpose.msra.mxu0 0.0
      %3089 = vmatprep.subr.mxu0 0.0
      %3090 = vmatpush1.xpose.msra.mxu0 0.0
      %3091 = vmatprep.subr.mxu0 0.0
      %3092 = vmatpush1.xpose.msra.mxu0 %v3061
      %3093 = vmatprep.subr.mxu0 0.0
      %3094 = vmatpush1.xpose.msra.mxu0 %v3059
      %3095 = vmatprep.subr.mxu0 0.0
      %3096 = vmatpush2.xpose.msra.mxu0 0.0
      %3097 = vmatprep.subr.mxu0 0.0
      %3098 = vmatpush2.xpose.msra.mxu0 0.0
      %3099 = vmatprep.subr.mxu0 0.0
      %3100 = vmatpush2.xpose.msra.mxu0 0.0
      %3101 = vmatprep.subr.mxu0 0.0
      %3102 = vmatpush2.xpose.msra.mxu0 0.0
      %3103 = vmatprep.subr.mxu0 0.0
      %3104 = vmatpush2.xpose.msra.mxu0 0.0
      %3105 = vmatprep.subr.mxu0 0.0
      %3106 = vmatpush2.xpose.msra.mxu0 0.0
      %3107 = vmatprep.subr.mxu0 0.0
      %3108 = vmatpush2.xpose.msra.mxu0 0.0
      %3109 = vmatprep.subr.mxu0 0.0
      %3110 = vmatpush2.xpose.msra.mxu0 0.0
      %3111 = vmatprep.subr.mxu0 0.0
      %3112 = vmatpush2.xpose.msra.mxu0 0.0
      %3113 = vmatprep.subr.mxu0 0.0
      %3114 = vmatpush2.xpose.msra.mxu0 0.0
      %3115 = vmatprep.subr.mxu0 0.0
      %3116 = vmatpush2.xpose.msra.mxu0 0.0
      %3117 = vmatprep.subr.mxu0 0.0
      %3118 = vmatpush2.xpose.msra.mxu0 0.0
      %3119 = vmatprep.subr.mxu0 0.0
      %3120 = vmatpush2.xpose.msra.mxu0 0.0
      %3121 = vmatprep.subr.mxu0 0.0
      %3122 = vmatpush2.xpose.msra.mxu0 0.0
      %3123 = vmatprep.subr.mxu0 0.0
      %3124 = vmatpush2.xpose.msra.mxu0 0.0
      %3125 = vmatprep.subr.mxu0 0.0
      %3126 = vmatpush2.xpose.msra.mxu0 0.0
      %3127 = vmatprep.mubr.f32.mxu0 0.0
      %3128 = vmatmul.mubr.f32.gmra.mxu0 %v3055
      %v3129 = vpop.f32.mrf.mxu0
      %v3130 = vadd.f32 %v3039, %v3129
      %v3131 = vpop.f32.mrf.mxu0
      %3132 = vmatprep.mubr.f32.mxu0 0.0
      %3133 = vmatmul.mubr.f32.gmra.mxu0 %v3057
      %v3134 = vpop.f32.mrf.mxu0
      %v3135 = vadd.f32 %v3044, %v3134
      %v3136 = vpop.f32.mrf.mxu0
      %3137 = vdwg.mxu0
      %v3138 = vsel %vm1112, %v3130, -inf
      %3139 = vmax.xlane.f32.xlu0 %v3138
      %v3140 = vpop.xlane.xlu0 %3139
      %v3141 = vsel %vm1112, %v3135, -inf
      %3142 = vmax.xlane.f32.xlu0 %v3141
      %v3143 = vpop.xlane.xlu0 %3142
      %v3144 = vsub.f32 %v3130, %v3140
      %v3145 = vsub.f32 %v3135, %v3143
      %v3146 = vmul.f32 %v3144, 1.442695
      %v3147 = vpow.pop %v3146
      %v3148 = vmul.f32 %v3145, 1.442695
      %v3149 = vpow.pop %v3148
      %v3150 = vsel %vm1112, %v3147, 0.0
      %3151 = vadd.xlane.f32.xlu0 %v3150
      %v3152 = vpop.xlane.xlu0 %3151
      %v3153 = vsel %vm1112, %v3149, 0.0
      %3154 = vadd.xlane.f32.xlu0 %v3153
      %v3155 = vpop.xlane.xlu0 %3154
      %v3156 = vrcp.pop %v3152
      %v3157 = vrcp.pop %v3155
      %v3158 = vmul.f32 %v3147, %v3156
      %v3159 = vmul.f32 %v3149, %v3157
      %3162 = vrot.lane.b32.xlu0 %v1019, 96
      %v3163 = vpop.permute.xlu0 %3162
      %3164 = vrot.lane.b32.xlu0 %v1024, 96
      %v3165 = vpop.permute.xlu0 %3164
      %v3169 = vsel %vm1112, %v3158, 0
      %v3172 = vsel %vm1112, %v3159, 0
      %3174 = vmatprep.subr.mxu0 0.0
      %3175 = vmatpush1.msra.mxu0 0.0
      %3176 = vmatprep.subr.mxu0 0.0
      %3177 = vmatpush1.msra.mxu0 0.0
      %3178 = vmatprep.subr.mxu0 0.0
      %3179 = vmatpush1.msra.mxu0 0.0
      %3180 = vmatprep.subr.mxu0 0.0
      %3181 = vmatpush1.msra.mxu0 0.0
      %3182 = vmatprep.subr.mxu0 0.0
      %3183 = vmatpush1.msra.mxu0 0.0
      %3184 = vmatprep.subr.mxu0 0.0
      %3185 = vmatpush1.msra.mxu0 0.0
      %3186 = vmatprep.subr.mxu0 0.0
      %3187 = vmatpush1.msra.mxu0 0.0
      %3188 = vmatprep.subr.mxu0 0.0
      %3189 = vmatpush1.msra.mxu0 0.0
      %3190 = vmatprep.subr.mxu0 0.0
      %3191 = vmatpush1.msra.mxu0 0.0
      %3192 = vmatprep.subr.mxu0 0.0
      %3193 = vmatpush1.msra.mxu0 0.0
      %3194 = vmatprep.subr.mxu0 0.0
      %3195 = vmatpush1.msra.mxu0 0.0
      %3196 = vmatprep.subr.mxu0 0.0
      %3197 = vmatpush1.msra.mxu0 0.0
      %3198 = vmatprep.subr.mxu0 0.0
      %3199 = vmatpush1.msra.mxu0 0.0
      %3200 = vmatprep.subr.mxu0 0.0
      %3201 = vmatpush1.msra.mxu0 0.0
      %3202 = vmatprep.subr.mxu0 0.0
      %3203 = vmatpush1.msra.mxu0 %v3165
      %3204 = vmatprep.subr.mxu0 0.0
      %3205 = vmatpush1.msra.mxu0 %v3163
      %3206 = vmatprep.subr.mxu0 0.0
      %3207 = vmatpush2.msra.mxu0 0.0
      %3208 = vmatprep.subr.mxu0 0.0
      %3209 = vmatpush2.msra.mxu0 0.0
      %3210 = vmatprep.subr.mxu0 0.0
      %3211 = vmatpush2.msra.mxu0 0.0
      %3212 = vmatprep.subr.mxu0 0.0
      %3213 = vmatpush2.msra.mxu0 0.0
      %3214 = vmatprep.subr.mxu0 0.0
      %3215 = vmatpush2.msra.mxu0 0.0
      %3216 = vmatprep.subr.mxu0 0.0
      %3217 = vmatpush2.msra.mxu0 0.0
      %3218 = vmatprep.subr.mxu0 0.0
      %3219 = vmatpush2.msra.mxu0 0.0
      %3220 = vmatprep.subr.mxu0 0.0
      %3221 = vmatpush2.msra.mxu0 0.0
      %3222 = vmatprep.subr.mxu0 0.0
      %3223 = vmatpush2.msra.mxu0 0.0
      %3224 = vmatprep.subr.mxu0 0.0
      %3225 = vmatpush2.msra.mxu0 0.0
      %3226 = vmatprep.subr.mxu0 0.0
      %3227 = vmatpush2.msra.mxu0 0.0
      %3228 = vmatprep.subr.mxu0 0.0
      %3229 = vmatpush2.msra.mxu0 0.0
      %3230 = vmatprep.subr.mxu0 0.0
      %3231 = vmatpush2.msra.mxu0 0.0
      %3232 = vmatprep.subr.mxu0 0.0
      %3233 = vmatpush2.msra.mxu0 0.0
      %3234 = vmatprep.subr.mxu0 0.0
      %3235 = vmatpush2.msra.mxu0 0.0
      %3236 = vmatprep.subr.mxu0 0.0
      %3237 = vmatpush2.msra.mxu0 0.0
      %3238 = vmatprep.mubr.f32.mxu0 0.0
      %3239 = vmatmul.mubr.f32.gmra.mxu0 %v3169
      %v3240 = vpop.f32.mrf.mxu0
      %v3241 = vadd.f32 0.0, %v3240
      %v3242 = vpop.f32.mrf.mxu0
      %3243 = vmatprep.mubr.f32.mxu0 0.0
      %3244 = vmatmul.mubr.f32.gmra.mxu0 %v3172
      %v3245 = vpop.f32.mrf.mxu0
      %v3246 = vadd.f32 0.0, %v3245
      %v3247 = vpop.f32.mrf.mxu0
      %3248 = vdwg.mxu0
      %v3250 = vsel %vm1382, %v3241, 0
      %v3253 = vsel %vm1382, %v3246, 0
      %3255 = vmatprep.subr.mxu0 0.0
      %3256 = vmatpush1.msra.mxu0 0.0
      %3257 = vmatprep.subr.mxu0 0.0
      %3258 = vmatpush1.msra.mxu0 0.0
      %3259 = vmatprep.subr.mxu0 0.0
      %3260 = vmatpush1.msra.mxu0 0.0
      %3261 = vmatprep.subr.mxu0 0.0
      %3262 = vmatpush1.msra.mxu0 0.0
      %3263 = vmatprep.subr.mxu0 0.0
      %3264 = vmatpush1.msra.mxu0 0.0
      %3265 = vmatprep.subr.mxu0 0.0
      %3266 = vmatpush1.msra.mxu0 0.0
      %3267 = vmatprep.subr.mxu0 0.0
      %3268 = vmatpush1.msra.mxu0 0.0
      %3269 = vmatprep.subr.mxu0 0.0
      %3270 = vmatpush1.msra.mxu0 0.0
      %3271 = vmatprep.subr.mxu0 0.0
      %3272 = vmatpush1.msra.mxu0 0.0
      %3273 = vmatprep.subr.mxu0 0.0
      %3274 = vmatpush1.msra.mxu0 0.0
      %3275 = vmatprep.subr.mxu0 0.0
      %3276 = vmatpush1.msra.mxu0 0.0
      %3277 = vmatprep.subr.mxu0 0.0
      %3278 = vmatpush1.msra.mxu0 0.0
      %3279 = vmatprep.subr.mxu0 0.0
      %3280 = vmatpush1.msra.mxu0 %v1082
      %3281 = vmatprep.subr.mxu0 0.0
      %3282 = vmatpush1.msra.mxu0 %v1081
      %3283 = vmatprep.subr.mxu0 0.0
      %3284 = vmatpush1.msra.mxu0 %v1080
      %3285 = vmatprep.subr.mxu0 0.0
      %3286 = vmatpush1.msra.mxu0 %v1079
      %3287 = vmatprep.subr.mxu0 0.0
      %3288 = vmatpush2.msra.mxu0 0.0
      %3289 = vmatprep.subr.mxu0 0.0
      %3290 = vmatpush2.msra.mxu0 0.0
      %3291 = vmatprep.subr.mxu0 0.0
      %3292 = vmatpush2.msra.mxu0 0.0
      %3293 = vmatprep.subr.mxu0 0.0
      %3294 = vmatpush2.msra.mxu0 0.0
      %3295 = vmatprep.subr.mxu0 0.0
      %3296 = vmatpush2.msra.mxu0 0.0
      %3297 = vmatprep.subr.mxu0 0.0
      %3298 = vmatpush2.msra.mxu0 0.0
      %3299 = vmatprep.subr.mxu0 0.0
      %3300 = vmatpush2.msra.mxu0 0.0
      %3301 = vmatprep.subr.mxu0 0.0
      %3302 = vmatpush2.msra.mxu0 0.0
      %3303 = vmatprep.subr.mxu0 0.0
      %3304 = vmatpush2.msra.mxu0 0.0
      %3305 = vmatprep.subr.mxu0 0.0
      %3306 = vmatpush2.msra.mxu0 0.0
      %3307 = vmatprep.subr.mxu0 0.0
      %3308 = vmatpush2.msra.mxu0 0.0
      %3309 = vmatprep.subr.mxu0 0.0
      %3310 = vmatpush2.msra.mxu0 0.0
      %3311 = vmatprep.subr.mxu0 0.0
      %3312 = vmatpush2.msra.mxu0 0.0
      %3313 = vmatprep.subr.mxu0 0.0
      %3314 = vmatpush2.msra.mxu0 0.0
      %3315 = vmatprep.subr.mxu0 0.0
      %3316 = vmatpush2.msra.mxu0 0.0
      %3317 = vmatprep.subr.mxu0 0.0
      %3318 = vmatpush2.msra.mxu0 0.0
      %3319 = vmatprep.mubr.f32.mxu0 0.0
      %3320 = vmatmul.mubr.f32.gmra.mxu0 %v3250
      %v3321 = vpop.f32.mrf.mxu0
      %v3322 = vadd.f32 0.0, %v3321
      %v3323 = vpop.f32.mrf.mxu0
      %3324 = vmatprep.mubr.f32.mxu0 0.0
      %3325 = vmatmul.mubr.f32.gmra.mxu0 %v3253
      %v3326 = vpop.f32.mrf.mxu0
      %v3327 = vadd.f32 0.0, %v3326
      %v3328 = vpop.f32.mrf.mxu0
      %3329 = vdwg.mxu0
      %v3330 = vadd.f32 %v2954, %v3322
      %v3331 = vadd.f32 %v2955, %v3327
      %3332 = vrot.lane.b32.xlu0 %v1053, 32
      %v3333 = vpop.permute.xlu0 %3332
      %3334 = vrot.lane.b32.xlu0 %v1054, 32
      %v3335 = vpop.permute.xlu0 %3334
      %3336 = vrot.lane.b32.xlu0 %v1073, 32
      %v3337 = vpop.permute.xlu0 %3336
      %3338 = vrot.lane.b32.xlu0 %v1074, 32
      %v3339 = vpop.permute.xlu0 %3338
      %v3340 = vsel %vm1112, %v3333, 0
      %v3342 = vsel %vm1112, %v3335, 0
      %v3344 = vsel %vm1112, %v3337, 0
      %v3346 = vsel %vm1112, %v3339, 0
      %3348 = vmatprep.subr.mxu0 0.0
      %3349 = vmatpush1.xpose.msra.mxu0 0.0
      %3350 = vmatprep.subr.mxu0 0.0
      %3351 = vmatpush1.xpose.msra.mxu0 0.0
      %3352 = vmatprep.subr.mxu0 0.0
      %3353 = vmatpush1.xpose.msra.mxu0 0.0
      %3354 = vmatprep.subr.mxu0 0.0
      %3355 = vmatpush1.xpose.msra.mxu0 0.0
      %3356 = vmatprep.subr.mxu0 0.0
      %3357 = vmatpush1.xpose.msra.mxu0 0.0
      %3358 = vmatprep.subr.mxu0 0.0
      %3359 = vmatpush1.xpose.msra.mxu0 0.0
      %3360 = vmatprep.subr.mxu0 0.0
      %3361 = vmatpush1.xpose.msra.mxu0 0.0
      %3362 = vmatprep.subr.mxu0 0.0
      %3363 = vmatpush1.xpose.msra.mxu0 0.0
      %3364 = vmatprep.subr.mxu0 0.0
      %3365 = vmatpush1.xpose.msra.mxu0 0.0
      %3366 = vmatprep.subr.mxu0 0.0
      %3367 = vmatpush1.xpose.msra.mxu0 0.0
      %3368 = vmatprep.subr.mxu0 0.0
      %3369 = vmatpush1.xpose.msra.mxu0 0.0
      %3370 = vmatprep.subr.mxu0 0.0
      %3371 = vmatpush1.xpose.msra.mxu0 0.0
      %3372 = vmatprep.subr.mxu0 0.0
      %3373 = vmatpush1.xpose.msra.mxu0 0.0
      %3374 = vmatprep.subr.mxu0 0.0
      %3375 = vmatpush1.xpose.msra.mxu0 0.0
      %3376 = vmatprep.subr.mxu0 0.0
      %3377 = vmatpush1.xpose.msra.mxu0 %v3346
      %3378 = vmatprep.subr.mxu0 0.0
      %3379 = vmatpush1.xpose.msra.mxu0 %v3344
      %3380 = vmatprep.subr.mxu0 0.0
      %3381 = vmatpush2.xpose.msra.mxu0 0.0
      %3382 = vmatprep.subr.mxu0 0.0
      %3383 = vmatpush2.xpose.msra.mxu0 0.0
      %3384 = vmatprep.subr.mxu0 0.0
      %3385 = vmatpush2.xpose.msra.mxu0 0.0
      %3386 = vmatprep.subr.mxu0 0.0
      %3387 = vmatpush2.xpose.msra.mxu0 0.0
      %3388 = vmatprep.subr.mxu0 0.0
      %3389 = vmatpush2.xpose.msra.mxu0 0.0
      %3390 = vmatprep.subr.mxu0 0.0
      %3391 = vmatpush2.xpose.msra.mxu0 0.0
      %3392 = vmatprep.subr.mxu0 0.0
      %3393 = vmatpush2.xpose.msra.mxu0 0.0
      %3394 = vmatprep.subr.mxu0 0.0
      %3395 = vmatpush2.xpose.msra.mxu0 0.0
      %3396 = vmatprep.subr.mxu0 0.0
      %3397 = vmatpush2.xpose.msra.mxu0 0.0
      %3398 = vmatprep.subr.mxu0 0.0
      %3399 = vmatpush2.xpose.msra.mxu0 0.0
      %3400 = vmatprep.subr.mxu0 0.0
      %3401 = vmatpush2.xpose.msra.mxu0 0.0
      %3402 = vmatprep.subr.mxu0 0.0
      %3403 = vmatpush2.xpose.msra.mxu0 0.0
      %3404 = vmatprep.subr.mxu0 0.0
      %3405 = vmatpush2.xpose.msra.mxu0 0.0
      %3406 = vmatprep.subr.mxu0 0.0
      %3407 = vmatpush2.xpose.msra.mxu0 0.0
      %3408 = vmatprep.subr.mxu0 0.0
      %3409 = vmatpush2.xpose.msra.mxu0 0.0
      %3410 = vmatprep.subr.mxu0 0.0
      %3411 = vmatpush2.xpose.msra.mxu0 0.0
      %3412 = vmatprep.mubr.f32.mxu0 0.0
      %3413 = vmatmul.mubr.f32.gmra.mxu0 %v3340
      %v3414 = vpop.f32.mrf.mxu0
      %v3415 = vadd.f32 0.0, %v3414
      %v3416 = vpop.f32.mrf.mxu0
      %3417 = vmatprep.mubr.f32.mxu0 0.0
      %3418 = vmatmul.mubr.f32.gmra.mxu0 %v3342
      %v3419 = vpop.f32.mrf.mxu0
      %v3420 = vadd.f32 0.0, %v3419
      %v3421 = vpop.f32.mrf.mxu0
      %3422 = vdwg.mxu0
      %3423 = vrot.lane.b32.xlu0 %v1053, 96
      %v3424 = vpop.permute.xlu0 %3423
      %3425 = vrot.lane.b32.xlu0 %v1054, 96
      %v3426 = vpop.permute.xlu0 %3425
      %3427 = vrot.lane.b32.xlu0 %v1073, 96
      %v3428 = vpop.permute.xlu0 %3427
      %3429 = vrot.lane.b32.xlu0 %v1074, 96
      %v3430 = vpop.permute.xlu0 %3429
      %v3431 = vsel %vm1112, %v3424, 0
      %v3433 = vsel %vm1112, %v3426, 0
      %v3435 = vsel %vm1112, %v3428, 0
      %v3437 = vsel %vm1112, %v3430, 0
      %3439 = vmatprep.subr.mxu0 0.0
      %3440 = vmatpush1.xpose.msra.mxu0 0.0
      %3441 = vmatprep.subr.mxu0 0.0
      %3442 = vmatpush1.xpose.msra.mxu0 0.0
      %3443 = vmatprep.subr.mxu0 0.0
      %3444 = vmatpush1.xpose.msra.mxu0 0.0
      %3445 = vmatprep.subr.mxu0 0.0
      %3446 = vmatpush1.xpose.msra.mxu0 0.0
      %3447 = vmatprep.subr.mxu0 0.0
      %3448 = vmatpush1.xpose.msra.mxu0 0.0
      %3449 = vmatprep.subr.mxu0 0.0
      %3450 = vmatpush1.xpose.msra.mxu0 0.0
      %3451 = vmatprep.subr.mxu0 0.0
      %3452 = vmatpush1.xpose.msra.mxu0 0.0
      %3453 = vmatprep.subr.mxu0 0.0
      %3454 = vmatpush1.xpose.msra.mxu0 0.0
      %3455 = vmatprep.subr.mxu0 0.0
      %3456 = vmatpush1.xpose.msra.mxu0 0.0
      %3457 = vmatprep.subr.mxu0 0.0
      %3458 = vmatpush1.xpose.msra.mxu0 0.0
      %3459 = vmatprep.subr.mxu0 0.0
      %3460 = vmatpush1.xpose.msra.mxu0 0.0
      %3461 = vmatprep.subr.mxu0 0.0
      %3462 = vmatpush1.xpose.msra.mxu0 0.0
      %3463 = vmatprep.subr.mxu0 0.0
      %3464 = vmatpush1.xpose.msra.mxu0 0.0
      %3465 = vmatprep.subr.mxu0 0.0
      %3466 = vmatpush1.xpose.msra.mxu0 0.0
      %3467 = vmatprep.subr.mxu0 0.0
      %3468 = vmatpush1.xpose.msra.mxu0 %v3437
      %3469 = vmatprep.subr.mxu0 0.0
      %3470 = vmatpush1.xpose.msra.mxu0 %v3435
      %3471 = vmatprep.subr.mxu0 0.0
      %3472 = vmatpush2.xpose.msra.mxu0 0.0
      %3473 = vmatprep.subr.mxu0 0.0
      %3474 = vmatpush2.xpose.msra.mxu0 0.0
      %3475 = vmatprep.subr.mxu0 0.0
      %3476 = vmatpush2.xpose.msra.mxu0 0.0
      %3477 = vmatprep.subr.mxu0 0.0
      %3478 = vmatpush2.xpose.msra.mxu0 0.0
      %3479 = vmatprep.subr.mxu0 0.0
      %3480 = vmatpush2.xpose.msra.mxu0 0.0
      %3481 = vmatprep.subr.mxu0 0.0
      %3482 = vmatpush2.xpose.msra.mxu0 0.0
      %3483 = vmatprep.subr.mxu0 0.0
      %3484 = vmatpush2.xpose.msra.mxu0 0.0
      %3485 = vmatprep.subr.mxu0 0.0
      %3486 = vmatpush2.xpose.msra.mxu0 0.0
      %3487 = vmatprep.subr.mxu0 0.0
      %3488 = vmatpush2.xpose.msra.mxu0 0.0
      %3489 = vmatprep.subr.mxu0 0.0
      %3490 = vmatpush2.xpose.msra.mxu0 0.0
      %3491 = vmatprep.subr.mxu0 0.0
      %3492 = vmatpush2.xpose.msra.mxu0 0.0
      %3493 = vmatprep.subr.mxu0 0.0
      %3494 = vmatpush2.xpose.msra.mxu0 0.0
      %3495 = vmatprep.subr.mxu0 0.0
      %3496 = vmatpush2.xpose.msra.mxu0 0.0
      %3497 = vmatprep.subr.mxu0 0.0
      %3498 = vmatpush2.xpose.msra.mxu0 0.0
      %3499 = vmatprep.subr.mxu0 0.0
      %3500 = vmatpush2.xpose.msra.mxu0 0.0
      %3501 = vmatprep.subr.mxu0 0.0
      %3502 = vmatpush2.xpose.msra.mxu0 0.0
      %3503 = vmatprep.mubr.f32.mxu0 0.0
      %3504 = vmatmul.mubr.f32.gmra.mxu0 %v3431
      %v3505 = vpop.f32.mrf.mxu0
      %v3506 = vadd.f32 %v3415, %v3505
      %v3507 = vpop.f32.mrf.mxu0
      %3508 = vmatprep.mubr.f32.mxu0 0.0
      %3509 = vmatmul.mubr.f32.gmra.mxu0 %v3433
      %v3510 = vpop.f32.mrf.mxu0
      %v3511 = vadd.f32 %v3420, %v3510
      %v3512 = vpop.f32.mrf.mxu0
      %3513 = vdwg.mxu0
      %v3514 = vsel %vm1112, %v3506, -inf
      %3515 = vmax.xlane.f32.xlu0 %v3514
      %v3516 = vpop.xlane.xlu0 %3515
      %v3517 = vsel %vm1112, %v3511, -inf
      %3518 = vmax.xlane.f32.xlu0 %v3517
      %v3519 = vpop.xlane.xlu0 %3518
      %v3520 = vsub.f32 %v3506, %v3516
      %v3521 = vsub.f32 %v3511, %v3519
      %v3522 = vmul.f32 %v3520, 1.442695
      %v3523 = vpow.pop %v3522
      %v3524 = vmul.f32 %v3521, 1.442695
      %v3525 = vpow.pop %v3524
      %v3526 = vsel %vm1112, %v3523, 0.0
      %3527 = vadd.xlane.f32.xlu0 %v3526
      %v3528 = vpop.xlane.xlu0 %3527
      %v3529 = vsel %vm1112, %v3525, 0.0
      %3530 = vadd.xlane.f32.xlu0 %v3529
      %v3531 = vpop.xlane.xlu0 %3530
      %v3532 = vrcp.pop %v3528
      %v3533 = vrcp.pop %v3531
      %v3534 = vmul.f32 %v3523, %v3532
      %v3535 = vmul.f32 %v3525, %v3533
      %3536 = vrot.lane.b32.xlu0 %v1019, 64
      %v3537 = vpop.permute.xlu0 %3536
      %3538 = vrot.lane.b32.xlu0 %v1024, 64
      %v3539 = vpop.permute.xlu0 %3538
      %v3543 = vsel %vm1112, %v3534, 0
      %v3546 = vsel %vm1112, %v3535, 0
      %3548 = vmatprep.subr.mxu0 0.0
      %3549 = vmatpush1.msra.mxu0 0.0
      %3550 = vmatprep.subr.mxu0 0.0
      %3551 = vmatpush1.msra.mxu0 0.0
      %3552 = vmatprep.subr.mxu0 0.0
      %3553 = vmatpush1.msra.mxu0 0.0
      %3554 = vmatprep.subr.mxu0 0.0
      %3555 = vmatpush1.msra.mxu0 0.0
      %3556 = vmatprep.subr.mxu0 0.0
      %3557 = vmatpush1.msra.mxu0 0.0
      %3558 = vmatprep.subr.mxu0 0.0
      %3559 = vmatpush1.msra.mxu0 0.0
      %3560 = vmatprep.subr.mxu0 0.0
      %3561 = vmatpush1.msra.mxu0 0.0
      %3562 = vmatprep.subr.mxu0 0.0
      %3563 = vmatpush1.msra.mxu0 0.0
      %3564 = vmatprep.subr.mxu0 0.0
      %3565 = vmatpush1.msra.mxu0 0.0
      %3566 = vmatprep.subr.mxu0 0.0
      %3567 = vmatpush1.msra.mxu0 0.0
      %3568 = vmatprep.subr.mxu0 0.0
      %3569 = vmatpush1.msra.mxu0 0.0
      %3570 = vmatprep.subr.mxu0 0.0
      %3571 = vmatpush1.msra.mxu0 0.0
      %3572 = vmatprep.subr.mxu0 0.0
      %3573 = vmatpush1.msra.mxu0 0.0
      %3574 = vmatprep.subr.mxu0 0.0
      %3575 = vmatpush1.msra.mxu0 0.0
      %3576 = vmatprep.subr.mxu0 0.0
      %3577 = vmatpush1.msra.mxu0 %v3539
      %3578 = vmatprep.subr.mxu0 0.0
      %3579 = vmatpush1.msra.mxu0 %v3537
      %3580 = vmatprep.subr.mxu0 0.0
      %3581 = vmatpush2.msra.mxu0 0.0
      %3582 = vmatprep.subr.mxu0 0.0
      %3583 = vmatpush2.msra.mxu0 0.0
      %3584 = vmatprep.subr.mxu0 0.0
      %3585 = vmatpush2.msra.mxu0 0.0
      %3586 = vmatprep.subr.mxu0 0.0
      %3587 = vmatpush2.msra.mxu0 0.0
      %3588 = vmatprep.subr.mxu0 0.0
      %3589 = vmatpush2.msra.mxu0 0.0
      %3590 = vmatprep.subr.mxu0 0.0
      %3591 = vmatpush2.msra.mxu0 0.0
      %3592 = vmatprep.subr.mxu0 0.0
      %3593 = vmatpush2.msra.mxu0 0.0
      %3594 = vmatprep.subr.mxu0 0.0
      %3595 = vmatpush2.msra.mxu0 0.0
      %3596 = vmatprep.subr.mxu0 0.0
      %3597 = vmatpush2.msra.mxu0 0.0
      %3598 = vmatprep.subr.mxu0 0.0
      %3599 = vmatpush2.msra.mxu0 0.0
      %3600 = vmatprep.subr.mxu0 0.0
      %3601 = vmatpush2.msra.mxu0 0.0
      %3602 = vmatprep.subr.mxu0 0.0
      %3603 = vmatpush2.msra.mxu0 0.0
      %3604 = vmatprep.subr.mxu0 0.0
      %3605 = vmatpush2.msra.mxu0 0.0
      %3606 = vmatprep.subr.mxu0 0.0
      %3607 = vmatpush2.msra.mxu0 0.0
      %3608 = vmatprep.subr.mxu0 0.0
      %3609 = vmatpush2.msra.mxu0 0.0
      %3610 = vmatprep.subr.mxu0 0.0
      %3611 = vmatpush2.msra.mxu0 0.0
      %3612 = vmatprep.mubr.f32.mxu0 0.0
      %3613 = vmatmul.mubr.f32.gmra.mxu0 %v3543
      %v3614 = vpop.f32.mrf.mxu0
      %v3615 = vadd.f32 0.0, %v3614
      %v3616 = vpop.f32.mrf.mxu0
      %3617 = vmatprep.mubr.f32.mxu0 0.0
      %3618 = vmatmul.mubr.f32.gmra.mxu0 %v3546
      %v3619 = vpop.f32.mrf.mxu0
      %v3620 = vadd.f32 0.0, %v3619
      %v3621 = vpop.f32.mrf.mxu0
      %3622 = vdwg.mxu0
      %v3624 = vsel %vm1382, %v3615, 0
      %v3627 = vsel %vm1382, %v3620, 0
      %3629 = vmatprep.subr.mxu0 0.0
      %3630 = vmatpush1.msra.mxu0 0.0
      %3631 = vmatprep.subr.mxu0 0.0
      %3632 = vmatpush1.msra.mxu0 0.0
      %3633 = vmatprep.subr.mxu0 0.0
      %3634 = vmatpush1.msra.mxu0 0.0
      %3635 = vmatprep.subr.mxu0 0.0
      %3636 = vmatpush1.msra.mxu0 0.0
      %3637 = vmatprep.subr.mxu0 0.0
      %3638 = vmatpush1.msra.mxu0 0.0
      %3639 = vmatprep.subr.mxu0 0.0
      %3640 = vmatpush1.msra.mxu0 0.0
      %3641 = vmatprep.subr.mxu0 0.0
      %3642 = vmatpush1.msra.mxu0 0.0
      %3643 = vmatprep.subr.mxu0 0.0
      %3644 = vmatpush1.msra.mxu0 0.0
      %3645 = vmatprep.subr.mxu0 0.0
      %3646 = vmatpush1.msra.mxu0 0.0
      %3647 = vmatprep.subr.mxu0 0.0
      %3648 = vmatpush1.msra.mxu0 0.0
      %3649 = vmatprep.subr.mxu0 0.0
      %3650 = vmatpush1.msra.mxu0 0.0
      %3651 = vmatprep.subr.mxu0 0.0
      %3652 = vmatpush1.msra.mxu0 0.0
      %3653 = vmatprep.subr.mxu0 0.0
      %3654 = vmatpush1.msra.mxu0 %v1086
      %3655 = vmatprep.subr.mxu0 0.0
      %3656 = vmatpush1.msra.mxu0 %v1085
      %3657 = vmatprep.subr.mxu0 0.0
      %3658 = vmatpush1.msra.mxu0 %v1084
      %3659 = vmatprep.subr.mxu0 0.0
      %3660 = vmatpush1.msra.mxu0 %v1083
      %3661 = vmatprep.subr.mxu0 0.0
      %3662 = vmatpush2.msra.mxu0 0.0
      %3663 = vmatprep.subr.mxu0 0.0
      %3664 = vmatpush2.msra.mxu0 0.0
      %3665 = vmatprep.subr.mxu0 0.0
      %3666 = vmatpush2.msra.mxu0 0.0
      %3667 = vmatprep.subr.mxu0 0.0
      %3668 = vmatpush2.msra.mxu0 0.0
      %3669 = vmatprep.subr.mxu0 0.0
      %3670 = vmatpush2.msra.mxu0 0.0
      %3671 = vmatprep.subr.mxu0 0.0
      %3672 = vmatpush2.msra.mxu0 0.0
      %3673 = vmatprep.subr.mxu0 0.0
      %3674 = vmatpush2.msra.mxu0 0.0
      %3675 = vmatprep.subr.mxu0 0.0
      %3676 = vmatpush2.msra.mxu0 0.0
      %3677 = vmatprep.subr.mxu0 0.0
      %3678 = vmatpush2.msra.mxu0 0.0
      %3679 = vmatprep.subr.mxu0 0.0
      %3680 = vmatpush2.msra.mxu0 0.0
      %3681 = vmatprep.subr.mxu0 0.0
      %3682 = vmatpush2.msra.mxu0 0.0
      %3683 = vmatprep.subr.mxu0 0.0
      %3684 = vmatpush2.msra.mxu0 0.0
      %3685 = vmatprep.subr.mxu0 0.0
      %3686 = vmatpush2.msra.mxu0 0.0
      %3687 = vmatprep.subr.mxu0 0.0
      %3688 = vmatpush2.msra.mxu0 0.0
      %3689 = vmatprep.subr.mxu0 0.0
      %3690 = vmatpush2.msra.mxu0 0.0
      %3691 = vmatprep.subr.mxu0 0.0
      %3692 = vmatpush2.msra.mxu0 0.0
      %3693 = vmatprep.mubr.f32.mxu0 0.0
      %3694 = vmatmul.mubr.f32.gmra.mxu0 %v3624
      %v3695 = vpop.f32.mrf.mxu0
      %v3696 = vadd.f32 0.0, %v3695
      %v3697 = vpop.f32.mrf.mxu0
      %3698 = vmatprep.mubr.f32.mxu0 0.0
      %3699 = vmatmul.mubr.f32.gmra.mxu0 %v3627
      %v3700 = vpop.f32.mrf.mxu0
      %v3701 = vadd.f32 0.0, %v3700
      %v3702 = vpop.f32.mrf.mxu0
      %3703 = vdwg.mxu0
      %v3704 = vadd.f32 %v3330, %v3696
      %v3705 = vadd.f32 %v3331, %v3701
      %3706 = vrot.lane.b32.xlu0 %v1053, 16
      %v3707 = vpop.permute.xlu0 %3706
      %3708 = vrot.lane.b32.xlu0 %v1054, 16
      %v3709 = vpop.permute.xlu0 %3708
      %3710 = vrot.lane.b32.xlu0 %v1073, 16
      %v3711 = vpop.permute.xlu0 %3710
      %3712 = vrot.lane.b32.xlu0 %v1074, 16
      %v3713 = vpop.permute.xlu0 %3712
      %v3714 = vsel %vm1112, %v3707, 0
      %v3716 = vsel %vm1112, %v3709, 0
      %v3718 = vsel %vm1112, %v3711, 0
      %v3720 = vsel %vm1112, %v3713, 0
      %3722 = vmatprep.subr.mxu0 0.0
      %3723 = vmatpush1.xpose.msra.mxu0 0.0
      %3724 = vmatprep.subr.mxu0 0.0
      %3725 = vmatpush1.xpose.msra.mxu0 0.0
      %3726 = vmatprep.subr.mxu0 0.0
      %3727 = vmatpush1.xpose.msra.mxu0 0.0
      %3728 = vmatprep.subr.mxu0 0.0
      %3729 = vmatpush1.xpose.msra.mxu0 0.0
      %3730 = vmatprep.subr.mxu0 0.0
      %3731 = vmatpush1.xpose.msra.mxu0 0.0
      %3732 = vmatprep.subr.mxu0 0.0
      %3733 = vmatpush1.xpose.msra.mxu0 0.0
      %3734 = vmatprep.subr.mxu0 0.0
      %3735 = vmatpush1.xpose.msra.mxu0 0.0
      %3736 = vmatprep.subr.mxu0 0.0
      %3737 = vmatpush1.xpose.msra.mxu0 0.0
      %3738 = vmatprep.subr.mxu0 0.0
      %3739 = vmatpush1.xpose.msra.mxu0 0.0
      %3740 = vmatprep.subr.mxu0 0.0
      %3741 = vmatpush1.xpose.msra.mxu0 0.0
      %3742 = vmatprep.subr.mxu0 0.0
      %3743 = vmatpush1.xpose.msra.mxu0 0.0
      %3744 = vmatprep.subr.mxu0 0.0
      %3745 = vmatpush1.xpose.msra.mxu0 0.0
      %3746 = vmatprep.subr.mxu0 0.0
      %3747 = vmatpush1.xpose.msra.mxu0 0.0
      %3748 = vmatprep.subr.mxu0 0.0
      %3749 = vmatpush1.xpose.msra.mxu0 0.0
      %3750 = vmatprep.subr.mxu0 0.0
      %3751 = vmatpush1.xpose.msra.mxu0 %v3720
      %3752 = vmatprep.subr.mxu0 0.0
      %3753 = vmatpush1.xpose.msra.mxu0 %v3718
      %3754 = vmatprep.subr.mxu0 0.0
      %3755 = vmatpush2.xpose.msra.mxu0 0.0
      %3756 = vmatprep.subr.mxu0 0.0
      %3757 = vmatpush2.xpose.msra.mxu0 0.0
      %3758 = vmatprep.subr.mxu0 0.0
      %3759 = vmatpush2.xpose.msra.mxu0 0.0
      %3760 = vmatprep.subr.mxu0 0.0
      %3761 = vmatpush2.xpose.msra.mxu0 0.0
      %3762 = vmatprep.subr.mxu0 0.0
      %3763 = vmatpush2.xpose.msra.mxu0 0.0
      %3764 = vmatprep.subr.mxu0 0.0
      %3765 = vmatpush2.xpose.msra.mxu0 0.0
      %3766 = vmatprep.subr.mxu0 0.0
      %3767 = vmatpush2.xpose.msra.mxu0 0.0
      %3768 = vmatprep.subr.mxu0 0.0
      %3769 = vmatpush2.xpose.msra.mxu0 0.0
      %3770 = vmatprep.subr.mxu0 0.0
      %3771 = vmatpush2.xpose.msra.mxu0 0.0
      %3772 = vmatprep.subr.mxu0 0.0
      %3773 = vmatpush2.xpose.msra.mxu0 0.0
      %3774 = vmatprep.subr.mxu0 0.0
      %3775 = vmatpush2.xpose.msra.mxu0 0.0
      %3776 = vmatprep.subr.mxu0 0.0
      %3777 = vmatpush2.xpose.msra.mxu0 0.0
      %3778 = vmatprep.subr.mxu0 0.0
      %3779 = vmatpush2.xpose.msra.mxu0 0.0
      %3780 = vmatprep.subr.mxu0 0.0
      %3781 = vmatpush2.xpose.msra.mxu0 0.0
      %3782 = vmatprep.subr.mxu0 0.0
      %3783 = vmatpush2.xpose.msra.mxu0 0.0
      %3784 = vmatprep.subr.mxu0 0.0
      %3785 = vmatpush2.xpose.msra.mxu0 0.0
      %3786 = vmatprep.mubr.f32.mxu0 0.0
      %3787 = vmatmul.mubr.f32.gmra.mxu0 %v3714
      %v3788 = vpop.f32.mrf.mxu0
      %v3789 = vadd.f32 0.0, %v3788
      %v3790 = vpop.f32.mrf.mxu0
      %3791 = vmatprep.mubr.f32.mxu0 0.0
      %3792 = vmatmul.mubr.f32.gmra.mxu0 %v3716
      %v3793 = vpop.f32.mrf.mxu0
      %v3794 = vadd.f32 0.0, %v3793
      %v3795 = vpop.f32.mrf.mxu0
      %3796 = vdwg.mxu0
      %3797 = vrot.lane.b32.xlu0 %v1053, 80
      %v3798 = vpop.permute.xlu0 %3797
      %3799 = vrot.lane.b32.xlu0 %v1054, 80
      %v3800 = vpop.permute.xlu0 %3799
      %3801 = vrot.lane.b32.xlu0 %v1073, 80
      %v3802 = vpop.permute.xlu0 %3801
      %3803 = vrot.lane.b32.xlu0 %v1074, 80
      %v3804 = vpop.permute.xlu0 %3803
      %v3805 = vsel %vm1112, %v3798, 0
      %v3807 = vsel %vm1112, %v3800, 0
      %v3809 = vsel %vm1112, %v3802, 0
      %v3811 = vsel %vm1112, %v3804, 0
      %3813 = vmatprep.subr.mxu0 0.0
      %3814 = vmatpush1.xpose.msra.mxu0 0.0
      %3815 = vmatprep.subr.mxu0 0.0
      %3816 = vmatpush1.xpose.msra.mxu0 0.0
      %3817 = vmatprep.subr.mxu0 0.0
      %3818 = vmatpush1.xpose.msra.mxu0 0.0
      %3819 = vmatprep.subr.mxu0 0.0
      %3820 = vmatpush1.xpose.msra.mxu0 0.0
      %3821 = vmatprep.subr.mxu0 0.0
      %3822 = vmatpush1.xpose.msra.mxu0 0.0
      %3823 = vmatprep.subr.mxu0 0.0
      %3824 = vmatpush1.xpose.msra.mxu0 0.0
      %3825 = vmatprep.subr.mxu0 0.0
      %3826 = vmatpush1.xpose.msra.mxu0 0.0
      %3827 = vmatprep.subr.mxu0 0.0
      %3828 = vmatpush1.xpose.msra.mxu0 0.0
      %3829 = vmatprep.subr.mxu0 0.0
      %3830 = vmatpush1.xpose.msra.mxu0 0.0
      %3831 = vmatprep.subr.mxu0 0.0
      %3832 = vmatpush1.xpose.msra.mxu0 0.0
      %3833 = vmatprep.subr.mxu0 0.0
      %3834 = vmatpush1.xpose.msra.mxu0 0.0
      %3835 = vmatprep.subr.mxu0 0.0
      %3836 = vmatpush1.xpose.msra.mxu0 0.0
      %3837 = vmatprep.subr.mxu0 0.0
      %3838 = vmatpush1.xpose.msra.mxu0 0.0
      %3839 = vmatprep.subr.mxu0 0.0
      %3840 = vmatpush1.xpose.msra.mxu0 0.0
      %3841 = vmatprep.subr.mxu0 0.0
      %3842 = vmatpush1.xpose.msra.mxu0 %v3811
      %3843 = vmatprep.subr.mxu0 0.0
      %3844 = vmatpush1.xpose.msra.mxu0 %v3809
      %3845 = vmatprep.subr.mxu0 0.0
      %3846 = vmatpush2.xpose.msra.mxu0 0.0
      %3847 = vmatprep.subr.mxu0 0.0
      %3848 = vmatpush2.xpose.msra.mxu0 0.0
      %3849 = vmatprep.subr.mxu0 0.0
      %3850 = vmatpush2.xpose.msra.mxu0 0.0
      %3851 = vmatprep.subr.mxu0 0.0
      %3852 = vmatpush2.xpose.msra.mxu0 0.0
      %3853 = vmatprep.subr.mxu0 0.0
      %3854 = vmatpush2.xpose.msra.mxu0 0.0
      %3855 = vmatprep.subr.mxu0 0.0
      %3856 = vmatpush2.xpose.msra.mxu0 0.0
      %3857 = vmatprep.subr.mxu0 0.0
      %3858 = vmatpush2.xpose.msra.mxu0 0.0
      %3859 = vmatprep.subr.mxu0 0.0
      %3860 = vmatpush2.xpose.msra.mxu0 0.0
      %3861 = vmatprep.subr.mxu0 0.0
      %3862 = vmatpush2.xpose.msra.mxu0 0.0
      %3863 = vmatprep.subr.mxu0 0.0
      %3864 = vmatpush2.xpose.msra.mxu0 0.0
      %3865 = vmatprep.subr.mxu0 0.0
      %3866 = vmatpush2.xpose.msra.mxu0 0.0
      %3867 = vmatprep.subr.mxu0 0.0
      %3868 = vmatpush2.xpose.msra.mxu0 0.0
      %3869 = vmatprep.subr.mxu0 0.0
      %3870 = vmatpush2.xpose.msra.mxu0 0.0
      %3871 = vmatprep.subr.mxu0 0.0
      %3872 = vmatpush2.xpose.msra.mxu0 0.0
      %3873 = vmatprep.subr.mxu0 0.0
      %3874 = vmatpush2.xpose.msra.mxu0 0.0
      %3875 = vmatprep.subr.mxu0 0.0
      %3876 = vmatpush2.xpose.msra.mxu0 0.0
      %3877 = vmatprep.mubr.f32.mxu0 0.0
      %3878 = vmatmul.mubr.f32.gmra.mxu0 %v3805
      %v3879 = vpop.f32.mrf.mxu0
      %v3880 = vadd.f32 %v3789, %v3879
      %v3881 = vpop.f32.mrf.mxu0
      %3882 = vmatprep.mubr.f32.mxu0 0.0
      %3883 = vmatmul.mubr.f32.gmra.mxu0 %v3807
      %v3884 = vpop.f32.mrf.mxu0
      %v3885 = vadd.f32 %v3794, %v3884
      %v3886 = vpop.f32.mrf.mxu0
      %3887 = vdwg.mxu0
      %v3888 = vsel %vm1112, %v3880, -inf
      %3889 = vmax.xlane.f32.xlu0 %v3888
      %v3890 = vpop.xlane.xlu0 %3889
      %v3891 = vsel %vm1112, %v3885, -inf
      %3892 = vmax.xlane.f32.xlu0 %v3891
      %v3893 = vpop.xlane.xlu0 %3892
      %v3894 = vsub.f32 %v3880, %v3890
      %v3895 = vsub.f32 %v3885, %v3893
      %v3896 = vmul.f32 %v3894, 1.442695
      %v3897 = vpow.pop %v3896
      %v3898 = vmul.f32 %v3895, 1.442695
      %v3899 = vpow.pop %v3898
      %v3900 = vsel %vm1112, %v3897, 0.0
      %3901 = vadd.xlane.f32.xlu0 %v3900
      %v3902 = vpop.xlane.xlu0 %3901
      %v3903 = vsel %vm1112, %v3899, 0.0
      %3904 = vadd.xlane.f32.xlu0 %v3903
      %v3905 = vpop.xlane.xlu0 %3904
      %v3906 = vrcp.pop %v3902
      %v3907 = vrcp.pop %v3905
      %v3908 = vmul.f32 %v3897, %v3906
      %v3909 = vmul.f32 %v3899, %v3907
      %3910 = vrot.lane.b32.xlu0 %v1019, 32
      %v3911 = vpop.permute.xlu0 %3910
      %3912 = vrot.lane.b32.xlu0 %v1024, 32
      %v3913 = vpop.permute.xlu0 %3912
      %v3917 = vsel %vm1112, %v3908, 0
      %v3920 = vsel %vm1112, %v3909, 0
      %3922 = vmatprep.subr.mxu0 0.0
      %3923 = vmatpush1.msra.mxu0 0.0
      %3924 = vmatprep.subr.mxu0 0.0
      %3925 = vmatpush1.msra.mxu0 0.0
      %3926 = vmatprep.subr.mxu0 0.0
      %3927 = vmatpush1.msra.mxu0 0.0
      %3928 = vmatprep.subr.mxu0 0.0
      %3929 = vmatpush1.msra.mxu0 0.0
      %3930 = vmatprep.subr.mxu0 0.0
      %3931 = vmatpush1.msra.mxu0 0.0
      %3932 = vmatprep.subr.mxu0 0.0
      %3933 = vmatpush1.msra.mxu0 0.0
      %3934 = vmatprep.subr.mxu0 0.0
      %3935 = vmatpush1.msra.mxu0 0.0
      %3936 = vmatprep.subr.mxu0 0.0
      %3937 = vmatpush1.msra.mxu0 0.0
      %3938 = vmatprep.subr.mxu0 0.0
      %3939 = vmatpush1.msra.mxu0 0.0
      %3940 = vmatprep.subr.mxu0 0.0
      %3941 = vmatpush1.msra.mxu0 0.0
      %3942 = vmatprep.subr.mxu0 0.0
      %3943 = vmatpush1.msra.mxu0 0.0
      %3944 = vmatprep.subr.mxu0 0.0
      %3945 = vmatpush1.msra.mxu0 0.0
      %3946 = vmatprep.subr.mxu0 0.0
      %3947 = vmatpush1.msra.mxu0 0.0
      %3948 = vmatprep.subr.mxu0 0.0
      %3949 = vmatpush1.msra.mxu0 0.0
      %3950 = vmatprep.subr.mxu0 0.0
      %3951 = vmatpush1.msra.mxu0 %v3913
      %3952 = vmatprep.subr.mxu0 0.0
      %3953 = vmatpush1.msra.mxu0 %v3911
      %3954 = vmatprep.subr.mxu0 0.0
      %3955 = vmatpush2.msra.mxu0 0.0
      %3956 = vmatprep.subr.mxu0 0.0
      %3957 = vmatpush2.msra.mxu0 0.0
      %3958 = vmatprep.subr.mxu0 0.0
      %3959 = vmatpush2.msra.mxu0 0.0
      %3960 = vmatprep.subr.mxu0 0.0
      %3961 = vmatpush2.msra.mxu0 0.0
      %3962 = vmatprep.subr.mxu0 0.0
      %3963 = vmatpush2.msra.mxu0 0.0
      %3964 = vmatprep.subr.mxu0 0.0
      %3965 = vmatpush2.msra.mxu0 0.0
      %3966 = vmatprep.subr.mxu0 0.0
      %3967 = vmatpush2.msra.mxu0 0.0
      %3968 = vmatprep.subr.mxu0 0.0
      %3969 = vmatpush2.msra.mxu0 0.0
      %3970 = vmatprep.subr.mxu0 0.0
      %3971 = vmatpush2.msra.mxu0 0.0
      %3972 = vmatprep.subr.mxu0 0.0
      %3973 = vmatpush2.msra.mxu0 0.0
      %3974 = vmatprep.subr.mxu0 0.0
      %3975 = vmatpush2.msra.mxu0 0.0
      %3976 = vmatprep.subr.mxu0 0.0
      %3977 = vmatpush2.msra.mxu0 0.0
      %3978 = vmatprep.subr.mxu0 0.0
      %3979 = vmatpush2.msra.mxu0 0.0
      %3980 = vmatprep.subr.mxu0 0.0
      %3981 = vmatpush2.msra.mxu0 0.0
      %3982 = vmatprep.subr.mxu0 0.0
      %3983 = vmatpush2.msra.mxu0 0.0
      %3984 = vmatprep.subr.mxu0 0.0
      %3985 = vmatpush2.msra.mxu0 0.0
      %3986 = vmatprep.mubr.f32.mxu0 0.0
      %3987 = vmatmul.mubr.f32.gmra.mxu0 %v3917
      %v3988 = vpop.f32.mrf.mxu0
      %v3989 = vadd.f32 0.0, %v3988
      %v3990 = vpop.f32.mrf.mxu0
      %3991 = vmatprep.mubr.f32.mxu0 0.0
      %3992 = vmatmul.mubr.f32.gmra.mxu0 %v3920
      %v3993 = vpop.f32.mrf.mxu0
      %v3994 = vadd.f32 0.0, %v3993
      %v3995 = vpop.f32.mrf.mxu0
      %3996 = vdwg.mxu0
      %v3998 = vsel %vm1382, %v3989, 0
      %v4001 = vsel %vm1382, %v3994, 0
      %4003 = vmatprep.subr.mxu0 0.0
      %4004 = vmatpush1.msra.mxu0 0.0
      %4005 = vmatprep.subr.mxu0 0.0
      %4006 = vmatpush1.msra.mxu0 0.0
      %4007 = vmatprep.subr.mxu0 0.0
      %4008 = vmatpush1.msra.mxu0 0.0
      %4009 = vmatprep.subr.mxu0 0.0
      %4010 = vmatpush1.msra.mxu0 0.0
      %4011 = vmatprep.subr.mxu0 0.0
      %4012 = vmatpush1.msra.mxu0 0.0
      %4013 = vmatprep.subr.mxu0 0.0
      %4014 = vmatpush1.msra.mxu0 0.0
      %4015 = vmatprep.subr.mxu0 0.0
      %4016 = vmatpush1.msra.mxu0 0.0
      %4017 = vmatprep.subr.mxu0 0.0
      %4018 = vmatpush1.msra.mxu0 0.0
      %4019 = vmatprep.subr.mxu0 0.0
      %4020 = vmatpush1.msra.mxu0 0.0
      %4021 = vmatprep.subr.mxu0 0.0
      %4022 = vmatpush1.msra.mxu0 0.0
      %4023 = vmatprep.subr.mxu0 0.0
      %4024 = vmatpush1.msra.mxu0 0.0
      %4025 = vmatprep.subr.mxu0 0.0
      %4026 = vmatpush1.msra.mxu0 0.0
      %4027 = vmatprep.subr.mxu0 0.0
      %4028 = vmatpush1.msra.mxu0 %v1090
      %4029 = vmatprep.subr.mxu0 0.0
      %4030 = vmatpush1.msra.mxu0 %v1089
      %4031 = vmatprep.subr.mxu0 0.0
      %4032 = vmatpush1.msra.mxu0 %v1088
      %4033 = vmatprep.subr.mxu0 0.0
      %4034 = vmatpush1.msra.mxu0 %v1087
      %4035 = vmatprep.subr.mxu0 0.0
      %4036 = vmatpush2.msra.mxu0 0.0
      %4037 = vmatprep.subr.mxu0 0.0
      %4038 = vmatpush2.msra.mxu0 0.0
      %4039 = vmatprep.subr.mxu0 0.0
      %4040 = vmatpush2.msra.mxu0 0.0
      %4041 = vmatprep.subr.mxu0 0.0
      %4042 = vmatpush2.msra.mxu0 0.0
      %4043 = vmatprep.subr.mxu0 0.0
      %4044 = vmatpush2.msra.mxu0 0.0
      %4045 = vmatprep.subr.mxu0 0.0
      %4046 = vmatpush2.msra.mxu0 0.0
      %4047 = vmatprep.subr.mxu0 0.0
      %4048 = vmatpush2.msra.mxu0 0.0
      %4049 = vmatprep.subr.mxu0 0.0
      %4050 = vmatpush2.msra.mxu0 0.0
      %4051 = vmatprep.subr.mxu0 0.0
      %4052 = vmatpush2.msra.mxu0 0.0
      %4053 = vmatprep.subr.mxu0 0.0
      %4054 = vmatpush2.msra.mxu0 0.0
      %4055 = vmatprep.subr.mxu0 0.0
      %4056 = vmatpush2.msra.mxu0 0.0
      %4057 = vmatprep.subr.mxu0 0.0
      %4058 = vmatpush2.msra.mxu0 0.0
      %4059 = vmatprep.subr.mxu0 0.0
      %4060 = vmatpush2.msra.mxu0 0.0
      %4061 = vmatprep.subr.mxu0 0.0
      %4062 = vmatpush2.msra.mxu0 0.0
      %4063 = vmatprep.subr.mxu0 0.0
      %4064 = vmatpush2.msra.mxu0 0.0
      %4065 = vmatprep.subr.mxu0 0.0
      %4066 = vmatpush2.msra.mxu0 0.0
      %4067 = vmatprep.mubr.f32.mxu0 0.0
      %4068 = vmatmul.mubr.f32.gmra.mxu0 %v3998
      %v4069 = vpop.f32.mrf.mxu0
      %v4070 = vadd.f32 0.0, %v4069
      %v4071 = vpop.f32.mrf.mxu0
      %4072 = vmatprep.mubr.f32.mxu0 0.0
      %4073 = vmatmul.mubr.f32.gmra.mxu0 %v4001
      %v4074 = vpop.f32.mrf.mxu0
      %v4075 = vadd.f32 0.0, %v4074
      %v4076 = vpop.f32.mrf.mxu0
      %4077 = vdwg.mxu0
      %v4078 = vadd.f32 %v3704, %v4070
      %v4079 = vadd.f32 %v3705, %v4075
      %v4080 = vld [vmem:[%s679] sm:$0x1]
      %v4081 = vld [vmem:[%s682] sm:$0x1]
      %4082 = vadd.xlane.f32.xlu0 %v2588
      %v4083 = vpop.xlane.xlu0 %4082
      %4084 = vadd.xlane.f32.xlu0 %v2589
      %v4085 = vpop.xlane.xlu0 %4084
      %4086 = vadd.xlane.f32.xlu0 %v4078
      %v4087 = vpop.xlane.xlu0 %4086
      %4088 = vadd.xlane.f32.xlu0 %v4079
      %v4089 = vpop.xlane.xlu0 %4088
      %v4090 = vmul.f32 %v4083, %v731
      %v4091 = vmul.f32 %v4085, %v731
      %v4092 = vmul.f32 %v4087, %v731
      %v4093 = vmul.f32 %v4089, %v731
      %v4094 = vsub.f32 %v2588, %v4090
      %v4095 = vsub.f32 %v2589, %v4091
      %v4096 = vsub.f32 %v4078, %v4092
      %v4097 = vsub.f32 %v4079, %v4093
      %v4098 = vmul.f32 %v4094, %v4094
      %v4099 = vmul.f32 %v4095, %v4095
      %v4100 = vmul.f32 %v4096, %v4096
      %v4101 = vmul.f32 %v4097, %v4097
      %4102 = vadd.xlane.f32.xlu0 %v4098
      %v4103 = vpop.xlane.xlu0 %4102
      %4104 = vadd.xlane.f32.xlu0 %v4099
      %v4105 = vpop.xlane.xlu0 %4104
      %4106 = vadd.xlane.f32.xlu0 %v4100
      %v4107 = vpop.xlane.xlu0 %4106
      %4108 = vadd.xlane.f32.xlu0 %v4101
      %v4109 = vpop.xlane.xlu0 %4108
      %v4110 = vmul.f32 %v4103, %v731
      %v4111 = vmul.f32 %v4105, %v731
      %v4112 = vmul.f32 %v4107, %v731
      %v4113 = vmul.f32 %v4109, %v731
      %v4114 = vadd.f32 %v4110, 1e-05
      %v4115 = vadd.f32 %v4111, 1e-05
      %v4116 = vadd.f32 %v4112, 1e-05
      %v4117 = vadd.f32 %v4113, 1e-05
      %v4118 = vrsqrt.pop %v4114
      %v4119 = vrsqrt.pop %v4115
      %v4120 = vrsqrt.pop %v4116
      %v4121 = vrsqrt.pop %v4117
      %v4122 = vmul.f32 %v4094, %v4118
      %v4123 = vmul.f32 %v4095, %v4119
      %v4124 = vmul.f32 %v4096, %v4120
      %v4125 = vmul.f32 %v4097, %v4121
      %v4127 = vlaneseq
      %v4128 = vshrl.u32 %v4127, 7
      %v4129 = vsub.s32 0, %v4128
      %v4130 = vrot.slane %v4080, %v4129
      %v4132 = vmul.f32 %v4122, %v4130
      %v4133 = vmul.f32 %v4123, %v4130
      %v4134 = vmul.f32 %v4124, %v4130
      %v4135 = vmul.f32 %v4125, %v4130
      %v4137 = vlaneseq
      %v4138 = vshrl.u32 %v4137, 7
      %v4139 = vsub.s32 0, %v4138
      %v4140 = vrot.slane %v4081, %v4139
      %v4142 = vadd.f32 %v4132, %v4140
      %v4143 = vadd.f32 %v4133, %v4140
      %v4144 = vadd.f32 %v4134, %v4140
      %v4145 = vadd.f32 %v4135, %v4140
      %v4146 = vld [vmem:[%s687] sm:$0xff]
      %v4147 = vld [vmem:[%s687 + $0x8] sm:$0xff]
      %v4148 = vld [vmem:[%s687 + $0x10] sm:$0xff]
      %v4149 = vld [vmem:[%s687 + $0x18] sm:$0xff]
      %v4150 = vld [vmem:[%s687 + $0x20] sm:$0xff]
      %v4151 = vld [vmem:[%s687 + $0x28] sm:$0xff]
      %v4152 = vld [vmem:[%s687 + $0x30] sm:$0xff]
      %v4153 = vld [vmem:[%s687 + $0x38] sm:$0xff]
      %v4154 = vld [vmem:[%s687 + $0x40] sm:$0xff]
      %v4155 = vld [vmem:[%s687 + $0x48] sm:$0xff]
      %v4156 = vld [vmem:[%s687 + $0x50] sm:$0xff]
      %v4157 = vld [vmem:[%s687 + $0x58] sm:$0xff]
      %v4158 = vld [vmem:[%s687 + $0x60] sm:$0xff]
      %v4159 = vld [vmem:[%s687 + $0x68] sm:$0xff]
      %v4160 = vld [vmem:[%s687 + $0x70] sm:$0xff]
      %v4161 = vld [vmem:[%s687 + $0x78] sm:$0xff]
      %v4162 = vld [vmem:[%s687 + $0x80] sm:$0xff]
      %v4163 = vld [vmem:[%s687 + $0x88] sm:$0xff]
      %v4164 = vld [vmem:[%s687 + $0x90] sm:$0xff]
      %v4165 = vld [vmem:[%s687 + $0x98] sm:$0xff]
      %v4166 = vld [vmem:[%s687 + $0xa0] sm:$0xff]
      %v4167 = vld [vmem:[%s687 + $0xa8] sm:$0xff]
      %v4168 = vld [vmem:[%s687 + $0xb0] sm:$0xff]
      %v4169 = vld [vmem:[%s687 + $0xb8] sm:$0xff]
      %v4170 = vld [vmem:[%s687 + $0xc0] sm:$0xff]
      %v4171 = vld [vmem:[%s687 + $0xc8] sm:$0xff]
      %v4172 = vld [vmem:[%s687 + $0xd0] sm:$0xff]
      %v4173 = vld [vmem:[%s687 + $0xd8] sm:$0xff]
      %v4174 = vld [vmem:[%s687 + $0xe0] sm:$0xff]
      %v4175 = vld [vmem:[%s687 + $0xe8] sm:$0xff]
      %v4176 = vld [vmem:[%s687 + $0xf0] sm:$0xff]
      %v4177 = vld [vmem:[%s687 + $0xf8] sm:$0xff]
      %v4178 = vld [vmem:[%s687 + $0x100] sm:$0xff]
      %v4179 = vld [vmem:[%s687 + $0x108] sm:$0xff]
      %v4180 = vld [vmem:[%s687 + $0x110] sm:$0xff]
      %v4181 = vld [vmem:[%s687 + $0x118] sm:$0xff]
      %v4182 = vld [vmem:[%s687 + $0x120] sm:$0xff]
      %v4183 = vld [vmem:[%s687 + $0x128] sm:$0xff]
      %v4184 = vld [vmem:[%s687 + $0x130] sm:$0xff]
      %v4185 = vld [vmem:[%s687 + $0x138] sm:$0xff]
      %v4186 = vld [vmem:[%s687 + $0x140] sm:$0xff]
      %v4187 = vld [vmem:[%s687 + $0x148] sm:$0xff]
      %v4188 = vld [vmem:[%s687 + $0x150] sm:$0xff]
      %v4189 = vld [vmem:[%s687 + $0x158] sm:$0xff]
      %v4190 = vld [vmem:[%s687 + $0x160] sm:$0xff]
      %v4191 = vld [vmem:[%s687 + $0x168] sm:$0xff]
      %v4192 = vld [vmem:[%s687 + $0x170] sm:$0xff]
      %v4193 = vld [vmem:[%s687 + $0x178] sm:$0xff]
      %v4194 = vld [vmem:[%s687 + $0x180] sm:$0xff]
      %v4195 = vld [vmem:[%s687 + $0x188] sm:$0xff]
      %v4196 = vld [vmem:[%s687 + $0x190] sm:$0xff]
      %v4197 = vld [vmem:[%s687 + $0x198] sm:$0xff]
      %v4198 = vld [vmem:[%s687 + $0x1a0] sm:$0xff]
      %v4199 = vld [vmem:[%s687 + $0x1a8] sm:$0xff]
      %v4200 = vld [vmem:[%s687 + $0x1b0] sm:$0xff]
      %v4201 = vld [vmem:[%s687 + $0x1b8] sm:$0xff]
      %v4202 = vld [vmem:[%s687 + $0x1c0] sm:$0xff]
      %v4203 = vld [vmem:[%s687 + $0x1c8] sm:$0xff]
      %v4204 = vld [vmem:[%s687 + $0x1d0] sm:$0xff]
      %v4205 = vld [vmem:[%s687 + $0x1d8] sm:$0xff]
      %v4206 = vld [vmem:[%s687 + $0x1e0] sm:$0xff]
      %v4207 = vld [vmem:[%s687 + $0x1e8] sm:$0xff]
      %v4208 = vld [vmem:[%s687 + $0x1f0] sm:$0xff]
      %v4209 = vld [vmem:[%s687 + $0x1f8] sm:$0xff]
      %v4210 = vld [vmem:[%s691] sm:$0xf]
      %v4212 = vlaneseq
      %v4213 = vshrl.u32 %v4212, 7
      %v4214 = vsub.s32 0, %v4213
      %v4215 = vrot.slane %v4210, %v4214
      %v4216 = vlaneseq
      %v4217 = vshrl.u32 %v4216, 7
      %v4218 = vsub.s32 1, %v4217
      %v4219 = vrot.slane %v4210, %v4218
      %v4220 = vlaneseq
      %v4221 = vshrl.u32 %v4220, 7
      %v4222 = vsub.s32 2, %v4221
      %v4223 = vrot.slane %v4210, %v4222
      %v4224 = vlaneseq
      %v4225 = vshrl.u32 %v4224, 7
      %v4226 = vsub.s32 3, %v4225
      %v4227 = vrot.slane %v4210, %v4226
      %4232 = vmatprep.subr.mxu0 %v4207
      %4233 = vmatpush1.msra.mxu0 %v4206
      %4234 = vmatprep.subr.mxu0 %v4203
      %4235 = vmatpush1.msra.mxu0 %v4202
      %4236 = vmatprep.subr.mxu0 %v4199
      %4237 = vmatpush1.msra.mxu0 %v4198
      %4238 = vmatprep.subr.mxu0 %v4195
      %4239 = vmatpush1.msra.mxu0 %v4194
      %4240 = vmatprep.subr.mxu0 %v4191
      %4241 = vmatpush1.msra.mxu0 %v4190
      %4242 = vmatprep.subr.mxu0 %v4187
      %4243 = vmatpush1.msra.mxu0 %v4186
      %4244 = vmatprep.subr.mxu0 %v4183
      %4245 = vmatpush1.msra.mxu0 %v4182
      %4246 = vmatprep.subr.mxu0 %v4179
      %4247 = vmatpush1.msra.mxu0 %v4178
      %4248 = vmatprep.subr.mxu0 %v4175
      %4249 = vmatpush1.msra.mxu0 %v4174
      %4250 = vmatprep.subr.mxu0 %v4171
      %4251 = vmatpush1.msra.mxu0 %v4170
      %4252 = vmatprep.subr.mxu0 %v4167
      %4253 = vmatpush1.msra.mxu0 %v4166
      %4254 = vmatprep.subr.mxu0 %v4163
      %4255 = vmatpush1.msra.mxu0 %v4162
      %4256 = vmatprep.subr.mxu0 %v4159
      %4257 = vmatpush1.msra.mxu0 %v4158
      %4258 = vmatprep.subr.mxu0 %v4155
      %4259 = vmatpush1.msra.mxu0 %v4154
      %4260 = vmatprep.subr.mxu0 %v4151
      %4261 = vmatpush1.msra.mxu0 %v4150
      %4262 = vmatprep.subr.mxu0 %v4147
      %4263 = vmatpush1.msra.mxu0 %v4146
      %4264 = vmatprep.subr.mxu0 0.0
      %4265 = vmatpush2.msra.mxu0 0.0
      %4266 = vmatprep.subr.mxu0 0.0
      %4267 = vmatpush2.msra.mxu0 0.0
      %4268 = vmatprep.subr.mxu0 0.0
      %4269 = vmatpush2.msra.mxu0 0.0
      %4270 = vmatprep.subr.mxu0 0.0
      %4271 = vmatpush2.msra.mxu0 0.0
      %4272 = vmatprep.subr.mxu0 0.0
      %4273 = vmatpush2.msra.mxu0 0.0
      %4274 = vmatprep.subr.mxu0 0.0
      %4275 = vmatpush2.msra.mxu0 0.0
      %4276 = vmatprep.subr.mxu0 0.0
      %4277 = vmatpush2.msra.mxu0 0.0
      %4278 = vmatprep.subr.mxu0 0.0
      %4279 = vmatpush2.msra.mxu0 0.0
      %4280 = vmatprep.subr.mxu0 0.0
      %4281 = vmatpush2.msra.mxu0 0.0
      %4282 = vmatprep.subr.mxu0 0.0
      %4283 = vmatpush2.msra.mxu0 0.0
      %4284 = vmatprep.subr.mxu0 0.0
      %4285 = vmatpush2.msra.mxu0 0.0
      %4286 = vmatprep.subr.mxu0 0.0
      %4287 = vmatpush2.msra.mxu0 0.0
      %4288 = vmatprep.subr.mxu0 0.0
      %4289 = vmatpush2.msra.mxu0 0.0
      %4290 = vmatprep.subr.mxu0 0.0
      %4291 = vmatpush2.msra.mxu0 0.0
      %4292 = vmatprep.subr.mxu0 0.0
      %4293 = vmatpush2.msra.mxu0 0.0
      %4294 = vmatprep.subr.mxu0 0.0
      %4295 = vmatpush2.msra.mxu0 0.0
      %4296 = vmatprep.mubr.f32.mxu0 0.0
      %4297 = vmatmul.mubr.f32.gmra.mxu0 %v4142
      %v4298 = vpop.f32.mrf.mxu0
      %v4299 = vadd.f32 %v4215, %v4298
      %v4300 = vpop.f32.mrf.mxu0
      %v4301 = vadd.f32 %v4219, %v4300
      %4302 = vmatprep.mubr.f32.mxu0 0.0
      %4303 = vmatmul.mubr.f32.gmra.mxu0 %v4143
      %v4304 = vpop.f32.mrf.mxu0
      %v4305 = vadd.f32 %v4215, %v4304
      %v4306 = vpop.f32.mrf.mxu0
      %v4307 = vadd.f32 %v4219, %v4306
      %4308 = vmatprep.mubr.f32.mxu0 0.0
      %4309 = vmatmul.mubr.f32.gmra.mxu0 %v4144
      %v4310 = vpop.f32.mrf.mxu0
      %v4311 = vadd.f32 %v4215, %v4310
      %v4312 = vpop.f32.mrf.mxu0
      %v4313 = vadd.f32 %v4219, %v4312
      %4314 = vmatprep.mubr.f32.mxu0 0.0
      %4315 = vmatmul.mubr.f32.gmra.mxu0 %v4145
      %v4316 = vpop.f32.mrf.mxu0
      %v4317 = vadd.f32 %v4215, %v4316
      %v4318 = vpop.f32.mrf.mxu0
      %v4319 = vadd.f32 %v4219, %v4318
      %4320 = vdwg.mxu0
      %4321 = vmatprep.subr.mxu0 %v4209
      %4322 = vmatpush1.msra.mxu0 %v4208
      %4323 = vmatprep.subr.mxu0 %v4205
      %4324 = vmatpush1.msra.mxu0 %v4204
      %4325 = vmatprep.subr.mxu0 %v4201
      %4326 = vmatpush1.msra.mxu0 %v4200
      %4327 = vmatprep.subr.mxu0 %v4197
      %4328 = vmatpush1.msra.mxu0 %v4196
      %4329 = vmatprep.subr.mxu0 %v4193
      %4330 = vmatpush1.msra.mxu0 %v4192
      %4331 = vmatprep.subr.mxu0 %v4189
      %4332 = vmatpush1.msra.mxu0 %v4188
      %4333 = vmatprep.subr.mxu0 %v4185
      %4334 = vmatpush1.msra.mxu0 %v4184
      %4335 = vmatprep.subr.mxu0 %v4181
      %4336 = vmatpush1.msra.mxu0 %v4180
      %4337 = vmatprep.subr.mxu0 %v4177
      %4338 = vmatpush1.msra.mxu0 %v4176
      %4339 = vmatprep.subr.mxu0 %v4173
      %4340 = vmatpush1.msra.mxu0 %v4172
      %4341 = vmatprep.subr.mxu0 %v4169
      %4342 = vmatpush1.msra.mxu0 %v4168
      %4343 = vmatprep.subr.mxu0 %v4165
      %4344 = vmatpush1.msra.mxu0 %v4164
      %4345 = vmatprep.subr.mxu0 %v4161
      %4346 = vmatpush1.msra.mxu0 %v4160
      %4347 = vmatprep.subr.mxu0 %v4157
      %4348 = vmatpush1.msra.mxu0 %v4156
      %4349 = vmatprep.subr.mxu0 %v4153
      %4350 = vmatpush1.msra.mxu0 %v4152
      %4351 = vmatprep.subr.mxu0 %v4149
      %4352 = vmatpush1.msra.mxu0 %v4148
      %4353 = vmatprep.subr.mxu0 0.0
      %4354 = vmatpush2.msra.mxu0 0.0
      %4355 = vmatprep.subr.mxu0 0.0
      %4356 = vmatpush2.msra.mxu0 0.0
      %4357 = vmatprep.subr.mxu0 0.0
      %4358 = vmatpush2.msra.mxu0 0.0
      %4359 = vmatprep.subr.mxu0 0.0
      %4360 = vmatpush2.msra.mxu0 0.0
      %4361 = vmatprep.subr.mxu0 0.0
      %4362 = vmatpush2.msra.mxu0 0.0
      %4363 = vmatprep.subr.mxu0 0.0
      %4364 = vmatpush2.msra.mxu0 0.0
      %4365 = vmatprep.subr.mxu0 0.0
      %4366 = vmatpush2.msra.mxu0 0.0
      %4367 = vmatprep.subr.mxu0 0.0
      %4368 = vmatpush2.msra.mxu0 0.0
      %4369 = vmatprep.subr.mxu0 0.0
      %4370 = vmatpush2.msra.mxu0 0.0
      %4371 = vmatprep.subr.mxu0 0.0
      %4372 = vmatpush2.msra.mxu0 0.0
      %4373 = vmatprep.subr.mxu0 0.0
      %4374 = vmatpush2.msra.mxu0 0.0
      %4375 = vmatprep.subr.mxu0 0.0
      %4376 = vmatpush2.msra.mxu0 0.0
      %4377 = vmatprep.subr.mxu0 0.0
      %4378 = vmatpush2.msra.mxu0 0.0
      %4379 = vmatprep.subr.mxu0 0.0
      %4380 = vmatpush2.msra.mxu0 0.0
      %4381 = vmatprep.subr.mxu0 0.0
      %4382 = vmatpush2.msra.mxu0 0.0
      %4383 = vmatprep.subr.mxu0 0.0
      %4384 = vmatpush2.msra.mxu0 0.0
      %4385 = vmatprep.mubr.f32.mxu0 0.0
      %4386 = vmatmul.mubr.f32.gmra.mxu0 %v4142
      %v4387 = vpop.f32.mrf.mxu0
      %v4388 = vadd.f32 %v4223, %v4387
      %v4389 = vpop.f32.mrf.mxu0
      %v4390 = vadd.f32 %v4227, %v4389
      %4391 = vmatprep.mubr.f32.mxu0 0.0
      %4392 = vmatmul.mubr.f32.gmra.mxu0 %v4143
      %v4393 = vpop.f32.mrf.mxu0
      %v4394 = vadd.f32 %v4223, %v4393
      %v4395 = vpop.f32.mrf.mxu0
      %v4396 = vadd.f32 %v4227, %v4395
      %4397 = vmatprep.mubr.f32.mxu0 0.0
      %4398 = vmatmul.mubr.f32.gmra.mxu0 %v4144
      %v4399 = vpop.f32.mrf.mxu0
      %v4400 = vadd.f32 %v4223, %v4399
      %v4401 = vpop.f32.mrf.mxu0
      %v4402 = vadd.f32 %v4227, %v4401
      %4403 = vmatprep.mubr.f32.mxu0 0.0
      %4404 = vmatmul.mubr.f32.gmra.mxu0 %v4145
      %v4405 = vpop.f32.mrf.mxu0
      %v4406 = vadd.f32 %v4223, %v4405
      %v4407 = vpop.f32.mrf.mxu0
      %v4408 = vadd.f32 %v4227, %v4407
      %4409 = vdwg.mxu0
      %v4410 = vmul.f32 %v4299, 0.5
      %v4411 = vmul.f32 %v4301, 0.5
      %v4412 = vmul.f32 %v4388, 0.5
      %v4413 = vmul.f32 %v4390, 0.5
      %v4414 = vmul.f32 %v4305, 0.5
      %v4415 = vmul.f32 %v4307, 0.5
      %v4416 = vmul.f32 %v4394, 0.5
      %v4417 = vmul.f32 %v4396, 0.5
      %v4418 = vmul.f32 %v4311, 0.5
      %v4419 = vmul.f32 %v4313, 0.5
      %v4420 = vmul.f32 %v4400, 0.5
      %v4421 = vmul.f32 %v4402, 0.5
      %v4422 = vmul.f32 %v4317, 0.5
      %v4423 = vmul.f32 %v4319, 0.5
      %v4424 = vmul.f32 %v4406, 0.5
      %v4425 = vmul.f32 %v4408, 0.5
      %v4426 = vmul.f32 %v4299, 0.70710677
      %v4427 = vmul.f32 %v4301, 0.70710677
      %v4428 = vmul.f32 %v4388, 0.70710677
      %v4429 = vmul.f32 %v4390, 0.70710677
      %v4430 = vmul.f32 %v4305, 0.70710677
      %v4431 = vmul.f32 %v4307, 0.70710677
      %v4432 = vmul.f32 %v4394, 0.70710677
      %v4433 = vmul.f32 %v4396, 0.70710677
      %v4434 = vmul.f32 %v4311, 0.70710677
      %v4435 = vmul.f32 %v4313, 0.70710677
      %v4436 = vmul.f32 %v4400, 0.70710677
      %v4437 = vmul.f32 %v4402, 0.70710677
      %v4438 = vmul.f32 %v4317, 0.70710677
      %v4439 = vmul.f32 %v4319, 0.70710677
      %v4440 = vmul.f32 %v4406, 0.70710677
      %v4441 = vmul.f32 %v4408, 0.70710677
      %v4442 = verf.f32.pop %v4426
      %v4443 = verf.f32.pop %v4427
      %v4444 = verf.f32.pop %v4428
      %v4445 = verf.f32.pop %v4429
      %v4446 = verf.f32.pop %v4430
      %v4447 = verf.f32.pop %v4431
      %v4448 = verf.f32.pop %v4432
      %v4449 = verf.f32.pop %v4433
      %v4450 = verf.f32.pop %v4434
      %v4451 = verf.f32.pop %v4435
      %v4452 = verf.f32.pop %v4436
      %v4453 = verf.f32.pop %v4437
      %v4454 = verf.f32.pop %v4438
      %v4455 = verf.f32.pop %v4439
      %v4456 = verf.f32.pop %v4440
      %v4457 = verf.f32.pop %v4441
      %v4458 = vadd.f32 %v4442, 1.0
      %v4459 = vadd.f32 %v4443, 1.0
      %v4460 = vadd.f32 %v4444, 1.0
      %v4461 = vadd.f32 %v4445, 1.0
      %v4462 = vadd.f32 %v4446, 1.0
      %v4463 = vadd.f32 %v4447, 1.0
      %v4464 = vadd.f32 %v4448, 1.0
      %v4465 = vadd.f32 %v4449, 1.0
      %v4466 = vadd.f32 %v4450, 1.0
      %v4467 = vadd.f32 %v4451, 1.0
      %v4468 = vadd.f32 %v4452, 1.0
      %v4469 = vadd.f32 %v4453, 1.0
      %v4470 = vadd.f32 %v4454, 1.0
      %v4471 = vadd.f32 %v4455, 1.0
      %v4472 = vadd.f32 %v4456, 1.0
      %v4473 = vadd.f32 %v4457, 1.0
      %v4474 = vmul.f32 %v4410, %v4458
      %v4475 = vmul.f32 %v4411, %v4459
      %v4476 = vmul.f32 %v4412, %v4460
      %v4477 = vmul.f32 %v4413, %v4461
      %v4478 = vmul.f32 %v4414, %v4462
      %v4479 = vmul.f32 %v4415, %v4463
      %v4480 = vmul.f32 %v4416, %v4464
      %v4481 = vmul.f32 %v4417, %v4465
      %v4482 = vmul.f32 %v4418, %v4466
      %v4483 = vmul.f32 %v4419, %v4467
      %v4484 = vmul.f32 %v4420, %v4468
      %v4485 = vmul.f32 %v4421, %v4469
      %v4486 = vmul.f32 %v4422, %v4470
      %v4487 = vmul.f32 %v4423, %v4471
      %v4488 = vmul.f32 %v4424, %v4472
      %v4489 = vmul.f32 %v4425, %v4473
      %v4490 = vld [vmem:[%s696] sm:$0xff]
      %v4491 = vld [vmem:[%s696 + $0x8] sm:$0xff]
      %v4492 = vld [vmem:[%s696 + $0x10] sm:$0xff]
      %v4493 = vld [vmem:[%s696 + $0x18] sm:$0xff]
      %v4494 = vld [vmem:[%s696 + $0x20] sm:$0xff]
      %v4495 = vld [vmem:[%s696 + $0x28] sm:$0xff]
      %v4496 = vld [vmem:[%s696 + $0x30] sm:$0xff]
      %v4497 = vld [vmem:[%s696 + $0x38] sm:$0xff]
      %v4498 = vld [vmem:[%s696 + $0x40] sm:$0xff]
      %v4499 = vld [vmem:[%s696 + $0x48] sm:$0xff]
      %v4500 = vld [vmem:[%s696 + $0x50] sm:$0xff]
      %v4501 = vld [vmem:[%s696 + $0x58] sm:$0xff]
      %v4502 = vld [vmem:[%s696 + $0x60] sm:$0xff]
      %v4503 = vld [vmem:[%s696 + $0x68] sm:$0xff]
      %v4504 = vld [vmem:[%s696 + $0x70] sm:$0xff]
      %v4505 = vld [vmem:[%s696 + $0x78] sm:$0xff]
      %v4506 = vld [vmem:[%s696 + $0x80] sm:$0xff]
      %v4507 = vld [vmem:[%s696 + $0x88] sm:$0xff]
      %v4508 = vld [vmem:[%s696 + $0x90] sm:$0xff]
      %v4509 = vld [vmem:[%s696 + $0x98] sm:$0xff]
      %v4510 = vld [vmem:[%s696 + $0xa0] sm:$0xff]
      %v4511 = vld [vmem:[%s696 + $0xa8] sm:$0xff]
      %v4512 = vld [vmem:[%s696 + $0xb0] sm:$0xff]
      %v4513 = vld [vmem:[%s696 + $0xb8] sm:$0xff]
      %v4514 = vld [vmem:[%s696 + $0xc0] sm:$0xff]
      %v4515 = vld [vmem:[%s696 + $0xc8] sm:$0xff]
      %v4516 = vld [vmem:[%s696 + $0xd0] sm:$0xff]
      %v4517 = vld [vmem:[%s696 + $0xd8] sm:$0xff]
      %v4518 = vld [vmem:[%s696 + $0xe0] sm:$0xff]
      %v4519 = vld [vmem:[%s696 + $0xe8] sm:$0xff]
      %v4520 = vld [vmem:[%s696 + $0xf0] sm:$0xff]
      %v4521 = vld [vmem:[%s696 + $0xf8] sm:$0xff]
      %v4522 = vld [vmem:[%s696 + $0x100] sm:$0xff]
      %v4523 = vld [vmem:[%s696 + $0x108] sm:$0xff]
      %v4524 = vld [vmem:[%s696 + $0x110] sm:$0xff]
      %v4525 = vld [vmem:[%s696 + $0x118] sm:$0xff]
      %v4526 = vld [vmem:[%s696 + $0x120] sm:$0xff]
      %v4527 = vld [vmem:[%s696 + $0x128] sm:$0xff]
      %v4528 = vld [vmem:[%s696 + $0x130] sm:$0xff]
      %v4529 = vld [vmem:[%s696 + $0x138] sm:$0xff]
      %v4530 = vld [vmem:[%s696 + $0x140] sm:$0xff]
      %v4531 = vld [vmem:[%s696 + $0x148] sm:$0xff]
      %v4532 = vld [vmem:[%s696 + $0x150] sm:$0xff]
      %v4533 = vld [vmem:[%s696 + $0x158] sm:$0xff]
      %v4534 = vld [vmem:[%s696 + $0x160] sm:$0xff]
      %v4535 = vld [vmem:[%s696 + $0x168] sm:$0xff]
      %v4536 = vld [vmem:[%s696 + $0x170] sm:$0xff]
      %v4537 = vld [vmem:[%s696 + $0x178] sm:$0xff]
      %v4538 = vld [vmem:[%s696 + $0x180] sm:$0xff]
      %v4539 = vld [vmem:[%s696 + $0x188] sm:$0xff]
      %v4540 = vld [vmem:[%s696 + $0x190] sm:$0xff]
      %v4541 = vld [vmem:[%s696 + $0x198] sm:$0xff]
      %v4542 = vld [vmem:[%s696 + $0x1a0] sm:$0xff]
      %v4543 = vld [vmem:[%s696 + $0x1a8] sm:$0xff]
      %v4544 = vld [vmem:[%s696 + $0x1b0] sm:$0xff]
      %v4545 = vld [vmem:[%s696 + $0x1b8] sm:$0xff]
      %v4546 = vld [vmem:[%s696 + $0x1c0] sm:$0xff]
      %v4547 = vld [vmem:[%s696 + $0x1c8] sm:$0xff]
      %v4548 = vld [vmem:[%s696 + $0x1d0] sm:$0xff]
      %v4549 = vld [vmem:[%s696 + $0x1d8] sm:$0xff]
      %v4550 = vld [vmem:[%s696 + $0x1e0] sm:$0xff]
      %v4551 = vld [vmem:[%s696 + $0x1e8] sm:$0xff]
      %v4552 = vld [vmem:[%s696 + $0x1f0] sm:$0xff]
      %v4553 = vld [vmem:[%s696 + $0x1f8] sm:$0xff]
      %4554 = vmatprep.subr.mxu0 0.0
      %4555 = vmatpush1.msra.mxu0 %v4505
      %4556 = vmatprep.subr.mxu0 0.0
      %4557 = vmatpush1.msra.mxu0 %v4504
      %4558 = vmatprep.subr.mxu0 0.0
      %4559 = vmatpush1.msra.mxu0 %v4503
      %4560 = vmatprep.subr.mxu0 0.0
      %4561 = vmatpush1.msra.mxu0 %v4502
      %4562 = vmatprep.subr.mxu0 0.0
      %4563 = vmatpush1.msra.mxu0 %v4501
      %4564 = vmatprep.subr.mxu0 0.0
      %4565 = vmatpush1.msra.mxu0 %v4500
      %4566 = vmatprep.subr.mxu0 0.0
      %4567 = vmatpush1.msra.mxu0 %v4499
      %4568 = vmatprep.subr.mxu0 0.0
      %4569 = vmatpush1.msra.mxu0 %v4498
      %4570 = vmatprep.subr.mxu0 0.0
      %4571 = vmatpush1.msra.mxu0 %v4497
      %4572 = vmatprep.subr.mxu0 0.0
      %4573 = vmatpush1.msra.mxu0 %v4496
      %4574 = vmatprep.subr.mxu0 0.0
      %4575 = vmatpush1.msra.mxu0 %v4495
      %4576 = vmatprep.subr.mxu0 0.0
      %4577 = vmatpush1.msra.mxu0 %v4494
      %4578 = vmatprep.subr.mxu0 0.0
      %4579 = vmatpush1.msra.mxu0 %v4493
      %4580 = vmatprep.subr.mxu0 0.0
      %4581 = vmatpush1.msra.mxu0 %v4492
      %4582 = vmatprep.subr.mxu0 0.0
      %4583 = vmatpush1.msra.mxu0 %v4491
      %4584 = vmatprep.subr.mxu0 0.0
      %4585 = vmatpush1.msra.mxu0 %v4490
      %4586 = vmatprep.subr.mxu0 0.0
      %4587 = vmatpush2.msra.mxu0 %v4521
      %4588 = vmatprep.subr.mxu0 0.0
      %4589 = vmatpush2.msra.mxu0 %v4520
      %4590 = vmatprep.subr.mxu0 0.0
      %4591 = vmatpush2.msra.mxu0 %v4519
      %4592 = vmatprep.subr.mxu0 0.0
      %4593 = vmatpush2.msra.mxu0 %v4518
      %4594 = vmatprep.subr.mxu0 0.0
      %4595 = vmatpush2.msra.mxu0 %v4517
      %4596 = vmatprep.subr.mxu0 0.0
      %4597 = vmatpush2.msra.mxu0 %v4516
      %4598 = vmatprep.subr.mxu0 0.0
      %4599 = vmatpush2.msra.mxu0 %v4515
      %4600 = vmatprep.subr.mxu0 0.0
      %4601 = vmatpush2.msra.mxu0 %v4514
      %4602 = vmatprep.subr.mxu0 0.0
      %4603 = vmatpush2.msra.mxu0 %v4513
      %4604 = vmatprep.subr.mxu0 0.0
      %4605 = vmatpush2.msra.mxu0 %v4512
      %4606 = vmatprep.subr.mxu0 0.0
      %4607 = vmatpush2.msra.mxu0 %v4511
      %4608 = vmatprep.subr.mxu0 0.0
      %4609 = vmatpush2.msra.mxu0 %v4510
      %4610 = vmatprep.subr.mxu0 0.0
      %4611 = vmatpush2.msra.mxu0 %v4509
      %4612 = vmatprep.subr.mxu0 0.0
      %4613 = vmatpush2.msra.mxu0 %v4508
      %4614 = vmatprep.subr.mxu0 0.0
      %4615 = vmatpush2.msra.mxu0 %v4507
      %4616 = vmatprep.subr.mxu0 0.0
      %4617 = vmatpush2.msra.mxu0 %v4506
      %4618 = vmatprep.mubr.f32.mxu0 %v4475
      %4619 = vmatmul.mubr.f32.gmra.mxu0 %v4474
      %v4620 = vpop.f32.mrf.mxu0
      %v4621 = vadd.f32 0.0, %v4620
      %v4622 = vpop.f32.mrf.mxu0
      %4623 = vmatprep.mubr.f32.mxu0 %v4479
      %4624 = vmatmul.mubr.f32.gmra.mxu0 %v4478
      %v4625 = vpop.f32.mrf.mxu0
      %v4626 = vadd.f32 0.0, %v4625
      %v4627 = vpop.f32.mrf.mxu0
      %4628 = vmatprep.mubr.f32.mxu0 %v4483
      %4629 = vmatmul.mubr.f32.gmra.mxu0 %v4482
      %v4630 = vpop.f32.mrf.mxu0
      %v4631 = vadd.f32 0.0, %v4630
      %v4632 = vpop.f32.mrf.mxu0
      %4633 = vmatprep.mubr.f32.mxu0 %v4487
      %4634 = vmatmul.mubr.f32.gmra.mxu0 %v4486
      %v4635 = vpop.f32.mrf.mxu0
      %v4636 = vadd.f32 0.0, %v4635
      %v4637 = vpop.f32.mrf.mxu0
      %4638 = vdwg.mxu0
      %4639 = vmatprep.subr.mxu0 0.0
      %4640 = vmatpush1.msra.mxu0 %v4537
      %4641 = vmatprep.subr.mxu0 0.0
      %4642 = vmatpush1.msra.mxu0 %v4536
      %4643 = vmatprep.subr.mxu0 0.0
      %4644 = vmatpush1.msra.mxu0 %v4535
      %4645 = vmatprep.subr.mxu0 0.0
      %4646 = vmatpush1.msra.mxu0 %v4534
      %4647 = vmatprep.subr.mxu0 0.0
      %4648 = vmatpush1.msra.mxu0 %v4533
      %4649 = vmatprep.subr.mxu0 0.0
      %4650 = vmatpush1.msra.mxu0 %v4532
      %4651 = vmatprep.subr.mxu0 0.0
      %4652 = vmatpush1.msra.mxu0 %v4531
      %4653 = vmatprep.subr.mxu0 0.0
      %4654 = vmatpush1.msra.mxu0 %v4530
      %4655 = vmatprep.subr.mxu0 0.0
      %4656 = vmatpush1.msra.mxu0 %v4529
      %4657 = vmatprep.subr.mxu0 0.0
      %4658 = vmatpush1.msra.mxu0 %v4528
      %4659 = vmatprep.subr.mxu0 0.0
      %4660 = vmatpush1.msra.mxu0 %v4527
      %4661 = vmatprep.subr.mxu0 0.0
      %4662 = vmatpush1.msra.mxu0 %v4526
      %4663 = vmatprep.subr.mxu0 0.0
      %4664 = vmatpush1.msra.mxu0 %v4525
      %4665 = vmatprep.subr.mxu0 0.0
      %4666 = vmatpush1.msra.mxu0 %v4524
      %4667 = vmatprep.subr.mxu0 0.0
      %4668 = vmatpush1.msra.mxu0 %v4523
      %4669 = vmatprep.subr.mxu0 0.0
      %4670 = vmatpush1.msra.mxu0 %v4522
      %4671 = vmatprep.subr.mxu0 0.0
      %4672 = vmatpush2.msra.mxu0 %v4553
      %4673 = vmatprep.subr.mxu0 0.0
      %4674 = vmatpush2.msra.mxu0 %v4552
      %4675 = vmatprep.subr.mxu0 0.0
      %4676 = vmatpush2.msra.mxu0 %v4551
      %4677 = vmatprep.subr.mxu0 0.0
      %4678 = vmatpush2.msra.mxu0 %v4550
      %4679 = vmatprep.subr.mxu0 0.0
      %4680 = vmatpush2.msra.mxu0 %v4549
      %4681 = vmatprep.subr.mxu0 0.0
      %4682 = vmatpush2.msra.mxu0 %v4548
      %4683 = vmatprep.subr.mxu0 0.0
      %4684 = vmatpush2.msra.mxu0 %v4547
      %4685 = vmatprep.subr.mxu0 0.0
      %4686 = vmatpush2.msra.mxu0 %v4546
      %4687 = vmatprep.subr.mxu0 0.0
      %4688 = vmatpush2.msra.mxu0 %v4545
      %4689 = vmatprep.subr.mxu0 0.0
      %4690 = vmatpush2.msra.mxu0 %v4544
      %4691 = vmatprep.subr.mxu0 0.0
      %4692 = vmatpush2.msra.mxu0 %v4543
      %4693 = vmatprep.subr.mxu0 0.0
      %4694 = vmatpush2.msra.mxu0 %v4542
      %4695 = vmatprep.subr.mxu0 0.0
      %4696 = vmatpush2.msra.mxu0 %v4541
      %4697 = vmatprep.subr.mxu0 0.0
      %4698 = vmatpush2.msra.mxu0 %v4540
      %4699 = vmatprep.subr.mxu0 0.0
      %4700 = vmatpush2.msra.mxu0 %v4539
      %4701 = vmatprep.subr.mxu0 0.0
      %4702 = vmatpush2.msra.mxu0 %v4538
      %4703 = vmatprep.mubr.f32.mxu0 %v4477
      %4704 = vmatmul.mubr.f32.gmra.mxu0 %v4476
      %v4705 = vpop.f32.mrf.mxu0
      %v4706 = vadd.f32 %v4621, %v4705
      %v4707 = vpop.f32.mrf.mxu0
      %4708 = vmatprep.mubr.f32.mxu0 %v4481
      %4709 = vmatmul.mubr.f32.gmra.mxu0 %v4480
      %v4710 = vpop.f32.mrf.mxu0
      %v4711 = vadd.f32 %v4626, %v4710
      %v4712 = vpop.f32.mrf.mxu0
      %4713 = vmatprep.mubr.f32.mxu0 %v4485
      %4714 = vmatmul.mubr.f32.gmra.mxu0 %v4484
      %v4715 = vpop.f32.mrf.mxu0
      %v4716 = vadd.f32 %v4631, %v4715
      %v4717 = vpop.f32.mrf.mxu0
      %4718 = vmatprep.mubr.f32.mxu0 %v4489
      %4719 = vmatmul.mubr.f32.gmra.mxu0 %v4488
      %v4720 = vpop.f32.mrf.mxu0
      %v4721 = vadd.f32 %v4636, %v4720
      %v4722 = vpop.f32.mrf.mxu0
      %4723 = vdwg.mxu0
      %v4724 = vadd.f32 %v2588, %v4706
      %v4725 = vadd.f32 %v2589, %v4711
      %v4726 = vadd.f32 %v4078, %v4716
      %v4727 = vadd.f32 %v4079, %v4721
      %v4728 = vld [vmem:[%s699] sm:$0x1]
      %v4730 = vlaneseq
      %v4731 = vshrl.u32 %v4730, 7
      %v4732 = vsub.s32 0, %v4731
      %v4733 = vrot.slane %v4728, %v4732
      %v4735 = vadd.f32 %v4724, %v4733
      %v4736 = vadd.f32 %v4725, %v4733
      %v4737 = vadd.f32 %v4726, %v4733
      %v4738 = vadd.f32 %v4727, %v4733
      %4739 = vst [vmem:[#allocation2] sm:$0xff] %v4735
      %4740 = vst [vmem:[#allocation2 + $0x8] sm:$0xff] %v4736
      %4741 = vst [vmem:[#allocation2 + $0x10] sm:$0xff] %v4737
      %4742 = vst [vmem:[#allocation2 + $0x18] sm:$0xff] %v4738
      %p4743 = scmp.eq.s32.totalorder %s31, 1
      // Predicated region
      $region85: #{_lambda_.4} parent=79 // pred_check
        %p4744 = pneg %p4743
      $region86: #{_lambda_.4} parent=79 // pred_check_branch
        %4746 = sbr.rel (%p4744) target = $region88
      $region87: #{_lambda_.4} parent=79 // pred_region
        %4747 = vst [vmem:[%s704] sm:$0xff] %v4735
        %4748 = vst [vmem:[%s704 + $0x8] sm:$0xff] %v4736
        %4749 = vst [vmem:[%s704 + $0x10] sm:$0xff] %v4737
        %4750 = vst [vmem:[%s704 + $0x18] sm:$0xff] %v4738
      $region88: #{_lambda_.4} parent=79 // pred_fallthru
        _
      %p4751 = scmp.lt.s32.totalorder %s30, 0
      %s4752 = scalar_select %p4751, %s30, 0
      %s4753 = smul.addr %s4752, 4
      %s4754 = smul.addr %s4753, 8
      %s4755 = scalar_lea.vmem %s15, %s4754
      // Predicated region
      $region89: #{_lambda_.4} parent=79 // pred_check
        %p4756 = pneg %p436
      $region90: #{_lambda_.4} parent=79 // pred_check_branch
        %4758 = sbr.rel (%p4756) target = $region92
      $region91: #{_lambda_.4} parent=79 // pred_region
        _
      $region92: #{_lambda_.4} parent=79 // pred_fallthru
        _
      // Predicated region
      $region93: #{_lambda_.4} parent=79 // pred_check
        %p4759 = pneg %p436
      $region94: #{_lambda_.4} parent=79 // pred_check_branch
        %4761 = sbr.rel (%p4759) target = $region96
      $region95: #{_lambda_.4} parent=79 // pred_region
        %p4762 = scmp.lt.s32.totalorder %s30, 0
        %s4763 = scalar_select %p4762, %s30, 0
        %s4764 = smul.addr %s4763, 4
        %s4765 = smul.addr %s4764, 8
        %s4766 = scalar_lea.vmem %s15, %s4765
      $region96: #{_lambda_.4} parent=79 // pred_fallthru
        _
    $region80: #{_lambda_.4} parent=5 // pred_fallthru
      _
    %p4767 = scmp.le.s32.totalorder 2, %s21
    // Predicated region
    $region97: #{_lambda_.4} parent=5 // pred_check
      %p4768 = pneg %p4767
    $region98: #{_lambda_.4} parent=5 // pred_check_branch
      %4770 = sbr.rel (%p4768) target = $region100
    $region99: #{_lambda_.4} parent=5 // pred_region
      %s4771 = ssub.s32 %s21, 2
    $region100: #{_lambda_.4} parent=5 // pred_fallthru
      _
  $region6: #{_lambda_.4} parent=0 // loop_footer
    %s25 = sadd.s32 1, %s21
  $region7: #{_lambda_.4} parent=0 // loop_footer_branch
    %20 = sbr.rel target = $region3
  $region8: #{_lambda_.4} parent=0 // loop_exit
    _

</llo_original>
